<compile_context>
chip_gen: v5e
topology: v5e:2x2
jax: 0.10.0
libtpu: 0.0.40
codegen_flags: <defaults>
</compile_context>

<pallas_src>
import functools

import jax
import jax.numpy as jnp
from jax.experimental import pallas as pl
from jax.experimental.pallas import tpu as pltpu


# --------------------------- fused conv1+conv2 kernel ---------------------------

def _conv_kernel(x_ref, w1_ref, b1_ref, w2_ref, b2_ref, o_ref):
    """x_ref: (LpadE, B) input padded by (K//2 + 1) each side, length-major.
    w1_ref: (K, H) conv1 weight with BN1 scale folded.
    w2_ref: (K, H, H) conv2 weight with BN2 scale folded (k, cin, cout).
    o_ref:  (B, Lout2, H) = relu(bn2(conv2(relu(bn1(conv1(x)))))), token-major."""
    LpadE, B = x_ref.shape
    K, H = w1_ref.shape
    _, Lout2, _ = o_ref.shape
    Lext = LpadE - K + 1          # = Lout1 + 2 (conv1 output + conv2's zero pad of 1)
    Lout1 = Lext - 2

    # mask selecting the valid conv1 rows (rows 0 and Lout1+1 are conv2's zero padding)
    rows = jax.lax.broadcasted_iota(jnp.int32, (Lext, H), 0)
    valid = jnp.logical_and(rows >= 1, rows <= Lout1)

    for b in range(B):                                   # B is tiny & static
        # ---- conv1 as K shifted broadcast-MACs on the VPU (Cin = 1) ----
        acc1 = jnp.zeros((Lext, H), jnp.float32)
        for k in range(K):
            xk = x_ref[k:k + Lext, b:b + 1]              # (Lext, 1)
            acc1 = acc1 + xk * w1_ref[k:k + 1, :]        # (Lext,1)*(1,H) -> (Lext,H)
        y1 = jnp.maximum(acc1 + b1_ref[...], 0.0)        # folded BN1 bias + ReLU
        y1 = jnp.where(valid, y1, 0.0)                   # zero rows = conv2 padding

        # ---- conv2 as K shifted (Lout2,H)@(H,H) MXU matmuls ----
        acc2 = jnp.zeros((Lout2, H), jnp.float32)
        for k in range(K):
            acc2 = acc2 + jnp.dot(y1[k:k + Lout2, :], w2_ref[k],
                                  preferred_element_type=jnp.float32)
        o_ref[b] = jnp.maximum(acc2 + b2_ref[...], 0.0)  # folded BN2 bias + ReLU


def conv_bn_relu_x2(xpad_t, w1f, b1f, w2f, b2f, *, out_shape):
    LpadE, B = xpad_t.shape
    K, H = w1f.shape
    return pl.pallas_call(
        _conv_kernel,
        out_shape=jax.ShapeDtypeStruct(out_shape, jnp.float32),
        grid=(1,),
        in_specs=[
            pl.BlockSpec((LpadE, B), lambda i: (0, 0)),
            pl.BlockSpec((K, H), lambda i: (0, 0)),
            pl.BlockSpec((1, H), lambda i: (0, 0)),
            pl.BlockSpec((K, H, H), lambda i: (0, 0, 0)),
            pl.BlockSpec((1, H), lambda i: (0, 0)),
        ],
        out_specs=pl.BlockSpec(out_shape, lambda i: (0, 0, 0)),
        compiler_params=pltpu.CompilerParams(dimension_semantics=("arbitrary",)),
    )(xpad_t, w1f, b1f, w2f, b2f)


# ------------------- fused transformer stack + mean + FC kernel -------------------

def _tx_stack_kernel(y_ref, wqkv_ref, bqkv_ref, wo_ref, bo_ref,
                     ln1g_ref, ln1b_ref, wff1_ref, bff1_ref,
                     wff2_ref, bff2_ref, ln2g_ref, ln2b_ref,
                     fcw_ref, fcb_ref, o_ref, carry, *, n_heads, eps):
    """One grid step == one post-norm TransformerEncoderLayer (eval mode).
    carry (VMEM scratch) holds the (B, S, H) activation across layers.
    At the last layer: mean over S + final Linear, written to o_ref (B, O)."""
    l = pl.program_id(0)
    n_layers = pl.num_programs(0)
    B, S, H = carry.shape
    dh = H // n_heads
    scale = 1.0 / float(dh) ** 0.5

    @pl.when(l == 0)
    def _init():
        carry[...] = y_ref[...]

    w_qkv = wqkv_ref[0]       # (H, 3H)
    b_qkv = bqkv_ref[0]       # (1, 3H)
    w_o = wo_ref[0]           # (H, H)
    b_o = bo_ref[0]           # (1, H)
    g1, be1 = ln1g_ref[0], ln1b_ref[0]
    w_f1, b_f1 = wff1_ref[0], bff1_ref[0]
    w_f2, b_f2 = wff2_ref[0], bff2_ref[0]
    g2, be2 = ln2g_ref[0], ln2b_ref[0]

    def layer_norm(v, g, b):
        mu = jnp.mean(v, axis=-1, keepdims=True)
        var = jnp.mean(jnp.square(v - mu), axis=-1, keepdims=True)
        return (v - mu) * jax.lax.rsqrt(var + eps) * g + b

    for b in range(B):                                   # static unroll over tiny batch
        xb = carry[b]                                    # (S, H)
        qkv = jnp.dot(xb, w_qkv, preferred_element_type=jnp.float32) + b_qkv  # (S, 3H)

        # attention with in-kernel head split; out-proj folded per head (no concat)
        attn = jnp.zeros((S, H), jnp.float32)
        for h in range(n_heads):
            lo = h * dh
            qh = qkv[:, lo:lo + dh]
            kh = qkv[:, H + lo:H + lo + dh]
            vh = qkv[:, 2 * H + lo:2 * H + lo + dh]
            s = jax.lax.dot_general(qh, kh, (((1,), (1,)), ((), ())),
                                    preferred_element_type=jnp.float32) * scale  # (S,S)
            s = s - jnp.max(s, axis=-1, keepdims=True)
            p = jnp.exp(s)
            p = p * pl.reciprocal(jnp.sum(p, axis=-1, keepdims=True), approx=True)
            oh = jnp.dot(p, vh, preferred_element_type=jnp.float32)              # (S,dh)
            attn = attn + jnp.dot(oh, w_o[lo:lo + dh, :],
                                  preferred_element_type=jnp.float32)
        attn = attn + b_o

        # residual + LN1, feed-forward, residual + LN2 (all resident in VMEM)
        y1 = layer_norm(xb + attn, g1, be1)
        hmid = jnp.maximum(jnp.dot(y1, w_f1, preferred_element_type=jnp.float32) + b_f1,
                           0.0)
        ff = jnp.dot(hmid, w_f2, preferred_element_type=jnp.float32) + b_f2
        carry[b] = layer_norm(y1 + ff, g2, be2)

    @pl.when(l == n_layers - 1)
    def _finalize():
        for b in range(B):
            xm = jnp.mean(carry[b], axis=0, keepdims=True)           # (1, H) mean over S
            o_ref[b:b + 1, :] = (jnp.dot(xm, fcw_ref[...],
                                         preferred_element_type=jnp.float32)
                                 + fcb_ref[...])


def transformer_stack_mean_fc(y, params, *, n_heads, eps=1e-5):
    B, S, H = y.shape
    Lnum = params["wqkv"].shape[0]
    O = params["fc_w"].shape[1]

    wqkv = params["wqkv"]
    bqkv = params["bqkv"].reshape(Lnum, 1, 3 * H)
    wo = params["wo"]
    bo = params["bo"].reshape(Lnum, 1, H)
    ln1g = params["ln1_g"].reshape(Lnum, 1, H)
    ln1b = params["ln1_b"].reshape(Lnum, 1, H)
    wff1 = params["wff1"]
    bff1 = params["bff1"].reshape(Lnum, 1, 2 * H)
    wff2 = params["wff2"]
    bff2 = params["bff2"].reshape(Lnum, 1, H)
    ln2g = params["ln2_g"].reshape(Lnum, 1, H)
    ln2b = params["ln2_b"].reshape(Lnum, 1, H)
    fc_w = params["fc_w"]
    fc_b = params["fc_b"].reshape(1, O)

    def per_layer(shape):
        return pl.BlockSpec((1,) + tuple(shape[1:]), lambda l: (l, 0, 0))

    kernel = functools.partial(_tx_stack_kernel, n_heads=n_heads, eps=eps)
    return pl.pallas_call(
        kernel,
        out_shape=jax.ShapeDtypeStruct((B, O), jnp.float32),
        grid=(Lnum,),
        in_specs=[
            pl.BlockSpec((B, S, H), lambda l: (0, 0, 0)),   # activation, resident
            per_layer(wqkv.shape), per_layer(bqkv.shape),
            per_layer(wo.shape), per_layer(bo.shape),
            per_layer(ln1g.shape), per_layer(ln1b.shape),
            per_layer(wff1.shape), per_layer(bff1.shape),
            per_layer(wff2.shape), per_layer(bff2.shape),
            per_layer(ln2g.shape), per_layer(ln2b.shape),
            pl.BlockSpec((H, O), lambda l: (0, 0)),
            pl.BlockSpec((1, O), lambda l: (0, 0)),
        ],
        out_specs=pl.BlockSpec((B, O), lambda l: (0, 0)),
        scratch_shapes=[pltpu.VMEM((B, S, H), jnp.float32)],
        compiler_params=pltpu.CompilerParams(dimension_semantics=("arbitrary",)),
    )(y, wqkv, bqkv, wo, bo, ln1g, ln1b, wff1, bff1, wff2, bff2, ln2g, ln2b, fc_w, fc_b)


# --------------------------------- forward pass ---------------------------------

def network_forward(x, params, *, n_heads, kernel_size):
    """x: (B, L) float32 -> (B, output_dim) float32 (eval-mode semantics)."""
    eps = 1e-5
    B, Lin = x.shape
    H = params["conv1_w"].shape[0]
    K = kernel_size
    pad1 = K // 2

    # fold eval-mode BatchNorm into the conv weights/biases (tiny parameter-side ops)
    s1 = params["bn1_g"] * jax.lax.rsqrt(params["bn1_v"] + eps)
    w1f = (params["conv1_w"][:, 0, :] * s1[:, None]).T                    # (K, H)
    b1f = ((params["conv1_b"] - params["bn1_m"]) * s1 + params["bn1_b"]).reshape(1, H)
    s2 = params["bn2_g"] * jax.lax.rsqrt(params["bn2_v"] + eps)
    w2f = jnp.transpose(params["conv2_w"], (2, 1, 0)) * s2[None, None, :]  # (K, Cin, Cout)
    b2f = ((params["conv2_b"] - params["bn2_m"]) * s2 + params["bn2_b"]).reshape(1, H)

    Lout1 = Lin + 2 * pad1 - K + 1            # conv1 (padding = K//2)
    Lout2 = Lout1 + 2 * 1 - K + 1             # conv2 (padding = 1)

    # pad by (pad1 + 1): the extra 1 lets the kernel build conv2's zero-padding rows
    # in-register (masked) instead of concatenating / gathering in HBM.
    xpad_t = jnp.pad(x, ((0, 0), (pad1 + 1, pad1 + 1))).T                 # (LpadE, B)

    y2 = conv_bn_relu_x2(xpad_t, w1f, b1f, w2f, b2f,
                         out_shape=(B, Lout2, H))                         # (B, S, H)
    # attention / layer ops are per batch element over the full sequence, so the
    # batch-major (B, S, H) layout is equivalent to PyTorch's seq-first (S, B, H).
    return transformer_stack_mean_fc(y2, params, n_heads=n_heads)         # (B, O)


# -------------------------------- parameter init --------------------------------

def init_params(key, *, output_dim, hidden_dim, num_layers, n_heads, kernel_size):
    H, L = hidden_dim, num_layers
    keys = iter(jax.random.split(key, 40))

    def nrm(shape, scale=0.05):
        return jax.random.normal(next(keys), shape, dtype=jnp.float32) * scale

    return {
        "conv1_w": nrm((H, 1, kernel_size)),
        "conv1_b": nrm((H,)),
        "bn1_g": 1.0 + nrm((H,)), "bn1_b": nrm((H,)),
        "bn1_m": nrm((H,)), "bn1_v": 1.0 + jnp.abs(nrm((H,))),
        "conv2_w": nrm((H, H, kernel_size)),
        "conv2_b": nrm((H,)),
        "bn2_g": 1.0 + nrm((H,)), "bn2_b": nrm((H,)),
        "bn2_m": nrm((H,)), "bn2_v": 1.0 + jnp.abs(nrm((H,))),
        # transformer layers stored stacked along a leading layer axis
        # (in_proj / out_proj weights stored as (in, out): y = x @ W + b)
        "wqkv": nrm((L, H, 3 * H)), "bqkv": nrm((L, 3 * H)),
        "wo": nrm((L, H, H)), "bo": nrm((L, H)),
        "ln1_g": 1.0 + nrm((L, H)), "ln1_b": nrm((L, H)),
        "wff1": nrm((L, H, 2 * H)), "bff1": nrm((L, 2 * H)),
        "wff2": nrm((L, 2 * H, H)), "bff2": nrm((L, H)),
        "ln2_g": 1.0 + nrm((L, H)), "ln2_b": nrm((L, H)),
        "fc_w": nrm((H, output_dim)), "fc_b": nrm((output_dim,)),
    }


# ------------------------------------- main --------------------------------------

if __name__ == "__main__":
    # Small, forward-consistent hyperparameters (defaults scaled down).
    batch = 2
    input_dim = 64        # raw signal length L
    output_dim = 8
    hidden_dim = 32
    num_layers = 2
    n_heads = 4           # head_dim = 8
    kernel_size = 6

    key = jax.random.PRNGKey(0)
    pkey, xkey = jax.random.split(key)
    params = init_params(pkey, output_dim=output_dim, hidden_dim=hidden_dim,
                         num_layers=num_layers, n_heads=n_heads,
                         kernel_size=kernel_size)
    x = jax.random.normal(xkey, (batch, input_dim), dtype=jnp.float32)

    fwd = jax.jit(functools.partial(network_forward,
                                    n_heads=n_heads, kernel_size=kernel_size))
    out = fwd(x, params)
    out = jax.block_until_ready(out)
    assert out.shape == (batch, output_dim), out.shape
    assert jnp.all(jnp.isfinite(out))
    print("KERNEL_OK")
</pallas_src>

<mosaic_0001>
module attributes {stable_mosaic.version = 11 : i64} {
  func.func @_conv_kernel(%arg0: i32, %arg1: memref<72x2xf32, #tpu.memory_space<vmem>>, %arg2: memref<6x32xf32, #tpu.memory_space<vmem>>, %arg3: memref<1x32xf32, #tpu.memory_space<vmem>>, %arg4: memref<6x32x32xf32, #tpu.memory_space<vmem>>, %arg5: memref<1x32xf32, #tpu.memory_space<vmem>>, %arg6: memref<2x62x32xf32, #tpu.memory_space<vmem>>) attributes {dimension_semantics = [#tpu.dimension_semantics<arbitrary>], iteration_bounds = array<i64: 1>, scalar_prefetch = 0 : i64, scratch_operands = 0 : i64, tpu.core_type = #tpu.core_type<tc>, window_params = [{pipeline_mode = #tpu.pipeline_mode<synchronous>, transform_indices = @transform_0, window_bounds = array<i64: 72, 2>}, {pipeline_mode = #tpu.pipeline_mode<synchronous>, transform_indices = @transform_1, window_bounds = array<i64: 6, 32>}, {pipeline_mode = #tpu.pipeline_mode<synchronous>, transform_indices = @transform_2, window_bounds = array<i64: 1, 32>}, {pipeline_mode = #tpu.pipeline_mode<synchronous>, transform_indices = @transform_3, window_bounds = array<i64: 6, 32, 32>}, {pipeline_mode = #tpu.pipeline_mode<synchronous>, transform_indices = @transform_4, window_bounds = array<i64: 1, 32>}, {pipeline_mode = #tpu.pipeline_mode<synchronous>, transform_indices = @transform_5, window_bounds = array<i64: 2, 62, 32>}]} {
    %0 = tpu.iota {dimensions = array<i32: 0>} : vector<67x32xi32>
    %c1_i32 = arith.constant 1 : i32
    %1 = vector.broadcast %c1_i32 : i32 to vector<67x32xi32>
    %2 = arith.cmpi sge, %0, %1 : vector<67x32xi32>
    %c65_i32 = arith.constant 65 : i32
    %3 = vector.broadcast %c65_i32 : i32 to vector<67x32xi32>
    %4 = arith.cmpi sle, %0, %3 : vector<67x32xi32>
    %5 = arith.andi %2, %4 : vector<67x32xi1>
    %cst = arith.constant 0.000000e+00 : f32
    %6 = vector.broadcast %cst : f32 to vector<67x32xf32>
    %c0 = arith.constant 0 : index
    %c0_0 = arith.constant 0 : index
    %7 = vector.load %arg1[%c0, %c0_0] : memref<72x2xf32, #tpu.memory_space<vmem>>, vector<67x1xf32>
    %c0_1 = arith.constant 0 : index
    %c0_2 = arith.constant 0 : index
    %8 = vector.load %arg2[%c0_1, %c0_2] : memref<6x32xf32, #tpu.memory_space<vmem>>, vector<1x32xf32>
    %9 = vector.broadcast %7 : vector<67x1xf32> to vector<67x32xf32>
    %10 = vector.broadcast %8 : vector<1x32xf32> to vector<67x32xf32>
    %11 = arith.mulf %9, %10 : vector<67x32xf32>
    %12 = arith.addf %6, %11 : vector<67x32xf32>
    %c1 = arith.constant 1 : index
    %c0_3 = arith.constant 0 : index
    %13 = vector.load %arg1[%c1, %c0_3] : memref<72x2xf32, #tpu.memory_space<vmem>>, vector<67x1xf32>
    %c1_4 = arith.constant 1 : index
    %c0_5 = arith.constant 0 : index
    %14 = vector.load %arg2[%c1_4, %c0_5] : memref<6x32xf32, #tpu.memory_space<vmem>>, vector<1x32xf32>
    %15 = vector.broadcast %13 : vector<67x1xf32> to vector<67x32xf32>
    %16 = vector.broadcast %14 : vector<1x32xf32> to vector<67x32xf32>
    %17 = arith.mulf %15, %16 : vector<67x32xf32>
    %18 = arith.addf %12, %17 : vector<67x32xf32>
    %c2 = arith.constant 2 : index
    %c0_6 = arith.constant 0 : index
    %19 = vector.load %arg1[%c2, %c0_6] : memref<72x2xf32, #tpu.memory_space<vmem>>, vector<67x1xf32>
    %c2_7 = arith.constant 2 : index
    %c0_8 = arith.constant 0 : index
    %20 = vector.load %arg2[%c2_7, %c0_8] : memref<6x32xf32, #tpu.memory_space<vmem>>, vector<1x32xf32>
    %21 = vector.broadcast %19 : vector<67x1xf32> to vector<67x32xf32>
    %22 = vector.broadcast %20 : vector<1x32xf32> to vector<67x32xf32>
    %23 = arith.mulf %21, %22 : vector<67x32xf32>
    %24 = arith.addf %18, %23 : vector<67x32xf32>
    %c3 = arith.constant 3 : index
    %c0_9 = arith.constant 0 : index
    %25 = vector.load %arg1[%c3, %c0_9] : memref<72x2xf32, #tpu.memory_space<vmem>>, vector<67x1xf32>
    %c3_10 = arith.constant 3 : index
    %c0_11 = arith.constant 0 : index
    %26 = vector.load %arg2[%c3_10, %c0_11] : memref<6x32xf32, #tpu.memory_space<vmem>>, vector<1x32xf32>
    %27 = vector.broadcast %25 : vector<67x1xf32> to vector<67x32xf32>
    %28 = vector.broadcast %26 : vector<1x32xf32> to vector<67x32xf32>
    %29 = arith.mulf %27, %28 : vector<67x32xf32>
    %30 = arith.addf %24, %29 : vector<67x32xf32>
    %c4 = arith.constant 4 : index
    %c0_12 = arith.constant 0 : index
    %31 = vector.load %arg1[%c4, %c0_12] : memref<72x2xf32, #tpu.memory_space<vmem>>, vector<67x1xf32>
    %c4_13 = arith.constant 4 : index
    %c0_14 = arith.constant 0 : index
    %32 = vector.load %arg2[%c4_13, %c0_14] : memref<6x32xf32, #tpu.memory_space<vmem>>, vector<1x32xf32>
    %33 = vector.broadcast %31 : vector<67x1xf32> to vector<67x32xf32>
    %34 = vector.broadcast %32 : vector<1x32xf32> to vector<67x32xf32>
    %35 = arith.mulf %33, %34 : vector<67x32xf32>
    %36 = arith.addf %30, %35 : vector<67x32xf32>
    %c5 = arith.constant 5 : index
    %c0_15 = arith.constant 0 : index
    %37 = vector.load %arg1[%c5, %c0_15] : memref<72x2xf32, #tpu.memory_space<vmem>>, vector<67x1xf32>
    %c5_16 = arith.constant 5 : index
    %c0_17 = arith.constant 0 : index
    %38 = vector.load %arg2[%c5_16, %c0_17] : memref<6x32xf32, #tpu.memory_space<vmem>>, vector<1x32xf32>
    %39 = vector.broadcast %37 : vector<67x1xf32> to vector<67x32xf32>
    %40 = vector.broadcast %38 : vector<1x32xf32> to vector<67x32xf32>
    %41 = arith.mulf %39, %40 : vector<67x32xf32>
    %42 = arith.addf %36, %41 : vector<67x32xf32>
    %c0_18 = arith.constant 0 : index
    %c0_19 = arith.constant 0 : index
    %43 = vector.load %arg3[%c0_18, %c0_19] : memref<1x32xf32, #tpu.memory_space<vmem>>, vector<1x32xf32>
    %44 = vector.broadcast %43 : vector<1x32xf32> to vector<67x32xf32>
    %45 = arith.addf %42, %44 : vector<67x32xf32>
    %cst_20 = arith.constant 0.000000e+00 : f32
    %46 = vector.broadcast %cst_20 : f32 to vector<67x32xf32>
    %47 = arith.maximumf %45, %46 : vector<67x32xf32>
    %cst_21 = arith.constant 0.000000e+00 : f32
    %48 = vector.broadcast %cst_21 : f32 to vector<67x32xf32>
    %49 = arith.select %5, %47, %48 : vector<67x32xi1>, vector<67x32xf32>
    %cst_22 = arith.constant 0.000000e+00 : f32
    %50 = vector.broadcast %cst_22 : f32 to vector<62x32xf32>
    %51 = vector.extract_strided_slice %49 {offsets = [0, 0], sizes = [62, 32], strides = [1, 1]} : vector<67x32xf32> to vector<62x32xf32>
    %c0_23 = arith.constant 0 : index
    %c0_24 = arith.constant 0 : index
    %c0_25 = arith.constant 0 : index
    %52 = vector.load %arg4[%c0_23, %c0_24, %c0_25] : memref<6x32x32xf32, #tpu.memory_space<vmem>>, vector<1x32x32xf32>
    %53 = vector.shape_cast %52 : vector<1x32x32xf32> to vector<32x32xf32>
    %cst_26 = arith.constant dense<0.000000e+00> : vector<62x32xf32>
    %54 = tpu.matmul %51, %53, %cst_26 {dimension_numbers = #tpu.dot_dimension_numbers<[1], [0], [0], [1], [0, 0, 1, 1], [], []>} : vector<62x32xf32>, vector<32x32xf32>, vector<62x32xf32> -> vector<62x32xf32>
    %55 = arith.addf %50, %54 : vector<62x32xf32>
    %56 = vector.extract_strided_slice %49 {offsets = [1, 0], sizes = [62, 32], strides = [1, 1]} : vector<67x32xf32> to vector<62x32xf32>
    %c1_27 = arith.constant 1 : index
    %c0_28 = arith.constant 0 : index
    %c0_29 = arith.constant 0 : index
    %57 = vector.load %arg4[%c1_27, %c0_28, %c0_29] : memref<6x32x32xf32, #tpu.memory_space<vmem>>, vector<1x32x32xf32>
    %58 = vector.shape_cast %57 : vector<1x32x32xf32> to vector<32x32xf32>
    %cst_30 = arith.constant dense<0.000000e+00> : vector<62x32xf32>
    %59 = tpu.matmul %56, %58, %cst_30 {dimension_numbers = #tpu.dot_dimension_numbers<[1], [0], [0], [1], [0, 0, 1, 1], [], []>} : vector<62x32xf32>, vector<32x32xf32>, vector<62x32xf32> -> vector<62x32xf32>
    %60 = arith.addf %55, %59 : vector<62x32xf32>
    %61 = vector.extract_strided_slice %49 {offsets = [2, 0], sizes = [62, 32], strides = [1, 1]} : vector<67x32xf32> to vector<62x32xf32>
    %c2_31 = arith.constant 2 : index
    %c0_32 = arith.constant 0 : index
    %c0_33 = arith.constant 0 : index
    %62 = vector.load %arg4[%c2_31, %c0_32, %c0_33] : memref<6x32x32xf32, #tpu.memory_space<vmem>>, vector<1x32x32xf32>
    %63 = vector.shape_cast %62 : vector<1x32x32xf32> to vector<32x32xf32>
    %cst_34 = arith.constant dense<0.000000e+00> : vector<62x32xf32>
    %64 = tpu.matmul %61, %63, %cst_34 {dimension_numbers = #tpu.dot_dimension_numbers<[1], [0], [0], [1], [0, 0, 1, 1], [], []>} : vector<62x32xf32>, vector<32x32xf32>, vector<62x32xf32> -> vector<62x32xf32>
    %65 = arith.addf %60, %64 : vector<62x32xf32>
    %66 = vector.extract_strided_slice %49 {offsets = [3, 0], sizes = [62, 32], strides = [1, 1]} : vector<67x32xf32> to vector<62x32xf32>
    %c3_35 = arith.constant 3 : index
    %c0_36 = arith.constant 0 : index
    %c0_37 = arith.constant 0 : index
    %67 = vector.load %arg4[%c3_35, %c0_36, %c0_37] : memref<6x32x32xf32, #tpu.memory_space<vmem>>, vector<1x32x32xf32>
    %68 = vector.shape_cast %67 : vector<1x32x32xf32> to vector<32x32xf32>
    %cst_38 = arith.constant dense<0.000000e+00> : vector<62x32xf32>
    %69 = tpu.matmul %66, %68, %cst_38 {dimension_numbers = #tpu.dot_dimension_numbers<[1], [0], [0], [1], [0, 0, 1, 1], [], []>} : vector<62x32xf32>, vector<32x32xf32>, vector<62x32xf32> -> vector<62x32xf32>
    %70 = arith.addf %65, %69 : vector<62x32xf32>
    %71 = vector.extract_strided_slice %49 {offsets = [4, 0], sizes = [62, 32], strides = [1, 1]} : vector<67x32xf32> to vector<62x32xf32>
    %c4_39 = arith.constant 4 : index
    %c0_40 = arith.constant 0 : index
    %c0_41 = arith.constant 0 : index
    %72 = vector.load %arg4[%c4_39, %c0_40, %c0_41] : memref<6x32x32xf32, #tpu.memory_space<vmem>>, vector<1x32x32xf32>
    %73 = vector.shape_cast %72 : vector<1x32x32xf32> to vector<32x32xf32>
    %cst_42 = arith.constant dense<0.000000e+00> : vector<62x32xf32>
    %74 = tpu.matmul %71, %73, %cst_42 {dimension_numbers = #tpu.dot_dimension_numbers<[1], [0], [0], [1], [0, 0, 1, 1], [], []>} : vector<62x32xf32>, vector<32x32xf32>, vector<62x32xf32> -> vector<62x32xf32>
    %75 = arith.addf %70, %74 : vector<62x32xf32>
    %76 = vector.extract_strided_slice %49 {offsets = [5, 0], sizes = [62, 32], strides = [1, 1]} : vector<67x32xf32> to vector<62x32xf32>
    %c5_43 = arith.constant 5 : index
    %c0_44 = arith.constant 0 : index
    %c0_45 = arith.constant 0 : index
    %77 = vector.load %arg4[%c5_43, %c0_44, %c0_45] : memref<6x32x32xf32, #tpu.memory_space<vmem>>, vector<1x32x32xf32>
    %78 = vector.shape_cast %77 : vector<1x32x32xf32> to vector<32x32xf32>
    %cst_46 = arith.constant dense<0.000000e+00> : vector<62x32xf32>
    %79 = tpu.matmul %76, %78, %cst_46 {dimension_numbers = #tpu.dot_dimension_numbers<[1], [0], [0], [1], [0, 0, 1, 1], [], []>} : vector<62x32xf32>, vector<32x32xf32>, vector<62x32xf32> -> vector<62x32xf32>
    %80 = arith.addf %75, %79 : vector<62x32xf32>
    %c0_47 = arith.constant 0 : index
    %c0_48 = arith.constant 0 : index
    %81 = vector.load %arg5[%c0_47, %c0_48] : memref<1x32xf32, #tpu.memory_space<vmem>>, vector<1x32xf32>
    %82 = vector.broadcast %81 : vector<1x32xf32> to vector<62x32xf32>
    %83 = arith.addf %80, %82 : vector<62x32xf32>
    %cst_49 = arith.constant 0.000000e+00 : f32
    %84 = vector.broadcast %cst_49 : f32 to vector<62x32xf32>
    %85 = arith.maximumf %83, %84 : vector<62x32xf32>
    %c0_50 = arith.constant 0 : index
    %c0_51 = arith.constant 0 : index
    %c0_52 = arith.constant 0 : index
    %86 = vector.load %arg6[%c0_50, %c0_51, %c0_52] : memref<2x62x32xf32, #tpu.memory_space<vmem>>, vector<1x62x32xf32>
    %87 = vector.shape_cast %86 : vector<1x62x32xf32> to vector<62x32xf32>
    %88 = vector.shape_cast %85 : vector<62x32xf32> to vector<1x62x32xf32>
    tpu.vector_store %arg6[%c0_50, %c0_51, %c0_52], %88 {strides = array<i32>} : memref<2x62x32xf32, #tpu.memory_space<vmem>>, vector<1x62x32xf32>,
    %cst_53 = arith.constant 0.000000e+00 : f32
    %89 = vector.broadcast %cst_53 : f32 to vector<67x32xf32>
    %c0_54 = arith.constant 0 : index
    %c1_55 = arith.constant 1 : index
    %90 = vector.load %arg1[%c0_54, %c1_55] : memref<72x2xf32, #tpu.memory_space<vmem>>, vector<67x1xf32>
    %c0_56 = arith.constant 0 : index
    %c0_57 = arith.constant 0 : index
    %91 = vector.load %arg2[%c0_56, %c0_57] : memref<6x32xf32, #tpu.memory_space<vmem>>, vector<1x32xf32>
    %92 = vector.broadcast %90 : vector<67x1xf32> to vector<67x32xf32>
    %93 = vector.broadcast %91 : vector<1x32xf32> to vector<67x32xf32>
    %94 = arith.mulf %92, %93 : vector<67x32xf32>
    %95 = arith.addf %89, %94 : vector<67x32xf32>
    %c1_58 = arith.constant 1 : index
    %c1_59 = arith.constant 1 : index
    %96 = vector.load %arg1[%c1_58, %c1_59] : memref<72x2xf32, #tpu.memory_space<vmem>>, vector<67x1xf32>
    %c1_60 = arith.constant 1 : index
    %c0_61 = arith.constant 0 : index
    %97 = vector.load %arg2[%c1_60, %c0_61] : memref<6x32xf32, #tpu.memory_space<vmem>>, vector<1x32xf32>
    %98 = vector.broadcast %96 : vector<67x1xf32> to vector<67x32xf32>
    %99 = vector.broadcast %97 : vector<1x32xf32> to vector<67x32xf32>
    %100 = arith.mulf %98, %99 : vector<67x32xf32>
    %101 = arith.addf %95, %100 : vector<67x32xf32>
    %c2_62 = arith.constant 2 : index
    %c1_63 = arith.constant 1 : index
    %102 = vector.load %arg1[%c2_62, %c1_63] : memref<72x2xf32, #tpu.memory_space<vmem>>, vector<67x1xf32>
    %c2_64 = arith.constant 2 : index
    %c0_65 = arith.constant 0 : index
    %103 = vector.load %arg2[%c2_64, %c0_65] : memref<6x32xf32, #tpu.memory_space<vmem>>, vector<1x32xf32>
    %104 = vector.broadcast %102 : vector<67x1xf32> to vector<67x32xf32>
    %105 = vector.broadcast %103 : vector<1x32xf32> to vector<67x32xf32>
    %106 = arith.mulf %104, %105 : vector<67x32xf32>
    %107 = arith.addf %101, %106 : vector<67x32xf32>
    %c3_66 = arith.constant 3 : index
    %c1_67 = arith.constant 1 : index
    %108 = vector.load %arg1[%c3_66, %c1_67] : memref<72x2xf32, #tpu.memory_space<vmem>>, vector<67x1xf32>
    %c3_68 = arith.constant 3 : index
    %c0_69 = arith.constant 0 : index
    %109 = vector.load %arg2[%c3_68, %c0_69] : memref<6x32xf32, #tpu.memory_space<vmem>>, vector<1x32xf32>
    %110 = vector.broadcast %108 : vector<67x1xf32> to vector<67x32xf32>
    %111 = vector.broadcast %109 : vector<1x32xf32> to vector<67x32xf32>
    %112 = arith.mulf %110, %111 : vector<67x32xf32>
    %113 = arith.addf %107, %112 : vector<67x32xf32>
    %c4_70 = arith.constant 4 : index
    %c1_71 = arith.constant 1 : index
    %114 = vector.load %arg1[%c4_70, %c1_71] : memref<72x2xf32, #tpu.memory_space<vmem>>, vector<67x1xf32>
    %c4_72 = arith.constant 4 : index
    %c0_73 = arith.constant 0 : index
    %115 = vector.load %arg2[%c4_72, %c0_73] : memref<6x32xf32, #tpu.memory_space<vmem>>, vector<1x32xf32>
    %116 = vector.broadcast %114 : vector<67x1xf32> to vector<67x32xf32>
    %117 = vector.broadcast %115 : vector<1x32xf32> to vector<67x32xf32>
    %118 = arith.mulf %116, %117 : vector<67x32xf32>
    %119 = arith.addf %113, %118 : vector<67x32xf32>
    %c5_74 = arith.constant 5 : index
    %c1_75 = arith.constant 1 : index
    %120 = vector.load %arg1[%c5_74, %c1_75] : memref<72x2xf32, #tpu.memory_space<vmem>>, vector<67x1xf32>
    %c5_76 = arith.constant 5 : index
    %c0_77 = arith.constant 0 : index
    %121 = vector.load %arg2[%c5_76, %c0_77] : memref<6x32xf32, #tpu.memory_space<vmem>>, vector<1x32xf32>
    %122 = vector.broadcast %120 : vector<67x1xf32> to vector<67x32xf32>
    %123 = vector.broadcast %121 : vector<1x32xf32> to vector<67x32xf32>
    %124 = arith.mulf %122, %123 : vector<67x32xf32>
    %125 = arith.addf %119, %124 : vector<67x32xf32>
    %c0_78 = arith.constant 0 : index
    %c0_79 = arith.constant 0 : index
    %126 = vector.load %arg3[%c0_78, %c0_79] : memref<1x32xf32, #tpu.memory_space<vmem>>, vector<1x32xf32>
    %127 = vector.broadcast %126 : vector<1x32xf32> to vector<67x32xf32>
    %128 = arith.addf %125, %127 : vector<67x32xf32>
    %cst_80 = arith.constant 0.000000e+00 : f32
    %129 = vector.broadcast %cst_80 : f32 to vector<67x32xf32>
    %130 = arith.maximumf %128, %129 : vector<67x32xf32>
    %cst_81 = arith.constant 0.000000e+00 : f32
    %131 = vector.broadcast %cst_81 : f32 to vector<67x32xf32>
    %132 = arith.select %5, %130, %131 : vector<67x32xi1>, vector<67x32xf32>
    %cst_82 = arith.constant 0.000000e+00 : f32
    %133 = vector.broadcast %cst_82 : f32 to vector<62x32xf32>
    %134 = vector.extract_strided_slice %132 {offsets = [0, 0], sizes = [62, 32], strides = [1, 1]} : vector<67x32xf32> to vector<62x32xf32>
    %c0_83 = arith.constant 0 : index
    %c0_84 = arith.constant 0 : index
    %c0_85 = arith.constant 0 : index
    %135 = vector.load %arg4[%c0_83, %c0_84, %c0_85] : memref<6x32x32xf32, #tpu.memory_space<vmem>>, vector<1x32x32xf32>
    %136 = vector.shape_cast %135 : vector<1x32x32xf32> to vector<32x32xf32>
    %cst_86 = arith.constant dense<0.000000e+00> : vector<62x32xf32>
    %137 = tpu.matmul %134, %136, %cst_86 {dimension_numbers = #tpu.dot_dimension_numbers<[1], [0], [0], [1], [0, 0, 1, 1], [], []>} : vector<62x32xf32>, vector<32x32xf32>, vector<62x32xf32> -> vector<62x32xf32>
    %138 = arith.addf %133, %137 : vector<62x32xf32>
    %139 = vector.extract_strided_slice %132 {offsets = [1, 0], sizes = [62, 32], strides = [1, 1]} : vector<67x32xf32> to vector<62x32xf32>
    %c1_87 = arith.constant 1 : index
    %c0_88 = arith.constant 0 : index
    %c0_89 = arith.constant 0 : index
    %140 = vector.load %arg4[%c1_87, %c0_88, %c0_89] : memref<6x32x32xf32, #tpu.memory_space<vmem>>, vector<1x32x32xf32>
    %141 = vector.shape_cast %140 : vector<1x32x32xf32> to vector<32x32xf32>
    %cst_90 = arith.constant dense<0.000000e+00> : vector<62x32xf32>
    %142 = tpu.matmul %139, %141, %cst_90 {dimension_numbers = #tpu.dot_dimension_numbers<[1], [0], [0], [1], [0, 0, 1, 1], [], []>} : vector<62x32xf32>, vector<32x32xf32>, vector<62x32xf32> -> vector<62x32xf32>
    %143 = arith.addf %138, %142 : vector<62x32xf32>
    %144 = vector.extract_strided_slice %132 {offsets = [2, 0], sizes = [62, 32], strides = [1, 1]} : vector<67x32xf32> to vector<62x32xf32>
    %c2_91 = arith.constant 2 : index
    %c0_92 = arith.constant 0 : index
    %c0_93 = arith.constant 0 : index
    %145 = vector.load %arg4[%c2_91, %c0_92, %c0_93] : memref<6x32x32xf32, #tpu.memory_space<vmem>>, vector<1x32x32xf32>
    %146 = vector.shape_cast %145 : vector<1x32x32xf32> to vector<32x32xf32>
    %cst_94 = arith.constant dense<0.000000e+00> : vector<62x32xf32>
    %147 = tpu.matmul %144, %146, %cst_94 {dimension_numbers = #tpu.dot_dimension_numbers<[1], [0], [0], [1], [0, 0, 1, 1], [], []>} : vector<62x32xf32>, vector<32x32xf32>, vector<62x32xf32> -> vector<62x32xf32>
    %148 = arith.addf %143, %147 : vector<62x32xf32>
    %149 = vector.extract_strided_slice %132 {offsets = [3, 0], sizes = [62, 32], strides = [1, 1]} : vector<67x32xf32> to vector<62x32xf32>
    %c3_95 = arith.constant 3 : index
    %c0_96 = arith.constant 0 : index
    %c0_97 = arith.constant 0 : index
    %150 = vector.load %arg4[%c3_95, %c0_96, %c0_97] : memref<6x32x32xf32, #tpu.memory_space<vmem>>, vector<1x32x32xf32>
    %151 = vector.shape_cast %150 : vector<1x32x32xf32> to vector<32x32xf32>
    %cst_98 = arith.constant dense<0.000000e+00> : vector<62x32xf32>
    %152 = tpu.matmul %149, %151, %cst_98 {dimension_numbers = #tpu.dot_dimension_numbers<[1], [0], [0], [1], [0, 0, 1, 1], [], []>} : vector<62x32xf32>, vector<32x32xf32>, vector<62x32xf32> -> vector<62x32xf32>
    %153 = arith.addf %148, %152 : vector<62x32xf32>
    %154 = vector.extract_strided_slice %132 {offsets = [4, 0], sizes = [62, 32], strides = [1, 1]} : vector<67x32xf32> to vector<62x32xf32>
    %c4_99 = arith.constant 4 : index
    %c0_100 = arith.constant 0 : index
    %c0_101 = arith.constant 0 : index
    %155 = vector.load %arg4[%c4_99, %c0_100, %c0_101] : memref<6x32x32xf32, #tpu.memory_space<vmem>>, vector<1x32x32xf32>
    %156 = vector.shape_cast %155 : vector<1x32x32xf32> to vector<32x32xf32>
    %cst_102 = arith.constant dense<0.000000e+00> : vector<62x32xf32>
    %157 = tpu.matmul %154, %156, %cst_102 {dimension_numbers = #tpu.dot_dimension_numbers<[1], [0], [0], [1], [0, 0, 1, 1], [], []>} : vector<62x32xf32>, vector<32x32xf32>, vector<62x32xf32> -> vector<62x32xf32>
    %158 = arith.addf %153, %157 : vector<62x32xf32>
    %159 = vector.extract_strided_slice %132 {offsets = [5, 0], sizes = [62, 32], strides = [1, 1]} : vector<67x32xf32> to vector<62x32xf32>
    %c5_103 = arith.constant 5 : index
    %c0_104 = arith.constant 0 : index
    %c0_105 = arith.constant 0 : index
    %160 = vector.load %arg4[%c5_103, %c0_104, %c0_105] : memref<6x32x32xf32, #tpu.memory_space<vmem>>, vector<1x32x32xf32>
    %161 = vector.shape_cast %160 : vector<1x32x32xf32> to vector<32x32xf32>
    %cst_106 = arith.constant dense<0.000000e+00> : vector<62x32xf32>
    %162 = tpu.matmul %159, %161, %cst_106 {dimension_numbers = #tpu.dot_dimension_numbers<[1], [0], [0], [1], [0, 0, 1, 1], [], []>} : vector<62x32xf32>, vector<32x32xf32>, vector<62x32xf32> -> vector<62x32xf32>
    %163 = arith.addf %158, %162 : vector<62x32xf32>
    %c0_107 = arith.constant 0 : index
    %c0_108 = arith.constant 0 : index
    %164 = vector.load %arg5[%c0_107, %c0_108] : memref<1x32xf32, #tpu.memory_space<vmem>>, vector<1x32xf32>
    %165 = vector.broadcast %164 : vector<1x32xf32> to vector<62x32xf32>
    %166 = arith.addf %163, %165 : vector<62x32xf32>
    %cst_109 = arith.constant 0.000000e+00 : f32
    %167 = vector.broadcast %cst_109 : f32 to vector<62x32xf32>
    %168 = arith.maximumf %166, %167 : vector<62x32xf32>
    %c1_110 = arith.constant 1 : index
    %c0_111 = arith.constant 0 : index
    %c0_112 = arith.constant 0 : index
    %169 = vector.load %arg6[%c1_110, %c0_111, %c0_112] : memref<2x62x32xf32, #tpu.memory_space<vmem>>, vector<1x62x32xf32>
    %170 = vector.shape_cast %169 : vector<1x62x32xf32> to vector<62x32xf32>
    %171 = vector.shape_cast %168 : vector<62x32xf32> to vector<1x62x32xf32>
    tpu.vector_store %arg6[%c1_110, %c0_111, %c0_112], %171 {strides = array<i32>} : memref<2x62x32xf32, #tpu.memory_space<vmem>>, vector<1x62x32xf32>,
    return
  }
  func.func @transform_0(%arg0: i32) -> (i32, i32) {
    %c0_i32 = arith.constant 0 : i32
    %c0_i32_0 = arith.constant 0 : i32
    %c0_i32_1 = arith.constant 0 : i32
    return %c0_i32, %c0_i32_0 : i32, i32
  }
  func.func @transform_1(%arg0: i32) -> (i32, i32) {
    %c0_i32 = arith.constant 0 : i32
    %c0_i32_0 = arith.constant 0 : i32
    %c0_i32_1 = arith.constant 0 : i32
    return %c0_i32, %c0_i32_0 : i32, i32
  }
  func.func @transform_2(%arg0: i32) -> (i32, i32) {
    %c0_i32 = arith.constant 0 : i32
    %c0_i32_0 = arith.constant 0 : i32
    %c0_i32_1 = arith.constant 0 : i32
    return %c0_i32, %c0_i32_0 : i32, i32
  }
  func.func @transform_3(%arg0: i32) -> (i32, i32, i32) {
    %c0_i32 = arith.constant 0 : i32
    %c0_i32_0 = arith.constant 0 : i32
    %c0_i32_1 = arith.constant 0 : i32
    %c0_i32_2 = arith.constant 0 : i32
    return %c0_i32, %c0_i32_0, %c0_i32_1 : i32, i32, i32
  }
  func.func @transform_4(%arg0: i32) -> (i32, i32) {
    %c0_i32 = arith.constant 0 : i32
    %c0_i32_0 = arith.constant 0 : i32
    %c0_i32_1 = arith.constant 0 : i32
    return %c0_i32, %c0_i32_0 : i32, i32
  }
  func.func @transform_5(%arg0: i32) -> (i32, i32, i32) {
    %c0_i32 = arith.constant 0 : i32
    %c0_i32_0 = arith.constant 0 : i32
    %c0_i32_1 = arith.constant 0 : i32
    %c0_i32_2 = arith.constant 0 : i32
    return %c0_i32, %c0_i32_0, %c0_i32_1 : i32, i32, i32
  }
}

module attributes {stable_mosaic.version = 11 : i64} {
  func.func @_tx_stack_kernel(%arg0: i32, %arg1: memref<2x62x32xf32, #tpu.memory_space<vmem>>, %arg2: memref<1x32x96xf32, #tpu.memory_space<vmem>>, %arg3: memref<1x1x96xf32, #tpu.memory_space<vmem>>, %arg4: memref<1x32x32xf32, #tpu.memory_space<vmem>>, %arg5: memref<1x1x32xf32, #tpu.memory_space<vmem>>, %arg6: memref<1x1x32xf32, #tpu.memory_space<vmem>>, %arg7: memref<1x1x32xf32, #tpu.memory_space<vmem>>, %arg8: memref<1x32x64xf32, #tpu.memory_space<vmem>>, %arg9: memref<1x1x64xf32, #tpu.memory_space<vmem>>, %arg10: memref<1x64x32xf32, #tpu.memory_space<vmem>>, %arg11: memref<1x1x32xf32, #tpu.memory_space<vmem>>, %arg12: memref<1x1x32xf32, #tpu.memory_space<vmem>>, %arg13: memref<1x1x32xf32, #tpu.memory_space<vmem>>, %arg14: memref<32x8xf32, #tpu.memory_space<vmem>>, %arg15: memref<1x8xf32, #tpu.memory_space<vmem>>, %arg16: memref<2x8xf32, #tpu.memory_space<vmem>>, %arg17: memref<2x62x32xf32, #tpu.memory_space<vmem>>) attributes {dimension_semantics = [#tpu.dimension_semantics<arbitrary>], iteration_bounds = array<i64: 2>, scalar_prefetch = 0 : i64, scratch_operands = 1 : i64, tpu.core_type = #tpu.core_type<tc>, window_params = [{pipeline_mode = #tpu.pipeline_mode<synchronous>, transform_indices = @transform_0, window_bounds = array<i64: 2, 62, 32>}, {transform_indices = @transform_1, window_bounds = array<i64: 1, 32, 96>}, {transform_indices = @transform_2, window_bounds = array<i64: 1, 1, 96>}, {transform_indices = @transform_3, window_bounds = array<i64: 1, 32, 32>}, {transform_indices = @transform_4, window_bounds = array<i64: 1, 1, 32>}, {transform_indices = @transform_5, window_bounds = array<i64: 1, 1, 32>}, {transform_indices = @transform_6, window_bounds = array<i64: 1, 1, 32>}, {transform_indices = @transform_7, window_bounds = array<i64: 1, 32, 64>}, {transform_indices = @transform_8, window_bounds = array<i64: 1, 1, 64>}, {transform_indices = @transform_9, window_bounds = array<i64: 1, 64, 32>}, {transform_indices = @transform_10, window_bounds = array<i64: 1, 1, 32>}, {transform_indices = @transform_11, window_bounds = array<i64: 1, 1, 32>}, {transform_indices = @transform_12, window_bounds = array<i64: 1, 1, 32>}, {pipeline_mode = #tpu.pipeline_mode<synchronous>, transform_indices = @transform_13, window_bounds = array<i64: 32, 8>}, {pipeline_mode = #tpu.pipeline_mode<synchronous>, transform_indices = @transform_14, window_bounds = array<i64: 1, 8>}, {pipeline_mode = #tpu.pipeline_mode<synchronous>, transform_indices = @transform_15, window_bounds = array<i64: 2, 8>}]} {
    %c0_i32 = arith.constant 0 : i32
    %0 = arith.cmpi eq, %arg0, %c0_i32 : i32
    %1 = arith.extui %0 : i1 to i32
    %c0_i32_0 = arith.constant 0 : i32
    %2 = arith.cmpi ne, %1, %c0_i32_0 : i32
    scf.if %2 {
      %c0_125 = arith.constant 0 : index
      %c0_126 = arith.constant 0 : index
      %c0_127 = arith.constant 0 : index
      %320 = vector.load %arg1[%c0_125, %c0_126, %c0_127] : memref<2x62x32xf32, #tpu.memory_space<vmem>>, vector<2x62x32xf32>
      %c0_128 = arith.constant 0 : index
      %c0_129 = arith.constant 0 : index
      %c0_130 = arith.constant 0 : index
      %321 = vector.load %arg17[%c0_128, %c0_129, %c0_130] : memref<2x62x32xf32, #tpu.memory_space<vmem>>, vector<2x62x32xf32>
      tpu.vector_store %arg17[%c0_128, %c0_129, %c0_130], %320 {strides = array<i32>} : memref<2x62x32xf32, #tpu.memory_space<vmem>>, vector<2x62x32xf32>,
    } else {
    }
    %c0 = arith.constant 0 : index
    %c0_1 = arith.constant 0 : index
    %c0_2 = arith.constant 0 : index
    %3 = vector.load %arg2[%c0, %c0_1, %c0_2] : memref<1x32x96xf32, #tpu.memory_space<vmem>>, vector<1x32x96xf32>
    %4 = vector.shape_cast %3 : vector<1x32x96xf32> to vector<32x96xf32>
    %c0_3 = arith.constant 0 : index
    %c0_4 = arith.constant 0 : index
    %c0_5 = arith.constant 0 : index
    %5 = vector.load %arg3[%c0_3, %c0_4, %c0_5] : memref<1x1x96xf32, #tpu.memory_space<vmem>>, vector<1x1x96xf32>
    %6 = vector.shape_cast %5 : vector<1x1x96xf32> to vector<1x96xf32>
    %c0_6 = arith.constant 0 : index
    %c0_7 = arith.constant 0 : index
    %c0_8 = arith.constant 0 : index
    %7 = vector.load %arg4[%c0_6, %c0_7, %c0_8] : memref<1x32x32xf32, #tpu.memory_space<vmem>>, vector<1x32x32xf32>
    %8 = vector.shape_cast %7 : vector<1x32x32xf32> to vector<32x32xf32>
    %c0_9 = arith.constant 0 : index
    %c0_10 = arith.constant 0 : index
    %c0_11 = arith.constant 0 : index
    %9 = vector.load %arg5[%c0_9, %c0_10, %c0_11] : memref<1x1x32xf32, #tpu.memory_space<vmem>>, vector<1x1x32xf32>
    %10 = vector.shape_cast %9 : vector<1x1x32xf32> to vector<1x32xf32>
    %c0_12 = arith.constant 0 : index
    %c0_13 = arith.constant 0 : index
    %c0_14 = arith.constant 0 : index
    %11 = vector.load %arg6[%c0_12, %c0_13, %c0_14] : memref<1x1x32xf32, #tpu.memory_space<vmem>>, vector<1x1x32xf32>
    %12 = vector.shape_cast %11 : vector<1x1x32xf32> to vector<1x32xf32>
    %c0_15 = arith.constant 0 : index
    %c0_16 = arith.constant 0 : index
    %c0_17 = arith.constant 0 : index
    %13 = vector.load %arg7[%c0_15, %c0_16, %c0_17] : memref<1x1x32xf32, #tpu.memory_space<vmem>>, vector<1x1x32xf32>
    %14 = vector.shape_cast %13 : vector<1x1x32xf32> to vector<1x32xf32>
    %c0_18 = arith.constant 0 : index
    %c0_19 = arith.constant 0 : index
    %c0_20 = arith.constant 0 : index
    %15 = vector.load %arg8[%c0_18, %c0_19, %c0_20] : memref<1x32x64xf32, #tpu.memory_space<vmem>>, vector<1x32x64xf32>
    %16 = vector.shape_cast %15 : vector<1x32x64xf32> to vector<32x64xf32>
    %c0_21 = arith.constant 0 : index
    %c0_22 = arith.constant 0 : index
    %c0_23 = arith.constant 0 : index
    %17 = vector.load %arg9[%c0_21, %c0_22, %c0_23] : memref<1x1x64xf32, #tpu.memory_space<vmem>>, vector<1x1x64xf32>
    %18 = vector.shape_cast %17 : vector<1x1x64xf32> to vector<1x64xf32>
    %c0_24 = arith.constant 0 : index
    %c0_25 = arith.constant 0 : index
    %c0_26 = arith.constant 0 : index
    %19 = vector.load %arg10[%c0_24, %c0_25, %c0_26] : memref<1x64x32xf32, #tpu.memory_space<vmem>>, vector<1x64x32xf32>
    %20 = vector.shape_cast %19 : vector<1x64x32xf32> to vector<64x32xf32>
    %c0_27 = arith.constant 0 : index
    %c0_28 = arith.constant 0 : index
    %c0_29 = arith.constant 0 : index
    %21 = vector.load %arg11[%c0_27, %c0_28, %c0_29] : memref<1x1x32xf32, #tpu.memory_space<vmem>>, vector<1x1x32xf32>
    %22 = vector.shape_cast %21 : vector<1x1x32xf32> to vector<1x32xf32>
    %c0_30 = arith.constant 0 : index
    %c0_31 = arith.constant 0 : index
    %c0_32 = arith.constant 0 : index
    %23 = vector.load %arg12[%c0_30, %c0_31, %c0_32] : memref<1x1x32xf32, #tpu.memory_space<vmem>>, vector<1x1x32xf32>
    %24 = vector.shape_cast %23 : vector<1x1x32xf32> to vector<1x32xf32>
    %c0_33 = arith.constant 0 : index
    %c0_34 = arith.constant 0 : index
    %c0_35 = arith.constant 0 : index
    %25 = vector.load %arg13[%c0_33, %c0_34, %c0_35] : memref<1x1x32xf32, #tpu.memory_space<vmem>>, vector<1x1x32xf32>
    %26 = vector.shape_cast %25 : vector<1x1x32xf32> to vector<1x32xf32>
    %c0_36 = arith.constant 0 : index
    %c0_37 = arith.constant 0 : index
    %c0_38 = arith.constant 0 : index
    %27 = vector.load %arg17[%c0_36, %c0_37, %c0_38] : memref<2x62x32xf32, #tpu.memory_space<vmem>>, vector<1x62x32xf32>
    %28 = vector.shape_cast %27 : vector<1x62x32xf32> to vector<62x32xf32>
    %cst = arith.constant dense<0.000000e+00> : vector<62x96xf32>
    %29 = tpu.matmul %28, %4, %cst {dimension_numbers = #tpu.dot_dimension_numbers<[1], [0], [0], [1], [0, 0, 1, 1], [], []>} : vector<62x32xf32>, vector<32x96xf32>, vector<62x96xf32> -> vector<62x96xf32>
    %30 = vector.broadcast %6 : vector<1x96xf32> to vector<62x96xf32>
    %31 = arith.addf %29, %30 : vector<62x96xf32>
    %cst_39 = arith.constant 0.000000e+00 : f32
    %32 = vector.broadcast %cst_39 : f32 to vector<62x32xf32>
    %33 = vector.extract_strided_slice %31 {offsets = [0, 0], sizes = [62, 8], strides = [1, 1]} : vector<62x96xf32> to vector<62x8xf32>
    %34 = vector.extract_strided_slice %31 {offsets = [0, 32], sizes = [62, 8], strides = [1, 1]} : vector<62x96xf32> to vector<62x8xf32>
    %35 = vector.extract_strided_slice %31 {offsets = [0, 64], sizes = [62, 8], strides = [1, 1]} : vector<62x96xf32> to vector<62x8xf32>
    %cst_40 = arith.constant dense<0.000000e+00> : vector<62x62xf32>
    %36 = tpu.matmul %33, %34, %cst_40 {dimension_numbers = #tpu.dot_dimension_numbers<[1], [1], [0], [0], [0, 0, 1, 0], [], []>} : vector<62x8xf32>, vector<62x8xf32>, vector<62x62xf32> -> vector<62x62xf32>
    %cst_41 = arith.constant 0.353553385 : f32
    %37 = vector.broadcast %cst_41 : f32 to vector<62x62xf32>
    %38 = arith.mulf %36, %37 : vector<62x62xf32>
    %cst_42 = arith.constant dense<0xFF800000> : vector<62xf32>
    %39 = vector.multi_reduction <maximumf>, %38, %cst_42 [1] : vector<62x62xf32> to vector<62xf32>
    %40 = vector.shape_cast %39 : vector<62xf32> to vector<62x1xf32>
    %41 = vector.broadcast %40 : vector<62x1xf32> to vector<62x62xf32>
    %42 = arith.subf %38, %41 : vector<62x62xf32>
    %43 = math.exp %42 : vector<62x62xf32>
    %cst_43 = arith.constant dense<0.000000e+00> : vector<62xf32>
    %44 = vector.multi_reduction <add>, %43, %cst_43 [1] : vector<62x62xf32> to vector<62xf32>
    %45 = vector.shape_cast %44 : vector<62xf32> to vector<62x1xf32>
    %46 = tpu.reciprocal %45 {approx = true} : vector<62x1xf32> -> vector<62x1xf32>
    %47 = vector.broadcast %46 : vector<62x1xf32> to vector<62x62xf32>
    %48 = arith.mulf %43, %47 : vector<62x62xf32>
    %cst_44 = arith.constant dense<0.000000e+00> : vector<62x8xf32>
    %49 = tpu.matmul %48, %35, %cst_44 {dimension_numbers = #tpu.dot_dimension_numbers<[1], [0], [0], [1], [0, 0, 1, 1], [], []>} : vector<62x62xf32>, vector<62x8xf32>, vector<62x8xf32> -> vector<62x8xf32>
    %50 = vector.extract_strided_slice %8 {offsets = [0, 0], sizes = [8, 32], strides = [1, 1]} : vector<32x32xf32> to vector<8x32xf32>
    %cst_45 = arith.constant dense<0.000000e+00> : vector<62x32xf32>
    %51 = tpu.matmul %49, %50, %cst_45 {dimension_numbers = #tpu.dot_dimension_numbers<[1], [0], [0], [1], [0, 0, 1, 1], [], []>} : vector<62x8xf32>, vector<8x32xf32>, vector<62x32xf32> -> vector<62x32xf32>
    %52 = arith.addf %32, %51 : vector<62x32xf32>
    %53 = vector.extract_strided_slice %31 {offsets = [0, 8], sizes = [62, 8], strides = [1, 1]} : vector<62x96xf32> to vector<62x8xf32>
    %54 = vector.extract_strided_slice %31 {offsets = [0, 40], sizes = [62, 8], strides = [1, 1]} : vector<62x96xf32> to vector<62x8xf32>
    %55 = vector.extract_strided_slice %31 {offsets = [0, 72], sizes = [62, 8], strides = [1, 1]} : vector<62x96xf32> to vector<62x8xf32>
    %cst_46 = arith.constant dense<0.000000e+00> : vector<62x62xf32>
    %56 = tpu.matmul %53, %54, %cst_46 {dimension_numbers = #tpu.dot_dimension_numbers<[1], [1], [0], [0], [0, 0, 1, 0], [], []>} : vector<62x8xf32>, vector<62x8xf32>, vector<62x62xf32> -> vector<62x62xf32>
    %cst_47 = arith.constant 0.353553385 : f32
    %57 = vector.broadcast %cst_47 : f32 to vector<62x62xf32>
    %58 = arith.mulf %56, %57 : vector<62x62xf32>
    %cst_48 = arith.constant dense<0xFF800000> : vector<62xf32>
    %59 = vector.multi_reduction <maximumf>, %58, %cst_48 [1] : vector<62x62xf32> to vector<62xf32>
    %60 = vector.shape_cast %59 : vector<62xf32> to vector<62x1xf32>
    %61 = vector.broadcast %60 : vector<62x1xf32> to vector<62x62xf32>
    %62 = arith.subf %58, %61 : vector<62x62xf32>
    %63 = math.exp %62 : vector<62x62xf32>
    %cst_49 = arith.constant dense<0.000000e+00> : vector<62xf32>
    %64 = vector.multi_reduction <add>, %63, %cst_49 [1] : vector<62x62xf32> to vector<62xf32>
    %65 = vector.shape_cast %64 : vector<62xf32> to vector<62x1xf32>
    %66 = tpu.reciprocal %65 {approx = true} : vector<62x1xf32> -> vector<62x1xf32>
    %67 = vector.broadcast %66 : vector<62x1xf32> to vector<62x62xf32>
    %68 = arith.mulf %63, %67 : vector<62x62xf32>
    %cst_50 = arith.constant dense<0.000000e+00> : vector<62x8xf32>
    %69 = tpu.matmul %68, %55, %cst_50 {dimension_numbers = #tpu.dot_dimension_numbers<[1], [0], [0], [1], [0, 0, 1, 1], [], []>} : vector<62x62xf32>, vector<62x8xf32>, vector<62x8xf32> -> vector<62x8xf32>
    %70 = vector.extract_strided_slice %8 {offsets = [8, 0], sizes = [8, 32], strides = [1, 1]} : vector<32x32xf32> to vector<8x32xf32>
    %cst_51 = arith.constant dense<0.000000e+00> : vector<62x32xf32>
    %71 = tpu.matmul %69, %70, %cst_51 {dimension_numbers = #tpu.dot_dimension_numbers<[1], [0], [0], [1], [0, 0, 1, 1], [], []>} : vector<62x8xf32>, vector<8x32xf32>, vector<62x32xf32> -> vector<62x32xf32>
    %72 = arith.addf %52, %71 : vector<62x32xf32>
    %73 = vector.extract_strided_slice %31 {offsets = [0, 16], sizes = [62, 8], strides = [1, 1]} : vector<62x96xf32> to vector<62x8xf32>
    %74 = vector.extract_strided_slice %31 {offsets = [0, 48], sizes = [62, 8], strides = [1, 1]} : vector<62x96xf32> to vector<62x8xf32>
    %75 = vector.extract_strided_slice %31 {offsets = [0, 80], sizes = [62, 8], strides = [1, 1]} : vector<62x96xf32> to vector<62x8xf32>
    %cst_52 = arith.constant dense<0.000000e+00> : vector<62x62xf32>
    %76 = tpu.matmul %73, %74, %cst_52 {dimension_numbers = #tpu.dot_dimension_numbers<[1], [1], [0], [0], [0, 0, 1, 0], [], []>} : vector<62x8xf32>, vector<62x8xf32>, vector<62x62xf32> -> vector<62x62xf32>
    %cst_53 = arith.constant 0.353553385 : f32
    %77 = vector.broadcast %cst_53 : f32 to vector<62x62xf32>
    %78 = arith.mulf %76, %77 : vector<62x62xf32>
    %cst_54 = arith.constant dense<0xFF800000> : vector<62xf32>
    %79 = vector.multi_reduction <maximumf>, %78, %cst_54 [1] : vector<62x62xf32> to vector<62xf32>
    %80 = vector.shape_cast %79 : vector<62xf32> to vector<62x1xf32>
    %81 = vector.broadcast %80 : vector<62x1xf32> to vector<62x62xf32>
    %82 = arith.subf %78, %81 : vector<62x62xf32>
    %83 = math.exp %82 : vector<62x62xf32>
    %cst_55 = arith.constant dense<0.000000e+00> : vector<62xf32>
    %84 = vector.multi_reduction <add>, %83, %cst_55 [1] : vector<62x62xf32> to vector<62xf32>
    %85 = vector.shape_cast %84 : vector<62xf32> to vector<62x1xf32>
    %86 = tpu.reciprocal %85 {approx = true} : vector<62x1xf32> -> vector<62x1xf32>
    %87 = vector.broadcast %86 : vector<62x1xf32> to vector<62x62xf32>
    %88 = arith.mulf %83, %87 : vector<62x62xf32>
    %cst_56 = arith.constant dense<0.000000e+00> : vector<62x8xf32>
    %89 = tpu.matmul %88, %75, %cst_56 {dimension_numbers = #tpu.dot_dimension_numbers<[1], [0], [0], [1], [0, 0, 1, 1], [], []>} : vector<62x62xf32>, vector<62x8xf32>, vector<62x8xf32> -> vector<62x8xf32>
    %90 = vector.extract_strided_slice %8 {offsets = [16, 0], sizes = [8, 32], strides = [1, 1]} : vector<32x32xf32> to vector<8x32xf32>
    %cst_57 = arith.constant dense<0.000000e+00> : vector<62x32xf32>
    %91 = tpu.matmul %89, %90, %cst_57 {dimension_numbers = #tpu.dot_dimension_numbers<[1], [0], [0], [1], [0, 0, 1, 1], [], []>} : vector<62x8xf32>, vector<8x32xf32>, vector<62x32xf32> -> vector<62x32xf32>
    %92 = arith.addf %72, %91 : vector<62x32xf32>
    %93 = vector.extract_strided_slice %31 {offsets = [0, 24], sizes = [62, 8], strides = [1, 1]} : vector<62x96xf32> to vector<62x8xf32>
    %94 = vector.extract_strided_slice %31 {offsets = [0, 56], sizes = [62, 8], strides = [1, 1]} : vector<62x96xf32> to vector<62x8xf32>
    %95 = vector.extract_strided_slice %31 {offsets = [0, 88], sizes = [62, 8], strides = [1, 1]} : vector<62x96xf32> to vector<62x8xf32>
    %cst_58 = arith.constant dense<0.000000e+00> : vector<62x62xf32>
    %96 = tpu.matmul %93, %94, %cst_58 {dimension_numbers = #tpu.dot_dimension_numbers<[1], [1], [0], [0], [0, 0, 1, 0], [], []>} : vector<62x8xf32>, vector<62x8xf32>, vector<62x62xf32> -> vector<62x62xf32>
    %cst_59 = arith.constant 0.353553385 : f32
    %97 = vector.broadcast %cst_59 : f32 to vector<62x62xf32>
    %98 = arith.mulf %96, %97 : vector<62x62xf32>
    %cst_60 = arith.constant dense<0xFF800000> : vector<62xf32>
    %99 = vector.multi_reduction <maximumf>, %98, %cst_60 [1] : vector<62x62xf32> to vector<62xf32>
    %100 = vector.shape_cast %99 : vector<62xf32> to vector<62x1xf32>
    %101 = vector.broadcast %100 : vector<62x1xf32> to vector<62x62xf32>
    %102 = arith.subf %98, %101 : vector<62x62xf32>
    %103 = math.exp %102 : vector<62x62xf32>
    %cst_61 = arith.constant dense<0.000000e+00> : vector<62xf32>
    %104 = vector.multi_reduction <add>, %103, %cst_61 [1] : vector<62x62xf32> to vector<62xf32>
    %105 = vector.shape_cast %104 : vector<62xf32> to vector<62x1xf32>
    %106 = tpu.reciprocal %105 {approx = true} : vector<62x1xf32> -> vector<62x1xf32>
    %107 = vector.broadcast %106 : vector<62x1xf32> to vector<62x62xf32>
    %108 = arith.mulf %103, %107 : vector<62x62xf32>
    %cst_62 = arith.constant dense<0.000000e+00> : vector<62x8xf32>
    %109 = tpu.matmul %108, %95, %cst_62 {dimension_numbers = #tpu.dot_dimension_numbers<[1], [0], [0], [1], [0, 0, 1, 1], [], []>} : vector<62x62xf32>, vector<62x8xf32>, vector<62x8xf32> -> vector<62x8xf32>
    %110 = vector.extract_strided_slice %8 {offsets = [24, 0], sizes = [8, 32], strides = [1, 1]} : vector<32x32xf32> to vector<8x32xf32>
    %cst_63 = arith.constant dense<0.000000e+00> : vector<62x32xf32>
    %111 = tpu.matmul %109, %110, %cst_63 {dimension_numbers = #tpu.dot_dimension_numbers<[1], [0], [0], [1], [0, 0, 1, 1], [], []>} : vector<62x8xf32>, vector<8x32xf32>, vector<62x32xf32> -> vector<62x32xf32>
    %112 = arith.addf %92, %111 : vector<62x32xf32>
    %113 = vector.broadcast %10 : vector<1x32xf32> to vector<62x32xf32>
    %114 = arith.addf %112, %113 : vector<62x32xf32>
    %115 = arith.addf %28, %114 : vector<62x32xf32>
    %cst_64 = arith.constant dense<0.000000e+00> : vector<62xf32>
    %116 = vector.multi_reduction <add>, %115, %cst_64 [1] : vector<62x32xf32> to vector<62xf32>
    %117 = vector.shape_cast %116 : vector<62xf32> to vector<62x1xf32>
    %cst_65 = arith.constant 3.200000e+01 : f32
    %118 = vector.broadcast %cst_65 : f32 to vector<62x1xf32>
    %119 = arith.divf %117, %118 : vector<62x1xf32>
    %120 = vector.broadcast %119 : vector<62x1xf32> to vector<62x32xf32>
    %121 = arith.subf %115, %120 : vector<62x32xf32>
    %122 = arith.mulf %121, %121 : vector<62x32xf32>
    %cst_66 = arith.constant dense<0.000000e+00> : vector<62xf32>
    %123 = vector.multi_reduction <add>, %122, %cst_66 [1] : vector<62x32xf32> to vector<62xf32>
    %124 = vector.shape_cast %123 : vector<62xf32> to vector<62x1xf32>
    %cst_67 = arith.constant 3.200000e+01 : f32
    %125 = vector.broadcast %cst_67 : f32 to vector<62x1xf32>
    %126 = arith.divf %124, %125 : vector<62x1xf32>
    %127 = vector.broadcast %119 : vector<62x1xf32> to vector<62x32xf32>
    %128 = arith.subf %115, %127 : vector<62x32xf32>
    %cst_68 = arith.constant 9.99999974E-6 : f32
    %129 = vector.broadcast %cst_68 : f32 to vector<62x1xf32>
    %130 = arith.addf %126, %129 : vector<62x1xf32>
    %131 = math.rsqrt %130 : vector<62x1xf32>
    %132 = vector.broadcast %131 : vector<62x1xf32> to vector<62x32xf32>
    %133 = arith.mulf %128, %132 : vector<62x32xf32>
    %134 = vector.broadcast %12 : vector<1x32xf32> to vector<62x32xf32>
    %135 = arith.mulf %133, %134 : vector<62x32xf32>
    %136 = vector.broadcast %14 : vector<1x32xf32> to vector<62x32xf32>
    %137 = arith.addf %135, %136 : vector<62x32xf32>
    %cst_69 = arith.constant dense<0.000000e+00> : vector<62x64xf32>
    %138 = tpu.matmul %137, %16, %cst_69 {dimension_numbers = #tpu.dot_dimension_numbers<[1], [0], [0], [1], [0, 0, 1, 1], [], []>} : vector<62x32xf32>, vector<32x64xf32>, vector<62x64xf32> -> vector<62x64xf32>
    %139 = vector.broadcast %18 : vector<1x64xf32> to vector<62x64xf32>
    %140 = arith.addf %138, %139 : vector<62x64xf32>
    %cst_70 = arith.constant 0.000000e+00 : f32
    %141 = vector.broadcast %cst_70 : f32 to vector<62x64xf32>
    %142 = arith.maximumf %140, %141 : vector<62x64xf32>
    %cst_71 = arith.constant dense<0.000000e+00> : vector<62x32xf32>
    %143 = tpu.matmul %142, %20, %cst_71 {dimension_numbers = #tpu.dot_dimension_numbers<[1], [0], [0], [1], [0, 0, 1, 1], [], []>} : vector<62x64xf32>, vector<64x32xf32>, vector<62x32xf32> -> vector<62x32xf32>
    %144 = vector.broadcast %22 : vector<1x32xf32> to vector<62x32xf32>
    %145 = arith.addf %143, %144 : vector<62x32xf32>
    %146 = arith.addf %137, %145 : vector<62x32xf32>
    %cst_72 = arith.constant dense<0.000000e+00> : vector<62xf32>
    %147 = vector.multi_reduction <add>, %146, %cst_72 [1] : vector<62x32xf32> to vector<62xf32>
    %148 = vector.shape_cast %147 : vector<62xf32> to vector<62x1xf32>
    %cst_73 = arith.constant 3.200000e+01 : f32
    %149 = vector.broadcast %cst_73 : f32 to vector<62x1xf32>
    %150 = arith.divf %148, %149 : vector<62x1xf32>
    %151 = vector.broadcast %150 : vector<62x1xf32> to vector<62x32xf32>
    %152 = arith.subf %146, %151 : vector<62x32xf32>
    %153 = arith.mulf %152, %152 : vector<62x32xf32>
    %cst_74 = arith.constant dense<0.000000e+00> : vector<62xf32>
    %154 = vector.multi_reduction <add>, %153, %cst_74 [1] : vector<62x32xf32> to vector<62xf32>
    %155 = vector.shape_cast %154 : vector<62xf32> to vector<62x1xf32>
    %cst_75 = arith.constant 3.200000e+01 : f32
    %156 = vector.broadcast %cst_75 : f32 to vector<62x1xf32>
    %157 = arith.divf %155, %156 : vector<62x1xf32>
    %158 = vector.broadcast %150 : vector<62x1xf32> to vector<62x32xf32>
    %159 = arith.subf %146, %158 : vector<62x32xf32>
    %cst_76 = arith.constant 9.99999974E-6 : f32
    %160 = vector.broadcast %cst_76 : f32 to vector<62x1xf32>
    %161 = arith.addf %157, %160 : vector<62x1xf32>
    %162 = math.rsqrt %161 : vector<62x1xf32>
    %163 = vector.broadcast %162 : vector<62x1xf32> to vector<62x32xf32>
    %164 = arith.mulf %159, %163 : vector<62x32xf32>
    %165 = vector.broadcast %24 : vector<1x32xf32> to vector<62x32xf32>
    %166 = arith.mulf %164, %165 : vector<62x32xf32>
    %167 = vector.broadcast %26 : vector<1x32xf32> to vector<62x32xf32>
    %168 = arith.addf %166, %167 : vector<62x32xf32>
    %c0_77 = arith.constant 0 : index
    %c0_78 = arith.constant 0 : index
    %c0_79 = arith.constant 0 : index
    %169 = vector.load %arg17[%c0_77, %c0_78, %c0_79] : memref<2x62x32xf32, #tpu.memory_space<vmem>>, vector<1x62x32xf32>
    %170 = vector.shape_cast %169 : vector<1x62x32xf32> to vector<62x32xf32>
    %171 = vector.shape_cast %168 : vector<62x32xf32> to vector<1x62x32xf32>
    tpu.vector_store %arg17[%c0_77, %c0_78, %c0_79], %171 {strides = array<i32>} : memref<2x62x32xf32, #tpu.memory_space<vmem>>, vector<1x62x32xf32>,
    %c1 = arith.constant 1 : index
    %c0_80 = arith.constant 0 : index
    %c0_81 = arith.constant 0 : index
    %172 = vector.load %arg17[%c1, %c0_80, %c0_81] : memref<2x62x32xf32, #tpu.memory_space<vmem>>, vector<1x62x32xf32>
    %173 = vector.shape_cast %172 : vector<1x62x32xf32> to vector<62x32xf32>
    %cst_82 = arith.constant dense<0.000000e+00> : vector<62x96xf32>
    %174 = tpu.matmul %173, %4, %cst_82 {dimension_numbers = #tpu.dot_dimension_numbers<[1], [0], [0], [1], [0, 0, 1, 1], [], []>} : vector<62x32xf32>, vector<32x96xf32>, vector<62x96xf32> -> vector<62x96xf32>
    %175 = vector.broadcast %6 : vector<1x96xf32> to vector<62x96xf32>
    %176 = arith.addf %174, %175 : vector<62x96xf32>
    %cst_83 = arith.constant 0.000000e+00 : f32
    %177 = vector.broadcast %cst_83 : f32 to vector<62x32xf32>
    %178 = vector.extract_strided_slice %176 {offsets = [0, 0], sizes = [62, 8], strides = [1, 1]} : vector<62x96xf32> to vector<62x8xf32>
    %179 = vector.extract_strided_slice %176 {offsets = [0, 32], sizes = [62, 8], strides = [1, 1]} : vector<62x96xf32> to vector<62x8xf32>
    %180 = vector.extract_strided_slice %176 {offsets = [0, 64], sizes = [62, 8], strides = [1, 1]} : vector<62x96xf32> to vector<62x8xf32>
    %cst_84 = arith.constant dense<0.000000e+00> : vector<62x62xf32>
    %181 = tpu.matmul %178, %179, %cst_84 {dimension_numbers = #tpu.dot_dimension_numbers<[1], [1], [0], [0], [0, 0, 1, 0], [], []>} : vector<62x8xf32>, vector<62x8xf32>, vector<62x62xf32> -> vector<62x62xf32>
    %cst_85 = arith.constant 0.353553385 : f32
    %182 = vector.broadcast %cst_85 : f32 to vector<62x62xf32>
    %183 = arith.mulf %181, %182 : vector<62x62xf32>
    %cst_86 = arith.constant dense<0xFF800000> : vector<62xf32>
    %184 = vector.multi_reduction <maximumf>, %183, %cst_86 [1] : vector<62x62xf32> to vector<62xf32>
    %185 = vector.shape_cast %184 : vector<62xf32> to vector<62x1xf32>
    %186 = vector.broadcast %185 : vector<62x1xf32> to vector<62x62xf32>
    %187 = arith.subf %183, %186 : vector<62x62xf32>
    %188 = math.exp %187 : vector<62x62xf32>
    %cst_87 = arith.constant dense<0.000000e+00> : vector<62xf32>
    %189 = vector.multi_reduction <add>, %188, %cst_87 [1] : vector<62x62xf32> to vector<62xf32>
    %190 = vector.shape_cast %189 : vector<62xf32> to vector<62x1xf32>
    %191 = tpu.reciprocal %190 {approx = true} : vector<62x1xf32> -> vector<62x1xf32>
    %192 = vector.broadcast %191 : vector<62x1xf32> to vector<62x62xf32>
    %193 = arith.mulf %188, %192 : vector<62x62xf32>
    %cst_88 = arith.constant dense<0.000000e+00> : vector<62x8xf32>
    %194 = tpu.matmul %193, %180, %cst_88 {dimension_numbers = #tpu.dot_dimension_numbers<[1], [0], [0], [1], [0, 0, 1, 1], [], []>} : vector<62x62xf32>, vector<62x8xf32>, vector<62x8xf32> -> vector<62x8xf32>
    %195 = vector.extract_strided_slice %8 {offsets = [0, 0], sizes = [8, 32], strides = [1, 1]} : vector<32x32xf32> to vector<8x32xf32>
    %cst_89 = arith.constant dense<0.000000e+00> : vector<62x32xf32>
    %196 = tpu.matmul %194, %195, %cst_89 {dimension_numbers = #tpu.dot_dimension_numbers<[1], [0], [0], [1], [0, 0, 1, 1], [], []>} : vector<62x8xf32>, vector<8x32xf32>, vector<62x32xf32> -> vector<62x32xf32>
    %197 = arith.addf %177, %196 : vector<62x32xf32>
    %198 = vector.extract_strided_slice %176 {offsets = [0, 8], sizes = [62, 8], strides = [1, 1]} : vector<62x96xf32> to vector<62x8xf32>
    %199 = vector.extract_strided_slice %176 {offsets = [0, 40], sizes = [62, 8], strides = [1, 1]} : vector<62x96xf32> to vector<62x8xf32>
    %200 = vector.extract_strided_slice %176 {offsets = [0, 72], sizes = [62, 8], strides = [1, 1]} : vector<62x96xf32> to vector<62x8xf32>
    %cst_90 = arith.constant dense<0.000000e+00> : vector<62x62xf32>
    %201 = tpu.matmul %198, %199, %cst_90 {dimension_numbers = #tpu.dot_dimension_numbers<[1], [1], [0], [0], [0, 0, 1, 0], [], []>} : vector<62x8xf32>, vector<62x8xf32>, vector<62x62xf32> -> vector<62x62xf32>
    %cst_91 = arith.constant 0.353553385 : f32
    %202 = vector.broadcast %cst_91 : f32 to vector<62x62xf32>
    %203 = arith.mulf %201, %202 : vector<62x62xf32>
    %cst_92 = arith.constant dense<0xFF800000> : vector<62xf32>
    %204 = vector.multi_reduction <maximumf>, %203, %cst_92 [1] : vector<62x62xf32> to vector<62xf32>
    %205 = vector.shape_cast %204 : vector<62xf32> to vector<62x1xf32>
    %206 = vector.broadcast %205 : vector<62x1xf32> to vector<62x62xf32>
    %207 = arith.subf %203, %206 : vector<62x62xf32>
    %208 = math.exp %207 : vector<62x62xf32>
    %cst_93 = arith.constant dense<0.000000e+00> : vector<62xf32>
    %209 = vector.multi_reduction <add>, %208, %cst_93 [1] : vector<62x62xf32> to vector<62xf32>
    %210 = vector.shape_cast %209 : vector<62xf32> to vector<62x1xf32>
    %211 = tpu.reciprocal %210 {approx = true} : vector<62x1xf32> -> vector<62x1xf32>
    %212 = vector.broadcast %211 : vector<62x1xf32> to vector<62x62xf32>
    %213 = arith.mulf %208, %212 : vector<62x62xf32>
    %cst_94 = arith.constant dense<0.000000e+00> : vector<62x8xf32>
    %214 = tpu.matmul %213, %200, %cst_94 {dimension_numbers = #tpu.dot_dimension_numbers<[1], [0], [0], [1], [0, 0, 1, 1], [], []>} : vector<62x62xf32>, vector<62x8xf32>, vector<62x8xf32> -> vector<62x8xf32>
    %215 = vector.extract_strided_slice %8 {offsets = [8, 0], sizes = [8, 32], strides = [1, 1]} : vector<32x32xf32> to vector<8x32xf32>
    %cst_95 = arith.constant dense<0.000000e+00> : vector<62x32xf32>
    %216 = tpu.matmul %214, %215, %cst_95 {dimension_numbers = #tpu.dot_dimension_numbers<[1], [0], [0], [1], [0, 0, 1, 1], [], []>} : vector<62x8xf32>, vector<8x32xf32>, vector<62x32xf32> -> vector<62x32xf32>
    %217 = arith.addf %197, %216 : vector<62x32xf32>
    %218 = vector.extract_strided_slice %176 {offsets = [0, 16], sizes = [62, 8], strides = [1, 1]} : vector<62x96xf32> to vector<62x8xf32>
    %219 = vector.extract_strided_slice %176 {offsets = [0, 48], sizes = [62, 8], strides = [1, 1]} : vector<62x96xf32> to vector<62x8xf32>
    %220 = vector.extract_strided_slice %176 {offsets = [0, 80], sizes = [62, 8], strides = [1, 1]} : vector<62x96xf32> to vector<62x8xf32>
    %cst_96 = arith.constant dense<0.000000e+00> : vector<62x62xf32>
    %221 = tpu.matmul %218, %219, %cst_96 {dimension_numbers = #tpu.dot_dimension_numbers<[1], [1], [0], [0], [0, 0, 1, 0], [], []>} : vector<62x8xf32>, vector<62x8xf32>, vector<62x62xf32> -> vector<62x62xf32>
    %cst_97 = arith.constant 0.353553385 : f32
    %222 = vector.broadcast %cst_97 : f32 to vector<62x62xf32>
    %223 = arith.mulf %221, %222 : vector<62x62xf32>
    %cst_98 = arith.constant dense<0xFF800000> : vector<62xf32>
    %224 = vector.multi_reduction <maximumf>, %223, %cst_98 [1] : vector<62x62xf32> to vector<62xf32>
    %225 = vector.shape_cast %224 : vector<62xf32> to vector<62x1xf32>
    %226 = vector.broadcast %225 : vector<62x1xf32> to vector<62x62xf32>
    %227 = arith.subf %223, %226 : vector<62x62xf32>
    %228 = math.exp %227 : vector<62x62xf32>
    %cst_99 = arith.constant dense<0.000000e+00> : vector<62xf32>
    %229 = vector.multi_reduction <add>, %228, %cst_99 [1] : vector<62x62xf32> to vector<62xf32>
    %230 = vector.shape_cast %229 : vector<62xf32> to vector<62x1xf32>
    %231 = tpu.reciprocal %230 {approx = true} : vector<62x1xf32> -> vector<62x1xf32>
    %232 = vector.broadcast %231 : vector<62x1xf32> to vector<62x62xf32>
    %233 = arith.mulf %228, %232 : vector<62x62xf32>
    %cst_100 = arith.constant dense<0.000000e+00> : vector<62x8xf32>
    %234 = tpu.matmul %233, %220, %cst_100 {dimension_numbers = #tpu.dot_dimension_numbers<[1], [0], [0], [1], [0, 0, 1, 1], [], []>} : vector<62x62xf32>, vector<62x8xf32>, vector<62x8xf32> -> vector<62x8xf32>
    %235 = vector.extract_strided_slice %8 {offsets = [16, 0], sizes = [8, 32], strides = [1, 1]} : vector<32x32xf32> to vector<8x32xf32>
    %cst_101 = arith.constant dense<0.000000e+00> : vector<62x32xf32>
    %236 = tpu.matmul %234, %235, %cst_101 {dimension_numbers = #tpu.dot_dimension_numbers<[1], [0], [0], [1], [0, 0, 1, 1], [], []>} : vector<62x8xf32>, vector<8x32xf32>, vector<62x32xf32> -> vector<62x32xf32>
    %237 = arith.addf %217, %236 : vector<62x32xf32>
    %238 = vector.extract_strided_slice %176 {offsets = [0, 24], sizes = [62, 8], strides = [1, 1]} : vector<62x96xf32> to vector<62x8xf32>
    %239 = vector.extract_strided_slice %176 {offsets = [0, 56], sizes = [62, 8], strides = [1, 1]} : vector<62x96xf32> to vector<62x8xf32>
    %240 = vector.extract_strided_slice %176 {offsets = [0, 88], sizes = [62, 8], strides = [1, 1]} : vector<62x96xf32> to vector<62x8xf32>
    %cst_102 = arith.constant dense<0.000000e+00> : vector<62x62xf32>
    %241 = tpu.matmul %238, %239, %cst_102 {dimension_numbers = #tpu.dot_dimension_numbers<[1], [1], [0], [0], [0, 0, 1, 0], [], []>} : vector<62x8xf32>, vector<62x8xf32>, vector<62x62xf32> -> vector<62x62xf32>
    %cst_103 = arith.constant 0.353553385 : f32
    %242 = vector.broadcast %cst_103 : f32 to vector<62x62xf32>
    %243 = arith.mulf %241, %242 : vector<62x62xf32>
    %cst_104 = arith.constant dense<0xFF800000> : vector<62xf32>
    %244 = vector.multi_reduction <maximumf>, %243, %cst_104 [1] : vector<62x62xf32> to vector<62xf32>
    %245 = vector.shape_cast %244 : vector<62xf32> to vector<62x1xf32>
    %246 = vector.broadcast %245 : vector<62x1xf32> to vector<62x62xf32>
    %247 = arith.subf %243, %246 : vector<62x62xf32>
    %248 = math.exp %247 : vector<62x62xf32>
    %cst_105 = arith.constant dense<0.000000e+00> : vector<62xf32>
    %249 = vector.multi_reduction <add>, %248, %cst_105 [1] : vector<62x62xf32> to vector<62xf32>
    %250 = vector.shape_cast %249 : vector<62xf32> to vector<62x1xf32>
    %251 = tpu.reciprocal %250 {approx = true} : vector<62x1xf32> -> vector<62x1xf32>
    %252 = vector.broadcast %251 : vector<62x1xf32> to vector<62x62xf32>
    %253 = arith.mulf %248, %252 : vector<62x62xf32>
    %cst_106 = arith.constant dense<0.000000e+00> : vector<62x8xf32>
    %254 = tpu.matmul %253, %240, %cst_106 {dimension_numbers = #tpu.dot_dimension_numbers<[1], [0], [0], [1], [0, 0, 1, 1], [], []>} : vector<62x62xf32>, vector<62x8xf32>, vector<62x8xf32> -> vector<62x8xf32>
    %255 = vector.extract_strided_slice %8 {offsets = [24, 0], sizes = [8, 32], strides = [1, 1]} : vector<32x32xf32> to vector<8x32xf32>
    %cst_107 = arith.constant dense<0.000000e+00> : vector<62x32xf32>
    %256 = tpu.matmul %254, %255, %cst_107 {dimension_numbers = #tpu.dot_dimension_numbers<[1], [0], [0], [1], [0, 0, 1, 1], [], []>} : vector<62x8xf32>, vector<8x32xf32>, vector<62x32xf32> -> vector<62x32xf32>
    %257 = arith.addf %237, %256 : vector<62x32xf32>
    %258 = vector.broadcast %10 : vector<1x32xf32> to vector<62x32xf32>
    %259 = arith.addf %257, %258 : vector<62x32xf32>
    %260 = arith.addf %173, %259 : vector<62x32xf32>
    %cst_108 = arith.constant dense<0.000000e+00> : vector<62xf32>
    %261 = vector.multi_reduction <add>, %260, %cst_108 [1] : vector<62x32xf32> to vector<62xf32>
    %262 = vector.shape_cast %261 : vector<62xf32> to vector<62x1xf32>
    %cst_109 = arith.constant 3.200000e+01 : f32
    %263 = vector.broadcast %cst_109 : f32 to vector<62x1xf32>
    %264 = arith.divf %262, %263 : vector<62x1xf32>
    %265 = vector.broadcast %264 : vector<62x1xf32> to vector<62x32xf32>
    %266 = arith.subf %260, %265 : vector<62x32xf32>
    %267 = arith.mulf %266, %266 : vector<62x32xf32>
    %cst_110 = arith.constant dense<0.000000e+00> : vector<62xf32>
    %268 = vector.multi_reduction <add>, %267, %cst_110 [1] : vector<62x32xf32> to vector<62xf32>
    %269 = vector.shape_cast %268 : vector<62xf32> to vector<62x1xf32>
    %cst_111 = arith.constant 3.200000e+01 : f32
    %270 = vector.broadcast %cst_111 : f32 to vector<62x1xf32>
    %271 = arith.divf %269, %270 : vector<62x1xf32>
    %272 = vector.broadcast %264 : vector<62x1xf32> to vector<62x32xf32>
    %273 = arith.subf %260, %272 : vector<62x32xf32>
    %cst_112 = arith.constant 9.99999974E-6 : f32
    %274 = vector.broadcast %cst_112 : f32 to vector<62x1xf32>
    %275 = arith.addf %271, %274 : vector<62x1xf32>
    %276 = math.rsqrt %275 : vector<62x1xf32>
    %277 = vector.broadcast %276 : vector<62x1xf32> to vector<62x32xf32>
    %278 = arith.mulf %273, %277 : vector<62x32xf32>
    %279 = vector.broadcast %12 : vector<1x32xf32> to vector<62x32xf32>
    %280 = arith.mulf %278, %279 : vector<62x32xf32>
    %281 = vector.broadcast %14 : vector<1x32xf32> to vector<62x32xf32>
    %282 = arith.addf %280, %281 : vector<62x32xf32>
    %cst_113 = arith.constant dense<0.000000e+00> : vector<62x64xf32>
    %283 = tpu.matmul %282, %16, %cst_113 {dimension_numbers = #tpu.dot_dimension_numbers<[1], [0], [0], [1], [0, 0, 1, 1], [], []>} : vector<62x32xf32>, vector<32x64xf32>, vector<62x64xf32> -> vector<62x64xf32>
    %284 = vector.broadcast %18 : vector<1x64xf32> to vector<62x64xf32>
    %285 = arith.addf %283, %284 : vector<62x64xf32>
    %cst_114 = arith.constant 0.000000e+00 : f32
    %286 = vector.broadcast %cst_114 : f32 to vector<62x64xf32>
    %287 = arith.maximumf %285, %286 : vector<62x64xf32>
    %cst_115 = arith.constant dense<0.000000e+00> : vector<62x32xf32>
    %288 = tpu.matmul %287, %20, %cst_115 {dimension_numbers = #tpu.dot_dimension_numbers<[1], [0], [0], [1], [0, 0, 1, 1], [], []>} : vector<62x64xf32>, vector<64x32xf32>, vector<62x32xf32> -> vector<62x32xf32>
    %289 = vector.broadcast %22 : vector<1x32xf32> to vector<62x32xf32>
    %290 = arith.addf %288, %289 : vector<62x32xf32>
    %291 = arith.addf %282, %290 : vector<62x32xf32>
    %cst_116 = arith.constant dense<0.000000e+00> : vector<62xf32>
    %292 = vector.multi_reduction <add>, %291, %cst_116 [1] : vector<62x32xf32> to vector<62xf32>
    %293 = vector.shape_cast %292 : vector<62xf32> to vector<62x1xf32>
    %cst_117 = arith.constant 3.200000e+01 : f32
    %294 = vector.broadcast %cst_117 : f32 to vector<62x1xf32>
    %295 = arith.divf %293, %294 : vector<62x1xf32>
    %296 = vector.broadcast %295 : vector<62x1xf32> to vector<62x32xf32>
    %297 = arith.subf %291, %296 : vector<62x32xf32>
    %298 = arith.mulf %297, %297 : vector<62x32xf32>
    %cst_118 = arith.constant dense<0.000000e+00> : vector<62xf32>
    %299 = vector.multi_reduction <add>, %298, %cst_118 [1] : vector<62x32xf32> to vector<62xf32>
    %300 = vector.shape_cast %299 : vector<62xf32> to vector<62x1xf32>
    %cst_119 = arith.constant 3.200000e+01 : f32
    %301 = vector.broadcast %cst_119 : f32 to vector<62x1xf32>
    %302 = arith.divf %300, %301 : vector<62x1xf32>
    %303 = vector.broadcast %295 : vector<62x1xf32> to vector<62x32xf32>
    %304 = arith.subf %291, %303 : vector<62x32xf32>
    %cst_120 = arith.constant 9.99999974E-6 : f32
    %305 = vector.broadcast %cst_120 : f32 to vector<62x1xf32>
    %306 = arith.addf %302, %305 : vector<62x1xf32>
    %307 = math.rsqrt %306 : vector<62x1xf32>
    %308 = vector.broadcast %307 : vector<62x1xf32> to vector<62x32xf32>
    %309 = arith.mulf %304, %308 : vector<62x32xf32>
    %310 = vector.broadcast %24 : vector<1x32xf32> to vector<62x32xf32>
    %311 = arith.mulf %309, %310 : vector<62x32xf32>
    %312 = vector.broadcast %26 : vector<1x32xf32> to vector<62x32xf32>
    %313 = arith.addf %311, %312 : vector<62x32xf32>
    %c1_121 = arith.constant 1 : index
    %c0_122 = arith.constant 0 : index
    %c0_123 = arith.constant 0 : index
    %314 = vector.load %arg17[%c1_121, %c0_122, %c0_123] : memref<2x62x32xf32, #tpu.memory_space<vmem>>, vector<1x62x32xf32>
    %315 = vector.shape_cast %314 : vector<1x62x32xf32> to vector<62x32xf32>
    %316 = vector.shape_cast %313 : vector<62x32xf32> to vector<1x62x32xf32>
    tpu.vector_store %arg17[%c1_121, %c0_122, %c0_123], %316 {strides = array<i32>} : memref<2x62x32xf32, #tpu.memory_space<vmem>>, vector<1x62x32xf32>,
    %c1_i32 = arith.constant 1 : i32
    %317 = arith.cmpi eq, %arg0, %c1_i32 : i32
    %318 = arith.extui %317 : i1 to i32
    %c0_i32_124 = arith.constant 0 : i32
    %319 = arith.cmpi ne, %318, %c0_i32_124 : i32
    scf.if %319 {
      %c0_125 = arith.constant 0 : index
      %c0_126 = arith.constant 0 : index
      %c0_127 = arith.constant 0 : index
      %320 = vector.load %arg17[%c0_125, %c0_126, %c0_127] : memref<2x62x32xf32, #tpu.memory_space<vmem>>, vector<1x62x32xf32>
      %321 = vector.shape_cast %320 : vector<1x62x32xf32> to vector<62x32xf32>
      %cst_128 = arith.constant dense<0.000000e+00> : vector<32xf32>
      %322 = vector.multi_reduction <add>, %321, %cst_128 [0] : vector<62x32xf32> to vector<32xf32>
      %323 = vector.shape_cast %322 : vector<32xf32> to vector<1x32xf32>
      %cst_129 = arith.constant 6.200000e+01 : f32
      %324 = vector.broadcast %cst_129 : f32 to vector<1x32xf32>
      %325 = arith.divf %323, %324 : vector<1x32xf32>
      %c0_130 = arith.constant 0 : index
      %c0_131 = arith.constant 0 : index
      %326 = vector.load %arg14[%c0_130, %c0_131] : memref<32x8xf32, #tpu.memory_space<vmem>>, vector<32x8xf32>
      %cst_132 = arith.constant dense<0.000000e+00> : vector<1x8xf32>
      %327 = tpu.matmul %325, %326, %cst_132 {dimension_numbers = #tpu.dot_dimension_numbers<[1], [0], [0], [1], [0, 0, 1, 1], [], []>} : vector<1x32xf32>, vector<32x8xf32>, vector<1x8xf32> -> vector<1x8xf32>
      %c0_133 = arith.constant 0 : index
      %c0_134 = arith.constant 0 : index
      %328 = vector.load %arg15[%c0_133, %c0_134] : memref<1x8xf32, #tpu.memory_space<vmem>>, vector<1x8xf32>
      %329 = arith.addf %327, %328 : vector<1x8xf32>
      %c0_135 = arith.constant 0 : index
      %c0_136 = arith.constant 0 : index
      %330 = vector.load %arg16[%c0_135, %c0_136] : memref<2x8xf32, #tpu.memory_space<vmem>>, vector<1x8xf32>
      tpu.vector_store %arg16[%c0_135, %c0_136], %329 {strides = array<i32>} : memref<2x8xf32, #tpu.memory_space<vmem>>, vector<1x8xf32>,
      %c1_137 = arith.constant 1 : index
      %c0_138 = arith.constant 0 : index
      %c0_139 = arith.constant 0 : index
      %331 = vector.load %arg17[%c1_137, %c0_138, %c0_139] : memref<2x62x32xf32, #tpu.memory_space<vmem>>, vector<1x62x32xf32>
      %332 = vector.shape_cast %331 : vector<1x62x32xf32> to vector<62x32xf32>
      %cst_140 = arith.constant dense<0.000000e+00> : vector<32xf32>
      %333 = vector.multi_reduction <add>, %332, %cst_140 [0] : vector<62x32xf32> to vector<32xf32>
      %334 = vector.shape_cast %333 : vector<32xf32> to vector<1x32xf32>
      %cst_141 = arith.constant 6.200000e+01 : f32
      %335 = vector.broadcast %cst_141 : f32 to vector<1x32xf32>
      %336 = arith.divf %334, %335 : vector<1x32xf32>
      %c0_142 = arith.constant 0 : index
      %c0_143 = arith.constant 0 : index
      %337 = vector.load %arg14[%c0_142, %c0_143] : memref<32x8xf32, #tpu.memory_space<vmem>>, vector<32x8xf32>
      %cst_144 = arith.constant dense<0.000000e+00> : vector<1x8xf32>
      %338 = tpu.matmul %336, %337, %cst_144 {dimension_numbers = #tpu.dot_dimension_numbers<[1], [0], [0], [1], [0, 0, 1, 1], [], []>} : vector<1x32xf32>, vector<32x8xf32>, vector<1x8xf32> -> vector<1x8xf32>
      %c0_145 = arith.constant 0 : index
      %c0_146 = arith.constant 0 : index
      %339 = vector.load %arg15[%c0_145, %c0_146] : memref<1x8xf32, #tpu.memory_space<vmem>>, vector<1x8xf32>
      %340 = arith.addf %338, %339 : vector<1x8xf32>
      %c1_147 = arith.constant 1 : index
      %c0_148 = arith.constant 0 : index
      %341 = vector.load %arg16[%c1_147, %c0_148] : memref<2x8xf32, #tpu.memory_space<vmem>>, vector<1x8xf32>
      tpu.vector_store %arg16[%c1_147, %c0_148], %340 {strides = array<i32>} : memref<2x8xf32, #tpu.memory_space<vmem>>, vector<1x8xf32>,
    } else {
    }
    return
  }
  func.func @transform_0(%arg0: i32) -> (i32, i32, i32) {
    %c0_i32 = arith.constant 0 : i32
    %c0_i32_0 = arith.constant 0 : i32
    %c0_i32_1 = arith.constant 0 : i32
    %c0_i32_2 = arith.constant 0 : i32
    return %c0_i32, %c0_i32_0, %c0_i32_1 : i32, i32, i32
  }
  func.func @transform_1(%arg0: i32) -> (i32, i32, i32) {
    %c0_i32 = arith.constant 0 : i32
    %c0_i32_0 = arith.constant 0 : i32
    %c0_i32_1 = arith.constant 0 : i32
    return %arg0, %c0_i32, %c0_i32_0 : i32, i32, i32
  }
  func.func @transform_2(%arg0: i32) -> (i32, i32, i32) {
    %c0_i32 = arith.constant 0 : i32
    %c0_i32_0 = arith.constant 0 : i32
    %c0_i32_1 = arith.constant 0 : i32
    return %arg0, %c0_i32, %c0_i32_0 : i32, i32, i32
  }
  func.func @transform_3(%arg0: i32) -> (i32, i32, i32) {
    %c0_i32 = arith.constant 0 : i32
    %c0_i32_0 = arith.constant 0 : i32
    %c0_i32_1 = arith.constant 0 : i32
    return %arg0, %c0_i32, %c0_i32_0 : i32, i32, i32
  }
  func.func @transform_4(%arg0: i32) -> (i32, i32, i32) {
    %c0_i32 = arith.constant 0 : i32
    %c0_i32_0 = arith.constant 0 : i32
    %c0_i32_1 = arith.constant 0 : i32
    return %arg0, %c0_i32, %c0_i32_0 : i32, i32, i32
  }
  func.func @transform_5(%arg0: i32) -> (i32, i32, i32) {
    %c0_i32 = arith.constant 0 : i32
    %c0_i32_0 = arith.constant 0 : i32
    %c0_i32_1 = arith.constant 0 : i32
    return %arg0, %c0_i32, %c0_i32_0 : i32, i32, i32
  }
  func.func @transform_6(%arg0: i32) -> (i32, i32, i32) {
    %c0_i32 = arith.constant 0 : i32
    %c0_i32_0 = arith.constant 0 : i32
    %c0_i32_1 = arith.constant 0 : i32
    return %arg0, %c0_i32, %c0_i32_0 : i32, i32, i32
  }
  func.func @transform_7(%arg0: i32) -> (i32, i32, i32) {
    %c0_i32 = arith.constant 0 : i32
    %c0_i32_0 = arith.constant 0 : i32
    %c0_i32_1 = arith.constant 0 : i32
    return %arg0, %c0_i32, %c0_i32_0 : i32, i32, i32
  }
  func.func @transform_8(%arg0: i32) -> (i32, i32, i32) {
    %c0_i32 = arith.constant 0 : i32
    %c0_i32_0 = arith.constant 0 : i32
    %c0_i32_1 = arith.constant 0 : i32
    return %arg0, %c0_i32, %c0_i32_0 : i32, i32, i32
  }
  func.func @transform_9(%arg0: i32) -> (i32, i32, i32) {
    %c0_i32 = arith.constant 0 : i32
    %c0_i32_0 = arith.constant 0 : i32
    %c0_i32_1 = arith.constant 0 : i32
    return %arg0, %c0_i32, %c0_i32_0 : i32, i32, i32
  }
  func.func @transform_10(%arg0: i32) -> (i32, i32, i32) {
    %c0_i32 = arith.constant 0 : i32
    %c0_i32_0 = arith.constant 0 : i32
    %c0_i32_1 = arith.constant 0 : i32
    return %arg0, %c0_i32, %c0_i32_0 : i32, i32, i32
  }
  func.func @transform_11(%arg0: i32) -> (i32, i32, i32) {
    %c0_i32 = arith.constant 0 : i32
    %c0_i32_0 = arith.constant 0 : i32
    %c0_i32_1 = arith.constant 0 : i32
    return %arg0, %c0_i32, %c0_i32_0 : i32, i32, i32
  }
  func.func @transform_12(%arg0: i32) -> (i32, i32, i32) {
    %c0_i32 = arith.constant 0 : i32
    %c0_i32_0 = arith.constant 0 : i32
    %c0_i32_1 = arith.constant 0 : i32
    return %arg0, %c0_i32, %c0_i32_0 : i32, i32, i32
  }
  func.func @transform_13(%arg0: i32) -> (i32, i32) {
    %c0_i32 = arith.constant 0 : i32
    %c0_i32_0 = arith.constant 0 : i32
    %c0_i32_1 = arith.constant 0 : i32
    return %c0_i32, %c0_i32_0 : i32, i32
  }
  func.func @transform_14(%arg0: i32) -> (i32, i32) {
    %c0_i32 = arith.constant 0 : i32
    %c0_i32_0 = arith.constant 0 : i32
    %c0_i32_1 = arith.constant 0 : i32
    return %c0_i32, %c0_i32_0 : i32, i32
  }
  func.func @transform_15(%arg0: i32) -> (i32, i32) {
    %c0_i32 = arith.constant 0 : i32
    %c0_i32_0 = arith.constant 0 : i32
    %c0_i32_1 = arith.constant 0 : i32
    return %c0_i32, %c0_i32_0 : i32, i32
  }
}

</mosaic_0001>

<llo_original>
// kernel: network_forward.2
$region0: #{network_forward.2}
  #allocation0 [shape = 'u32[]', space=smem, size = 0x4, offset = 0x4, fixed_abs, tag = 'smem constant byte address 0x4 - core index']
  #allocation1 [shape = 'u32[72,128]{1,0:T(1,128)}', space=vmem, size = 0x9000, scoped, tag = 'internal scratch']
  %s0 = inlined_call_operand.vmem [shape: f32[72,2], index: 0, kind: input, shape index: {}]
  %s1 = inlined_call_operand.vmem [shape: f32[6,32], index: 1, kind: input, shape index: {}]
  %s2 = inlined_call_operand.vmem [shape: f32[1,32], index: 2, kind: input, shape index: {}]
  %s3 = inlined_call_operand.vmem [shape: f32[6,32,32], index: 3, kind: input, shape index: {}]
  %s4 = inlined_call_operand.vmem [shape: f32[1,32], index: 4, kind: input, shape index: {}]
  %s5 = inlined_call_operand.vmem [shape: f32[2,62,32], index: 5, kind: output, shape index: {}]
  %s6 = sld [smem:[#allocation0]]
  $region30: #{network_forward.2} parent=0
    _
  %s8 = ssub.s32 1, %s6
  %s9 = scalar_select 0, %s8, %s6
  // Predicated region
  $region2: #{network_forward.2} parent=0 // pred_check
    _
  $region3: #{network_forward.2} parent=0 // pred_check_branch
    %11 = sbr.rel (0) target = $region5
  $region4: #{network_forward.2} parent=0 // pred_region
    _
  $region5: #{network_forward.2} parent=0 // pred_fallthru
    _
  // Predicated region
  $region6: #{network_forward.2} parent=0 // pred_check
    _
  $region7: #{network_forward.2} parent=0 // pred_check_branch
    %13 = sbr.rel (0) target = $region9
  $region8: #{network_forward.2} parent=0 // pred_region
    _
  $region9: #{network_forward.2} parent=0 // pred_fallthru
    _
  // Predicated region
  $region10: #{network_forward.2} parent=0 // pred_check
    _
  $region11: #{network_forward.2} parent=0 // pred_check_branch
    %15 = sbr.rel (0) target = $region13
  $region12: #{network_forward.2} parent=0 // pred_region
    _
  $region13: #{network_forward.2} parent=0 // pred_fallthru
    _
  // Predicated region
  $region14: #{network_forward.2} parent=0 // pred_check
    _
  $region15: #{network_forward.2} parent=0 // pred_check_branch
    %17 = sbr.rel (0) target = $region17
  $region16: #{network_forward.2} parent=0 // pred_region
    _
  $region17: #{network_forward.2} parent=0 // pred_fallthru
    _
  // Predicated region
  $region18: #{network_forward.2} parent=0 // pred_check
    _
  $region19: #{network_forward.2} parent=0 // pred_check_branch
    %19 = sbr.rel (0) target = $region21
  $region20: #{network_forward.2} parent=0 // pred_region
    _
  $region21: #{network_forward.2} parent=0 // pred_fallthru
    _
  %v20 = vlaneseq
  %v21 = vshrl.u32 %v20, 7
  %v22 = vadd.s32 %v21, 8
  %v23 = vadd.s32 %v21, 16
  %v24 = vadd.s32 %v21, 24
  %v25 = vadd.s32 %v21, 32
  %v26 = vadd.s32 %v21, 40
  %v27 = vadd.s32 %v21, 48
  %v28 = vadd.s32 %v21, 56
  %v29 = vadd.s32 %v21, 64
  %vm30 = vcmp.ge.s32.totalorder %v21, 1
  %vm31 = vcmp.ge.s32.totalorder %v22, 1
  %vm32 = vcmp.ge.s32.totalorder %v23, 1
  %vm33 = vcmp.ge.s32.totalorder %v24, 1
  %vm34 = vcmp.ge.s32.totalorder %v25, 1
  %vm35 = vcmp.ge.s32.totalorder %v26, 1
  %vm36 = vcmp.ge.s32.totalorder %v27, 1
  %vm37 = vcmp.ge.s32.totalorder %v28, 1
  %vm38 = vcmp.ge.s32.totalorder %v29, 1
  %vm39 = vcmp.le.s32.totalorder %v21, 65
  %vm40 = vcmp.le.s32.totalorder %v22, 65
  %vm41 = vcmp.le.s32.totalorder %v23, 65
  %vm42 = vcmp.le.s32.totalorder %v24, 65
  %vm43 = vcmp.le.s32.totalorder %v25, 65
  %vm44 = vcmp.le.s32.totalorder %v26, 65
  %vm45 = vcmp.le.s32.totalorder %v27, 65
  %vm46 = vcmp.le.s32.totalorder %v28, 65
  %vm47 = vcmp.le.s32.totalorder %v29, 65
  %vm48 = vmand %vm30, %vm39
  %vm49 = vmand %vm31, %vm40
  %vm50 = vmand %vm32, %vm41
  %vm51 = vmand %vm33, %vm42
  %vm52 = vmand %vm34, %vm43
  %vm53 = vmand %vm35, %vm44
  %vm54 = vmand %vm36, %vm45
  %vm55 = vmand %vm37, %vm46
  %vm56 = vmand %vm38, %vm47
  %v57 = vld [vmem:[%s0] sm:$0xff]
  %v58 = vld [vmem:[%s0 + $0x8] sm:$0xff]
  %v59 = vld [vmem:[%s0 + $0x10] sm:$0xff]
  %v60 = vld [vmem:[%s0 + $0x18] sm:$0xff]
  %v61 = vld [vmem:[%s0 + $0x20] sm:$0xff]
  %v62 = vld [vmem:[%s0 + $0x28] sm:$0xff]
  %v63 = vld [vmem:[%s0 + $0x30] sm:$0xff]
  %v64 = vld [vmem:[%s0 + $0x38] sm:$0xff]
  %v65 = vld [vmem:[%s0 + $0x40] sm:$0x7]
  %v66 = vld [vmem:[%s1] sm:$0x1]
  %68 = vset.pattern.permute.xlu0 0
  %69 = vperm.xlu0 %68, %v57
  %v70 = vpop.permute.xlu0 %69
  %73 = vset.pattern.permute.xlu0 0
  %74 = vperm.xlu0 %73, %v58
  %v75 = vpop.permute.xlu0 %74
  %78 = vset.pattern.permute.xlu0 0
  %79 = vperm.xlu0 %78, %v59
  %v80 = vpop.permute.xlu0 %79
  %83 = vset.pattern.permute.xlu0 0
  %84 = vperm.xlu0 %83, %v60
  %v85 = vpop.permute.xlu0 %84
  %88 = vset.pattern.permute.xlu0 0
  %89 = vperm.xlu0 %88, %v61
  %v90 = vpop.permute.xlu0 %89
  %93 = vset.pattern.permute.xlu0 0
  %94 = vperm.xlu0 %93, %v62
  %v95 = vpop.permute.xlu0 %94
  %98 = vset.pattern.permute.xlu0 0
  %99 = vperm.xlu0 %98, %v63
  %v100 = vpop.permute.xlu0 %99
  %103 = vset.pattern.permute.xlu0 0
  %104 = vperm.xlu0 %103, %v64
  %v105 = vpop.permute.xlu0 %104
  %108 = vset.pattern.permute.xlu0 0
  %109 = vperm.xlu0 %108, %v65
  %v110 = vpop.permute.xlu0 %109
  %v112 = vperm.slane %v66, 0
  %v113 = vmul.f32 %v70, %v112
  %v114 = vmul.f32 %v75, %v112
  %v115 = vmul.f32 %v80, %v112
  %v116 = vmul.f32 %v85, %v112
  %v117 = vmul.f32 %v90, %v112
  %v118 = vmul.f32 %v95, %v112
  %v119 = vmul.f32 %v100, %v112
  %v120 = vmul.f32 %v105, %v112
  %v121 = vmul.f32 %v110, %v112
  %v122 = vadd.f32 %v113, 0.0
  %v123 = vadd.f32 %v114, 0.0
  %v124 = vadd.f32 %v115, 0.0
  %v125 = vadd.f32 %v116, 0.0
  %v126 = vadd.f32 %v117, 0.0
  %v127 = vadd.f32 %v118, 0.0
  %v128 = vadd.f32 %v119, 0.0
  %v129 = vadd.f32 %v120, 0.0
  %v130 = vadd.f32 %v121, 0.0
  %v131 = vld [vmem:[%s0 + $0x1] sm:$0xff]
  %v132 = vld [vmem:[%s0 + $0x9] sm:$0xff]
  %v133 = vld [vmem:[%s0 + $0x11] sm:$0xff]
  %v134 = vld [vmem:[%s0 + $0x19] sm:$0xff]
  %v135 = vld [vmem:[%s0 + $0x21] sm:$0xff]
  %v136 = vld [vmem:[%s0 + $0x29] sm:$0xff]
  %v137 = vld [vmem:[%s0 + $0x31] sm:$0xff]
  %v138 = vld [vmem:[%s0 + $0x39] sm:$0xff]
  %v139 = vld [vmem:[%s0 + $0x41] sm:$0x7]
  %v140 = vld [vmem:[%s1 + $0x1] sm:$0x1]
  %142 = vset.pattern.permute.xlu0 0
  %143 = vperm.xlu0 %142, %v131
  %v144 = vpop.permute.xlu0 %143
  %147 = vset.pattern.permute.xlu0 0
  %148 = vperm.xlu0 %147, %v132
  %v149 = vpop.permute.xlu0 %148
  %152 = vset.pattern.permute.xlu0 0
  %153 = vperm.xlu0 %152, %v133
  %v154 = vpop.permute.xlu0 %153
  %157 = vset.pattern.permute.xlu0 0
  %158 = vperm.xlu0 %157, %v134
  %v159 = vpop.permute.xlu0 %158
  %162 = vset.pattern.permute.xlu0 0
  %163 = vperm.xlu0 %162, %v135
  %v164 = vpop.permute.xlu0 %163
  %167 = vset.pattern.permute.xlu0 0
  %168 = vperm.xlu0 %167, %v136
  %v169 = vpop.permute.xlu0 %168
  %172 = vset.pattern.permute.xlu0 0
  %173 = vperm.xlu0 %172, %v137
  %v174 = vpop.permute.xlu0 %173
  %177 = vset.pattern.permute.xlu0 0
  %178 = vperm.xlu0 %177, %v138
  %v179 = vpop.permute.xlu0 %178
  %182 = vset.pattern.permute.xlu0 0
  %183 = vperm.xlu0 %182, %v139
  %v184 = vpop.permute.xlu0 %183
  %v186 = vperm.slane %v140, 0
  %v187 = vmul.f32 %v144, %v186
  %v188 = vmul.f32 %v149, %v186
  %v189 = vmul.f32 %v154, %v186
  %v190 = vmul.f32 %v159, %v186
  %v191 = vmul.f32 %v164, %v186
  %v192 = vmul.f32 %v169, %v186
  %v193 = vmul.f32 %v174, %v186
  %v194 = vmul.f32 %v179, %v186
  %v195 = vmul.f32 %v184, %v186
  %v196 = vadd.f32 %v122, %v187
  %v197 = vadd.f32 %v123, %v188
  %v198 = vadd.f32 %v124, %v189
  %v199 = vadd.f32 %v125, %v190
  %v200 = vadd.f32 %v126, %v191
  %v201 = vadd.f32 %v127, %v192
  %v202 = vadd.f32 %v128, %v193
  %v203 = vadd.f32 %v129, %v194
  %v204 = vadd.f32 %v130, %v195
  %v205 = vld [vmem:[%s0 + $0x2] sm:$0xff]
  %v206 = vld [vmem:[%s0 + $0xa] sm:$0xff]
  %v207 = vld [vmem:[%s0 + $0x12] sm:$0xff]
  %v208 = vld [vmem:[%s0 + $0x1a] sm:$0xff]
  %v209 = vld [vmem:[%s0 + $0x22] sm:$0xff]
  %v210 = vld [vmem:[%s0 + $0x2a] sm:$0xff]
  %v211 = vld [vmem:[%s0 + $0x32] sm:$0xff]
  %v212 = vld [vmem:[%s0 + $0x3a] sm:$0xff]
  %v213 = vld [vmem:[%s0 + $0x42] sm:$0x7]
  %v214 = vld [vmem:[%s1 + $0x2] sm:$0x1]
  %216 = vset.pattern.permute.xlu0 0
  %217 = vperm.xlu0 %216, %v205
  %v218 = vpop.permute.xlu0 %217
  %221 = vset.pattern.permute.xlu0 0
  %222 = vperm.xlu0 %221, %v206
  %v223 = vpop.permute.xlu0 %222
  %226 = vset.pattern.permute.xlu0 0
  %227 = vperm.xlu0 %226, %v207
  %v228 = vpop.permute.xlu0 %227
  %231 = vset.pattern.permute.xlu0 0
  %232 = vperm.xlu0 %231, %v208
  %v233 = vpop.permute.xlu0 %232
  %236 = vset.pattern.permute.xlu0 0
  %237 = vperm.xlu0 %236, %v209
  %v238 = vpop.permute.xlu0 %237
  %241 = vset.pattern.permute.xlu0 0
  %242 = vperm.xlu0 %241, %v210
  %v243 = vpop.permute.xlu0 %242
  %246 = vset.pattern.permute.xlu0 0
  %247 = vperm.xlu0 %246, %v211
  %v248 = vpop.permute.xlu0 %247
  %251 = vset.pattern.permute.xlu0 0
  %252 = vperm.xlu0 %251, %v212
  %v253 = vpop.permute.xlu0 %252
  %256 = vset.pattern.permute.xlu0 0
  %257 = vperm.xlu0 %256, %v213
  %v258 = vpop.permute.xlu0 %257
  %v260 = vperm.slane %v214, 0
  %v261 = vmul.f32 %v218, %v260
  %v262 = vmul.f32 %v223, %v260
  %v263 = vmul.f32 %v228, %v260
  %v264 = vmul.f32 %v233, %v260
  %v265 = vmul.f32 %v238, %v260
  %v266 = vmul.f32 %v243, %v260
  %v267 = vmul.f32 %v248, %v260
  %v268 = vmul.f32 %v253, %v260
  %v269 = vmul.f32 %v258, %v260
  %v270 = vadd.f32 %v196, %v261
  %v271 = vadd.f32 %v197, %v262
  %v272 = vadd.f32 %v198, %v263
  %v273 = vadd.f32 %v199, %v264
  %v274 = vadd.f32 %v200, %v265
  %v275 = vadd.f32 %v201, %v266
  %v276 = vadd.f32 %v202, %v267
  %v277 = vadd.f32 %v203, %v268
  %v278 = vadd.f32 %v204, %v269
  %v279 = vld [vmem:[%s0 + $0x3] sm:$0xff]
  %v280 = vld [vmem:[%s0 + $0xb] sm:$0xff]
  %v281 = vld [vmem:[%s0 + $0x13] sm:$0xff]
  %v282 = vld [vmem:[%s0 + $0x1b] sm:$0xff]
  %v283 = vld [vmem:[%s0 + $0x23] sm:$0xff]
  %v284 = vld [vmem:[%s0 + $0x2b] sm:$0xff]
  %v285 = vld [vmem:[%s0 + $0x33] sm:$0xff]
  %v286 = vld [vmem:[%s0 + $0x3b] sm:$0xff]
  %v287 = vld [vmem:[%s0 + $0x43] sm:$0x7]
  %v288 = vld [vmem:[%s1 + $0x3] sm:$0x1]
  %290 = vset.pattern.permute.xlu0 0
  %291 = vperm.xlu0 %290, %v279
  %v292 = vpop.permute.xlu0 %291
  %295 = vset.pattern.permute.xlu0 0
  %296 = vperm.xlu0 %295, %v280
  %v297 = vpop.permute.xlu0 %296
  %300 = vset.pattern.permute.xlu0 0
  %301 = vperm.xlu0 %300, %v281
  %v302 = vpop.permute.xlu0 %301
  %305 = vset.pattern.permute.xlu0 0
  %306 = vperm.xlu0 %305, %v282
  %v307 = vpop.permute.xlu0 %306
  %310 = vset.pattern.permute.xlu0 0
  %311 = vperm.xlu0 %310, %v283
  %v312 = vpop.permute.xlu0 %311
  %315 = vset.pattern.permute.xlu0 0
  %316 = vperm.xlu0 %315, %v284
  %v317 = vpop.permute.xlu0 %316
  %320 = vset.pattern.permute.xlu0 0
  %321 = vperm.xlu0 %320, %v285
  %v322 = vpop.permute.xlu0 %321
  %325 = vset.pattern.permute.xlu0 0
  %326 = vperm.xlu0 %325, %v286
  %v327 = vpop.permute.xlu0 %326
  %330 = vset.pattern.permute.xlu0 0
  %331 = vperm.xlu0 %330, %v287
  %v332 = vpop.permute.xlu0 %331
  %v334 = vperm.slane %v288, 0
  %v335 = vmul.f32 %v292, %v334
  %v336 = vmul.f32 %v297, %v334
  %v337 = vmul.f32 %v302, %v334
  %v338 = vmul.f32 %v307, %v334
  %v339 = vmul.f32 %v312, %v334
  %v340 = vmul.f32 %v317, %v334
  %v341 = vmul.f32 %v322, %v334
  %v342 = vmul.f32 %v327, %v334
  %v343 = vmul.f32 %v332, %v334
  %v344 = vadd.f32 %v270, %v335
  %v345 = vadd.f32 %v271, %v336
  %v346 = vadd.f32 %v272, %v337
  %v347 = vadd.f32 %v273, %v338
  %v348 = vadd.f32 %v274, %v339
  %v349 = vadd.f32 %v275, %v340
  %v350 = vadd.f32 %v276, %v341
  %v351 = vadd.f32 %v277, %v342
  %v352 = vadd.f32 %v278, %v343
  %v353 = vld [vmem:[%s0 + $0x4] sm:$0xff]
  %v354 = vld [vmem:[%s0 + $0xc] sm:$0xff]
  %v355 = vld [vmem:[%s0 + $0x14] sm:$0xff]
  %v356 = vld [vmem:[%s0 + $0x1c] sm:$0xff]
  %v357 = vld [vmem:[%s0 + $0x24] sm:$0xff]
  %v358 = vld [vmem:[%s0 + $0x2c] sm:$0xff]
  %v359 = vld [vmem:[%s0 + $0x34] sm:$0xff]
  %v360 = vld [vmem:[%s0 + $0x3c] sm:$0xff]
  %v361 = vld [vmem:[%s0 + $0x44] sm:$0x7]
  %v362 = vld [vmem:[%s1 + $0x4] sm:$0x1]
  %364 = vset.pattern.permute.xlu0 0
  %365 = vperm.xlu0 %364, %v353
  %v366 = vpop.permute.xlu0 %365
  %369 = vset.pattern.permute.xlu0 0
  %370 = vperm.xlu0 %369, %v354
  %v371 = vpop.permute.xlu0 %370
  %374 = vset.pattern.permute.xlu0 0
  %375 = vperm.xlu0 %374, %v355
  %v376 = vpop.permute.xlu0 %375
  %379 = vset.pattern.permute.xlu0 0
  %380 = vperm.xlu0 %379, %v356
  %v381 = vpop.permute.xlu0 %380
  %384 = vset.pattern.permute.xlu0 0
  %385 = vperm.xlu0 %384, %v357
  %v386 = vpop.permute.xlu0 %385
  %389 = vset.pattern.permute.xlu0 0
  %390 = vperm.xlu0 %389, %v358
  %v391 = vpop.permute.xlu0 %390
  %394 = vset.pattern.permute.xlu0 0
  %395 = vperm.xlu0 %394, %v359
  %v396 = vpop.permute.xlu0 %395
  %399 = vset.pattern.permute.xlu0 0
  %400 = vperm.xlu0 %399, %v360
  %v401 = vpop.permute.xlu0 %400
  %404 = vset.pattern.permute.xlu0 0
  %405 = vperm.xlu0 %404, %v361
  %v406 = vpop.permute.xlu0 %405
  %v408 = vperm.slane %v362, 0
  %v409 = vmul.f32 %v366, %v408
  %v410 = vmul.f32 %v371, %v408
  %v411 = vmul.f32 %v376, %v408
  %v412 = vmul.f32 %v381, %v408
  %v413 = vmul.f32 %v386, %v408
  %v414 = vmul.f32 %v391, %v408
  %v415 = vmul.f32 %v396, %v408
  %v416 = vmul.f32 %v401, %v408
  %v417 = vmul.f32 %v406, %v408
  %v418 = vadd.f32 %v344, %v409
  %v419 = vadd.f32 %v345, %v410
  %v420 = vadd.f32 %v346, %v411
  %v421 = vadd.f32 %v347, %v412
  %v422 = vadd.f32 %v348, %v413
  %v423 = vadd.f32 %v349, %v414
  %v424 = vadd.f32 %v350, %v415
  %v425 = vadd.f32 %v351, %v416
  %v426 = vadd.f32 %v352, %v417
  %v427 = vld [vmem:[%s0 + $0x5] sm:$0xff]
  %v428 = vld [vmem:[%s0 + $0xd] sm:$0xff]
  %v429 = vld [vmem:[%s0 + $0x15] sm:$0xff]
  %v430 = vld [vmem:[%s0 + $0x1d] sm:$0xff]
  %v431 = vld [vmem:[%s0 + $0x25] sm:$0xff]
  %v432 = vld [vmem:[%s0 + $0x2d] sm:$0xff]
  %v433 = vld [vmem:[%s0 + $0x35] sm:$0xff]
  %v434 = vld [vmem:[%s0 + $0x3d] sm:$0xff]
  %v435 = vld [vmem:[%s0 + $0x45] sm:$0x7]
  %v436 = vld [vmem:[%s1 + $0x5] sm:$0x1]
  %438 = vset.pattern.permute.xlu0 0
  %439 = vperm.xlu0 %438, %v427
  %v440 = vpop.permute.xlu0 %439
  %443 = vset.pattern.permute.xlu0 0
  %444 = vperm.xlu0 %443, %v428
  %v445 = vpop.permute.xlu0 %444
  %448 = vset.pattern.permute.xlu0 0
  %449 = vperm.xlu0 %448, %v429
  %v450 = vpop.permute.xlu0 %449
  %453 = vset.pattern.permute.xlu0 0
  %454 = vperm.xlu0 %453, %v430
  %v455 = vpop.permute.xlu0 %454
  %458 = vset.pattern.permute.xlu0 0
  %459 = vperm.xlu0 %458, %v431
  %v460 = vpop.permute.xlu0 %459
  %463 = vset.pattern.permute.xlu0 0
  %464 = vperm.xlu0 %463, %v432
  %v465 = vpop.permute.xlu0 %464
  %468 = vset.pattern.permute.xlu0 0
  %469 = vperm.xlu0 %468, %v433
  %v470 = vpop.permute.xlu0 %469
  %473 = vset.pattern.permute.xlu0 0
  %474 = vperm.xlu0 %473, %v434
  %v475 = vpop.permute.xlu0 %474
  %478 = vset.pattern.permute.xlu0 0
  %479 = vperm.xlu0 %478, %v435
  %v480 = vpop.permute.xlu0 %479
  %v482 = vperm.slane %v436, 0
  %v483 = vmul.f32 %v440, %v482
  %v484 = vmul.f32 %v445, %v482
  %v485 = vmul.f32 %v450, %v482
  %v486 = vmul.f32 %v455, %v482
  %v487 = vmul.f32 %v460, %v482
  %v488 = vmul.f32 %v465, %v482
  %v489 = vmul.f32 %v470, %v482
  %v490 = vmul.f32 %v475, %v482
  %v491 = vmul.f32 %v480, %v482
  %v492 = vadd.f32 %v418, %v483
  %v493 = vadd.f32 %v419, %v484
  %v494 = vadd.f32 %v420, %v485
  %v495 = vadd.f32 %v421, %v486
  %v496 = vadd.f32 %v422, %v487
  %v497 = vadd.f32 %v423, %v488
  %v498 = vadd.f32 %v424, %v489
  %v499 = vadd.f32 %v425, %v490
  %v500 = vadd.f32 %v426, %v491
  %v501 = vld [vmem:[%s2] sm:$0x1]
  %v503 = vperm.slane %v501, 0
  %v505 = vadd.f32 %v492, %v503
  %v506 = vadd.f32 %v493, %v503
  %v507 = vadd.f32 %v494, %v503
  %v508 = vadd.f32 %v495, %v503
  %v509 = vadd.f32 %v496, %v503
  %v510 = vadd.f32 %v497, %v503
  %v511 = vadd.f32 %v498, %v503
  %v512 = vadd.f32 %v499, %v503
  %v513 = vadd.f32 %v500, %v503
  %v514 = vmax.f32 %v505, 0.0
  %v515 = vmax.f32 %v506, 0.0
  %v516 = vmax.f32 %v507, 0.0
  %v517 = vmax.f32 %v508, 0.0
  %v518 = vmax.f32 %v509, 0.0
  %v519 = vmax.f32 %v510, 0.0
  %v520 = vmax.f32 %v511, 0.0
  %v521 = vmax.f32 %v512, 0.0
  %v522 = vmax.f32 %v513, 0.0
  %v523 = vsel %vm48, %v514, 0.0
  %v524 = vsel %vm49, %v515, 0.0
  %v525 = vsel %vm50, %v516, 0.0
  %v526 = vsel %vm51, %v517, 0.0
  %v527 = vsel %vm52, %v518, 0.0
  %v528 = vsel %vm53, %v519, 0.0
  %v529 = vsel %vm54, %v520, 0.0
  %v530 = vsel %vm55, %v521, 0.0
  %v531 = vsel %vm56, %v522, 0.0
  %v532 = vld [vmem:[%s3] sm:$0xff]
  %v533 = vld [vmem:[%s3 + $0x8] sm:$0xff]
  %v534 = vld [vmem:[%s3 + $0x10] sm:$0xff]
  %v535 = vld [vmem:[%s3 + $0x18] sm:$0xff]
  %s536 = scalar_lea.vmem %s3, 32
  %v537 = vld [vmem:[%s536] sm:$0xff]
  %v538 = vld [vmem:[%s536 + $0x8] sm:$0xff]
  %v539 = vld [vmem:[%s536 + $0x10] sm:$0xff]
  %v540 = vld [vmem:[%s536 + $0x18] sm:$0xff]
  %vm549 = vcmask 1046528
  %v550 = vrot.slane %v523, 1
  %v551 = vrot.slane %v524, 1
  %v552 = vsel %vm549, %v550, %v551
  %v553 = vrot.slane %v525, 1
  %v554 = vsel %vm549, %v551, %v553
  %v555 = vrot.slane %v526, 1
  %v556 = vsel %vm549, %v553, %v555
  %v557 = vrot.slane %v527, 1
  %v558 = vsel %vm549, %v555, %v557
  %v559 = vrot.slane %v528, 1
  %v560 = vsel %vm549, %v557, %v559
  %v561 = vrot.slane %v529, 1
  %v562 = vsel %vm549, %v559, %v561
  %v563 = vrot.slane %v530, 1
  %v564 = vsel %vm549, %v561, %v563
  %vm565 = vcmask 261120
  %v566 = vsel %vm565, %v552, 0
  %v568 = vsel %vm565, %v554, 0
  %v570 = vsel %vm565, %v556, 0
  %v572 = vsel %vm565, %v558, 0
  %v574 = vsel %vm565, %v560, 0
  %v576 = vsel %vm565, %v562, 0
  %v578 = vsel %vm565, %v564, 0
  %v580 = vsel %vm565, %v563, 0
  %582 = vmatpush.msra.mxu0 0.0
  %583 = vmatpush.msra.mxu0 0.0
  %584 = vmatpush.msra.mxu0 0.0
  %585 = vmatpush.msra.mxu0 0.0
  %586 = vmatpush.msra.mxu0 0.0
  %587 = vmatpush.msra.mxu0 0.0
  %588 = vmatpush.msra.mxu0 0.0
  %589 = vmatpush.msra.mxu0 0.0
  %590 = vmatpush.msra.mxu0 0.0
  %591 = vmatpush.msra.mxu0 0.0
  %592 = vmatpush.msra.mxu0 0.0
  %593 = vmatpush.msra.mxu0 0.0
  %594 = vmatpush.msra.mxu0 %v540
  %595 = vmatpush.msra.mxu0 %v539
  %596 = vmatpush.msra.mxu0 %v538
  %597 = vmatpush.msra.mxu0 %v537
  %598 = vmatmul.f32.gmra.mxu0 %v566
  %v599 = vpop.f32.mrf.mxu0
  %v600 = vadd.f32 0.0, %v599
  %601 = vmatmul.f32.gmra.mxu0 %v568
  %v602 = vpop.f32.mrf.mxu0
  %v603 = vadd.f32 0.0, %v602
  %604 = vmatmul.f32.gmra.mxu0 %v570
  %v605 = vpop.f32.mrf.mxu0
  %v606 = vadd.f32 0.0, %v605
  %607 = vmatmul.f32.gmra.mxu0 %v572
  %v608 = vpop.f32.mrf.mxu0
  %v609 = vadd.f32 0.0, %v608
  %610 = vmatmul.f32.gmra.mxu0 %v574
  %v611 = vpop.f32.mrf.mxu0
  %v612 = vadd.f32 0.0, %v611
  %613 = vmatmul.f32.gmra.mxu0 %v576
  %v614 = vpop.f32.mrf.mxu0
  %v615 = vadd.f32 0.0, %v614
  %616 = vmatmul.f32.gmra.mxu0 %v578
  %v617 = vpop.f32.mrf.mxu0
  %v618 = vadd.f32 0.0, %v617
  %619 = vmatmul.f32.gmra.mxu0 %v580
  %v620 = vpop.f32.mrf.mxu0
  %v621 = vadd.f32 0.0, %v620
  %622 = vdwg.mxu0
  %v623 = vsel %vm565, %v523, 0
  %v625 = vsel %vm565, %v524, 0
  %v627 = vsel %vm565, %v525, 0
  %v629 = vsel %vm565, %v526, 0
  %v631 = vsel %vm565, %v527, 0
  %v633 = vsel %vm565, %v528, 0
  %v635 = vsel %vm565, %v529, 0
  %v637 = vsel %vm565, %v530, 0
  %639 = vmatpush.msra.mxu0 0.0
  %640 = vmatpush.msra.mxu0 0.0
  %641 = vmatpush.msra.mxu0 0.0
  %642 = vmatpush.msra.mxu0 0.0
  %643 = vmatpush.msra.mxu0 0.0
  %644 = vmatpush.msra.mxu0 0.0
  %645 = vmatpush.msra.mxu0 0.0
  %646 = vmatpush.msra.mxu0 0.0
  %647 = vmatpush.msra.mxu0 0.0
  %648 = vmatpush.msra.mxu0 0.0
  %649 = vmatpush.msra.mxu0 0.0
  %650 = vmatpush.msra.mxu0 0.0
  %651 = vmatpush.msra.mxu0 %v535
  %652 = vmatpush.msra.mxu0 %v534
  %653 = vmatpush.msra.mxu0 %v533
  %654 = vmatpush.msra.mxu0 %v532
  %655 = vmatmul.f32.gmra.mxu0 %v623
  %v656 = vpop.f32.mrf.mxu0
  %v657 = vadd.f32 %v600, %v656
  %658 = vmatmul.f32.gmra.mxu0 %v625
  %v659 = vpop.f32.mrf.mxu0
  %v660 = vadd.f32 %v603, %v659
  %661 = vmatmul.f32.gmra.mxu0 %v627
  %v662 = vpop.f32.mrf.mxu0
  %v663 = vadd.f32 %v606, %v662
  %664 = vmatmul.f32.gmra.mxu0 %v629
  %v665 = vpop.f32.mrf.mxu0
  %v666 = vadd.f32 %v609, %v665
  %667 = vmatmul.f32.gmra.mxu0 %v631
  %v668 = vpop.f32.mrf.mxu0
  %v669 = vadd.f32 %v612, %v668
  %670 = vmatmul.f32.gmra.mxu0 %v633
  %v671 = vpop.f32.mrf.mxu0
  %v672 = vadd.f32 %v615, %v671
  %673 = vmatmul.f32.gmra.mxu0 %v635
  %v674 = vpop.f32.mrf.mxu0
  %v675 = vadd.f32 %v618, %v674
  %676 = vmatmul.f32.gmra.mxu0 %v637
  %v677 = vpop.f32.mrf.mxu0
  %v678 = vadd.f32 %v621, %v677
  %679 = vdwg.mxu0
  %s680 = scalar_lea.vmem %s3, 64
  %v681 = vld [vmem:[%s680] sm:$0xff]
  %v682 = vld [vmem:[%s680 + $0x8] sm:$0xff]
  %v683 = vld [vmem:[%s680 + $0x10] sm:$0xff]
  %v684 = vld [vmem:[%s680 + $0x18] sm:$0xff]
  %vm685 = vcmask 1045504
  %v686 = vrot.slane %v523, 2
  %v687 = vrot.slane %v524, 2
  %v688 = vsel %vm685, %v686, %v687
  %v689 = vrot.slane %v525, 2
  %v690 = vsel %vm685, %v687, %v689
  %v691 = vrot.slane %v526, 2
  %v692 = vsel %vm685, %v689, %v691
  %v693 = vrot.slane %v527, 2
  %v694 = vsel %vm685, %v691, %v693
  %v695 = vrot.slane %v528, 2
  %v696 = vsel %vm685, %v693, %v695
  %v697 = vrot.slane %v529, 2
  %v698 = vsel %vm685, %v695, %v697
  %v699 = vrot.slane %v530, 2
  %v700 = vsel %vm685, %v697, %v699
  %v701 = vsel %vm565, %v688, 0
  %v703 = vsel %vm565, %v690, 0
  %v705 = vsel %vm565, %v692, 0
  %v707 = vsel %vm565, %v694, 0
  %v709 = vsel %vm565, %v696, 0
  %v711 = vsel %vm565, %v698, 0
  %v713 = vsel %vm565, %v700, 0
  %v715 = vsel %vm565, %v699, 0
  %717 = vmatpush.msra.mxu0 0.0
  %718 = vmatpush.msra.mxu0 0.0
  %719 = vmatpush.msra.mxu0 0.0
  %720 = vmatpush.msra.mxu0 0.0
  %721 = vmatpush.msra.mxu0 0.0
  %722 = vmatpush.msra.mxu0 0.0
  %723 = vmatpush.msra.mxu0 0.0
  %724 = vmatpush.msra.mxu0 0.0
  %725 = vmatpush.msra.mxu0 0.0
  %726 = vmatpush.msra.mxu0 0.0
  %727 = vmatpush.msra.mxu0 0.0
  %728 = vmatpush.msra.mxu0 0.0
  %729 = vmatpush.msra.mxu0 %v684
  %730 = vmatpush.msra.mxu0 %v683
  %731 = vmatpush.msra.mxu0 %v682
  %732 = vmatpush.msra.mxu0 %v681
  %733 = vmatmul.f32.gmra.mxu0 %v701
  %v734 = vpop.f32.mrf.mxu0
  %v735 = vadd.f32 0.0, %v734
  %736 = vmatmul.f32.gmra.mxu0 %v703
  %v737 = vpop.f32.mrf.mxu0
  %v738 = vadd.f32 0.0, %v737
  %739 = vmatmul.f32.gmra.mxu0 %v705
  %v740 = vpop.f32.mrf.mxu0
  %v741 = vadd.f32 0.0, %v740
  %742 = vmatmul.f32.gmra.mxu0 %v707
  %v743 = vpop.f32.mrf.mxu0
  %v744 = vadd.f32 0.0, %v743
  %745 = vmatmul.f32.gmra.mxu0 %v709
  %v746 = vpop.f32.mrf.mxu0
  %v747 = vadd.f32 0.0, %v746
  %748 = vmatmul.f32.gmra.mxu0 %v711
  %v749 = vpop.f32.mrf.mxu0
  %v750 = vadd.f32 0.0, %v749
  %751 = vmatmul.f32.gmra.mxu0 %v713
  %v752 = vpop.f32.mrf.mxu0
  %v753 = vadd.f32 0.0, %v752
  %754 = vmatmul.f32.gmra.mxu0 %v715
  %v755 = vpop.f32.mrf.mxu0
  %v756 = vadd.f32 0.0, %v755
  %757 = vdwg.mxu0
  %v758 = vadd.f32 %v657, %v735
  %v759 = vadd.f32 %v660, %v738
  %v760 = vadd.f32 %v663, %v741
  %v761 = vadd.f32 %v666, %v744
  %v762 = vadd.f32 %v669, %v747
  %v763 = vadd.f32 %v672, %v750
  %v764 = vadd.f32 %v675, %v753
  %v765 = vadd.f32 %v678, %v756
  %s766 = scalar_lea.vmem %s3, 96
  %v767 = vld [vmem:[%s766] sm:$0xff]
  %v768 = vld [vmem:[%s766 + $0x8] sm:$0xff]
  %v769 = vld [vmem:[%s766 + $0x10] sm:$0xff]
  %v770 = vld [vmem:[%s766 + $0x18] sm:$0xff]
  %vm772 = vcmask 1044480
  %v773 = vrot.slane %v523, 3
  %v774 = vrot.slane %v524, 3
  %v775 = vsel %vm772, %v773, %v774
  %v776 = vrot.slane %v525, 3
  %v777 = vsel %vm772, %v774, %v776
  %v778 = vrot.slane %v526, 3
  %v779 = vsel %vm772, %v776, %v778
  %v780 = vrot.slane %v527, 3
  %v781 = vsel %vm772, %v778, %v780
  %v782 = vrot.slane %v528, 3
  %v783 = vsel %vm772, %v780, %v782
  %v784 = vrot.slane %v529, 3
  %v785 = vsel %vm772, %v782, %v784
  %v786 = vrot.slane %v530, 3
  %v787 = vsel %vm772, %v784, %v786
  %v788 = vrot.slane %v531, 3
  %v789 = vsel %vm772, %v786, %v788
  %v790 = vsel %vm565, %v775, 0
  %v792 = vsel %vm565, %v777, 0
  %v794 = vsel %vm565, %v779, 0
  %v796 = vsel %vm565, %v781, 0
  %v798 = vsel %vm565, %v783, 0
  %v800 = vsel %vm565, %v785, 0
  %v802 = vsel %vm565, %v787, 0
  %v804 = vsel %vm565, %v789, 0
  %806 = vmatpush.msra.mxu0 0.0
  %807 = vmatpush.msra.mxu0 0.0
  %808 = vmatpush.msra.mxu0 0.0
  %809 = vmatpush.msra.mxu0 0.0
  %810 = vmatpush.msra.mxu0 0.0
  %811 = vmatpush.msra.mxu0 0.0
  %812 = vmatpush.msra.mxu0 0.0
  %813 = vmatpush.msra.mxu0 0.0
  %814 = vmatpush.msra.mxu0 0.0
  %815 = vmatpush.msra.mxu0 0.0
  %816 = vmatpush.msra.mxu0 0.0
  %817 = vmatpush.msra.mxu0 0.0
  %818 = vmatpush.msra.mxu0 %v770
  %819 = vmatpush.msra.mxu0 %v769
  %820 = vmatpush.msra.mxu0 %v768
  %821 = vmatpush.msra.mxu0 %v767
  %822 = vmatmul.f32.gmra.mxu0 %v790
  %v823 = vpop.f32.mrf.mxu0
  %v824 = vadd.f32 0.0, %v823
  %825 = vmatmul.f32.gmra.mxu0 %v792
  %v826 = vpop.f32.mrf.mxu0
  %v827 = vadd.f32 0.0, %v826
  %828 = vmatmul.f32.gmra.mxu0 %v794
  %v829 = vpop.f32.mrf.mxu0
  %v830 = vadd.f32 0.0, %v829
  %831 = vmatmul.f32.gmra.mxu0 %v796
  %v832 = vpop.f32.mrf.mxu0
  %v833 = vadd.f32 0.0, %v832
  %834 = vmatmul.f32.gmra.mxu0 %v798
  %v835 = vpop.f32.mrf.mxu0
  %v836 = vadd.f32 0.0, %v835
  %837 = vmatmul.f32.gmra.mxu0 %v800
  %v838 = vpop.f32.mrf.mxu0
  %v839 = vadd.f32 0.0, %v838
  %840 = vmatmul.f32.gmra.mxu0 %v802
  %v841 = vpop.f32.mrf.mxu0
  %v842 = vadd.f32 0.0, %v841
  %843 = vmatmul.f32.gmra.mxu0 %v804
  %v844 = vpop.f32.mrf.mxu0
  %v845 = vadd.f32 0.0, %v844
  %846 = vdwg.mxu0
  %v847 = vadd.f32 %v758, %v824
  %v848 = vadd.f32 %v759, %v827
  %v849 = vadd.f32 %v760, %v830
  %v850 = vadd.f32 %v761, %v833
  %v851 = vadd.f32 %v762, %v836
  %v852 = vadd.f32 %v763, %v839
  %v853 = vadd.f32 %v764, %v842
  %v854 = vadd.f32 %v765, %v845
  %s855 = scalar_lea.vmem %s3, 128
  %v856 = vld [vmem:[%s855] sm:$0xff]
  %v857 = vld [vmem:[%s855 + $0x8] sm:$0xff]
  %v858 = vld [vmem:[%s855 + $0x10] sm:$0xff]
  %v859 = vld [vmem:[%s855 + $0x18] sm:$0xff]
  %vm860 = vcmask 1043456
  %v861 = vrot.slane %v523, 4
  %v862 = vrot.slane %v524, 4
  %v863 = vsel %vm860, %v861, %v862
  %v864 = vrot.slane %v525, 4
  %v865 = vsel %vm860, %v862, %v864
  %v866 = vrot.slane %v526, 4
  %v867 = vsel %vm860, %v864, %v866
  %v868 = vrot.slane %v527, 4
  %v869 = vsel %vm860, %v866, %v868
  %v870 = vrot.slane %v528, 4
  %v871 = vsel %vm860, %v868, %v870
  %v872 = vrot.slane %v529, 4
  %v873 = vsel %vm860, %v870, %v872
  %v874 = vrot.slane %v530, 4
  %v875 = vsel %vm860, %v872, %v874
  %v876 = vrot.slane %v531, 4
  %v877 = vsel %vm860, %v874, %v876
  %v878 = vsel %vm565, %v863, 0
  %v880 = vsel %vm565, %v865, 0
  %v882 = vsel %vm565, %v867, 0
  %v884 = vsel %vm565, %v869, 0
  %v886 = vsel %vm565, %v871, 0
  %v888 = vsel %vm565, %v873, 0
  %v890 = vsel %vm565, %v875, 0
  %v892 = vsel %vm565, %v877, 0
  %894 = vmatpush.msra.mxu0 0.0
  %895 = vmatpush.msra.mxu0 0.0
  %896 = vmatpush.msra.mxu0 0.0
  %897 = vmatpush.msra.mxu0 0.0
  %898 = vmatpush.msra.mxu0 0.0
  %899 = vmatpush.msra.mxu0 0.0
  %900 = vmatpush.msra.mxu0 0.0
  %901 = vmatpush.msra.mxu0 0.0
  %902 = vmatpush.msra.mxu0 0.0
  %903 = vmatpush.msra.mxu0 0.0
  %904 = vmatpush.msra.mxu0 0.0
  %905 = vmatpush.msra.mxu0 0.0
  %906 = vmatpush.msra.mxu0 %v859
  %907 = vmatpush.msra.mxu0 %v858
  %908 = vmatpush.msra.mxu0 %v857
  %909 = vmatpush.msra.mxu0 %v856
  %910 = vmatmul.f32.gmra.mxu0 %v878
  %v911 = vpop.f32.mrf.mxu0
  %v912 = vadd.f32 0.0, %v911
  %913 = vmatmul.f32.gmra.mxu0 %v880
  %v914 = vpop.f32.mrf.mxu0
  %v915 = vadd.f32 0.0, %v914
  %916 = vmatmul.f32.gmra.mxu0 %v882
  %v917 = vpop.f32.mrf.mxu0
  %v918 = vadd.f32 0.0, %v917
  %919 = vmatmul.f32.gmra.mxu0 %v884
  %v920 = vpop.f32.mrf.mxu0
  %v921 = vadd.f32 0.0, %v920
  %922 = vmatmul.f32.gmra.mxu0 %v886
  %v923 = vpop.f32.mrf.mxu0
  %v924 = vadd.f32 0.0, %v923
  %925 = vmatmul.f32.gmra.mxu0 %v888
  %v926 = vpop.f32.mrf.mxu0
  %v927 = vadd.f32 0.0, %v926
  %928 = vmatmul.f32.gmra.mxu0 %v890
  %v929 = vpop.f32.mrf.mxu0
  %v930 = vadd.f32 0.0, %v929
  %931 = vmatmul.f32.gmra.mxu0 %v892
  %v932 = vpop.f32.mrf.mxu0
  %v933 = vadd.f32 0.0, %v932
  %934 = vdwg.mxu0
  %v935 = vadd.f32 %v847, %v912
  %v936 = vadd.f32 %v848, %v915
  %v937 = vadd.f32 %v849, %v918
  %v938 = vadd.f32 %v850, %v921
  %v939 = vadd.f32 %v851, %v924
  %v940 = vadd.f32 %v852, %v927
  %v941 = vadd.f32 %v853, %v930
  %v942 = vadd.f32 %v854, %v933
  %s943 = scalar_lea.vmem %s3, 160
  %v944 = vld [vmem:[%s943] sm:$0xff]
  %v945 = vld [vmem:[%s943 + $0x8] sm:$0xff]
  %v946 = vld [vmem:[%s943 + $0x10] sm:$0xff]
  %v947 = vld [vmem:[%s943 + $0x18] sm:$0xff]
  %vm948 = vcmask 1042432
  %v949 = vrot.slane %v523, 5
  %v950 = vrot.slane %v524, 5
  %v951 = vsel %vm948, %v949, %v950
  %v952 = vrot.slane %v525, 5
  %v953 = vsel %vm948, %v950, %v952
  %v954 = vrot.slane %v526, 5
  %v955 = vsel %vm948, %v952, %v954
  %v956 = vrot.slane %v527, 5
  %v957 = vsel %vm948, %v954, %v956
  %v958 = vrot.slane %v528, 5
  %v959 = vsel %vm948, %v956, %v958
  %v960 = vrot.slane %v529, 5
  %v961 = vsel %vm948, %v958, %v960
  %v962 = vrot.slane %v530, 5
  %v963 = vsel %vm948, %v960, %v962
  %v964 = vrot.slane %v531, 5
  %v965 = vsel %vm948, %v962, %v964
  %v966 = vsel %vm565, %v951, 0
  %v968 = vsel %vm565, %v953, 0
  %v970 = vsel %vm565, %v955, 0
  %v972 = vsel %vm565, %v957, 0
  %v974 = vsel %vm565, %v959, 0
  %v976 = vsel %vm565, %v961, 0
  %v978 = vsel %vm565, %v963, 0
  %v980 = vsel %vm565, %v965, 0
  %982 = vmatpush.msra.mxu0 0.0
  %983 = vmatpush.msra.mxu0 0.0
  %984 = vmatpush.msra.mxu0 0.0
  %985 = vmatpush.msra.mxu0 0.0
  %986 = vmatpush.msra.mxu0 0.0
  %987 = vmatpush.msra.mxu0 0.0
  %988 = vmatpush.msra.mxu0 0.0
  %989 = vmatpush.msra.mxu0 0.0
  %990 = vmatpush.msra.mxu0 0.0
  %991 = vmatpush.msra.mxu0 0.0
  %992 = vmatpush.msra.mxu0 0.0
  %993 = vmatpush.msra.mxu0 0.0
  %994 = vmatpush.msra.mxu0 %v947
  %995 = vmatpush.msra.mxu0 %v946
  %996 = vmatpush.msra.mxu0 %v945
  %997 = vmatpush.msra.mxu0 %v944
  %998 = vmatmul.f32.gmra.mxu0 %v966
  %v999 = vpop.f32.mrf.mxu0
  %v1000 = vadd.f32 0.0, %v999
  %1001 = vmatmul.f32.gmra.mxu0 %v968
  %v1002 = vpop.f32.mrf.mxu0
  %v1003 = vadd.f32 0.0, %v1002
  %1004 = vmatmul.f32.gmra.mxu0 %v970
  %v1005 = vpop.f32.mrf.mxu0
  %v1006 = vadd.f32 0.0, %v1005
  %1007 = vmatmul.f32.gmra.mxu0 %v972
  %v1008 = vpop.f32.mrf.mxu0
  %v1009 = vadd.f32 0.0, %v1008
  %1010 = vmatmul.f32.gmra.mxu0 %v974
  %v1011 = vpop.f32.mrf.mxu0
  %v1012 = vadd.f32 0.0, %v1011
  %1013 = vmatmul.f32.gmra.mxu0 %v976
  %v1014 = vpop.f32.mrf.mxu0
  %v1015 = vadd.f32 0.0, %v1014
  %1016 = vmatmul.f32.gmra.mxu0 %v978
  %v1017 = vpop.f32.mrf.mxu0
  %v1018 = vadd.f32 0.0, %v1017
  %1019 = vmatmul.f32.gmra.mxu0 %v980
  %v1020 = vpop.f32.mrf.mxu0
  %v1021 = vadd.f32 0.0, %v1020
  %1022 = vdwg.mxu0
  %v1023 = vadd.f32 %v935, %v1000
  %v1024 = vadd.f32 %v936, %v1003
  %v1025 = vadd.f32 %v937, %v1006
  %v1026 = vadd.f32 %v938, %v1009
  %v1027 = vadd.f32 %v939, %v1012
  %v1028 = vadd.f32 %v940, %v1015
  %v1029 = vadd.f32 %v941, %v1018
  %v1030 = vadd.f32 %v942, %v1021
  %v1031 = vld [vmem:[%s4] sm:$0x1]
  %v1033 = vperm.slane %v1031, 0
  %v1035 = vadd.f32 %v1023, %v1033
  %v1036 = vadd.f32 %v1024, %v1033
  %v1037 = vadd.f32 %v1025, %v1033
  %v1038 = vadd.f32 %v1026, %v1033
  %v1039 = vadd.f32 %v1027, %v1033
  %v1040 = vadd.f32 %v1028, %v1033
  %v1041 = vadd.f32 %v1029, %v1033
  %v1042 = vadd.f32 %v1030, %v1033
  %v1043 = vmax.f32 %v1035, 0.0
  %v1044 = vmax.f32 %v1036, 0.0
  %v1045 = vmax.f32 %v1037, 0.0
  %v1046 = vmax.f32 %v1038, 0.0
  %v1047 = vmax.f32 %v1039, 0.0
  %v1048 = vmax.f32 %v1040, 0.0
  %v1049 = vmax.f32 %v1041, 0.0
  %v1050 = vmax.f32 %v1042, 0.0
  %1051 = vst.msk [vmem:[%s5] sm:$0xff] %vm565, %v1043
  %1052 = vst.msk [vmem:[%s5 + $0x8] sm:$0xff] %vm565, %v1044
  %1053 = vst.msk [vmem:[%s5 + $0x10] sm:$0xff] %vm565, %v1045
  %1054 = vst.msk [vmem:[%s5 + $0x18] sm:$0xff] %vm565, %v1046
  %1055 = vst.msk [vmem:[%s5 + $0x20] sm:$0xff] %vm565, %v1047
  %1056 = vst.msk [vmem:[%s5 + $0x28] sm:$0xff] %vm565, %v1048
  %1057 = vst.msk [vmem:[%s5 + $0x30] sm:$0xff] %vm565, %v1049
  %vm1058 = vcmask 259072
  %1059 = vst.msk [vmem:[%s5 + $0x38] sm:$0x3f] %vm1058, %v1050
  %v1060 = vld [vmem:[%s0] sm:$0xff]
  %v1061 = vld [vmem:[%s0 + $0x8] sm:$0xff]
  %v1062 = vld [vmem:[%s0 + $0x10] sm:$0xff]
  %v1063 = vld [vmem:[%s0 + $0x18] sm:$0xff]
  %v1064 = vld [vmem:[%s0 + $0x20] sm:$0xff]
  %v1065 = vld [vmem:[%s0 + $0x28] sm:$0xff]
  %v1066 = vld [vmem:[%s0 + $0x30] sm:$0xff]
  %v1067 = vld [vmem:[%s0 + $0x38] sm:$0xff]
  %v1068 = vld [vmem:[%s0 + $0x40] sm:$0x7]
  %v1069 = vld [vmem:[%s1] sm:$0x1]
  %1071 = vset.pattern.permute.xlu0 1
  %1072 = vperm.xlu0 %1071, %v1060
  %v1073 = vpop.permute.xlu0 %1072
  %1076 = vset.pattern.permute.xlu0 1
  %1077 = vperm.xlu0 %1076, %v1061
  %v1078 = vpop.permute.xlu0 %1077
  %1081 = vset.pattern.permute.xlu0 1
  %1082 = vperm.xlu0 %1081, %v1062
  %v1083 = vpop.permute.xlu0 %1082
  %1086 = vset.pattern.permute.xlu0 1
  %1087 = vperm.xlu0 %1086, %v1063
  %v1088 = vpop.permute.xlu0 %1087
  %1091 = vset.pattern.permute.xlu0 1
  %1092 = vperm.xlu0 %1091, %v1064
  %v1093 = vpop.permute.xlu0 %1092
  %1096 = vset.pattern.permute.xlu0 1
  %1097 = vperm.xlu0 %1096, %v1065
  %v1098 = vpop.permute.xlu0 %1097
  %1101 = vset.pattern.permute.xlu0 1
  %1102 = vperm.xlu0 %1101, %v1066
  %v1103 = vpop.permute.xlu0 %1102
  %1106 = vset.pattern.permute.xlu0 1
  %1107 = vperm.xlu0 %1106, %v1067
  %v1108 = vpop.permute.xlu0 %1107
  %1111 = vset.pattern.permute.xlu0 1
  %1112 = vperm.xlu0 %1111, %v1068
  %v1113 = vpop.permute.xlu0 %1112
  %v1115 = vperm.slane %v1069, 0
  %v1116 = vmul.f32 %v1073, %v1115
  %v1117 = vmul.f32 %v1078, %v1115
  %v1118 = vmul.f32 %v1083, %v1115
  %v1119 = vmul.f32 %v1088, %v1115
  %v1120 = vmul.f32 %v1093, %v1115
  %v1121 = vmul.f32 %v1098, %v1115
  %v1122 = vmul.f32 %v1103, %v1115
  %v1123 = vmul.f32 %v1108, %v1115
  %v1124 = vmul.f32 %v1113, %v1115
  %v1125 = vadd.f32 %v1116, 0.0
  %v1126 = vadd.f32 %v1117, 0.0
  %v1127 = vadd.f32 %v1118, 0.0
  %v1128 = vadd.f32 %v1119, 0.0
  %v1129 = vadd.f32 %v1120, 0.0
  %v1130 = vadd.f32 %v1121, 0.0
  %v1131 = vadd.f32 %v1122, 0.0
  %v1132 = vadd.f32 %v1123, 0.0
  %v1133 = vadd.f32 %v1124, 0.0
  %v1134 = vld [vmem:[%s0 + $0x1] sm:$0xff]
  %v1135 = vld [vmem:[%s0 + $0x9] sm:$0xff]
  %v1136 = vld [vmem:[%s0 + $0x11] sm:$0xff]
  %v1137 = vld [vmem:[%s0 + $0x19] sm:$0xff]
  %v1138 = vld [vmem:[%s0 + $0x21] sm:$0xff]
  %v1139 = vld [vmem:[%s0 + $0x29] sm:$0xff]
  %v1140 = vld [vmem:[%s0 + $0x31] sm:$0xff]
  %v1141 = vld [vmem:[%s0 + $0x39] sm:$0xff]
  %v1142 = vld [vmem:[%s0 + $0x41] sm:$0x7]
  %v1143 = vld [vmem:[%s1 + $0x1] sm:$0x1]
  %1145 = vset.pattern.permute.xlu0 1
  %1146 = vperm.xlu0 %1145, %v1134
  %v1147 = vpop.permute.xlu0 %1146
  %1150 = vset.pattern.permute.xlu0 1
  %1151 = vperm.xlu0 %1150, %v1135
  %v1152 = vpop.permute.xlu0 %1151
  %1155 = vset.pattern.permute.xlu0 1
  %1156 = vperm.xlu0 %1155, %v1136
  %v1157 = vpop.permute.xlu0 %1156
  %1160 = vset.pattern.permute.xlu0 1
  %1161 = vperm.xlu0 %1160, %v1137
  %v1162 = vpop.permute.xlu0 %1161
  %1165 = vset.pattern.permute.xlu0 1
  %1166 = vperm.xlu0 %1165, %v1138
  %v1167 = vpop.permute.xlu0 %1166
  %1170 = vset.pattern.permute.xlu0 1
  %1171 = vperm.xlu0 %1170, %v1139
  %v1172 = vpop.permute.xlu0 %1171
  %1175 = vset.pattern.permute.xlu0 1
  %1176 = vperm.xlu0 %1175, %v1140
  %v1177 = vpop.permute.xlu0 %1176
  %1180 = vset.pattern.permute.xlu0 1
  %1181 = vperm.xlu0 %1180, %v1141
  %v1182 = vpop.permute.xlu0 %1181
  %1185 = vset.pattern.permute.xlu0 1
  %1186 = vperm.xlu0 %1185, %v1142
  %v1187 = vpop.permute.xlu0 %1186
  %v1189 = vperm.slane %v1143, 0
  %v1190 = vmul.f32 %v1147, %v1189
  %v1191 = vmul.f32 %v1152, %v1189
  %v1192 = vmul.f32 %v1157, %v1189
  %v1193 = vmul.f32 %v1162, %v1189
  %v1194 = vmul.f32 %v1167, %v1189
  %v1195 = vmul.f32 %v1172, %v1189
  %v1196 = vmul.f32 %v1177, %v1189
  %v1197 = vmul.f32 %v1182, %v1189
  %v1198 = vmul.f32 %v1187, %v1189
  %v1199 = vadd.f32 %v1125, %v1190
  %v1200 = vadd.f32 %v1126, %v1191
  %v1201 = vadd.f32 %v1127, %v1192
  %v1202 = vadd.f32 %v1128, %v1193
  %v1203 = vadd.f32 %v1129, %v1194
  %v1204 = vadd.f32 %v1130, %v1195
  %v1205 = vadd.f32 %v1131, %v1196
  %v1206 = vadd.f32 %v1132, %v1197
  %v1207 = vadd.f32 %v1133, %v1198
  %v1208 = vld [vmem:[%s0 + $0x2] sm:$0xff]
  %v1209 = vld [vmem:[%s0 + $0xa] sm:$0xff]
  %v1210 = vld [vmem:[%s0 + $0x12] sm:$0xff]
  %v1211 = vld [vmem:[%s0 + $0x1a] sm:$0xff]
  %v1212 = vld [vmem:[%s0 + $0x22] sm:$0xff]
  %v1213 = vld [vmem:[%s0 + $0x2a] sm:$0xff]
  %v1214 = vld [vmem:[%s0 + $0x32] sm:$0xff]
  %v1215 = vld [vmem:[%s0 + $0x3a] sm:$0xff]
  %v1216 = vld [vmem:[%s0 + $0x42] sm:$0x7]
  %v1217 = vld [vmem:[%s1 + $0x2] sm:$0x1]
  %1219 = vset.pattern.permute.xlu0 1
  %1220 = vperm.xlu0 %1219, %v1208
  %v1221 = vpop.permute.xlu0 %1220
  %1224 = vset.pattern.permute.xlu0 1
  %1225 = vperm.xlu0 %1224, %v1209
  %v1226 = vpop.permute.xlu0 %1225
  %1229 = vset.pattern.permute.xlu0 1
  %1230 = vperm.xlu0 %1229, %v1210
  %v1231 = vpop.permute.xlu0 %1230
  %1234 = vset.pattern.permute.xlu0 1
  %1235 = vperm.xlu0 %1234, %v1211
  %v1236 = vpop.permute.xlu0 %1235
  %1239 = vset.pattern.permute.xlu0 1
  %1240 = vperm.xlu0 %1239, %v1212
  %v1241 = vpop.permute.xlu0 %1240
  %1244 = vset.pattern.permute.xlu0 1
  %1245 = vperm.xlu0 %1244, %v1213
  %v1246 = vpop.permute.xlu0 %1245
  %1249 = vset.pattern.permute.xlu0 1
  %1250 = vperm.xlu0 %1249, %v1214
  %v1251 = vpop.permute.xlu0 %1250
  %1254 = vset.pattern.permute.xlu0 1
  %1255 = vperm.xlu0 %1254, %v1215
  %v1256 = vpop.permute.xlu0 %1255
  %1259 = vset.pattern.permute.xlu0 1
  %1260 = vperm.xlu0 %1259, %v1216
  %v1261 = vpop.permute.xlu0 %1260
  %v1263 = vperm.slane %v1217, 0
  %v1264 = vmul.f32 %v1221, %v1263
  %v1265 = vmul.f32 %v1226, %v1263
  %v1266 = vmul.f32 %v1231, %v1263
  %v1267 = vmul.f32 %v1236, %v1263
  %v1268 = vmul.f32 %v1241, %v1263
  %v1269 = vmul.f32 %v1246, %v1263
  %v1270 = vmul.f32 %v1251, %v1263
  %v1271 = vmul.f32 %v1256, %v1263
  %v1272 = vmul.f32 %v1261, %v1263
  %v1273 = vadd.f32 %v1199, %v1264
  %v1274 = vadd.f32 %v1200, %v1265
  %v1275 = vadd.f32 %v1201, %v1266
  %v1276 = vadd.f32 %v1202, %v1267
  %v1277 = vadd.f32 %v1203, %v1268
  %v1278 = vadd.f32 %v1204, %v1269
  %v1279 = vadd.f32 %v1205, %v1270
  %v1280 = vadd.f32 %v1206, %v1271
  %v1281 = vadd.f32 %v1207, %v1272
  %v1282 = vld [vmem:[%s0 + $0x3] sm:$0xff]
  %v1283 = vld [vmem:[%s0 + $0xb] sm:$0xff]
  %v1284 = vld [vmem:[%s0 + $0x13] sm:$0xff]
  %v1285 = vld [vmem:[%s0 + $0x1b] sm:$0xff]
  %v1286 = vld [vmem:[%s0 + $0x23] sm:$0xff]
  %v1287 = vld [vmem:[%s0 + $0x2b] sm:$0xff]
  %v1288 = vld [vmem:[%s0 + $0x33] sm:$0xff]
  %v1289 = vld [vmem:[%s0 + $0x3b] sm:$0xff]
  %v1290 = vld [vmem:[%s0 + $0x43] sm:$0x7]
  %v1291 = vld [vmem:[%s1 + $0x3] sm:$0x1]
  %1293 = vset.pattern.permute.xlu0 1
  %1294 = vperm.xlu0 %1293, %v1282
  %v1295 = vpop.permute.xlu0 %1294
  %1298 = vset.pattern.permute.xlu0 1
  %1299 = vperm.xlu0 %1298, %v1283
  %v1300 = vpop.permute.xlu0 %1299
  %1303 = vset.pattern.permute.xlu0 1
  %1304 = vperm.xlu0 %1303, %v1284
  %v1305 = vpop.permute.xlu0 %1304
  %1308 = vset.pattern.permute.xlu0 1
  %1309 = vperm.xlu0 %1308, %v1285
  %v1310 = vpop.permute.xlu0 %1309
  %1313 = vset.pattern.permute.xlu0 1
  %1314 = vperm.xlu0 %1313, %v1286
  %v1315 = vpop.permute.xlu0 %1314
  %1318 = vset.pattern.permute.xlu0 1
  %1319 = vperm.xlu0 %1318, %v1287
  %v1320 = vpop.permute.xlu0 %1319
  %1323 = vset.pattern.permute.xlu0 1
  %1324 = vperm.xlu0 %1323, %v1288
  %v1325 = vpop.permute.xlu0 %1324
  %1328 = vset.pattern.permute.xlu0 1
  %1329 = vperm.xlu0 %1328, %v1289
  %v1330 = vpop.permute.xlu0 %1329
  %1333 = vset.pattern.permute.xlu0 1
  %1334 = vperm.xlu0 %1333, %v1290
  %v1335 = vpop.permute.xlu0 %1334
  %v1337 = vperm.slane %v1291, 0
  %v1338 = vmul.f32 %v1295, %v1337
  %v1339 = vmul.f32 %v1300, %v1337
  %v1340 = vmul.f32 %v1305, %v1337
  %v1341 = vmul.f32 %v1310, %v1337
  %v1342 = vmul.f32 %v1315, %v1337
  %v1343 = vmul.f32 %v1320, %v1337
  %v1344 = vmul.f32 %v1325, %v1337
  %v1345 = vmul.f32 %v1330, %v1337
  %v1346 = vmul.f32 %v1335, %v1337
  %v1347 = vadd.f32 %v1273, %v1338
  %v1348 = vadd.f32 %v1274, %v1339
  %v1349 = vadd.f32 %v1275, %v1340
  %v1350 = vadd.f32 %v1276, %v1341
  %v1351 = vadd.f32 %v1277, %v1342
  %v1352 = vadd.f32 %v1278, %v1343
  %v1353 = vadd.f32 %v1279, %v1344
  %v1354 = vadd.f32 %v1280, %v1345
  %v1355 = vadd.f32 %v1281, %v1346
  %v1356 = vld [vmem:[%s0 + $0x4] sm:$0xff]
  %v1357 = vld [vmem:[%s0 + $0xc] sm:$0xff]
  %v1358 = vld [vmem:[%s0 + $0x14] sm:$0xff]
  %v1359 = vld [vmem:[%s0 + $0x1c] sm:$0xff]
  %v1360 = vld [vmem:[%s0 + $0x24] sm:$0xff]
  %v1361 = vld [vmem:[%s0 + $0x2c] sm:$0xff]
  %v1362 = vld [vmem:[%s0 + $0x34] sm:$0xff]
  %v1363 = vld [vmem:[%s0 + $0x3c] sm:$0xff]
  %v1364 = vld [vmem:[%s0 + $0x44] sm:$0x7]
  %v1365 = vld [vmem:[%s1 + $0x4] sm:$0x1]
  %1367 = vset.pattern.permute.xlu0 1
  %1368 = vperm.xlu0 %1367, %v1356
  %v1369 = vpop.permute.xlu0 %1368
  %1372 = vset.pattern.permute.xlu0 1
  %1373 = vperm.xlu0 %1372, %v1357
  %v1374 = vpop.permute.xlu0 %1373
  %1377 = vset.pattern.permute.xlu0 1
  %1378 = vperm.xlu0 %1377, %v1358
  %v1379 = vpop.permute.xlu0 %1378
  %1382 = vset.pattern.permute.xlu0 1
  %1383 = vperm.xlu0 %1382, %v1359
  %v1384 = vpop.permute.xlu0 %1383
  %1387 = vset.pattern.permute.xlu0 1
  %1388 = vperm.xlu0 %1387, %v1360
  %v1389 = vpop.permute.xlu0 %1388
  %1392 = vset.pattern.permute.xlu0 1
  %1393 = vperm.xlu0 %1392, %v1361
  %v1394 = vpop.permute.xlu0 %1393
  %1397 = vset.pattern.permute.xlu0 1
  %1398 = vperm.xlu0 %1397, %v1362
  %v1399 = vpop.permute.xlu0 %1398
  %1402 = vset.pattern.permute.xlu0 1
  %1403 = vperm.xlu0 %1402, %v1363
  %v1404 = vpop.permute.xlu0 %1403
  %1407 = vset.pattern.permute.xlu0 1
  %1408 = vperm.xlu0 %1407, %v1364
  %v1409 = vpop.permute.xlu0 %1408
  %v1411 = vperm.slane %v1365, 0
  %v1412 = vmul.f32 %v1369, %v1411
  %v1413 = vmul.f32 %v1374, %v1411
  %v1414 = vmul.f32 %v1379, %v1411
  %v1415 = vmul.f32 %v1384, %v1411
  %v1416 = vmul.f32 %v1389, %v1411
  %v1417 = vmul.f32 %v1394, %v1411
  %v1418 = vmul.f32 %v1399, %v1411
  %v1419 = vmul.f32 %v1404, %v1411
  %v1420 = vmul.f32 %v1409, %v1411
  %v1421 = vadd.f32 %v1347, %v1412
  %v1422 = vadd.f32 %v1348, %v1413
  %v1423 = vadd.f32 %v1349, %v1414
  %v1424 = vadd.f32 %v1350, %v1415
  %v1425 = vadd.f32 %v1351, %v1416
  %v1426 = vadd.f32 %v1352, %v1417
  %v1427 = vadd.f32 %v1353, %v1418
  %v1428 = vadd.f32 %v1354, %v1419
  %v1429 = vadd.f32 %v1355, %v1420
  %v1430 = vld [vmem:[%s0 + $0x5] sm:$0xff]
  %v1431 = vld [vmem:[%s0 + $0xd] sm:$0xff]
  %v1432 = vld [vmem:[%s0 + $0x15] sm:$0xff]
  %v1433 = vld [vmem:[%s0 + $0x1d] sm:$0xff]
  %v1434 = vld [vmem:[%s0 + $0x25] sm:$0xff]
  %v1435 = vld [vmem:[%s0 + $0x2d] sm:$0xff]
  %v1436 = vld [vmem:[%s0 + $0x35] sm:$0xff]
  %v1437 = vld [vmem:[%s0 + $0x3d] sm:$0xff]
  %v1438 = vld [vmem:[%s0 + $0x45] sm:$0x7]
  %v1439 = vld [vmem:[%s1 + $0x5] sm:$0x1]
  %1441 = vset.pattern.permute.xlu0 1
  %1442 = vperm.xlu0 %1441, %v1430
  %v1443 = vpop.permute.xlu0 %1442
  %1446 = vset.pattern.permute.xlu0 1
  %1447 = vperm.xlu0 %1446, %v1431
  %v1448 = vpop.permute.xlu0 %1447
  %1451 = vset.pattern.permute.xlu0 1
  %1452 = vperm.xlu0 %1451, %v1432
  %v1453 = vpop.permute.xlu0 %1452
  %1456 = vset.pattern.permute.xlu0 1
  %1457 = vperm.xlu0 %1456, %v1433
  %v1458 = vpop.permute.xlu0 %1457
  %1461 = vset.pattern.permute.xlu0 1
  %1462 = vperm.xlu0 %1461, %v1434
  %v1463 = vpop.permute.xlu0 %1462
  %1466 = vset.pattern.permute.xlu0 1
  %1467 = vperm.xlu0 %1466, %v1435
  %v1468 = vpop.permute.xlu0 %1467
  %1471 = vset.pattern.permute.xlu0 1
  %1472 = vperm.xlu0 %1471, %v1436
  %v1473 = vpop.permute.xlu0 %1472
  %1476 = vset.pattern.permute.xlu0 1
  %1477 = vperm.xlu0 %1476, %v1437
  %v1478 = vpop.permute.xlu0 %1477
  %1481 = vset.pattern.permute.xlu0 1
  %1482 = vperm.xlu0 %1481, %v1438
  %v1483 = vpop.permute.xlu0 %1482
  %v1485 = vperm.slane %v1439, 0
  %v1486 = vmul.f32 %v1443, %v1485
  %v1487 = vmul.f32 %v1448, %v1485
  %v1488 = vmul.f32 %v1453, %v1485
  %v1489 = vmul.f32 %v1458, %v1485
  %v1490 = vmul.f32 %v1463, %v1485
  %v1491 = vmul.f32 %v1468, %v1485
  %v1492 = vmul.f32 %v1473, %v1485
  %v1493 = vmul.f32 %v1478, %v1485
  %v1494 = vmul.f32 %v1483, %v1485
  %v1495 = vadd.f32 %v1421, %v1486
  %v1496 = vadd.f32 %v1422, %v1487
  %v1497 = vadd.f32 %v1423, %v1488
  %v1498 = vadd.f32 %v1424, %v1489
  %v1499 = vadd.f32 %v1425, %v1490
  %v1500 = vadd.f32 %v1426, %v1491
  %v1501 = vadd.f32 %v1427, %v1492
  %v1502 = vadd.f32 %v1428, %v1493
  %v1503 = vadd.f32 %v1429, %v1494
  %v1504 = vld [vmem:[%s2] sm:$0x1]
  %v1506 = vperm.slane %v1504, 0
  %v1508 = vadd.f32 %v1495, %v1506
  %v1509 = vadd.f32 %v1496, %v1506
  %v1510 = vadd.f32 %v1497, %v1506
  %v1511 = vadd.f32 %v1498, %v1506
  %v1512 = vadd.f32 %v1499, %v1506
  %v1513 = vadd.f32 %v1500, %v1506
  %v1514 = vadd.f32 %v1501, %v1506
  %v1515 = vadd.f32 %v1502, %v1506
  %v1516 = vadd.f32 %v1503, %v1506
  %v1517 = vmax.f32 %v1508, 0.0
  %v1518 = vmax.f32 %v1509, 0.0
  %v1519 = vmax.f32 %v1510, 0.0
  %v1520 = vmax.f32 %v1511, 0.0
  %v1521 = vmax.f32 %v1512, 0.0
  %v1522 = vmax.f32 %v1513, 0.0
  %v1523 = vmax.f32 %v1514, 0.0
  %v1524 = vmax.f32 %v1515, 0.0
  %v1525 = vmax.f32 %v1516, 0.0
  %v1526 = vsel %vm48, %v1517, 0.0
  %v1527 = vsel %vm49, %v1518, 0.0
  %v1528 = vsel %vm50, %v1519, 0.0
  %v1529 = vsel %vm51, %v1520, 0.0
  %v1530 = vsel %vm52, %v1521, 0.0
  %v1531 = vsel %vm53, %v1522, 0.0
  %v1532 = vsel %vm54, %v1523, 0.0
  %v1533 = vsel %vm55, %v1524, 0.0
  %v1534 = vsel %vm56, %v1525, 0.0
  %v1535 = vld [vmem:[%s3] sm:$0xff]
  %v1536 = vld [vmem:[%s3 + $0x8] sm:$0xff]
  %v1537 = vld [vmem:[%s3 + $0x10] sm:$0xff]
  %v1538 = vld [vmem:[%s3 + $0x18] sm:$0xff]
  %v1539 = vld [vmem:[%s536] sm:$0xff]
  %v1540 = vld [vmem:[%s536 + $0x8] sm:$0xff]
  %v1541 = vld [vmem:[%s536 + $0x10] sm:$0xff]
  %v1542 = vld [vmem:[%s536 + $0x18] sm:$0xff]
  %v1551 = vrot.slane %v1526, 1
  %v1552 = vrot.slane %v1527, 1
  %v1553 = vsel %vm549, %v1551, %v1552
  %v1554 = vrot.slane %v1528, 1
  %v1555 = vsel %vm549, %v1552, %v1554
  %v1556 = vrot.slane %v1529, 1
  %v1557 = vsel %vm549, %v1554, %v1556
  %v1558 = vrot.slane %v1530, 1
  %v1559 = vsel %vm549, %v1556, %v1558
  %v1560 = vrot.slane %v1531, 1
  %v1561 = vsel %vm549, %v1558, %v1560
  %v1562 = vrot.slane %v1532, 1
  %v1563 = vsel %vm549, %v1560, %v1562
  %v1564 = vrot.slane %v1533, 1
  %v1565 = vsel %vm549, %v1562, %v1564
  %v1566 = vsel %vm565, %v1553, 0
  %v1568 = vsel %vm565, %v1555, 0
  %v1570 = vsel %vm565, %v1557, 0
  %v1572 = vsel %vm565, %v1559, 0
  %v1574 = vsel %vm565, %v1561, 0
  %v1576 = vsel %vm565, %v1563, 0
  %v1578 = vsel %vm565, %v1565, 0
  %v1580 = vsel %vm565, %v1564, 0
  %1582 = vmatpush.msra.mxu0 0.0
  %1583 = vmatpush.msra.mxu0 0.0
  %1584 = vmatpush.msra.mxu0 0.0
  %1585 = vmatpush.msra.mxu0 0.0
  %1586 = vmatpush.msra.mxu0 0.0
  %1587 = vmatpush.msra.mxu0 0.0
  %1588 = vmatpush.msra.mxu0 0.0
  %1589 = vmatpush.msra.mxu0 0.0
  %1590 = vmatpush.msra.mxu0 0.0
  %1591 = vmatpush.msra.mxu0 0.0
  %1592 = vmatpush.msra.mxu0 0.0
  %1593 = vmatpush.msra.mxu0 0.0
  %1594 = vmatpush.msra.mxu0 %v1542
  %1595 = vmatpush.msra.mxu0 %v1541
  %1596 = vmatpush.msra.mxu0 %v1540
  %1597 = vmatpush.msra.mxu0 %v1539
  %1598 = vmatmul.f32.gmra.mxu0 %v1566
  %v1599 = vpop.f32.mrf.mxu0
  %v1600 = vadd.f32 0.0, %v1599
  %1601 = vmatmul.f32.gmra.mxu0 %v1568
  %v1602 = vpop.f32.mrf.mxu0
  %v1603 = vadd.f32 0.0, %v1602
  %1604 = vmatmul.f32.gmra.mxu0 %v1570
  %v1605 = vpop.f32.mrf.mxu0
  %v1606 = vadd.f32 0.0, %v1605
  %1607 = vmatmul.f32.gmra.mxu0 %v1572
  %v1608 = vpop.f32.mrf.mxu0
  %v1609 = vadd.f32 0.0, %v1608
  %1610 = vmatmul.f32.gmra.mxu0 %v1574
  %v1611 = vpop.f32.mrf.mxu0
  %v1612 = vadd.f32 0.0, %v1611
  %1613 = vmatmul.f32.gmra.mxu0 %v1576
  %v1614 = vpop.f32.mrf.mxu0
  %v1615 = vadd.f32 0.0, %v1614
  %1616 = vmatmul.f32.gmra.mxu0 %v1578
  %v1617 = vpop.f32.mrf.mxu0
  %v1618 = vadd.f32 0.0, %v1617
  %1619 = vmatmul.f32.gmra.mxu0 %v1580
  %v1620 = vpop.f32.mrf.mxu0
  %v1621 = vadd.f32 0.0, %v1620
  %1622 = vdwg.mxu0
  %v1623 = vsel %vm565, %v1526, 0
  %v1625 = vsel %vm565, %v1527, 0
  %v1627 = vsel %vm565, %v1528, 0
  %v1629 = vsel %vm565, %v1529, 0
  %v1631 = vsel %vm565, %v1530, 0
  %v1633 = vsel %vm565, %v1531, 0
  %v1635 = vsel %vm565, %v1532, 0
  %v1637 = vsel %vm565, %v1533, 0
  %1639 = vmatpush.msra.mxu0 0.0
  %1640 = vmatpush.msra.mxu0 0.0
  %1641 = vmatpush.msra.mxu0 0.0
  %1642 = vmatpush.msra.mxu0 0.0
  %1643 = vmatpush.msra.mxu0 0.0
  %1644 = vmatpush.msra.mxu0 0.0
  %1645 = vmatpush.msra.mxu0 0.0
  %1646 = vmatpush.msra.mxu0 0.0
  %1647 = vmatpush.msra.mxu0 0.0
  %1648 = vmatpush.msra.mxu0 0.0
  %1649 = vmatpush.msra.mxu0 0.0
  %1650 = vmatpush.msra.mxu0 0.0
  %1651 = vmatpush.msra.mxu0 %v1538
  %1652 = vmatpush.msra.mxu0 %v1537
  %1653 = vmatpush.msra.mxu0 %v1536
  %1654 = vmatpush.msra.mxu0 %v1535
  %1655 = vmatmul.f32.gmra.mxu0 %v1623
  %v1656 = vpop.f32.mrf.mxu0
  %v1657 = vadd.f32 %v1600, %v1656
  %1658 = vmatmul.f32.gmra.mxu0 %v1625
  %v1659 = vpop.f32.mrf.mxu0
  %v1660 = vadd.f32 %v1603, %v1659
  %1661 = vmatmul.f32.gmra.mxu0 %v1627
  %v1662 = vpop.f32.mrf.mxu0
  %v1663 = vadd.f32 %v1606, %v1662
  %1664 = vmatmul.f32.gmra.mxu0 %v1629
  %v1665 = vpop.f32.mrf.mxu0
  %v1666 = vadd.f32 %v1609, %v1665
  %1667 = vmatmul.f32.gmra.mxu0 %v1631
  %v1668 = vpop.f32.mrf.mxu0
  %v1669 = vadd.f32 %v1612, %v1668
  %1670 = vmatmul.f32.gmra.mxu0 %v1633
  %v1671 = vpop.f32.mrf.mxu0
  %v1672 = vadd.f32 %v1615, %v1671
  %1673 = vmatmul.f32.gmra.mxu0 %v1635
  %v1674 = vpop.f32.mrf.mxu0
  %v1675 = vadd.f32 %v1618, %v1674
  %1676 = vmatmul.f32.gmra.mxu0 %v1637
  %v1677 = vpop.f32.mrf.mxu0
  %v1678 = vadd.f32 %v1621, %v1677
  %1679 = vdwg.mxu0
  %v1680 = vld [vmem:[%s680] sm:$0xff]
  %v1681 = vld [vmem:[%s680 + $0x8] sm:$0xff]
  %v1682 = vld [vmem:[%s680 + $0x10] sm:$0xff]
  %v1683 = vld [vmem:[%s680 + $0x18] sm:$0xff]
  %v1684 = vrot.slane %v1526, 2
  %v1685 = vrot.slane %v1527, 2
  %v1686 = vsel %vm685, %v1684, %v1685
  %v1687 = vrot.slane %v1528, 2
  %v1688 = vsel %vm685, %v1685, %v1687
  %v1689 = vrot.slane %v1529, 2
  %v1690 = vsel %vm685, %v1687, %v1689
  %v1691 = vrot.slane %v1530, 2
  %v1692 = vsel %vm685, %v1689, %v1691
  %v1693 = vrot.slane %v1531, 2
  %v1694 = vsel %vm685, %v1691, %v1693
  %v1695 = vrot.slane %v1532, 2
  %v1696 = vsel %vm685, %v1693, %v1695
  %v1697 = vrot.slane %v1533, 2
  %v1698 = vsel %vm685, %v1695, %v1697
  %v1699 = vsel %vm565, %v1686, 0
  %v1701 = vsel %vm565, %v1688, 0
  %v1703 = vsel %vm565, %v1690, 0
  %v1705 = vsel %vm565, %v1692, 0
  %v1707 = vsel %vm565, %v1694, 0
  %v1709 = vsel %vm565, %v1696, 0
  %v1711 = vsel %vm565, %v1698, 0
  %v1713 = vsel %vm565, %v1697, 0
  %1715 = vmatpush.msra.mxu0 0.0
  %1716 = vmatpush.msra.mxu0 0.0
  %1717 = vmatpush.msra.mxu0 0.0
  %1718 = vmatpush.msra.mxu0 0.0
  %1719 = vmatpush.msra.mxu0 0.0
  %1720 = vmatpush.msra.mxu0 0.0
  %1721 = vmatpush.msra.mxu0 0.0
  %1722 = vmatpush.msra.mxu0 0.0
  %1723 = vmatpush.msra.mxu0 0.0
  %1724 = vmatpush.msra.mxu0 0.0
  %1725 = vmatpush.msra.mxu0 0.0
  %1726 = vmatpush.msra.mxu0 0.0
  %1727 = vmatpush.msra.mxu0 %v1683
  %1728 = vmatpush.msra.mxu0 %v1682
  %1729 = vmatpush.msra.mxu0 %v1681
  %1730 = vmatpush.msra.mxu0 %v1680
  %1731 = vmatmul.f32.gmra.mxu0 %v1699
  %v1732 = vpop.f32.mrf.mxu0
  %v1733 = vadd.f32 0.0, %v1732
  %1734 = vmatmul.f32.gmra.mxu0 %v1701
  %v1735 = vpop.f32.mrf.mxu0
  %v1736 = vadd.f32 0.0, %v1735
  %1737 = vmatmul.f32.gmra.mxu0 %v1703
  %v1738 = vpop.f32.mrf.mxu0
  %v1739 = vadd.f32 0.0, %v1738
  %1740 = vmatmul.f32.gmra.mxu0 %v1705
  %v1741 = vpop.f32.mrf.mxu0
  %v1742 = vadd.f32 0.0, %v1741
  %1743 = vmatmul.f32.gmra.mxu0 %v1707
  %v1744 = vpop.f32.mrf.mxu0
  %v1745 = vadd.f32 0.0, %v1744
  %1746 = vmatmul.f32.gmra.mxu0 %v1709
  %v1747 = vpop.f32.mrf.mxu0
  %v1748 = vadd.f32 0.0, %v1747
  %1749 = vmatmul.f32.gmra.mxu0 %v1711
  %v1750 = vpop.f32.mrf.mxu0
  %v1751 = vadd.f32 0.0, %v1750
  %1752 = vmatmul.f32.gmra.mxu0 %v1713
  %v1753 = vpop.f32.mrf.mxu0
  %v1754 = vadd.f32 0.0, %v1753
  %1755 = vdwg.mxu0
  %v1756 = vadd.f32 %v1657, %v1733
  %v1757 = vadd.f32 %v1660, %v1736
  %v1758 = vadd.f32 %v1663, %v1739
  %v1759 = vadd.f32 %v1666, %v1742
  %v1760 = vadd.f32 %v1669, %v1745
  %v1761 = vadd.f32 %v1672, %v1748
  %v1762 = vadd.f32 %v1675, %v1751
  %v1763 = vadd.f32 %v1678, %v1754
  %v1764 = vld [vmem:[%s766] sm:$0xff]
  %v1765 = vld [vmem:[%s766 + $0x8] sm:$0xff]
  %v1766 = vld [vmem:[%s766 + $0x10] sm:$0xff]
  %v1767 = vld [vmem:[%s766 + $0x18] sm:$0xff]
  %v1769 = vrot.slane %v1526, 3
  %v1770 = vrot.slane %v1527, 3
  %v1771 = vsel %vm772, %v1769, %v1770
  %v1772 = vrot.slane %v1528, 3
  %v1773 = vsel %vm772, %v1770, %v1772
  %v1774 = vrot.slane %v1529, 3
  %v1775 = vsel %vm772, %v1772, %v1774
  %v1776 = vrot.slane %v1530, 3
  %v1777 = vsel %vm772, %v1774, %v1776
  %v1778 = vrot.slane %v1531, 3
  %v1779 = vsel %vm772, %v1776, %v1778
  %v1780 = vrot.slane %v1532, 3
  %v1781 = vsel %vm772, %v1778, %v1780
  %v1782 = vrot.slane %v1533, 3
  %v1783 = vsel %vm772, %v1780, %v1782
  %v1784 = vrot.slane %v1534, 3
  %v1785 = vsel %vm772, %v1782, %v1784
  %v1786 = vsel %vm565, %v1771, 0
  %v1788 = vsel %vm565, %v1773, 0
  %v1790 = vsel %vm565, %v1775, 0
  %v1792 = vsel %vm565, %v1777, 0
  %v1794 = vsel %vm565, %v1779, 0
  %v1796 = vsel %vm565, %v1781, 0
  %v1798 = vsel %vm565, %v1783, 0
  %v1800 = vsel %vm565, %v1785, 0
  %1802 = vmatpush.msra.mxu0 0.0
  %1803 = vmatpush.msra.mxu0 0.0
  %1804 = vmatpush.msra.mxu0 0.0
  %1805 = vmatpush.msra.mxu0 0.0
  %1806 = vmatpush.msra.mxu0 0.0
  %1807 = vmatpush.msra.mxu0 0.0
  %1808 = vmatpush.msra.mxu0 0.0
  %1809 = vmatpush.msra.mxu0 0.0
  %1810 = vmatpush.msra.mxu0 0.0
  %1811 = vmatpush.msra.mxu0 0.0
  %1812 = vmatpush.msra.mxu0 0.0
  %1813 = vmatpush.msra.mxu0 0.0
  %1814 = vmatpush.msra.mxu0 %v1767
  %1815 = vmatpush.msra.mxu0 %v1766
  %1816 = vmatpush.msra.mxu0 %v1765
  %1817 = vmatpush.msra.mxu0 %v1764
  %1818 = vmatmul.f32.gmra.mxu0 %v1786
  %v1819 = vpop.f32.mrf.mxu0
  %v1820 = vadd.f32 0.0, %v1819
  %1821 = vmatmul.f32.gmra.mxu0 %v1788
  %v1822 = vpop.f32.mrf.mxu0
  %v1823 = vadd.f32 0.0, %v1822
  %1824 = vmatmul.f32.gmra.mxu0 %v1790
  %v1825 = vpop.f32.mrf.mxu0
  %v1826 = vadd.f32 0.0, %v1825
  %1827 = vmatmul.f32.gmra.mxu0 %v1792
  %v1828 = vpop.f32.mrf.mxu0
  %v1829 = vadd.f32 0.0, %v1828
  %1830 = vmatmul.f32.gmra.mxu0 %v1794
  %v1831 = vpop.f32.mrf.mxu0
  %v1832 = vadd.f32 0.0, %v1831
  %1833 = vmatmul.f32.gmra.mxu0 %v1796
  %v1834 = vpop.f32.mrf.mxu0
  %v1835 = vadd.f32 0.0, %v1834
  %1836 = vmatmul.f32.gmra.mxu0 %v1798
  %v1837 = vpop.f32.mrf.mxu0
  %v1838 = vadd.f32 0.0, %v1837
  %1839 = vmatmul.f32.gmra.mxu0 %v1800
  %v1840 = vpop.f32.mrf.mxu0
  %v1841 = vadd.f32 0.0, %v1840
  %1842 = vdwg.mxu0
  %v1843 = vadd.f32 %v1756, %v1820
  %v1844 = vadd.f32 %v1757, %v1823
  %v1845 = vadd.f32 %v1758, %v1826
  %v1846 = vadd.f32 %v1759, %v1829
  %v1847 = vadd.f32 %v1760, %v1832
  %v1848 = vadd.f32 %v1761, %v1835
  %v1849 = vadd.f32 %v1762, %v1838
  %v1850 = vadd.f32 %v1763, %v1841
  %v1851 = vld [vmem:[%s855] sm:$0xff]
  %v1852 = vld [vmem:[%s855 + $0x8] sm:$0xff]
  %v1853 = vld [vmem:[%s855 + $0x10] sm:$0xff]
  %v1854 = vld [vmem:[%s855 + $0x18] sm:$0xff]
  %v1855 = vrot.slane %v1526, 4
  %v1856 = vrot.slane %v1527, 4
  %v1857 = vsel %vm860, %v1855, %v1856
  %v1858 = vrot.slane %v1528, 4
  %v1859 = vsel %vm860, %v1856, %v1858
  %v1860 = vrot.slane %v1529, 4
  %v1861 = vsel %vm860, %v1858, %v1860
  %v1862 = vrot.slane %v1530, 4
  %v1863 = vsel %vm860, %v1860, %v1862
  %v1864 = vrot.slane %v1531, 4
  %v1865 = vsel %vm860, %v1862, %v1864
  %v1866 = vrot.slane %v1532, 4
  %v1867 = vsel %vm860, %v1864, %v1866
  %v1868 = vrot.slane %v1533, 4
  %v1869 = vsel %vm860, %v1866, %v1868
  %v1870 = vrot.slane %v1534, 4
  %v1871 = vsel %vm860, %v1868, %v1870
  %v1872 = vsel %vm565, %v1857, 0
  %v1874 = vsel %vm565, %v1859, 0
  %v1876 = vsel %vm565, %v1861, 0
  %v1878 = vsel %vm565, %v1863, 0
  %v1880 = vsel %vm565, %v1865, 0
  %v1882 = vsel %vm565, %v1867, 0
  %v1884 = vsel %vm565, %v1869, 0
  %v1886 = vsel %vm565, %v1871, 0
  %1888 = vmatpush.msra.mxu0 0.0
  %1889 = vmatpush.msra.mxu0 0.0
  %1890 = vmatpush.msra.mxu0 0.0
  %1891 = vmatpush.msra.mxu0 0.0
  %1892 = vmatpush.msra.mxu0 0.0
  %1893 = vmatpush.msra.mxu0 0.0
  %1894 = vmatpush.msra.mxu0 0.0
  %1895 = vmatpush.msra.mxu0 0.0
  %1896 = vmatpush.msra.mxu0 0.0
  %1897 = vmatpush.msra.mxu0 0.0
  %1898 = vmatpush.msra.mxu0 0.0
  %1899 = vmatpush.msra.mxu0 0.0
  %1900 = vmatpush.msra.mxu0 %v1854
  %1901 = vmatpush.msra.mxu0 %v1853
  %1902 = vmatpush.msra.mxu0 %v1852
  %1903 = vmatpush.msra.mxu0 %v1851
  %1904 = vmatmul.f32.gmra.mxu0 %v1872
  %v1905 = vpop.f32.mrf.mxu0
  %v1906 = vadd.f32 0.0, %v1905
  %1907 = vmatmul.f32.gmra.mxu0 %v1874
  %v1908 = vpop.f32.mrf.mxu0
  %v1909 = vadd.f32 0.0, %v1908
  %1910 = vmatmul.f32.gmra.mxu0 %v1876
  %v1911 = vpop.f32.mrf.mxu0
  %v1912 = vadd.f32 0.0, %v1911
  %1913 = vmatmul.f32.gmra.mxu0 %v1878
  %v1914 = vpop.f32.mrf.mxu0
  %v1915 = vadd.f32 0.0, %v1914
  %1916 = vmatmul.f32.gmra.mxu0 %v1880
  %v1917 = vpop.f32.mrf.mxu0
  %v1918 = vadd.f32 0.0, %v1917
  %1919 = vmatmul.f32.gmra.mxu0 %v1882
  %v1920 = vpop.f32.mrf.mxu0
  %v1921 = vadd.f32 0.0, %v1920
  %1922 = vmatmul.f32.gmra.mxu0 %v1884
  %v1923 = vpop.f32.mrf.mxu0
  %v1924 = vadd.f32 0.0, %v1923
  %1925 = vmatmul.f32.gmra.mxu0 %v1886
  %v1926 = vpop.f32.mrf.mxu0
  %v1927 = vadd.f32 0.0, %v1926
  %1928 = vdwg.mxu0
  %v1929 = vadd.f32 %v1843, %v1906
  %v1930 = vadd.f32 %v1844, %v1909
  %v1931 = vadd.f32 %v1845, %v1912
  %v1932 = vadd.f32 %v1846, %v1915
  %v1933 = vadd.f32 %v1847, %v1918
  %v1934 = vadd.f32 %v1848, %v1921
  %v1935 = vadd.f32 %v1849, %v1924
  %v1936 = vadd.f32 %v1850, %v1927
  %v1937 = vld [vmem:[%s943] sm:$0xff]
  %v1938 = vld [vmem:[%s943 + $0x8] sm:$0xff]
  %v1939 = vld [vmem:[%s943 + $0x10] sm:$0xff]
  %v1940 = vld [vmem:[%s943 + $0x18] sm:$0xff]
  %v1941 = vrot.slane %v1526, 5
  %v1942 = vrot.slane %v1527, 5
  %v1943 = vsel %vm948, %v1941, %v1942
  %v1944 = vrot.slane %v1528, 5
  %v1945 = vsel %vm948, %v1942, %v1944
  %v1946 = vrot.slane %v1529, 5
  %v1947 = vsel %vm948, %v1944, %v1946
  %v1948 = vrot.slane %v1530, 5
  %v1949 = vsel %vm948, %v1946, %v1948
  %v1950 = vrot.slane %v1531, 5
  %v1951 = vsel %vm948, %v1948, %v1950
  %v1952 = vrot.slane %v1532, 5
  %v1953 = vsel %vm948, %v1950, %v1952
  %v1954 = vrot.slane %v1533, 5
  %v1955 = vsel %vm948, %v1952, %v1954
  %v1956 = vrot.slane %v1534, 5
  %v1957 = vsel %vm948, %v1954, %v1956
  %v1958 = vsel %vm565, %v1943, 0
  %v1960 = vsel %vm565, %v1945, 0
  %v1962 = vsel %vm565, %v1947, 0
  %v1964 = vsel %vm565, %v1949, 0
  %v1966 = vsel %vm565, %v1951, 0
  %v1968 = vsel %vm565, %v1953, 0
  %v1970 = vsel %vm565, %v1955, 0
  %v1972 = vsel %vm565, %v1957, 0
  %1974 = vmatpush.msra.mxu0 0.0
  %1975 = vmatpush.msra.mxu0 0.0
  %1976 = vmatpush.msra.mxu0 0.0
  %1977 = vmatpush.msra.mxu0 0.0
  %1978 = vmatpush.msra.mxu0 0.0
  %1979 = vmatpush.msra.mxu0 0.0
  %1980 = vmatpush.msra.mxu0 0.0
  %1981 = vmatpush.msra.mxu0 0.0
  %1982 = vmatpush.msra.mxu0 0.0
  %1983 = vmatpush.msra.mxu0 0.0
  %1984 = vmatpush.msra.mxu0 0.0
  %1985 = vmatpush.msra.mxu0 0.0
  %1986 = vmatpush.msra.mxu0 %v1940
  %1987 = vmatpush.msra.mxu0 %v1939
  %1988 = vmatpush.msra.mxu0 %v1938
  %1989 = vmatpush.msra.mxu0 %v1937
  %1990 = vmatmul.f32.gmra.mxu0 %v1958
  %v1991 = vpop.f32.mrf.mxu0
  %v1992 = vadd.f32 0.0, %v1991
  %1993 = vmatmul.f32.gmra.mxu0 %v1960
  %v1994 = vpop.f32.mrf.mxu0
  %v1995 = vadd.f32 0.0, %v1994
  %1996 = vmatmul.f32.gmra.mxu0 %v1962
  %v1997 = vpop.f32.mrf.mxu0
  %v1998 = vadd.f32 0.0, %v1997
  %1999 = vmatmul.f32.gmra.mxu0 %v1964
  %v2000 = vpop.f32.mrf.mxu0
  %v2001 = vadd.f32 0.0, %v2000
  %2002 = vmatmul.f32.gmra.mxu0 %v1966
  %v2003 = vpop.f32.mrf.mxu0
  %v2004 = vadd.f32 0.0, %v2003
  %2005 = vmatmul.f32.gmra.mxu0 %v1968
  %v2006 = vpop.f32.mrf.mxu0
  %v2007 = vadd.f32 0.0, %v2006
  %2008 = vmatmul.f32.gmra.mxu0 %v1970
  %v2009 = vpop.f32.mrf.mxu0
  %v2010 = vadd.f32 0.0, %v2009
  %2011 = vmatmul.f32.gmra.mxu0 %v1972
  %v2012 = vpop.f32.mrf.mxu0
  %v2013 = vadd.f32 0.0, %v2012
  %2014 = vdwg.mxu0
  %v2015 = vadd.f32 %v1929, %v1992
  %v2016 = vadd.f32 %v1930, %v1995
  %v2017 = vadd.f32 %v1931, %v1998
  %v2018 = vadd.f32 %v1932, %v2001
  %v2019 = vadd.f32 %v1933, %v2004
  %v2020 = vadd.f32 %v1934, %v2007
  %v2021 = vadd.f32 %v1935, %v2010
  %v2022 = vadd.f32 %v1936, %v2013
  %v2023 = vld [vmem:[%s4] sm:$0x1]
  %v2025 = vperm.slane %v2023, 0
  %v2027 = vadd.f32 %v2015, %v2025
  %v2028 = vadd.f32 %v2016, %v2025
  %v2029 = vadd.f32 %v2017, %v2025
  %v2030 = vadd.f32 %v2018, %v2025
  %v2031 = vadd.f32 %v2019, %v2025
  %v2032 = vadd.f32 %v2020, %v2025
  %v2033 = vadd.f32 %v2021, %v2025
  %v2034 = vadd.f32 %v2022, %v2025
  %v2035 = vmax.f32 %v2027, 0.0
  %v2036 = vmax.f32 %v2028, 0.0
  %v2037 = vmax.f32 %v2029, 0.0
  %v2038 = vmax.f32 %v2030, 0.0
  %v2039 = vmax.f32 %v2031, 0.0
  %v2040 = vmax.f32 %v2032, 0.0
  %v2041 = vmax.f32 %v2033, 0.0
  %v2042 = vmax.f32 %v2034, 0.0
  %s2043 = scalar_lea.vmem %s5, 64
  %2044 = vst.msk [vmem:[%s2043] sm:$0xff] %vm565, %v2035
  %2045 = vst.msk [vmem:[%s2043 + $0x8] sm:$0xff] %vm565, %v2036
  %2046 = vst.msk [vmem:[%s2043 + $0x10] sm:$0xff] %vm565, %v2037
  %2047 = vst.msk [vmem:[%s2043 + $0x18] sm:$0xff] %vm565, %v2038
  %2048 = vst.msk [vmem:[%s2043 + $0x20] sm:$0xff] %vm565, %v2039
  %2049 = vst.msk [vmem:[%s2043 + $0x28] sm:$0xff] %vm565, %v2040
  %2050 = vst.msk [vmem:[%s2043 + $0x30] sm:$0xff] %vm565, %v2041
  %2051 = vst.msk [vmem:[%s2043 + $0x38] sm:$0x3f] %vm1058, %v2042
  // Predicated region
  $region22: #{network_forward.2} parent=0 // pred_check
    _
  $region23: #{network_forward.2} parent=0 // pred_check_branch
    %2053 = sbr.rel (0) target = $region25
  $region24: #{network_forward.2} parent=0 // pred_region
    _
  $region25: #{network_forward.2} parent=0 // pred_fallthru
    _
  // Predicated region
  $region26: #{network_forward.2} parent=0 // pred_check
    _
  $region27: #{network_forward.2} parent=0 // pred_check_branch
    %2055 = sbr.rel (0) target = $region29
  $region28: #{network_forward.2} parent=0 // pred_region
    _
  $region29: #{network_forward.2} parent=0 // pred_fallthru
    _

// kernel: network_forward.3
$region0: #{network_forward.3}
  #allocation0 [shape = 'u32[]', space=smem, size = 0x4, offset = 0x4, fixed_abs, tag = 'smem constant byte address 0x4 - core index']
  #allocation1 [shape = 'u32[72,128]{1,0:T(1,128)}', space=vmem, size = 0x9000, scoped, tag = 'internal scratch']
  #allocation2 [shape = 'f32[2,62,32]{2,1,0:T(8,128)}', space=vmem, size = 0x10000, scoped, tag = 'scratch operand']
  %s0 = inlined_call_operand.vmem [shape: f32[2,62,32], index: 0, kind: input, shape index: {}]
  %s1 = inlined_call_operand.vmem [shape: f32[2,32,96], index: 1, kind: input, shape index: {}]
  %s2 = inlined_call_operand.vmem [shape: f32[2,1,96], index: 2, kind: input, shape index: {}]
  %s3 = inlined_call_operand.vmem [shape: f32[2,32,32], index: 3, kind: input, shape index: {}]
  %s4 = inlined_call_operand.vmem [shape: f32[2,1,32], index: 4, kind: input, shape index: {}]
  %s5 = inlined_call_operand.vmem [shape: f32[2,1,32], index: 5, kind: input, shape index: {}]
  %s6 = inlined_call_operand.vmem [shape: f32[2,1,32], index: 6, kind: input, shape index: {}]
  %s7 = inlined_call_operand.vmem [shape: f32[2,32,64], index: 7, kind: input, shape index: {}]
  %s8 = inlined_call_operand.vmem [shape: f32[2,1,64], index: 8, kind: input, shape index: {}]
  %s9 = inlined_call_operand.vmem [shape: f32[2,64,32], index: 9, kind: input, shape index: {}]
  %s10 = inlined_call_operand.vmem [shape: f32[2,1,32], index: 10, kind: input, shape index: {}]
  %s11 = inlined_call_operand.vmem [shape: f32[2,1,32], index: 11, kind: input, shape index: {}]
  %s12 = inlined_call_operand.vmem [shape: f32[2,1,32], index: 12, kind: input, shape index: {}]
  %s13 = inlined_call_operand.vmem [shape: f32[32,8], index: 13, kind: input, shape index: {}]
  %s14 = inlined_call_operand.vmem [shape: f32[1,8], index: 14, kind: input, shape index: {}]
  %s15 = inlined_call_operand.hbm [shape: f32[2,8], index: 15, kind: output, shape index: {}]
  %s16 = sld [smem:[#allocation0]]
  $region101: #{network_forward.3} parent=0
    _
  %s18 = ssub.s32 1, %s16
  %s19 = scalar_select 0, %s18, %s16
  $region1: #{network_forward.3} parent=0
    #allocation3 [shape = 'u8[1024]{0}', space=vmem, size = 0x400, scoped, tag = 'output window, operand 0, single buffered']
    #allocation4 [shape = 's32[2]{0}', space=sflag, size = 0x8, scoped, tag = 'scoped memory for network_forward.3']
    %20 = vsyncpa [#allocation4], 0
    loop: start=0, step=1, limit=4
    $region2: #{network_forward.3} parent=1 // loop_pre_header
      _
    $region3: #{network_forward.3} parent=1 // loop_header
      %s22 = sphi 0, %s26
      %p23 = scmp.ge.s32.totalorder %s22, 4
      %s30 = sphi 0, %s30
      %s32 = sphi 0, %s30
      %s33 = sphi 0, %s32
      %s47 = sphi 0, %s33
      %s53 = sphi 0, %s55
      %s56 = sphi 0, %s53
      %s57 = sphi 0, %s56
      %s73 = sphi 0, %s57
      %s79 = sphi 0, %s81
      %s82 = sphi 0, %s79
      %s83 = sphi 0, %s82
      %s99 = sphi 0, %s83
      %s105 = sphi 0, %s107
      %s108 = sphi 0, %s105
      %s109 = sphi 0, %s108
      %s125 = sphi 0, %s109
      %s131 = sphi 0, %s133
      %s134 = sphi 0, %s131
      %s135 = sphi 0, %s134
      %s151 = sphi 0, %s135
      %s157 = sphi 0, %s159
      %s160 = sphi 0, %s157
      %s161 = sphi 0, %s160
      %s177 = sphi 0, %s161
      %s183 = sphi 0, %s185
      %s186 = sphi 0, %s183
      %s187 = sphi 0, %s186
      %s203 = sphi 0, %s187
      %s209 = sphi 0, %s211
      %s212 = sphi 0, %s209
      %s213 = sphi 0, %s212
      %s229 = sphi 0, %s213
      %s235 = sphi 0, %s237
      %s238 = sphi 0, %s235
      %s239 = sphi 0, %s238
      %s255 = sphi 0, %s239
      %s261 = sphi 0, %s263
      %s264 = sphi 0, %s261
      %s265 = sphi 0, %s264
      %s281 = sphi 0, %s265
      %s287 = sphi 0, %s289
      %s290 = sphi 0, %s287
      %s291 = sphi 0, %s290
      %s307 = sphi 0, %s291
      %s313 = sphi 0, %s315
      %s316 = sphi 0, %s313
      %s317 = sphi 0, %s316
      %s333 = sphi 0, %s317
      %s339 = sphi 0, %s341
      %s342 = sphi 0, %s339
      %s343 = sphi 0, %s342
      %s359 = sphi 0, %s343
      %s363 = sphi 0, %s363
      %s365 = sphi 0, %s363
      %s366 = sphi 0, %s365
      %s380 = sphi 0, %s366
      %s384 = sphi 0, %s384
      %s386 = sphi 0, %s384
      %s387 = sphi 0, %s386
      %s401 = sphi 0, %s387
      %s405 = sphi 0, %s405
      %s407 = sphi 0, %s405
      %s408 = sphi 0, %s407
      %s422 = sphi 0, %s408
    $region4: #{network_forward.3} parent=1 // loop_header_branch
      %25 = sbr.rel (%p23) target = $region8
    $region5: #{network_forward.3} parent=1 // loop_body
      %s27 = ssub.s32 %s22, 1
      %s28 = ssub.s32 %s22, 2
      %s29 = sadd.s32 %s22, 1
      %s31 = sadd.s32 %s30, 1
      %p34 = scmp.eq.s32.totalorder %s22, 1
      %p35 = scmp.ne.s32.totalorder %s30, %s32
      %p36 = scmp.eq.s32.totalorder %s22, 0
      %p37 = por %p35, %p36
      %p38 = scmp.ne.s32.totalorder %s30, %s32
      %p39 = scmp.eq.s32.totalorder %s27, 1
      %p40 = por %p38, %p39
      %p41 = scmp.ne.s32.totalorder %s32, %s33
      %p42 = scmp.eq.s32.totalorder %s27, 0
      %p43 = por %p41, %p42
      %p44 = scmp.ne.s32.totalorder %s32, %s33
      %p45 = scmp.eq.s32.totalorder %s28, 1
      %p46 = por %p44, %p45
      %p48 = scmp.ne.s32.totalorder %s33, %s47
      %p49 = scmp.eq.s32.totalorder %s28, 0
      %p50 = por %p48, %p49
      %s51 = ssub.s32 %s22, %s29
      %p52 = scmp.eq.s32.totalorder %s51, 0
      %s54 = sadd.s32 %s53, 1
      %s55 = scalar_select %p52, %s53, %s54
      %p58 = pneg %p52
      %p59 = scmp.eq.s32.totalorder %s22, 1
      %p60 = por %p58, %p59
      %p61 = scmp.ne.s32.totalorder %s53, %s56
      %p62 = scmp.eq.s32.totalorder %s22, 0
      %p63 = por %p61, %p62
      %p64 = scmp.ne.s32.totalorder %s53, %s56
      %p65 = scmp.eq.s32.totalorder %s27, 1
      %p66 = por %p64, %p65
      %p67 = scmp.ne.s32.totalorder %s56, %s57
      %p68 = scmp.eq.s32.totalorder %s27, 0
      %p69 = por %p67, %p68
      %p70 = scmp.ne.s32.totalorder %s56, %s57
      %p71 = scmp.eq.s32.totalorder %s28, 1
      %p72 = por %p70, %p71
      %p74 = scmp.ne.s32.totalorder %s57, %s73
      %p75 = scmp.eq.s32.totalorder %s28, 0
      %p76 = por %p74, %p75
      %s77 = ssub.s32 %s22, %s29
      %p78 = scmp.eq.s32.totalorder %s77, 0
      %s80 = sadd.s32 %s79, 1
      %s81 = scalar_select %p78, %s79, %s80
      %p84 = pneg %p78
      %p85 = scmp.eq.s32.totalorder %s22, 1
      %p86 = por %p84, %p85
      %p87 = scmp.ne.s32.totalorder %s79, %s82
      %p88 = scmp.eq.s32.totalorder %s22, 0
      %p89 = por %p87, %p88
      %p90 = scmp.ne.s32.totalorder %s79, %s82
      %p91 = scmp.eq.s32.totalorder %s27, 1
      %p92 = por %p90, %p91
      %p93 = scmp.ne.s32.totalorder %s82, %s83
      %p94 = scmp.eq.s32.totalorder %s27, 0
      %p95 = por %p93, %p94
      %p96 = scmp.ne.s32.totalorder %s82, %s83
      %p97 = scmp.eq.s32.totalorder %s28, 1
      %p98 = por %p96, %p97
      %p100 = scmp.ne.s32.totalorder %s83, %s99
      %p101 = scmp.eq.s32.totalorder %s28, 0
      %p102 = por %p100, %p101
      %s103 = ssub.s32 %s22, %s29
      %p104 = scmp.eq.s32.totalorder %s103, 0
      %s106 = sadd.s32 %s105, 1
      %s107 = scalar_select %p104, %s105, %s106
      %p110 = pneg %p104
      %p111 = scmp.eq.s32.totalorder %s22, 1
      %p112 = por %p110, %p111
      %p113 = scmp.ne.s32.totalorder %s105, %s108
      %p114 = scmp.eq.s32.totalorder %s22, 0
      %p115 = por %p113, %p114
      %p116 = scmp.ne.s32.totalorder %s105, %s108
      %p117 = scmp.eq.s32.totalorder %s27, 1
      %p118 = por %p116, %p117
      %p119 = scmp.ne.s32.totalorder %s108, %s109
      %p120 = scmp.eq.s32.totalorder %s27, 0
      %p121 = por %p119, %p120
      %p122 = scmp.ne.s32.totalorder %s108, %s109
      %p123 = scmp.eq.s32.totalorder %s28, 1
      %p124 = por %p122, %p123
      %p126 = scmp.ne.s32.totalorder %s109, %s125
      %p127 = scmp.eq.s32.totalorder %s28, 0
      %p128 = por %p126, %p127
      %s129 = ssub.s32 %s22, %s29
      %p130 = scmp.eq.s32.totalorder %s129, 0
      %s132 = sadd.s32 %s131, 1
      %s133 = scalar_select %p130, %s131, %s132
      %p136 = pneg %p130
      %p137 = scmp.eq.s32.totalorder %s22, 1
      %p138 = por %p136, %p137
      %p139 = scmp.ne.s32.totalorder %s131, %s134
      %p140 = scmp.eq.s32.totalorder %s22, 0
      %p141 = por %p139, %p140
      %p142 = scmp.ne.s32.totalorder %s131, %s134
      %p143 = scmp.eq.s32.totalorder %s27, 1
      %p144 = por %p142, %p143
      %p145 = scmp.ne.s32.totalorder %s134, %s135
      %p146 = scmp.eq.s32.totalorder %s27, 0
      %p147 = por %p145, %p146
      %p148 = scmp.ne.s32.totalorder %s134, %s135
      %p149 = scmp.eq.s32.totalorder %s28, 1
      %p150 = por %p148, %p149
      %p152 = scmp.ne.s32.totalorder %s135, %s151
      %p153 = scmp.eq.s32.totalorder %s28, 0
      %p154 = por %p152, %p153
      %s155 = ssub.s32 %s22, %s29
      %p156 = scmp.eq.s32.totalorder %s155, 0
      %s158 = sadd.s32 %s157, 1
      %s159 = scalar_select %p156, %s157, %s158
      %p162 = pneg %p156
      %p163 = scmp.eq.s32.totalorder %s22, 1
      %p164 = por %p162, %p163
      %p165 = scmp.ne.s32.totalorder %s157, %s160
      %p166 = scmp.eq.s32.totalorder %s22, 0
      %p167 = por %p165, %p166
      %p168 = scmp.ne.s32.totalorder %s157, %s160
      %p169 = scmp.eq.s32.totalorder %s27, 1
      %p170 = por %p168, %p169
      %p171 = scmp.ne.s32.totalorder %s160, %s161
      %p172 = scmp.eq.s32.totalorder %s27, 0
      %p173 = por %p171, %p172
      %p174 = scmp.ne.s32.totalorder %s160, %s161
      %p175 = scmp.eq.s32.totalorder %s28, 1
      %p176 = por %p174, %p175
      %p178 = scmp.ne.s32.totalorder %s161, %s177
      %p179 = scmp.eq.s32.totalorder %s28, 0
      %p180 = por %p178, %p179
      %s181 = ssub.s32 %s22, %s29
      %p182 = scmp.eq.s32.totalorder %s181, 0
      %s184 = sadd.s32 %s183, 1
      %s185 = scalar_select %p182, %s183, %s184
      %p188 = pneg %p182
      %p189 = scmp.eq.s32.totalorder %s22, 1
      %p190 = por %p188, %p189
      %p191 = scmp.ne.s32.totalorder %s183, %s186
      %p192 = scmp.eq.s32.totalorder %s22, 0
      %p193 = por %p191, %p192
      %p194 = scmp.ne.s32.totalorder %s183, %s186
      %p195 = scmp.eq.s32.totalorder %s27, 1
      %p196 = por %p194, %p195
      %p197 = scmp.ne.s32.totalorder %s186, %s187
      %p198 = scmp.eq.s32.totalorder %s27, 0
      %p199 = por %p197, %p198
      %p200 = scmp.ne.s32.totalorder %s186, %s187
      %p201 = scmp.eq.s32.totalorder %s28, 1
      %p202 = por %p200, %p201
      %p204 = scmp.ne.s32.totalorder %s187, %s203
      %p205 = scmp.eq.s32.totalorder %s28, 0
      %p206 = por %p204, %p205
      %s207 = ssub.s32 %s22, %s29
      %p208 = scmp.eq.s32.totalorder %s207, 0
      %s210 = sadd.s32 %s209, 1
      %s211 = scalar_select %p208, %s209, %s210
      %p214 = pneg %p208
      %p215 = scmp.eq.s32.totalorder %s22, 1
      %p216 = por %p214, %p215
      %p217 = scmp.ne.s32.totalorder %s209, %s212
      %p218 = scmp.eq.s32.totalorder %s22, 0
      %p219 = por %p217, %p218
      %p220 = scmp.ne.s32.totalorder %s209, %s212
      %p221 = scmp.eq.s32.totalorder %s27, 1
      %p222 = por %p220, %p221
      %p223 = scmp.ne.s32.totalorder %s212, %s213
      %p224 = scmp.eq.s32.totalorder %s27, 0
      %p225 = por %p223, %p224
      %p226 = scmp.ne.s32.totalorder %s212, %s213
      %p227 = scmp.eq.s32.totalorder %s28, 1
      %p228 = por %p226, %p227
      %p230 = scmp.ne.s32.totalorder %s213, %s229
      %p231 = scmp.eq.s32.totalorder %s28, 0
      %p232 = por %p230, %p231
      %s233 = ssub.s32 %s22, %s29
      %p234 = scmp.eq.s32.totalorder %s233, 0
      %s236 = sadd.s32 %s235, 1
      %s237 = scalar_select %p234, %s235, %s236
      %p240 = pneg %p234
      %p241 = scmp.eq.s32.totalorder %s22, 1
      %p242 = por %p240, %p241
      %p243 = scmp.ne.s32.totalorder %s235, %s238
      %p244 = scmp.eq.s32.totalorder %s22, 0
      %p245 = por %p243, %p244
      %p246 = scmp.ne.s32.totalorder %s235, %s238
      %p247 = scmp.eq.s32.totalorder %s27, 1
      %p248 = por %p246, %p247
      %p249 = scmp.ne.s32.totalorder %s238, %s239
      %p250 = scmp.eq.s32.totalorder %s27, 0
      %p251 = por %p249, %p250
      %p252 = scmp.ne.s32.totalorder %s238, %s239
      %p253 = scmp.eq.s32.totalorder %s28, 1
      %p254 = por %p252, %p253
      %p256 = scmp.ne.s32.totalorder %s239, %s255
      %p257 = scmp.eq.s32.totalorder %s28, 0
      %p258 = por %p256, %p257
      %s259 = ssub.s32 %s22, %s29
      %p260 = scmp.eq.s32.totalorder %s259, 0
      %s262 = sadd.s32 %s261, 1
      %s263 = scalar_select %p260, %s261, %s262
      %p266 = pneg %p260
      %p267 = scmp.eq.s32.totalorder %s22, 1
      %p268 = por %p266, %p267
      %p269 = scmp.ne.s32.totalorder %s261, %s264
      %p270 = scmp.eq.s32.totalorder %s22, 0
      %p271 = por %p269, %p270
      %p272 = scmp.ne.s32.totalorder %s261, %s264
      %p273 = scmp.eq.s32.totalorder %s27, 1
      %p274 = por %p272, %p273
      %p275 = scmp.ne.s32.totalorder %s264, %s265
      %p276 = scmp.eq.s32.totalorder %s27, 0
      %p277 = por %p275, %p276
      %p278 = scmp.ne.s32.totalorder %s264, %s265
      %p279 = scmp.eq.s32.totalorder %s28, 1
      %p280 = por %p278, %p279
      %p282 = scmp.ne.s32.totalorder %s265, %s281
      %p283 = scmp.eq.s32.totalorder %s28, 0
      %p284 = por %p282, %p283
      %s285 = ssub.s32 %s22, %s29
      %p286 = scmp.eq.s32.totalorder %s285, 0
      %s288 = sadd.s32 %s287, 1
      %s289 = scalar_select %p286, %s287, %s288
      %p292 = pneg %p286
      %p293 = scmp.eq.s32.totalorder %s22, 1
      %p294 = por %p292, %p293
      %p295 = scmp.ne.s32.totalorder %s287, %s290
      %p296 = scmp.eq.s32.totalorder %s22, 0
      %p297 = por %p295, %p296
      %p298 = scmp.ne.s32.totalorder %s287, %s290
      %p299 = scmp.eq.s32.totalorder %s27, 1
      %p300 = por %p298, %p299
      %p301 = scmp.ne.s32.totalorder %s290, %s291
      %p302 = scmp.eq.s32.totalorder %s27, 0
      %p303 = por %p301, %p302
      %p304 = scmp.ne.s32.totalorder %s290, %s291
      %p305 = scmp.eq.s32.totalorder %s28, 1
      %p306 = por %p304, %p305
      %p308 = scmp.ne.s32.totalorder %s291, %s307
      %p309 = scmp.eq.s32.totalorder %s28, 0
      %p310 = por %p308, %p309
      %s311 = ssub.s32 %s22, %s29
      %p312 = scmp.eq.s32.totalorder %s311, 0
      %s314 = sadd.s32 %s313, 1
      %s315 = scalar_select %p312, %s313, %s314
      %p318 = pneg %p312
      %p319 = scmp.eq.s32.totalorder %s22, 1
      %p320 = por %p318, %p319
      %p321 = scmp.ne.s32.totalorder %s313, %s316
      %p322 = scmp.eq.s32.totalorder %s22, 0
      %p323 = por %p321, %p322
      %p324 = scmp.ne.s32.totalorder %s313, %s316
      %p325 = scmp.eq.s32.totalorder %s27, 1
      %p326 = por %p324, %p325
      %p327 = scmp.ne.s32.totalorder %s316, %s317
      %p328 = scmp.eq.s32.totalorder %s27, 0
      %p329 = por %p327, %p328
      %p330 = scmp.ne.s32.totalorder %s316, %s317
      %p331 = scmp.eq.s32.totalorder %s28, 1
      %p332 = por %p330, %p331
      %p334 = scmp.ne.s32.totalorder %s317, %s333
      %p335 = scmp.eq.s32.totalorder %s28, 0
      %p336 = por %p334, %p335
      %s337 = ssub.s32 %s22, %s29
      %p338 = scmp.eq.s32.totalorder %s337, 0
      %s340 = sadd.s32 %s339, 1
      %s341 = scalar_select %p338, %s339, %s340
      %p344 = pneg %p338
      %p345 = scmp.eq.s32.totalorder %s22, 1
      %p346 = por %p344, %p345
      %p347 = scmp.ne.s32.totalorder %s339, %s342
      %p348 = scmp.eq.s32.totalorder %s22, 0
      %p349 = por %p347, %p348
      %p350 = scmp.ne.s32.totalorder %s339, %s342
      %p351 = scmp.eq.s32.totalorder %s27, 1
      %p352 = por %p350, %p351
      %p353 = scmp.ne.s32.totalorder %s342, %s343
      %p354 = scmp.eq.s32.totalorder %s27, 0
      %p355 = por %p353, %p354
      %p356 = scmp.ne.s32.totalorder %s342, %s343
      %p357 = scmp.eq.s32.totalorder %s28, 1
      %p358 = por %p356, %p357
      %p360 = scmp.ne.s32.totalorder %s343, %s359
      %p361 = scmp.eq.s32.totalorder %s28, 0
      %p362 = por %p360, %p361
      %s364 = sadd.s32 %s363, 1
      %p367 = scmp.eq.s32.totalorder %s22, 1
      %p368 = scmp.ne.s32.totalorder %s363, %s365
      %p369 = scmp.eq.s32.totalorder %s22, 0
      %p370 = por %p368, %p369
      %p371 = scmp.ne.s32.totalorder %s363, %s365
      %p372 = scmp.eq.s32.totalorder %s27, 1
      %p373 = por %p371, %p372
      %p374 = scmp.ne.s32.totalorder %s365, %s366
      %p375 = scmp.eq.s32.totalorder %s27, 0
      %p376 = por %p374, %p375
      %p377 = scmp.ne.s32.totalorder %s365, %s366
      %p378 = scmp.eq.s32.totalorder %s28, 1
      %p379 = por %p377, %p378
      %p381 = scmp.ne.s32.totalorder %s366, %s380
      %p382 = scmp.eq.s32.totalorder %s28, 0
      %p383 = por %p381, %p382
      %s385 = sadd.s32 %s384, 1
      %p388 = scmp.eq.s32.totalorder %s22, 1
      %p389 = scmp.ne.s32.totalorder %s384, %s386
      %p390 = scmp.eq.s32.totalorder %s22, 0
      %p391 = por %p389, %p390
      %p392 = scmp.ne.s32.totalorder %s384, %s386
      %p393 = scmp.eq.s32.totalorder %s27, 1
      %p394 = por %p392, %p393
      %p395 = scmp.ne.s32.totalorder %s386, %s387
      %p396 = scmp.eq.s32.totalorder %s27, 0
      %p397 = por %p395, %p396
      %p398 = scmp.ne.s32.totalorder %s386, %s387
      %p399 = scmp.eq.s32.totalorder %s28, 1
      %p400 = por %p398, %p399
      %p402 = scmp.ne.s32.totalorder %s387, %s401
      %p403 = scmp.eq.s32.totalorder %s28, 0
      %p404 = por %p402, %p403
      %s406 = sadd.s32 %s405, 1
      %p409 = scmp.eq.s32.totalorder %s22, 1
      %p410 = scmp.ne.s32.totalorder %s405, %s407
      %p411 = scmp.eq.s32.totalorder %s22, 0
      %p412 = por %p410, %p411
      %p413 = scmp.ne.s32.totalorder %s405, %s407
      %p414 = scmp.eq.s32.totalorder %s27, 1
      %p415 = por %p413, %p414
      %p416 = scmp.ne.s32.totalorder %s407, %s408
      %p417 = scmp.eq.s32.totalorder %s27, 0
      %p418 = por %p416, %p417
      %p419 = scmp.ne.s32.totalorder %s407, %s408
      %p420 = scmp.eq.s32.totalorder %s28, 1
      %p421 = por %p419, %p420
      %p423 = scmp.ne.s32.totalorder %s408, %s422
      %p424 = scmp.eq.s32.totalorder %s28, 0
      %p425 = por %p423, %p424
      %p426 = scmp.le.s32.totalorder 1, %s22
      %p427 = scmp.lt.s32.totalorder %s22, 3
      %p428 = pnand %p426, %p427
      %p429 = pneg %p428
      // Predicated region
      $region9: #{network_forward.3} parent=5 // pred_check
        _
      $region10: #{network_forward.3} parent=5 // pred_check_branch
        %431 = sbr.rel (%p428) target = $region12
      $region11: #{network_forward.3} parent=5 // pred_region
        %s432 = ssub.s32 %s22, 1
        // Predicated region
        $region13: #{network_forward.3} parent=11 // pred_check
          %p433 = pneg %p43
        $region14: #{network_forward.3} parent=11 // pred_check_branch
          %435 = sbr.rel (%p433) target = $region16
        $region15: #{network_forward.3} parent=11 // pred_region
          _
        $region16: #{network_forward.3} parent=11 // pred_fallthru
          _
        // Predicated region
        $region17: #{network_forward.3} parent=11 // pred_check
          %p436 = pneg %p376
        $region18: #{network_forward.3} parent=11 // pred_check_branch
          %438 = sbr.rel (%p436) target = $region20
        $region19: #{network_forward.3} parent=11 // pred_region
          _
        $region20: #{network_forward.3} parent=11 // pred_fallthru
          _
        // Predicated region
        $region21: #{network_forward.3} parent=11 // pred_check
          %p439 = pneg %p397
        $region22: #{network_forward.3} parent=11 // pred_check_branch
          %441 = sbr.rel (%p439) target = $region24
        $region23: #{network_forward.3} parent=11 // pred_region
          _
        $region24: #{network_forward.3} parent=11 // pred_fallthru
          _
      $region12: #{network_forward.3} parent=5 // pred_fallthru
        _
      %p442 = scmp.lt.s32.totalorder %s22, 2
      // Predicated region
      $region25: #{network_forward.3} parent=5 // pred_check
        %p443 = pneg %p442
      $region26: #{network_forward.3} parent=5 // pred_check_branch
        %445 = sbr.rel (%p443) target = $region28
      $region27: #{network_forward.3} parent=5 // pred_region
        // Predicated region
        $region29: #{network_forward.3} parent=27 // pred_check
          %p446 = pneg %p63
        $region30: #{network_forward.3} parent=27 // pred_check_branch
          %448 = sbr.rel (%p446) target = $region32
        $region31: #{network_forward.3} parent=27 // pred_region
          %p449 = scmp.lt.s32.totalorder %s22, 1
          %s450 = scalar_select %p449, %s22, 1
          %s451 = smul.addr %s450, 4
          %s452 = smul.addr %s451, 8
          %s453 = scalar_lea.vmem %s1, %s452
        $region32: #{network_forward.3} parent=27 // pred_fallthru
          _
        // Predicated region
        $region33: #{network_forward.3} parent=27 // pred_check
          %p454 = pneg %p89
        $region34: #{network_forward.3} parent=27 // pred_check_branch
          %456 = sbr.rel (%p454) target = $region36
        $region35: #{network_forward.3} parent=27 // pred_region
          %p457 = scmp.lt.s32.totalorder %s22, 1
          %s458 = scalar_select %p457, %s22, 1
          %s459 = scalar_lea.vmem %s2, %s458
        $region36: #{network_forward.3} parent=27 // pred_fallthru
          _
        // Predicated region
        $region37: #{network_forward.3} parent=27 // pred_check
          %p460 = pneg %p115
        $region38: #{network_forward.3} parent=27 // pred_check_branch
          %462 = sbr.rel (%p460) target = $region40
        $region39: #{network_forward.3} parent=27 // pred_region
          %p463 = scmp.lt.s32.totalorder %s22, 1
          %s464 = scalar_select %p463, %s22, 1
          %s465 = smul.addr %s464, 4
          %s466 = smul.addr %s465, 8
          %s467 = scalar_lea.vmem %s3, %s466
        $region40: #{network_forward.3} parent=27 // pred_fallthru
          _
        // Predicated region
        $region41: #{network_forward.3} parent=27 // pred_check
          %p468 = pneg %p141
        $region42: #{network_forward.3} parent=27 // pred_check_branch
          %470 = sbr.rel (%p468) target = $region44
        $region43: #{network_forward.3} parent=27 // pred_region
          %p471 = scmp.lt.s32.totalorder %s22, 1
          %s472 = scalar_select %p471, %s22, 1
          %s473 = scalar_lea.vmem %s4, %s472
        $region44: #{network_forward.3} parent=27 // pred_fallthru
          _
        // Predicated region
        $region45: #{network_forward.3} parent=27 // pred_check
          %p474 = pneg %p167
        $region46: #{network_forward.3} parent=27 // pred_check_branch
          %476 = sbr.rel (%p474) target = $region48
        $region47: #{network_forward.3} parent=27 // pred_region
          %p477 = scmp.lt.s32.totalorder %s22, 1
          %s478 = scalar_select %p477, %s22, 1
          %s479 = scalar_lea.vmem %s5, %s478
        $region48: #{network_forward.3} parent=27 // pred_fallthru
          _
        // Predicated region
        $region49: #{network_forward.3} parent=27 // pred_check
          %p480 = pneg %p193
        $region50: #{network_forward.3} parent=27 // pred_check_branch
          %482 = sbr.rel (%p480) target = $region52
        $region51: #{network_forward.3} parent=27 // pred_region
          %p483 = scmp.lt.s32.totalorder %s22, 1
          %s484 = scalar_select %p483, %s22, 1
          %s485 = scalar_lea.vmem %s6, %s484
        $region52: #{network_forward.3} parent=27 // pred_fallthru
          _
        // Predicated region
        $region53: #{network_forward.3} parent=27 // pred_check
          %p486 = pneg %p219
        $region54: #{network_forward.3} parent=27 // pred_check_branch
          %488 = sbr.rel (%p486) target = $region56
        $region55: #{network_forward.3} parent=27 // pred_region
          %p489 = scmp.lt.s32.totalorder %s22, 1
          %s490 = scalar_select %p489, %s22, 1
          %s491 = smul.addr %s490, 4
          %s492 = smul.addr %s491, 8
          %s493 = scalar_lea.vmem %s7, %s492
        $region56: #{network_forward.3} parent=27 // pred_fallthru
          _
        // Predicated region
        $region57: #{network_forward.3} parent=27 // pred_check
          %p494 = pneg %p245
        $region58: #{network_forward.3} parent=27 // pred_check_branch
          %496 = sbr.rel (%p494) target = $region60
        $region59: #{network_forward.3} parent=27 // pred_region
          %p497 = scmp.lt.s32.totalorder %s22, 1
          %s498 = scalar_select %p497, %s22, 1
          %s499 = scalar_lea.vmem %s8, %s498
        $region60: #{network_forward.3} parent=27 // pred_fallthru
          _
        // Predicated region
        $region61: #{network_forward.3} parent=27 // pred_check
          %p500 = pneg %p271
        $region62: #{network_forward.3} parent=27 // pred_check_branch
          %502 = sbr.rel (%p500) target = $region64
        $region63: #{network_forward.3} parent=27 // pred_region
          %p503 = scmp.lt.s32.totalorder %s22, 1
          %s504 = scalar_select %p503, %s22, 1
          %s505 = smul.addr %s504, 8
          %s506 = smul.addr %s505, 8
          %s507 = scalar_lea.vmem %s9, %s506
        $region64: #{network_forward.3} parent=27 // pred_fallthru
          _
        // Predicated region
        $region65: #{network_forward.3} parent=27 // pred_check
          %p508 = pneg %p297
        $region66: #{network_forward.3} parent=27 // pred_check_branch
          %510 = sbr.rel (%p508) target = $region68
        $region67: #{network_forward.3} parent=27 // pred_region
          %p511 = scmp.lt.s32.totalorder %s22, 1
          %s512 = scalar_select %p511, %s22, 1
          %s513 = scalar_lea.vmem %s10, %s512
        $region68: #{network_forward.3} parent=27 // pred_fallthru
          _
        // Predicated region
        $region69: #{network_forward.3} parent=27 // pred_check
          %p514 = pneg %p323
        $region70: #{network_forward.3} parent=27 // pred_check_branch
          %516 = sbr.rel (%p514) target = $region72
        $region71: #{network_forward.3} parent=27 // pred_region
          %p517 = scmp.lt.s32.totalorder %s22, 1
          %s518 = scalar_select %p517, %s22, 1
          %s519 = scalar_lea.vmem %s11, %s518
        $region72: #{network_forward.3} parent=27 // pred_fallthru
          _
        // Predicated region
        $region73: #{network_forward.3} parent=27 // pred_check
          %p520 = pneg %p349
        $region74: #{network_forward.3} parent=27 // pred_check_branch
          %522 = sbr.rel (%p520) target = $region76
        $region75: #{network_forward.3} parent=27 // pred_region
          %p523 = scmp.lt.s32.totalorder %s22, 1
          %s524 = scalar_select %p523, %s22, 1
          %s525 = scalar_lea.vmem %s12, %s524
        $region76: #{network_forward.3} parent=27 // pred_fallthru
          _
      $region28: #{network_forward.3} parent=5 // pred_fallthru
        _
      %p526 = scmp.le.s32.totalorder 1, %s22
      %p527 = scmp.lt.s32.totalorder %s22, 3
      %p528 = pnand %p526, %p527
      %p529 = pneg %p528
      // Predicated region
      $region77: #{network_forward.3} parent=5 // pred_check
        _
      $region78: #{network_forward.3} parent=5 // pred_check_branch
        %531 = sbr.rel (%p528) target = $region80
      $region79: #{network_forward.3} parent=5 // pred_region
        %s532 = ssub.s32 %s22, 1
        %p533 = pneg %p43
        %p534 = pneg %p40
        %p535 = scmp.lt.s32.totalorder %s27, 1
        %s536 = scalar_select %p535, %s27, 1
        %s537 = smul.addr %s536, 4
        %s538 = smul.addr %s537, 8
        %s539 = scalar_lea.vmem %s1, %s538
        %p540 = pneg %p69
        %p541 = pneg %p66
        %p542 = scmp.lt.s32.totalorder %s27, 1
        %s543 = scalar_select %p542, %s27, 1
        %s544 = scalar_lea.vmem %s2, %s543
        %p545 = pneg %p95
        %p546 = pneg %p92
        %p547 = scmp.lt.s32.totalorder %s27, 1
        %s548 = scalar_select %p547, %s27, 1
        %s549 = smul.addr %s548, 4
        %s550 = smul.addr %s549, 8
        %s551 = scalar_lea.vmem %s3, %s550
        %p552 = pneg %p121
        %p553 = pneg %p118
        %p554 = scmp.lt.s32.totalorder %s27, 1
        %s555 = scalar_select %p554, %s27, 1
        %s556 = scalar_lea.vmem %s4, %s555
        %p557 = pneg %p147
        %p558 = pneg %p144
        %p559 = scmp.lt.s32.totalorder %s27, 1
        %s560 = scalar_select %p559, %s27, 1
        %s561 = scalar_lea.vmem %s5, %s560
        %p562 = pneg %p173
        %p563 = pneg %p170
        %p564 = scmp.lt.s32.totalorder %s27, 1
        %s565 = scalar_select %p564, %s27, 1
        %s566 = scalar_lea.vmem %s6, %s565
        %p567 = pneg %p199
        %p568 = pneg %p196
        %p569 = scmp.lt.s32.totalorder %s27, 1
        %s570 = scalar_select %p569, %s27, 1
        %s571 = smul.addr %s570, 4
        %s572 = smul.addr %s571, 8
        %s573 = scalar_lea.vmem %s7, %s572
        %p574 = pneg %p225
        %p575 = pneg %p222
        %p576 = scmp.lt.s32.totalorder %s27, 1
        %s577 = scalar_select %p576, %s27, 1
        %s578 = scalar_lea.vmem %s8, %s577
        %p579 = pneg %p251
        %p580 = pneg %p248
        %p581 = scmp.lt.s32.totalorder %s27, 1
        %s582 = scalar_select %p581, %s27, 1
        %s583 = smul.addr %s582, 8
        %s584 = smul.addr %s583, 8
        %s585 = scalar_lea.vmem %s9, %s584
        %p586 = pneg %p277
        %p587 = pneg %p274
        %p588 = scmp.lt.s32.totalorder %s27, 1
        %s589 = scalar_select %p588, %s27, 1
        %s590 = scalar_lea.vmem %s10, %s589
        %p591 = pneg %p303
        %p592 = pneg %p300
        %p593 = scmp.lt.s32.totalorder %s27, 1
        %s594 = scalar_select %p593, %s27, 1
        %s595 = scalar_lea.vmem %s11, %s594
        %p596 = pneg %p329
        %p597 = pneg %p326
        %p598 = scmp.lt.s32.totalorder %s27, 1
        %s599 = scalar_select %p598, %s27, 1
        %s600 = scalar_lea.vmem %s12, %s599
        %p601 = pneg %p355
        %p602 = pneg %p352
        %p603 = pneg %p376
        %p604 = pneg %p373
        %p605 = pneg %p397
        %p606 = pneg %p394
        %p607 = pneg %p418
        %p608 = pneg %p415
        %p609 = scmp.lt.s32.totalorder %s27, 1
        %s610 = scalar_select %p609, %s27, 1
        %s611 = smul.addr %s610, 4
        %s612 = smul.addr %s611, 8
        %s613 = scalar_lea.vmem %s1, %s612
        %p614 = scmp.lt.s32.totalorder %s27, 1
        %s615 = scalar_select %p614, %s27, 1
        %s616 = scalar_lea.vmem %s2, %s615
        %p617 = scmp.lt.s32.totalorder %s27, 1
        %s618 = scalar_select %p617, %s27, 1
        %s619 = smul.addr %s618, 4
        %s620 = smul.addr %s619, 8
        %s621 = scalar_lea.vmem %s3, %s620
        %p622 = scmp.lt.s32.totalorder %s27, 1
        %s623 = scalar_select %p622, %s27, 1
        %s624 = scalar_lea.vmem %s4, %s623
        %p625 = scmp.lt.s32.totalorder %s27, 1
        %s626 = scalar_select %p625, %s27, 1
        %s627 = scalar_lea.vmem %s5, %s626
        %p628 = scmp.lt.s32.totalorder %s27, 1
        %s629 = scalar_select %p628, %s27, 1
        %s630 = scalar_lea.vmem %s6, %s629
        %p631 = scmp.lt.s32.totalorder %s27, 1
        %s632 = scalar_select %p631, %s27, 1
        %s633 = smul.addr %s632, 4
        %s634 = smul.addr %s633, 8
        %s635 = scalar_lea.vmem %s7, %s634
        %p636 = scmp.lt.s32.totalorder %s27, 1
        %s637 = scalar_select %p636, %s27, 1
        %s638 = scalar_lea.vmem %s8, %s637
        %p639 = scmp.lt.s32.totalorder %s27, 1
        %s640 = scalar_select %p639, %s27, 1
        %s641 = smul.addr %s640, 8
        %s642 = smul.addr %s641, 8
        %s643 = scalar_lea.vmem %s9, %s642
        %p644 = scmp.lt.s32.totalorder %s27, 1
        %s645 = scalar_select %p644, %s27, 1
        %s646 = scalar_lea.vmem %s10, %s645
        %p647 = scmp.lt.s32.totalorder %s27, 1
        %s648 = scalar_select %p647, %s27, 1
        %s649 = scalar_lea.vmem %s11, %s648
        %p650 = scmp.lt.s32.totalorder %s27, 1
        %s651 = scalar_select %p650, %s27, 1
        %s652 = scalar_lea.vmem %s12, %s651
        %p653 = scmp.eq.s32.totalorder %s27, 0
        // Predicated region
        $region81: #{network_forward.3} parent=79 // pred_check
          %p654 = pneg %p653
        $region82: #{network_forward.3} parent=79 // pred_check_branch
          %656 = sbr.rel (%p654) target = $region84
        $region83: #{network_forward.3} parent=79 // pred_region
          %v657 = vld [vmem:[%s0] sm:$0xff]
          %v658 = vld [vmem:[%s0 + $0x8] sm:$0xff]
          %v659 = vld [vmem:[%s0 + $0x10] sm:$0xff]
          %v660 = vld [vmem:[%s0 + $0x18] sm:$0xff]
          %v661 = vld [vmem:[%s0 + $0x20] sm:$0xff]
          %v662 = vld [vmem:[%s0 + $0x28] sm:$0xff]
          %v663 = vld [vmem:[%s0 + $0x30] sm:$0xff]
          %v664 = vld [vmem:[%s0 + $0x38] sm:$0x3f]
          %v665 = vld [vmem:[%s0 + $0x40] sm:$0xff]
          %v666 = vld [vmem:[%s0 + $0x48] sm:$0xff]
          %v667 = vld [vmem:[%s0 + $0x50] sm:$0xff]
          %v668 = vld [vmem:[%s0 + $0x58] sm:$0xff]
          %v669 = vld [vmem:[%s0 + $0x60] sm:$0xff]
          %v670 = vld [vmem:[%s0 + $0x68] sm:$0xff]
          %v671 = vld [vmem:[%s0 + $0x70] sm:$0xff]
          %v672 = vld [vmem:[%s0 + $0x78] sm:$0x3f]
          %vm673 = vcmask 261120
          %674 = vst.msk [vmem:[#allocation2] sm:$0xff] %vm673, %v657
          %675 = vst.msk [vmem:[#allocation2 + $0x8] sm:$0xff] %vm673, %v658
          %676 = vst.msk [vmem:[#allocation2 + $0x10] sm:$0xff] %vm673, %v659
          %677 = vst.msk [vmem:[#allocation2 + $0x18] sm:$0xff] %vm673, %v660
          %678 = vst.msk [vmem:[#allocation2 + $0x20] sm:$0xff] %vm673, %v661
          %679 = vst.msk [vmem:[#allocation2 + $0x28] sm:$0xff] %vm673, %v662
          %680 = vst.msk [vmem:[#allocation2 + $0x30] sm:$0xff] %vm673, %v663
          %vm681 = vcmask 259072
          %682 = vst.msk [vmem:[#allocation2 + $0x38] sm:$0x3f] %vm681, %v664
          %683 = vst.msk [vmem:[#allocation2 + $0x40] sm:$0xff] %vm673, %v665
          %684 = vst.msk [vmem:[#allocation2 + $0x48] sm:$0xff] %vm673, %v666
          %685 = vst.msk [vmem:[#allocation2 + $0x50] sm:$0xff] %vm673, %v667
          %686 = vst.msk [vmem:[#allocation2 + $0x58] sm:$0xff] %vm673, %v668
          %687 = vst.msk [vmem:[#allocation2 + $0x60] sm:$0xff] %vm673, %v669
          %688 = vst.msk [vmem:[#allocation2 + $0x68] sm:$0xff] %vm673, %v670
          %689 = vst.msk [vmem:[#allocation2 + $0x70] sm:$0xff] %vm673, %v671
          %690 = vst.msk [vmem:[#allocation2 + $0x78] sm:$0x3f] %vm681, %v672
        $region84: #{network_forward.3} parent=79 // pred_fallthru
          _
        %v691 = vld [vmem:[%s613] sm:$0xff]
        %v692 = vld [vmem:[%s613 + $0x8] sm:$0xff]
        %v693 = vld [vmem:[%s613 + $0x10] sm:$0xff]
        %v694 = vld [vmem:[%s613 + $0x18] sm:$0xff]
        %v695 = vld [vmem:[%s616] sm:$0x1]
        %v696 = vld [vmem:[%s621] sm:$0xff]
        %v697 = vld [vmem:[%s621 + $0x8] sm:$0xff]
        %v698 = vld [vmem:[%s621 + $0x10] sm:$0xff]
        %v699 = vld [vmem:[%s621 + $0x18] sm:$0xff]
        %v700 = vld [vmem:[%s624] sm:$0x1]
        %v701 = vld [vmem:[%s627] sm:$0x1]
        %v702 = vld [vmem:[%s630] sm:$0x1]
        %v703 = vld [vmem:[%s635] sm:$0xff]
        %v704 = vld [vmem:[%s635 + $0x8] sm:$0xff]
        %v705 = vld [vmem:[%s635 + $0x10] sm:$0xff]
        %v706 = vld [vmem:[%s635 + $0x18] sm:$0xff]
        %v707 = vld [vmem:[%s638] sm:$0x1]
        %v708 = vld [vmem:[%s643] sm:$0xff]
        %v709 = vld [vmem:[%s643 + $0x8] sm:$0xff]
        %v710 = vld [vmem:[%s643 + $0x10] sm:$0xff]
        %v711 = vld [vmem:[%s643 + $0x18] sm:$0xff]
        %v712 = vld [vmem:[%s643 + $0x20] sm:$0xff]
        %v713 = vld [vmem:[%s643 + $0x28] sm:$0xff]
        %v714 = vld [vmem:[%s643 + $0x30] sm:$0xff]
        %v715 = vld [vmem:[%s643 + $0x38] sm:$0xff]
        %v716 = vld [vmem:[%s646] sm:$0x1]
        %v717 = vld [vmem:[%s649] sm:$0x1]
        %v718 = vld [vmem:[%s652] sm:$0x1]
        %v719 = vld [vmem:[#allocation2] sm:$0xff]
        %v720 = vld [vmem:[#allocation2 + $0x8] sm:$0xff]
        %v721 = vld [vmem:[#allocation2 + $0x10] sm:$0xff]
        %v722 = vld [vmem:[#allocation2 + $0x18] sm:$0xff]
        %v723 = vld [vmem:[#allocation2 + $0x20] sm:$0xff]
        %v724 = vld [vmem:[#allocation2 + $0x28] sm:$0xff]
        %v725 = vld [vmem:[#allocation2 + $0x30] sm:$0xff]
        %v726 = vld [vmem:[#allocation2 + $0x38] sm:$0x3f]
        %v728 = vperm.slane %v695, 0
        %vm730 = vcmask 261120
        %v732 = vsel %vm730, %v719, 0
        %v735 = vsel %vm730, %v720, 0
        %v738 = vsel %vm730, %v721, 0
        %v741 = vsel %vm730, %v722, 0
        %v744 = vsel %vm730, %v723, 0
        %v747 = vsel %vm730, %v724, 0
        %v750 = vsel %vm730, %v725, 0
        %v753 = vsel %vm730, %v726, 0
        %755 = vmatpush.msra.mxu0 0.0
        %756 = vmatpush.msra.mxu0 0.0
        %757 = vmatpush.msra.mxu0 0.0
        %758 = vmatpush.msra.mxu0 0.0
        %759 = vmatpush.msra.mxu0 0.0
        %760 = vmatpush.msra.mxu0 0.0
        %761 = vmatpush.msra.mxu0 0.0
        %762 = vmatpush.msra.mxu0 0.0
        %763 = vmatpush.msra.mxu0 0.0
        %764 = vmatpush.msra.mxu0 0.0
        %765 = vmatpush.msra.mxu0 0.0
        %766 = vmatpush.msra.mxu0 0.0
        %767 = vmatpush.msra.mxu0 %v694
        %768 = vmatpush.msra.mxu0 %v693
        %769 = vmatpush.msra.mxu0 %v692
        %770 = vmatpush.msra.mxu0 %v691
        %771 = vmatmul.f32.gmra.mxu0 %v732
        %v772 = vpop.f32.mrf.mxu0
        %v773 = vadd.f32 %v728, %v772
        %774 = vmatmul.f32.gmra.mxu0 %v735
        %v775 = vpop.f32.mrf.mxu0
        %v776 = vadd.f32 %v728, %v775
        %777 = vmatmul.f32.gmra.mxu0 %v738
        %v778 = vpop.f32.mrf.mxu0
        %v779 = vadd.f32 %v728, %v778
        %780 = vmatmul.f32.gmra.mxu0 %v741
        %v781 = vpop.f32.mrf.mxu0
        %v782 = vadd.f32 %v728, %v781
        %783 = vmatmul.f32.gmra.mxu0 %v744
        %v784 = vpop.f32.mrf.mxu0
        %v785 = vadd.f32 %v728, %v784
        %786 = vmatmul.f32.gmra.mxu0 %v747
        %v787 = vpop.f32.mrf.mxu0
        %v788 = vadd.f32 %v728, %v787
        %789 = vmatmul.f32.gmra.mxu0 %v750
        %v790 = vpop.f32.mrf.mxu0
        %v791 = vadd.f32 %v728, %v790
        %792 = vmatmul.f32.gmra.mxu0 %v753
        %v793 = vpop.f32.mrf.mxu0
        %v794 = vadd.f32 %v728, %v793
        %795 = vdwg.mxu0
        %804 = vrot.lane.b32.xlu0 %v773, 96
        %v805 = vpop.permute.xlu0 %804
        %806 = vrot.lane.b32.xlu0 %v776, 96
        %v807 = vpop.permute.xlu0 %806
        %808 = vrot.lane.b32.xlu0 %v779, 96
        %v809 = vpop.permute.xlu0 %808
        %810 = vrot.lane.b32.xlu0 %v782, 96
        %v811 = vpop.permute.xlu0 %810
        %812 = vrot.lane.b32.xlu0 %v785, 96
        %v813 = vpop.permute.xlu0 %812
        %814 = vrot.lane.b32.xlu0 %v788, 96
        %v815 = vpop.permute.xlu0 %814
        %816 = vrot.lane.b32.xlu0 %v791, 96
        %v817 = vpop.permute.xlu0 %816
        %818 = vrot.lane.b32.xlu0 %v794, 96
        %v819 = vpop.permute.xlu0 %818
        %vm820 = vcmask 64512
        %v821 = vsel %vm820, %v773, 0
        %v823 = vsel %vm820, %v776, 0
        %v825 = vsel %vm820, %v779, 0
        %v827 = vsel %vm820, %v782, 0
        %v829 = vsel %vm820, %v785, 0
        %v831 = vsel %vm820, %v788, 0
        %v833 = vsel %vm820, %v791, 0
        %v835 = vsel %vm820, %v794, 0
        %v837 = vsel %vm820, %v805, 0
        %v839 = vsel %vm820, %v807, 0
        %v841 = vsel %vm820, %v809, 0
        %v843 = vsel %vm820, %v811, 0
        %v845 = vsel %vm820, %v813, 0
        %v847 = vsel %vm820, %v815, 0
        %v849 = vsel %vm820, %v817, 0
        %v851 = vsel %vm820, %v819, 0
        %853 = vmatpush.xpose.msra.mxu0 0.0
        %854 = vmatpush.xpose.msra.mxu0 0.0
        %855 = vmatpush.xpose.msra.mxu0 0.0
        %856 = vmatpush.xpose.msra.mxu0 0.0
        %857 = vmatpush.xpose.msra.mxu0 0.0
        %858 = vmatpush.xpose.msra.mxu0 0.0
        %859 = vmatpush.xpose.msra.mxu0 0.0
        %860 = vmatpush.xpose.msra.mxu0 0.0
        %861 = vmatpush.xpose.msra.mxu0 %v851
        %862 = vmatpush.xpose.msra.mxu0 %v849
        %863 = vmatpush.xpose.msra.mxu0 %v847
        %864 = vmatpush.xpose.msra.mxu0 %v845
        %865 = vmatpush.xpose.msra.mxu0 %v843
        %866 = vmatpush.xpose.msra.mxu0 %v841
        %867 = vmatpush.xpose.msra.mxu0 %v839
        %868 = vmatpush.xpose.msra.mxu0 %v837
        %869 = vmatmul.f32.gmra.mxu0 %v821
        %v870 = vpop.f32.mrf.mxu0
        %v871 = vadd.f32 0.0, %v870
        %872 = vmatmul.f32.gmra.mxu0 %v823
        %v873 = vpop.f32.mrf.mxu0
        %v874 = vadd.f32 0.0, %v873
        %875 = vmatmul.f32.gmra.mxu0 %v825
        %v876 = vpop.f32.mrf.mxu0
        %v877 = vadd.f32 0.0, %v876
        %878 = vmatmul.f32.gmra.mxu0 %v827
        %v879 = vpop.f32.mrf.mxu0
        %v880 = vadd.f32 0.0, %v879
        %881 = vmatmul.f32.gmra.mxu0 %v829
        %v882 = vpop.f32.mrf.mxu0
        %v883 = vadd.f32 0.0, %v882
        %884 = vmatmul.f32.gmra.mxu0 %v831
        %v885 = vpop.f32.mrf.mxu0
        %v886 = vadd.f32 0.0, %v885
        %887 = vmatmul.f32.gmra.mxu0 %v833
        %v888 = vpop.f32.mrf.mxu0
        %v889 = vadd.f32 0.0, %v888
        %890 = vmatmul.f32.gmra.mxu0 %v835
        %v891 = vpop.f32.mrf.mxu0
        %v892 = vadd.f32 0.0, %v891
        %893 = vdwg.mxu0
        %v894 = vmul.f32 %v871, 0.35355338
        %v895 = vmul.f32 %v874, 0.35355338
        %v896 = vmul.f32 %v877, 0.35355338
        %v897 = vmul.f32 %v880, 0.35355338
        %v898 = vmul.f32 %v883, 0.35355338
        %v899 = vmul.f32 %v886, 0.35355338
        %v900 = vmul.f32 %v889, 0.35355338
        %v901 = vmul.f32 %v892, 0.35355338
        %vm902 = vcmask 506880
        %v903 = vsel %vm902, %v894, -inf
        %904 = vmax.xlane.f32.xlu0 %v903
        %v905 = vpop.xlane.xlu0 %904
        %v906 = vsel %vm902, %v895, -inf
        %907 = vmax.xlane.f32.xlu0 %v906
        %v908 = vpop.xlane.xlu0 %907
        %v909 = vsel %vm902, %v896, -inf
        %910 = vmax.xlane.f32.xlu0 %v909
        %v911 = vpop.xlane.xlu0 %910
        %v912 = vsel %vm902, %v897, -inf
        %913 = vmax.xlane.f32.xlu0 %v912
        %v914 = vpop.xlane.xlu0 %913
        %v915 = vsel %vm902, %v898, -inf
        %916 = vmax.xlane.f32.xlu0 %v915
        %v917 = vpop.xlane.xlu0 %916
        %v918 = vsel %vm902, %v899, -inf
        %919 = vmax.xlane.f32.xlu0 %v918
        %v920 = vpop.xlane.xlu0 %919
        %v921 = vsel %vm902, %v900, -inf
        %922 = vmax.xlane.f32.xlu0 %v921
        %v923 = vpop.xlane.xlu0 %922
        %vm924 = vcmask 504832
        %v925 = vsel %vm924, %v901, -inf
        %926 = vmax.xlane.f32.xlu0 %v925
        %v927 = vpop.xlane.xlu0 %926
        %v928 = vsub.f32 %v894, %v905
        %v929 = vsub.f32 %v895, %v908
        %v930 = vsub.f32 %v896, %v911
        %v931 = vsub.f32 %v897, %v914
        %v932 = vsub.f32 %v898, %v917
        %v933 = vsub.f32 %v899, %v920
        %v934 = vsub.f32 %v900, %v923
        %v935 = vsub.f32 %v901, %v927
        %v936 = vmul.f32 %v928, 1.442695
        %v937 = vpow.pop %v936
        %v938 = vmul.f32 %v929, 1.442695
        %v939 = vpow.pop %v938
        %v940 = vmul.f32 %v930, 1.442695
        %v941 = vpow.pop %v940
        %v942 = vmul.f32 %v931, 1.442695
        %v943 = vpow.pop %v942
        %v944 = vmul.f32 %v932, 1.442695
        %v945 = vpow.pop %v944
        %v946 = vmul.f32 %v933, 1.442695
        %v947 = vpow.pop %v946
        %v948 = vmul.f32 %v934, 1.442695
        %v949 = vpow.pop %v948
        %v950 = vmul.f32 %v935, 1.442695
        %v951 = vpow.pop %v950
        %v952 = vsel %vm902, %v937, 0.0
        %953 = vadd.xlane.f32.xlu0 %v952
        %v954 = vpop.xlane.xlu0 %953
        %v955 = vsel %vm902, %v939, 0.0
        %956 = vadd.xlane.f32.xlu0 %v955
        %v957 = vpop.xlane.xlu0 %956
        %v958 = vsel %vm902, %v941, 0.0
        %959 = vadd.xlane.f32.xlu0 %v958
        %v960 = vpop.xlane.xlu0 %959
        %v961 = vsel %vm902, %v943, 0.0
        %962 = vadd.xlane.f32.xlu0 %v961
        %v963 = vpop.xlane.xlu0 %962
        %v964 = vsel %vm902, %v945, 0.0
        %965 = vadd.xlane.f32.xlu0 %v964
        %v966 = vpop.xlane.xlu0 %965
        %v967 = vsel %vm902, %v947, 0.0
        %968 = vadd.xlane.f32.xlu0 %v967
        %v969 = vpop.xlane.xlu0 %968
        %v970 = vsel %vm902, %v949, 0.0
        %971 = vadd.xlane.f32.xlu0 %v970
        %v972 = vpop.xlane.xlu0 %971
        %v973 = vsel %vm924, %v951, 0.0
        %974 = vadd.xlane.f32.xlu0 %v973
        %v975 = vpop.xlane.xlu0 %974
        %v976 = vrcp.pop %v954
        %v977 = vrcp.pop %v957
        %v978 = vrcp.pop %v960
        %v979 = vrcp.pop %v963
        %v980 = vrcp.pop %v966
        %v981 = vrcp.pop %v969
        %v982 = vrcp.pop %v972
        %v983 = vrcp.pop %v975
        %v984 = vmul.f32 %v937, %v976
        %v985 = vmul.f32 %v939, %v977
        %v986 = vmul.f32 %v941, %v978
        %v987 = vmul.f32 %v943, %v979
        %v988 = vmul.f32 %v945, %v980
        %v989 = vmul.f32 %v947, %v981
        %v990 = vmul.f32 %v949, %v982
        %v991 = vmul.f32 %v951, %v983
        %992 = vrot.lane.b32.xlu0 %v773, 64
        %v993 = vpop.permute.xlu0 %992
        %994 = vrot.lane.b32.xlu0 %v776, 64
        %v995 = vpop.permute.xlu0 %994
        %996 = vrot.lane.b32.xlu0 %v779, 64
        %v997 = vpop.permute.xlu0 %996
        %998 = vrot.lane.b32.xlu0 %v782, 64
        %v999 = vpop.permute.xlu0 %998
        %1000 = vrot.lane.b32.xlu0 %v785, 64
        %v1001 = vpop.permute.xlu0 %1000
        %1002 = vrot.lane.b32.xlu0 %v788, 64
        %v1003 = vpop.permute.xlu0 %1002
        %1004 = vrot.lane.b32.xlu0 %v791, 64
        %v1005 = vpop.permute.xlu0 %1004
        %1006 = vrot.lane.b32.xlu0 %v794, 64
        %v1007 = vpop.permute.xlu0 %1006
        %v1016 = vsel %vm902, %v984, 0
        %v1019 = vsel %vm902, %v985, 0
        %v1022 = vsel %vm902, %v986, 0
        %v1025 = vsel %vm902, %v987, 0
        %v1028 = vsel %vm902, %v988, 0
        %v1031 = vsel %vm902, %v989, 0
        %v1034 = vsel %vm902, %v990, 0
        %v1037 = vsel %vm902, %v991, 0
        %vm1039 = vcmask 1045504
        %v1040 = vsel %vm1039, %v1007, 0
        %1042 = vmatpush.msra.mxu0 0.0
        %1043 = vmatpush.msra.mxu0 0.0
        %1044 = vmatpush.msra.mxu0 0.0
        %1045 = vmatpush.msra.mxu0 0.0
        %1046 = vmatpush.msra.mxu0 0.0
        %1047 = vmatpush.msra.mxu0 0.0
        %1048 = vmatpush.msra.mxu0 0.0
        %1049 = vmatpush.msra.mxu0 0.0
        %1050 = vmatpush.msra.mxu0 %v1040
        %1051 = vmatpush.msra.mxu0 %v1005
        %1052 = vmatpush.msra.mxu0 %v1003
        %1053 = vmatpush.msra.mxu0 %v1001
        %1054 = vmatpush.msra.mxu0 %v999
        %1055 = vmatpush.msra.mxu0 %v997
        %1056 = vmatpush.msra.mxu0 %v995
        %1057 = vmatpush.msra.mxu0 %v993
        %1058 = vmatmul.f32.gmra.mxu0 %v1016
        %v1059 = vpop.f32.mrf.mxu0
        %v1060 = vadd.f32 0.0, %v1059
        %1061 = vmatmul.f32.gmra.mxu0 %v1019
        %v1062 = vpop.f32.mrf.mxu0
        %v1063 = vadd.f32 0.0, %v1062
        %1064 = vmatmul.f32.gmra.mxu0 %v1022
        %v1065 = vpop.f32.mrf.mxu0
        %v1066 = vadd.f32 0.0, %v1065
        %1067 = vmatmul.f32.gmra.mxu0 %v1025
        %v1068 = vpop.f32.mrf.mxu0
        %v1069 = vadd.f32 0.0, %v1068
        %1070 = vmatmul.f32.gmra.mxu0 %v1028
        %v1071 = vpop.f32.mrf.mxu0
        %v1072 = vadd.f32 0.0, %v1071
        %1073 = vmatmul.f32.gmra.mxu0 %v1031
        %v1074 = vpop.f32.mrf.mxu0
        %v1075 = vadd.f32 0.0, %v1074
        %1076 = vmatmul.f32.gmra.mxu0 %v1034
        %v1077 = vpop.f32.mrf.mxu0
        %v1078 = vadd.f32 0.0, %v1077
        %1079 = vmatmul.f32.gmra.mxu0 %v1037
        %v1080 = vpop.f32.mrf.mxu0
        %v1081 = vadd.f32 0.0, %v1080
        %1082 = vdwg.mxu0
        %1083 = vrot.lane.b32.xlu0 %v773, 120
        %v1084 = vpop.permute.xlu0 %1083
        %1085 = vrot.lane.b32.xlu0 %v776, 120
        %v1086 = vpop.permute.xlu0 %1085
        %1087 = vrot.lane.b32.xlu0 %v779, 120
        %v1088 = vpop.permute.xlu0 %1087
        %1089 = vrot.lane.b32.xlu0 %v782, 120
        %v1090 = vpop.permute.xlu0 %1089
        %1091 = vrot.lane.b32.xlu0 %v785, 120
        %v1092 = vpop.permute.xlu0 %1091
        %1093 = vrot.lane.b32.xlu0 %v788, 120
        %v1094 = vpop.permute.xlu0 %1093
        %1095 = vrot.lane.b32.xlu0 %v791, 120
        %v1096 = vpop.permute.xlu0 %1095
        %1097 = vrot.lane.b32.xlu0 %v794, 120
        %v1098 = vpop.permute.xlu0 %1097
        %1099 = vrot.lane.b32.xlu0 %v773, 88
        %v1100 = vpop.permute.xlu0 %1099
        %1101 = vrot.lane.b32.xlu0 %v776, 88
        %v1102 = vpop.permute.xlu0 %1101
        %1103 = vrot.lane.b32.xlu0 %v779, 88
        %v1104 = vpop.permute.xlu0 %1103
        %1105 = vrot.lane.b32.xlu0 %v782, 88
        %v1106 = vpop.permute.xlu0 %1105
        %1107 = vrot.lane.b32.xlu0 %v785, 88
        %v1108 = vpop.permute.xlu0 %1107
        %1109 = vrot.lane.b32.xlu0 %v788, 88
        %v1110 = vpop.permute.xlu0 %1109
        %1111 = vrot.lane.b32.xlu0 %v791, 88
        %v1112 = vpop.permute.xlu0 %1111
        %1113 = vrot.lane.b32.xlu0 %v794, 88
        %v1114 = vpop.permute.xlu0 %1113
        %v1115 = vsel %vm820, %v1084, 0
        %v1117 = vsel %vm820, %v1086, 0
        %v1119 = vsel %vm820, %v1088, 0
        %v1121 = vsel %vm820, %v1090, 0
        %v1123 = vsel %vm820, %v1092, 0
        %v1125 = vsel %vm820, %v1094, 0
        %v1127 = vsel %vm820, %v1096, 0
        %v1129 = vsel %vm820, %v1098, 0
        %v1131 = vsel %vm820, %v1100, 0
        %v1133 = vsel %vm820, %v1102, 0
        %v1135 = vsel %vm820, %v1104, 0
        %v1137 = vsel %vm820, %v1106, 0
        %v1139 = vsel %vm820, %v1108, 0
        %v1141 = vsel %vm820, %v1110, 0
        %v1143 = vsel %vm820, %v1112, 0
        %v1145 = vsel %vm820, %v1114, 0
        %1147 = vmatpush.xpose.msra.mxu0 0.0
        %1148 = vmatpush.xpose.msra.mxu0 0.0
        %1149 = vmatpush.xpose.msra.mxu0 0.0
        %1150 = vmatpush.xpose.msra.mxu0 0.0
        %1151 = vmatpush.xpose.msra.mxu0 0.0
        %1152 = vmatpush.xpose.msra.mxu0 0.0
        %1153 = vmatpush.xpose.msra.mxu0 0.0
        %1154 = vmatpush.xpose.msra.mxu0 0.0
        %1155 = vmatpush.xpose.msra.mxu0 %v1145
        %1156 = vmatpush.xpose.msra.mxu0 %v1143
        %1157 = vmatpush.xpose.msra.mxu0 %v1141
        %1158 = vmatpush.xpose.msra.mxu0 %v1139
        %1159 = vmatpush.xpose.msra.mxu0 %v1137
        %1160 = vmatpush.xpose.msra.mxu0 %v1135
        %1161 = vmatpush.xpose.msra.mxu0 %v1133
        %1162 = vmatpush.xpose.msra.mxu0 %v1131
        %1163 = vmatmul.f32.gmra.mxu0 %v1115
        %v1164 = vpop.f32.mrf.mxu0
        %v1165 = vadd.f32 0.0, %v1164
        %1166 = vmatmul.f32.gmra.mxu0 %v1117
        %v1167 = vpop.f32.mrf.mxu0
        %v1168 = vadd.f32 0.0, %v1167
        %1169 = vmatmul.f32.gmra.mxu0 %v1119
        %v1170 = vpop.f32.mrf.mxu0
        %v1171 = vadd.f32 0.0, %v1170
        %1172 = vmatmul.f32.gmra.mxu0 %v1121
        %v1173 = vpop.f32.mrf.mxu0
        %v1174 = vadd.f32 0.0, %v1173
        %1175 = vmatmul.f32.gmra.mxu0 %v1123
        %v1176 = vpop.f32.mrf.mxu0
        %v1177 = vadd.f32 0.0, %v1176
        %1178 = vmatmul.f32.gmra.mxu0 %v1125
        %v1179 = vpop.f32.mrf.mxu0
        %v1180 = vadd.f32 0.0, %v1179
        %1181 = vmatmul.f32.gmra.mxu0 %v1127
        %v1182 = vpop.f32.mrf.mxu0
        %v1183 = vadd.f32 0.0, %v1182
        %1184 = vmatmul.f32.gmra.mxu0 %v1129
        %v1185 = vpop.f32.mrf.mxu0
        %v1186 = vadd.f32 0.0, %v1185
        %1187 = vdwg.mxu0
        %v1188 = vmul.f32 %v1165, 0.35355338
        %v1189 = vmul.f32 %v1168, 0.35355338
        %v1190 = vmul.f32 %v1171, 0.35355338
        %v1191 = vmul.f32 %v1174, 0.35355338
        %v1192 = vmul.f32 %v1177, 0.35355338
        %v1193 = vmul.f32 %v1180, 0.35355338
        %v1194 = vmul.f32 %v1183, 0.35355338
        %v1195 = vmul.f32 %v1186, 0.35355338
        %v1196 = vsel %vm902, %v1188, -inf
        %1197 = vmax.xlane.f32.xlu0 %v1196
        %v1198 = vpop.xlane.xlu0 %1197
        %v1199 = vsel %vm902, %v1189, -inf
        %1200 = vmax.xlane.f32.xlu0 %v1199
        %v1201 = vpop.xlane.xlu0 %1200
        %v1202 = vsel %vm902, %v1190, -inf
        %1203 = vmax.xlane.f32.xlu0 %v1202
        %v1204 = vpop.xlane.xlu0 %1203
        %v1205 = vsel %vm902, %v1191, -inf
        %1206 = vmax.xlane.f32.xlu0 %v1205
        %v1207 = vpop.xlane.xlu0 %1206
        %v1208 = vsel %vm902, %v1192, -inf
        %1209 = vmax.xlane.f32.xlu0 %v1208
        %v1210 = vpop.xlane.xlu0 %1209
        %v1211 = vsel %vm902, %v1193, -inf
        %1212 = vmax.xlane.f32.xlu0 %v1211
        %v1213 = vpop.xlane.xlu0 %1212
        %v1214 = vsel %vm902, %v1194, -inf
        %1215 = vmax.xlane.f32.xlu0 %v1214
        %v1216 = vpop.xlane.xlu0 %1215
        %v1217 = vsel %vm924, %v1195, -inf
        %1218 = vmax.xlane.f32.xlu0 %v1217
        %v1219 = vpop.xlane.xlu0 %1218
        %v1220 = vsub.f32 %v1188, %v1198
        %v1221 = vsub.f32 %v1189, %v1201
        %v1222 = vsub.f32 %v1190, %v1204
        %v1223 = vsub.f32 %v1191, %v1207
        %v1224 = vsub.f32 %v1192, %v1210
        %v1225 = vsub.f32 %v1193, %v1213
        %v1226 = vsub.f32 %v1194, %v1216
        %v1227 = vsub.f32 %v1195, %v1219
        %v1228 = vmul.f32 %v1220, 1.442695
        %v1229 = vpow.pop %v1228
        %v1230 = vmul.f32 %v1221, 1.442695
        %v1231 = vpow.pop %v1230
        %v1232 = vmul.f32 %v1222, 1.442695
        %v1233 = vpow.pop %v1232
        %v1234 = vmul.f32 %v1223, 1.442695
        %v1235 = vpow.pop %v1234
        %v1236 = vmul.f32 %v1224, 1.442695
        %v1237 = vpow.pop %v1236
        %v1238 = vmul.f32 %v1225, 1.442695
        %v1239 = vpow.pop %v1238
        %v1240 = vmul.f32 %v1226, 1.442695
        %v1241 = vpow.pop %v1240
        %v1242 = vmul.f32 %v1227, 1.442695
        %v1243 = vpow.pop %v1242
        %v1244 = vsel %vm902, %v1229, 0.0
        %1245 = vadd.xlane.f32.xlu0 %v1244
        %v1246 = vpop.xlane.xlu0 %1245
        %v1247 = vsel %vm902, %v1231, 0.0
        %1248 = vadd.xlane.f32.xlu0 %v1247
        %v1249 = vpop.xlane.xlu0 %1248
        %v1250 = vsel %vm902, %v1233, 0.0
        %1251 = vadd.xlane.f32.xlu0 %v1250
        %v1252 = vpop.xlane.xlu0 %1251
        %v1253 = vsel %vm902, %v1235, 0.0
        %1254 = vadd.xlane.f32.xlu0 %v1253
        %v1255 = vpop.xlane.xlu0 %1254
        %v1256 = vsel %vm902, %v1237, 0.0
        %1257 = vadd.xlane.f32.xlu0 %v1256
        %v1258 = vpop.xlane.xlu0 %1257
        %v1259 = vsel %vm902, %v1239, 0.0
        %1260 = vadd.xlane.f32.xlu0 %v1259
        %v1261 = vpop.xlane.xlu0 %1260
        %v1262 = vsel %vm902, %v1241, 0.0
        %1263 = vadd.xlane.f32.xlu0 %v1262
        %v1264 = vpop.xlane.xlu0 %1263
        %v1265 = vsel %vm924, %v1243, 0.0
        %1266 = vadd.xlane.f32.xlu0 %v1265
        %v1267 = vpop.xlane.xlu0 %1266
        %v1268 = vrcp.pop %v1246
        %v1269 = vrcp.pop %v1249
        %v1270 = vrcp.pop %v1252
        %v1271 = vrcp.pop %v1255
        %v1272 = vrcp.pop %v1258
        %v1273 = vrcp.pop %v1261
        %v1274 = vrcp.pop %v1264
        %v1275 = vrcp.pop %v1267
        %v1276 = vmul.f32 %v1229, %v1268
        %v1277 = vmul.f32 %v1231, %v1269
        %v1278 = vmul.f32 %v1233, %v1270
        %v1279 = vmul.f32 %v1235, %v1271
        %v1280 = vmul.f32 %v1237, %v1272
        %v1281 = vmul.f32 %v1239, %v1273
        %v1282 = vmul.f32 %v1241, %v1274
        %v1283 = vmul.f32 %v1243, %v1275
        %1284 = vrot.lane.b32.xlu0 %v773, 56
        %v1285 = vpop.permute.xlu0 %1284
        %1286 = vrot.lane.b32.xlu0 %v776, 56
        %v1287 = vpop.permute.xlu0 %1286
        %1288 = vrot.lane.b32.xlu0 %v779, 56
        %v1289 = vpop.permute.xlu0 %1288
        %1290 = vrot.lane.b32.xlu0 %v782, 56
        %v1291 = vpop.permute.xlu0 %1290
        %1292 = vrot.lane.b32.xlu0 %v785, 56
        %v1293 = vpop.permute.xlu0 %1292
        %1294 = vrot.lane.b32.xlu0 %v788, 56
        %v1295 = vpop.permute.xlu0 %1294
        %1296 = vrot.lane.b32.xlu0 %v791, 56
        %v1297 = vpop.permute.xlu0 %1296
        %1298 = vrot.lane.b32.xlu0 %v794, 56
        %v1299 = vpop.permute.xlu0 %1298
        %v1308 = vsel %vm902, %v1276, 0
        %v1311 = vsel %vm902, %v1277, 0
        %v1314 = vsel %vm902, %v1278, 0
        %v1317 = vsel %vm902, %v1279, 0
        %v1320 = vsel %vm902, %v1280, 0
        %v1323 = vsel %vm902, %v1281, 0
        %v1326 = vsel %vm902, %v1282, 0
        %v1329 = vsel %vm902, %v1283, 0
        %v1331 = vsel %vm1039, %v1299, 0
        %1333 = vmatpush.msra.mxu0 0.0
        %1334 = vmatpush.msra.mxu0 0.0
        %1335 = vmatpush.msra.mxu0 0.0
        %1336 = vmatpush.msra.mxu0 0.0
        %1337 = vmatpush.msra.mxu0 0.0
        %1338 = vmatpush.msra.mxu0 0.0
        %1339 = vmatpush.msra.mxu0 0.0
        %1340 = vmatpush.msra.mxu0 0.0
        %1341 = vmatpush.msra.mxu0 %v1331
        %1342 = vmatpush.msra.mxu0 %v1297
        %1343 = vmatpush.msra.mxu0 %v1295
        %1344 = vmatpush.msra.mxu0 %v1293
        %1345 = vmatpush.msra.mxu0 %v1291
        %1346 = vmatpush.msra.mxu0 %v1289
        %1347 = vmatpush.msra.mxu0 %v1287
        %1348 = vmatpush.msra.mxu0 %v1285
        %1349 = vmatmul.f32.gmra.mxu0 %v1308
        %v1350 = vpop.f32.mrf.mxu0
        %v1351 = vadd.f32 0.0, %v1350
        %1352 = vmatmul.f32.gmra.mxu0 %v1311
        %v1353 = vpop.f32.mrf.mxu0
        %v1354 = vadd.f32 0.0, %v1353
        %1355 = vmatmul.f32.gmra.mxu0 %v1314
        %v1356 = vpop.f32.mrf.mxu0
        %v1357 = vadd.f32 0.0, %v1356
        %1358 = vmatmul.f32.gmra.mxu0 %v1317
        %v1359 = vpop.f32.mrf.mxu0
        %v1360 = vadd.f32 0.0, %v1359
        %1361 = vmatmul.f32.gmra.mxu0 %v1320
        %v1362 = vpop.f32.mrf.mxu0
        %v1363 = vadd.f32 0.0, %v1362
        %1364 = vmatmul.f32.gmra.mxu0 %v1323
        %v1365 = vpop.f32.mrf.mxu0
        %v1366 = vadd.f32 0.0, %v1365
        %1367 = vmatmul.f32.gmra.mxu0 %v1326
        %v1368 = vpop.f32.mrf.mxu0
        %v1369 = vadd.f32 0.0, %v1368
        %1370 = vmatmul.f32.gmra.mxu0 %v1329
        %v1371 = vpop.f32.mrf.mxu0
        %v1372 = vadd.f32 0.0, %v1371
        %1373 = vdwg.mxu0
        %v1375 = vsel %vm820, %v1351, 0
        %v1378 = vsel %vm820, %v1354, 0
        %v1381 = vsel %vm820, %v1357, 0
        %v1384 = vsel %vm820, %v1360, 0
        %v1387 = vsel %vm820, %v1363, 0
        %v1390 = vsel %vm820, %v1366, 0
        %v1393 = vsel %vm820, %v1369, 0
        %v1396 = vsel %vm820, %v1372, 0
        %1398 = vmatpush.msra.mxu0 0.0
        %1399 = vmatpush.msra.mxu0 0.0
        %1400 = vmatpush.msra.mxu0 0.0
        %1401 = vmatpush.msra.mxu0 0.0
        %1402 = vmatpush.msra.mxu0 0.0
        %1403 = vmatpush.msra.mxu0 0.0
        %1404 = vmatpush.msra.mxu0 0.0
        %1405 = vmatpush.msra.mxu0 0.0
        %1406 = vmatpush.msra.mxu0 0.0
        %1407 = vmatpush.msra.mxu0 0.0
        %1408 = vmatpush.msra.mxu0 0.0
        %1409 = vmatpush.msra.mxu0 0.0
        %1410 = vmatpush.msra.mxu0 0.0
        %1411 = vmatpush.msra.mxu0 0.0
        %1412 = vmatpush.msra.mxu0 0.0
        %1413 = vmatpush.msra.mxu0 %v697
        %1414 = vmatmul.f32.gmra.mxu0 %v1375
        %v1415 = vpop.f32.mrf.mxu0
        %v1416 = vadd.f32 0.0, %v1415
        %1417 = vmatmul.f32.gmra.mxu0 %v1378
        %v1418 = vpop.f32.mrf.mxu0
        %v1419 = vadd.f32 0.0, %v1418
        %1420 = vmatmul.f32.gmra.mxu0 %v1381
        %v1421 = vpop.f32.mrf.mxu0
        %v1422 = vadd.f32 0.0, %v1421
        %1423 = vmatmul.f32.gmra.mxu0 %v1384
        %v1424 = vpop.f32.mrf.mxu0
        %v1425 = vadd.f32 0.0, %v1424
        %1426 = vmatmul.f32.gmra.mxu0 %v1387
        %v1427 = vpop.f32.mrf.mxu0
        %v1428 = vadd.f32 0.0, %v1427
        %1429 = vmatmul.f32.gmra.mxu0 %v1390
        %v1430 = vpop.f32.mrf.mxu0
        %v1431 = vadd.f32 0.0, %v1430
        %1432 = vmatmul.f32.gmra.mxu0 %v1393
        %v1433 = vpop.f32.mrf.mxu0
        %v1434 = vadd.f32 0.0, %v1433
        %1435 = vmatmul.f32.gmra.mxu0 %v1396
        %v1436 = vpop.f32.mrf.mxu0
        %v1437 = vadd.f32 0.0, %v1436
        %1438 = vdwg.mxu0
        %v1440 = vsel %vm820, %v1060, 0
        %v1443 = vsel %vm820, %v1063, 0
        %v1446 = vsel %vm820, %v1066, 0
        %v1449 = vsel %vm820, %v1069, 0
        %v1452 = vsel %vm820, %v1072, 0
        %v1455 = vsel %vm820, %v1075, 0
        %v1458 = vsel %vm820, %v1078, 0
        %v1461 = vsel %vm820, %v1081, 0
        %1463 = vmatpush.msra.mxu0 0.0
        %1464 = vmatpush.msra.mxu0 0.0
        %1465 = vmatpush.msra.mxu0 0.0
        %1466 = vmatpush.msra.mxu0 0.0
        %1467 = vmatpush.msra.mxu0 0.0
        %1468 = vmatpush.msra.mxu0 0.0
        %1469 = vmatpush.msra.mxu0 0.0
        %1470 = vmatpush.msra.mxu0 0.0
        %1471 = vmatpush.msra.mxu0 0.0
        %1472 = vmatpush.msra.mxu0 0.0
        %1473 = vmatpush.msra.mxu0 0.0
        %1474 = vmatpush.msra.mxu0 0.0
        %1475 = vmatpush.msra.mxu0 0.0
        %1476 = vmatpush.msra.mxu0 0.0
        %1477 = vmatpush.msra.mxu0 0.0
        %1478 = vmatpush.msra.mxu0 %v696
        %1479 = vmatmul.f32.gmra.mxu0 %v1440
        %v1480 = vpop.f32.mrf.mxu0
        %v1481 = vadd.f32 %v1416, %v1480
        %1482 = vmatmul.f32.gmra.mxu0 %v1443
        %v1483 = vpop.f32.mrf.mxu0
        %v1484 = vadd.f32 %v1419, %v1483
        %1485 = vmatmul.f32.gmra.mxu0 %v1446
        %v1486 = vpop.f32.mrf.mxu0
        %v1487 = vadd.f32 %v1422, %v1486
        %1488 = vmatmul.f32.gmra.mxu0 %v1449
        %v1489 = vpop.f32.mrf.mxu0
        %v1490 = vadd.f32 %v1425, %v1489
        %1491 = vmatmul.f32.gmra.mxu0 %v1452
        %v1492 = vpop.f32.mrf.mxu0
        %v1493 = vadd.f32 %v1428, %v1492
        %1494 = vmatmul.f32.gmra.mxu0 %v1455
        %v1495 = vpop.f32.mrf.mxu0
        %v1496 = vadd.f32 %v1431, %v1495
        %1497 = vmatmul.f32.gmra.mxu0 %v1458
        %v1498 = vpop.f32.mrf.mxu0
        %v1499 = vadd.f32 %v1434, %v1498
        %1500 = vmatmul.f32.gmra.mxu0 %v1461
        %v1501 = vpop.f32.mrf.mxu0
        %v1502 = vadd.f32 %v1437, %v1501
        %1503 = vdwg.mxu0
        %1504 = vrot.lane.b32.xlu0 %v773, 112
        %v1505 = vpop.permute.xlu0 %1504
        %1506 = vrot.lane.b32.xlu0 %v776, 112
        %v1507 = vpop.permute.xlu0 %1506
        %1508 = vrot.lane.b32.xlu0 %v779, 112
        %v1509 = vpop.permute.xlu0 %1508
        %1510 = vrot.lane.b32.xlu0 %v782, 112
        %v1511 = vpop.permute.xlu0 %1510
        %1512 = vrot.lane.b32.xlu0 %v785, 112
        %v1513 = vpop.permute.xlu0 %1512
        %1514 = vrot.lane.b32.xlu0 %v788, 112
        %v1515 = vpop.permute.xlu0 %1514
        %1516 = vrot.lane.b32.xlu0 %v791, 112
        %v1517 = vpop.permute.xlu0 %1516
        %1518 = vrot.lane.b32.xlu0 %v794, 112
        %v1519 = vpop.permute.xlu0 %1518
        %1520 = vrot.lane.b32.xlu0 %v773, 80
        %v1521 = vpop.permute.xlu0 %1520
        %1522 = vrot.lane.b32.xlu0 %v776, 80
        %v1523 = vpop.permute.xlu0 %1522
        %1524 = vrot.lane.b32.xlu0 %v779, 80
        %v1525 = vpop.permute.xlu0 %1524
        %1526 = vrot.lane.b32.xlu0 %v782, 80
        %v1527 = vpop.permute.xlu0 %1526
        %1528 = vrot.lane.b32.xlu0 %v785, 80
        %v1529 = vpop.permute.xlu0 %1528
        %1530 = vrot.lane.b32.xlu0 %v788, 80
        %v1531 = vpop.permute.xlu0 %1530
        %1532 = vrot.lane.b32.xlu0 %v791, 80
        %v1533 = vpop.permute.xlu0 %1532
        %1534 = vrot.lane.b32.xlu0 %v794, 80
        %v1535 = vpop.permute.xlu0 %1534
        %v1536 = vsel %vm820, %v1505, 0
        %v1538 = vsel %vm820, %v1507, 0
        %v1540 = vsel %vm820, %v1509, 0
        %v1542 = vsel %vm820, %v1511, 0
        %v1544 = vsel %vm820, %v1513, 0
        %v1546 = vsel %vm820, %v1515, 0
        %v1548 = vsel %vm820, %v1517, 0
        %v1550 = vsel %vm820, %v1519, 0
        %v1552 = vsel %vm820, %v1521, 0
        %v1554 = vsel %vm820, %v1523, 0
        %v1556 = vsel %vm820, %v1525, 0
        %v1558 = vsel %vm820, %v1527, 0
        %v1560 = vsel %vm820, %v1529, 0
        %v1562 = vsel %vm820, %v1531, 0
        %v1564 = vsel %vm820, %v1533, 0
        %v1566 = vsel %vm820, %v1535, 0
        %1568 = vmatpush.xpose.msra.mxu0 0.0
        %1569 = vmatpush.xpose.msra.mxu0 0.0
        %1570 = vmatpush.xpose.msra.mxu0 0.0
        %1571 = vmatpush.xpose.msra.mxu0 0.0
        %1572 = vmatpush.xpose.msra.mxu0 0.0
        %1573 = vmatpush.xpose.msra.mxu0 0.0
        %1574 = vmatpush.xpose.msra.mxu0 0.0
        %1575 = vmatpush.xpose.msra.mxu0 0.0
        %1576 = vmatpush.xpose.msra.mxu0 %v1566
        %1577 = vmatpush.xpose.msra.mxu0 %v1564
        %1578 = vmatpush.xpose.msra.mxu0 %v1562
        %1579 = vmatpush.xpose.msra.mxu0 %v1560
        %1580 = vmatpush.xpose.msra.mxu0 %v1558
        %1581 = vmatpush.xpose.msra.mxu0 %v1556
        %1582 = vmatpush.xpose.msra.mxu0 %v1554
        %1583 = vmatpush.xpose.msra.mxu0 %v1552
        %1584 = vmatmul.f32.gmra.mxu0 %v1536
        %v1585 = vpop.f32.mrf.mxu0
        %v1586 = vadd.f32 0.0, %v1585
        %1587 = vmatmul.f32.gmra.mxu0 %v1538
        %v1588 = vpop.f32.mrf.mxu0
        %v1589 = vadd.f32 0.0, %v1588
        %1590 = vmatmul.f32.gmra.mxu0 %v1540
        %v1591 = vpop.f32.mrf.mxu0
        %v1592 = vadd.f32 0.0, %v1591
        %1593 = vmatmul.f32.gmra.mxu0 %v1542
        %v1594 = vpop.f32.mrf.mxu0
        %v1595 = vadd.f32 0.0, %v1594
        %1596 = vmatmul.f32.gmra.mxu0 %v1544
        %v1597 = vpop.f32.mrf.mxu0
        %v1598 = vadd.f32 0.0, %v1597
        %1599 = vmatmul.f32.gmra.mxu0 %v1546
        %v1600 = vpop.f32.mrf.mxu0
        %v1601 = vadd.f32 0.0, %v1600
        %1602 = vmatmul.f32.gmra.mxu0 %v1548
        %v1603 = vpop.f32.mrf.mxu0
        %v1604 = vadd.f32 0.0, %v1603
        %1605 = vmatmul.f32.gmra.mxu0 %v1550
        %v1606 = vpop.f32.mrf.mxu0
        %v1607 = vadd.f32 0.0, %v1606
        %1608 = vdwg.mxu0
        %v1609 = vmul.f32 %v1586, 0.35355338
        %v1610 = vmul.f32 %v1589, 0.35355338
        %v1611 = vmul.f32 %v1592, 0.35355338
        %v1612 = vmul.f32 %v1595, 0.35355338
        %v1613 = vmul.f32 %v1598, 0.35355338
        %v1614 = vmul.f32 %v1601, 0.35355338
        %v1615 = vmul.f32 %v1604, 0.35355338
        %v1616 = vmul.f32 %v1607, 0.35355338
        %v1617 = vsel %vm902, %v1609, -inf
        %1618 = vmax.xlane.f32.xlu0 %v1617
        %v1619 = vpop.xlane.xlu0 %1618
        %v1620 = vsel %vm902, %v1610, -inf
        %1621 = vmax.xlane.f32.xlu0 %v1620
        %v1622 = vpop.xlane.xlu0 %1621
        %v1623 = vsel %vm902, %v1611, -inf
        %1624 = vmax.xlane.f32.xlu0 %v1623
        %v1625 = vpop.xlane.xlu0 %1624
        %v1626 = vsel %vm902, %v1612, -inf
        %1627 = vmax.xlane.f32.xlu0 %v1626
        %v1628 = vpop.xlane.xlu0 %1627
        %v1629 = vsel %vm902, %v1613, -inf
        %1630 = vmax.xlane.f32.xlu0 %v1629
        %v1631 = vpop.xlane.xlu0 %1630
        %v1632 = vsel %vm902, %v1614, -inf
        %1633 = vmax.xlane.f32.xlu0 %v1632
        %v1634 = vpop.xlane.xlu0 %1633
        %v1635 = vsel %vm902, %v1615, -inf
        %1636 = vmax.xlane.f32.xlu0 %v1635
        %v1637 = vpop.xlane.xlu0 %1636
        %v1638 = vsel %vm924, %v1616, -inf
        %1639 = vmax.xlane.f32.xlu0 %v1638
        %v1640 = vpop.xlane.xlu0 %1639
        %v1641 = vsub.f32 %v1609, %v1619
        %v1642 = vsub.f32 %v1610, %v1622
        %v1643 = vsub.f32 %v1611, %v1625
        %v1644 = vsub.f32 %v1612, %v1628
        %v1645 = vsub.f32 %v1613, %v1631
        %v1646 = vsub.f32 %v1614, %v1634
        %v1647 = vsub.f32 %v1615, %v1637
        %v1648 = vsub.f32 %v1616, %v1640
        %v1649 = vmul.f32 %v1641, 1.442695
        %v1650 = vpow.pop %v1649
        %v1651 = vmul.f32 %v1642, 1.442695
        %v1652 = vpow.pop %v1651
        %v1653 = vmul.f32 %v1643, 1.442695
        %v1654 = vpow.pop %v1653
        %v1655 = vmul.f32 %v1644, 1.442695
        %v1656 = vpow.pop %v1655
        %v1657 = vmul.f32 %v1645, 1.442695
        %v1658 = vpow.pop %v1657
        %v1659 = vmul.f32 %v1646, 1.442695
        %v1660 = vpow.pop %v1659
        %v1661 = vmul.f32 %v1647, 1.442695
        %v1662 = vpow.pop %v1661
        %v1663 = vmul.f32 %v1648, 1.442695
        %v1664 = vpow.pop %v1663
        %v1665 = vsel %vm902, %v1650, 0.0
        %1666 = vadd.xlane.f32.xlu0 %v1665
        %v1667 = vpop.xlane.xlu0 %1666
        %v1668 = vsel %vm902, %v1652, 0.0
        %1669 = vadd.xlane.f32.xlu0 %v1668
        %v1670 = vpop.xlane.xlu0 %1669
        %v1671 = vsel %vm902, %v1654, 0.0
        %1672 = vadd.xlane.f32.xlu0 %v1671
        %v1673 = vpop.xlane.xlu0 %1672
        %v1674 = vsel %vm902, %v1656, 0.0
        %1675 = vadd.xlane.f32.xlu0 %v1674
        %v1676 = vpop.xlane.xlu0 %1675
        %v1677 = vsel %vm902, %v1658, 0.0
        %1678 = vadd.xlane.f32.xlu0 %v1677
        %v1679 = vpop.xlane.xlu0 %1678
        %v1680 = vsel %vm902, %v1660, 0.0
        %1681 = vadd.xlane.f32.xlu0 %v1680
        %v1682 = vpop.xlane.xlu0 %1681
        %v1683 = vsel %vm902, %v1662, 0.0
        %1684 = vadd.xlane.f32.xlu0 %v1683
        %v1685 = vpop.xlane.xlu0 %1684
        %v1686 = vsel %vm924, %v1664, 0.0
        %1687 = vadd.xlane.f32.xlu0 %v1686
        %v1688 = vpop.xlane.xlu0 %1687
        %v1689 = vrcp.pop %v1667
        %v1690 = vrcp.pop %v1670
        %v1691 = vrcp.pop %v1673
        %v1692 = vrcp.pop %v1676
        %v1693 = vrcp.pop %v1679
        %v1694 = vrcp.pop %v1682
        %v1695 = vrcp.pop %v1685
        %v1696 = vrcp.pop %v1688
        %v1697 = vmul.f32 %v1650, %v1689
        %v1698 = vmul.f32 %v1652, %v1690
        %v1699 = vmul.f32 %v1654, %v1691
        %v1700 = vmul.f32 %v1656, %v1692
        %v1701 = vmul.f32 %v1658, %v1693
        %v1702 = vmul.f32 %v1660, %v1694
        %v1703 = vmul.f32 %v1662, %v1695
        %v1704 = vmul.f32 %v1664, %v1696
        %1705 = vrot.lane.b32.xlu0 %v773, 48
        %v1706 = vpop.permute.xlu0 %1705
        %1707 = vrot.lane.b32.xlu0 %v776, 48
        %v1708 = vpop.permute.xlu0 %1707
        %1709 = vrot.lane.b32.xlu0 %v779, 48
        %v1710 = vpop.permute.xlu0 %1709
        %1711 = vrot.lane.b32.xlu0 %v782, 48
        %v1712 = vpop.permute.xlu0 %1711
        %1713 = vrot.lane.b32.xlu0 %v785, 48
        %v1714 = vpop.permute.xlu0 %1713
        %1715 = vrot.lane.b32.xlu0 %v788, 48
        %v1716 = vpop.permute.xlu0 %1715
        %1717 = vrot.lane.b32.xlu0 %v791, 48
        %v1718 = vpop.permute.xlu0 %1717
        %1719 = vrot.lane.b32.xlu0 %v794, 48
        %v1720 = vpop.permute.xlu0 %1719
        %v1729 = vsel %vm902, %v1697, 0
        %v1732 = vsel %vm902, %v1698, 0
        %v1735 = vsel %vm902, %v1699, 0
        %v1738 = vsel %vm902, %v1700, 0
        %v1741 = vsel %vm902, %v1701, 0
        %v1744 = vsel %vm902, %v1702, 0
        %v1747 = vsel %vm902, %v1703, 0
        %v1750 = vsel %vm902, %v1704, 0
        %v1752 = vsel %vm1039, %v1720, 0
        %1754 = vmatpush.msra.mxu0 0.0
        %1755 = vmatpush.msra.mxu0 0.0
        %1756 = vmatpush.msra.mxu0 0.0
        %1757 = vmatpush.msra.mxu0 0.0
        %1758 = vmatpush.msra.mxu0 0.0
        %1759 = vmatpush.msra.mxu0 0.0
        %1760 = vmatpush.msra.mxu0 0.0
        %1761 = vmatpush.msra.mxu0 0.0
        %1762 = vmatpush.msra.mxu0 %v1752
        %1763 = vmatpush.msra.mxu0 %v1718
        %1764 = vmatpush.msra.mxu0 %v1716
        %1765 = vmatpush.msra.mxu0 %v1714
        %1766 = vmatpush.msra.mxu0 %v1712
        %1767 = vmatpush.msra.mxu0 %v1710
        %1768 = vmatpush.msra.mxu0 %v1708
        %1769 = vmatpush.msra.mxu0 %v1706
        %1770 = vmatmul.f32.gmra.mxu0 %v1729
        %v1771 = vpop.f32.mrf.mxu0
        %v1772 = vadd.f32 0.0, %v1771
        %1773 = vmatmul.f32.gmra.mxu0 %v1732
        %v1774 = vpop.f32.mrf.mxu0
        %v1775 = vadd.f32 0.0, %v1774
        %1776 = vmatmul.f32.gmra.mxu0 %v1735
        %v1777 = vpop.f32.mrf.mxu0
        %v1778 = vadd.f32 0.0, %v1777
        %1779 = vmatmul.f32.gmra.mxu0 %v1738
        %v1780 = vpop.f32.mrf.mxu0
        %v1781 = vadd.f32 0.0, %v1780
        %1782 = vmatmul.f32.gmra.mxu0 %v1741
        %v1783 = vpop.f32.mrf.mxu0
        %v1784 = vadd.f32 0.0, %v1783
        %1785 = vmatmul.f32.gmra.mxu0 %v1744
        %v1786 = vpop.f32.mrf.mxu0
        %v1787 = vadd.f32 0.0, %v1786
        %1788 = vmatmul.f32.gmra.mxu0 %v1747
        %v1789 = vpop.f32.mrf.mxu0
        %v1790 = vadd.f32 0.0, %v1789
        %1791 = vmatmul.f32.gmra.mxu0 %v1750
        %v1792 = vpop.f32.mrf.mxu0
        %v1793 = vadd.f32 0.0, %v1792
        %1794 = vdwg.mxu0
        %v1796 = vsel %vm820, %v1772, 0
        %v1799 = vsel %vm820, %v1775, 0
        %v1802 = vsel %vm820, %v1778, 0
        %v1805 = vsel %vm820, %v1781, 0
        %v1808 = vsel %vm820, %v1784, 0
        %v1811 = vsel %vm820, %v1787, 0
        %v1814 = vsel %vm820, %v1790, 0
        %v1817 = vsel %vm820, %v1793, 0
        %1819 = vmatpush.msra.mxu0 0.0
        %1820 = vmatpush.msra.mxu0 0.0
        %1821 = vmatpush.msra.mxu0 0.0
        %1822 = vmatpush.msra.mxu0 0.0
        %1823 = vmatpush.msra.mxu0 0.0
        %1824 = vmatpush.msra.mxu0 0.0
        %1825 = vmatpush.msra.mxu0 0.0
        %1826 = vmatpush.msra.mxu0 0.0
        %1827 = vmatpush.msra.mxu0 0.0
        %1828 = vmatpush.msra.mxu0 0.0
        %1829 = vmatpush.msra.mxu0 0.0
        %1830 = vmatpush.msra.mxu0 0.0
        %1831 = vmatpush.msra.mxu0 0.0
        %1832 = vmatpush.msra.mxu0 0.0
        %1833 = vmatpush.msra.mxu0 0.0
        %1834 = vmatpush.msra.mxu0 %v698
        %1835 = vmatmul.f32.gmra.mxu0 %v1796
        %v1836 = vpop.f32.mrf.mxu0
        %v1837 = vadd.f32 0.0, %v1836
        %1838 = vmatmul.f32.gmra.mxu0 %v1799
        %v1839 = vpop.f32.mrf.mxu0
        %v1840 = vadd.f32 0.0, %v1839
        %1841 = vmatmul.f32.gmra.mxu0 %v1802
        %v1842 = vpop.f32.mrf.mxu0
        %v1843 = vadd.f32 0.0, %v1842
        %1844 = vmatmul.f32.gmra.mxu0 %v1805
        %v1845 = vpop.f32.mrf.mxu0
        %v1846 = vadd.f32 0.0, %v1845
        %1847 = vmatmul.f32.gmra.mxu0 %v1808
        %v1848 = vpop.f32.mrf.mxu0
        %v1849 = vadd.f32 0.0, %v1848
        %1850 = vmatmul.f32.gmra.mxu0 %v1811
        %v1851 = vpop.f32.mrf.mxu0
        %v1852 = vadd.f32 0.0, %v1851
        %1853 = vmatmul.f32.gmra.mxu0 %v1814
        %v1854 = vpop.f32.mrf.mxu0
        %v1855 = vadd.f32 0.0, %v1854
        %1856 = vmatmul.f32.gmra.mxu0 %v1817
        %v1857 = vpop.f32.mrf.mxu0
        %v1858 = vadd.f32 0.0, %v1857
        %1859 = vdwg.mxu0
        %v1860 = vadd.f32 %v1481, %v1837
        %v1861 = vadd.f32 %v1484, %v1840
        %v1862 = vadd.f32 %v1487, %v1843
        %v1863 = vadd.f32 %v1490, %v1846
        %v1864 = vadd.f32 %v1493, %v1849
        %v1865 = vadd.f32 %v1496, %v1852
        %v1866 = vadd.f32 %v1499, %v1855
        %v1867 = vadd.f32 %v1502, %v1858
        %1868 = vrot.lane.b32.xlu0 %v773, 104
        %v1869 = vpop.permute.xlu0 %1868
        %1870 = vrot.lane.b32.xlu0 %v776, 104
        %v1871 = vpop.permute.xlu0 %1870
        %1872 = vrot.lane.b32.xlu0 %v779, 104
        %v1873 = vpop.permute.xlu0 %1872
        %1874 = vrot.lane.b32.xlu0 %v782, 104
        %v1875 = vpop.permute.xlu0 %1874
        %1876 = vrot.lane.b32.xlu0 %v785, 104
        %v1877 = vpop.permute.xlu0 %1876
        %1878 = vrot.lane.b32.xlu0 %v788, 104
        %v1879 = vpop.permute.xlu0 %1878
        %1880 = vrot.lane.b32.xlu0 %v791, 104
        %v1881 = vpop.permute.xlu0 %1880
        %1882 = vrot.lane.b32.xlu0 %v794, 104
        %v1883 = vpop.permute.xlu0 %1882
        %1884 = vrot.lane.b32.xlu0 %v773, 72
        %v1885 = vpop.permute.xlu0 %1884
        %1886 = vrot.lane.b32.xlu0 %v776, 72
        %v1887 = vpop.permute.xlu0 %1886
        %1888 = vrot.lane.b32.xlu0 %v779, 72
        %v1889 = vpop.permute.xlu0 %1888
        %1890 = vrot.lane.b32.xlu0 %v782, 72
        %v1891 = vpop.permute.xlu0 %1890
        %1892 = vrot.lane.b32.xlu0 %v785, 72
        %v1893 = vpop.permute.xlu0 %1892
        %1894 = vrot.lane.b32.xlu0 %v788, 72
        %v1895 = vpop.permute.xlu0 %1894
        %1896 = vrot.lane.b32.xlu0 %v791, 72
        %v1897 = vpop.permute.xlu0 %1896
        %1898 = vrot.lane.b32.xlu0 %v794, 72
        %v1899 = vpop.permute.xlu0 %1898
        %v1900 = vsel %vm820, %v1869, 0
        %v1902 = vsel %vm820, %v1871, 0
        %v1904 = vsel %vm820, %v1873, 0
        %v1906 = vsel %vm820, %v1875, 0
        %v1908 = vsel %vm820, %v1877, 0
        %v1910 = vsel %vm820, %v1879, 0
        %v1912 = vsel %vm820, %v1881, 0
        %v1914 = vsel %vm820, %v1883, 0
        %v1916 = vsel %vm820, %v1885, 0
        %v1918 = vsel %vm820, %v1887, 0
        %v1920 = vsel %vm820, %v1889, 0
        %v1922 = vsel %vm820, %v1891, 0
        %v1924 = vsel %vm820, %v1893, 0
        %v1926 = vsel %vm820, %v1895, 0
        %v1928 = vsel %vm820, %v1897, 0
        %v1930 = vsel %vm820, %v1899, 0
        %1932 = vmatpush.xpose.msra.mxu0 0.0
        %1933 = vmatpush.xpose.msra.mxu0 0.0
        %1934 = vmatpush.xpose.msra.mxu0 0.0
        %1935 = vmatpush.xpose.msra.mxu0 0.0
        %1936 = vmatpush.xpose.msra.mxu0 0.0
        %1937 = vmatpush.xpose.msra.mxu0 0.0
        %1938 = vmatpush.xpose.msra.mxu0 0.0
        %1939 = vmatpush.xpose.msra.mxu0 0.0
        %1940 = vmatpush.xpose.msra.mxu0 %v1930
        %1941 = vmatpush.xpose.msra.mxu0 %v1928
        %1942 = vmatpush.xpose.msra.mxu0 %v1926
        %1943 = vmatpush.xpose.msra.mxu0 %v1924
        %1944 = vmatpush.xpose.msra.mxu0 %v1922
        %1945 = vmatpush.xpose.msra.mxu0 %v1920
        %1946 = vmatpush.xpose.msra.mxu0 %v1918
        %1947 = vmatpush.xpose.msra.mxu0 %v1916
        %1948 = vmatmul.f32.gmra.mxu0 %v1900
        %v1949 = vpop.f32.mrf.mxu0
        %v1950 = vadd.f32 0.0, %v1949
        %1951 = vmatmul.f32.gmra.mxu0 %v1902
        %v1952 = vpop.f32.mrf.mxu0
        %v1953 = vadd.f32 0.0, %v1952
        %1954 = vmatmul.f32.gmra.mxu0 %v1904
        %v1955 = vpop.f32.mrf.mxu0
        %v1956 = vadd.f32 0.0, %v1955
        %1957 = vmatmul.f32.gmra.mxu0 %v1906
        %v1958 = vpop.f32.mrf.mxu0
        %v1959 = vadd.f32 0.0, %v1958
        %1960 = vmatmul.f32.gmra.mxu0 %v1908
        %v1961 = vpop.f32.mrf.mxu0
        %v1962 = vadd.f32 0.0, %v1961
        %1963 = vmatmul.f32.gmra.mxu0 %v1910
        %v1964 = vpop.f32.mrf.mxu0
        %v1965 = vadd.f32 0.0, %v1964
        %1966 = vmatmul.f32.gmra.mxu0 %v1912
        %v1967 = vpop.f32.mrf.mxu0
        %v1968 = vadd.f32 0.0, %v1967
        %1969 = vmatmul.f32.gmra.mxu0 %v1914
        %v1970 = vpop.f32.mrf.mxu0
        %v1971 = vadd.f32 0.0, %v1970
        %1972 = vdwg.mxu0
        %v1973 = vmul.f32 %v1950, 0.35355338
        %v1974 = vmul.f32 %v1953, 0.35355338
        %v1975 = vmul.f32 %v1956, 0.35355338
        %v1976 = vmul.f32 %v1959, 0.35355338
        %v1977 = vmul.f32 %v1962, 0.35355338
        %v1978 = vmul.f32 %v1965, 0.35355338
        %v1979 = vmul.f32 %v1968, 0.35355338
        %v1980 = vmul.f32 %v1971, 0.35355338
        %v1981 = vsel %vm902, %v1973, -inf
        %1982 = vmax.xlane.f32.xlu0 %v1981
        %v1983 = vpop.xlane.xlu0 %1982
        %v1984 = vsel %vm902, %v1974, -inf
        %1985 = vmax.xlane.f32.xlu0 %v1984
        %v1986 = vpop.xlane.xlu0 %1985
        %v1987 = vsel %vm902, %v1975, -inf
        %1988 = vmax.xlane.f32.xlu0 %v1987
        %v1989 = vpop.xlane.xlu0 %1988
        %v1990 = vsel %vm902, %v1976, -inf
        %1991 = vmax.xlane.f32.xlu0 %v1990
        %v1992 = vpop.xlane.xlu0 %1991
        %v1993 = vsel %vm902, %v1977, -inf
        %1994 = vmax.xlane.f32.xlu0 %v1993
        %v1995 = vpop.xlane.xlu0 %1994
        %v1996 = vsel %vm902, %v1978, -inf
        %1997 = vmax.xlane.f32.xlu0 %v1996
        %v1998 = vpop.xlane.xlu0 %1997
        %v1999 = vsel %vm902, %v1979, -inf
        %2000 = vmax.xlane.f32.xlu0 %v1999
        %v2001 = vpop.xlane.xlu0 %2000
        %v2002 = vsel %vm924, %v1980, -inf
        %2003 = vmax.xlane.f32.xlu0 %v2002
        %v2004 = vpop.xlane.xlu0 %2003
        %v2005 = vsub.f32 %v1973, %v1983
        %v2006 = vsub.f32 %v1974, %v1986
        %v2007 = vsub.f32 %v1975, %v1989
        %v2008 = vsub.f32 %v1976, %v1992
        %v2009 = vsub.f32 %v1977, %v1995
        %v2010 = vsub.f32 %v1978, %v1998
        %v2011 = vsub.f32 %v1979, %v2001
        %v2012 = vsub.f32 %v1980, %v2004
        %v2013 = vmul.f32 %v2005, 1.442695
        %v2014 = vpow.pop %v2013
        %v2015 = vmul.f32 %v2006, 1.442695
        %v2016 = vpow.pop %v2015
        %v2017 = vmul.f32 %v2007, 1.442695
        %v2018 = vpow.pop %v2017
        %v2019 = vmul.f32 %v2008, 1.442695
        %v2020 = vpow.pop %v2019
        %v2021 = vmul.f32 %v2009, 1.442695
        %v2022 = vpow.pop %v2021
        %v2023 = vmul.f32 %v2010, 1.442695
        %v2024 = vpow.pop %v2023
        %v2025 = vmul.f32 %v2011, 1.442695
        %v2026 = vpow.pop %v2025
        %v2027 = vmul.f32 %v2012, 1.442695
        %v2028 = vpow.pop %v2027
        %v2029 = vsel %vm902, %v2014, 0.0
        %2030 = vadd.xlane.f32.xlu0 %v2029
        %v2031 = vpop.xlane.xlu0 %2030
        %v2032 = vsel %vm902, %v2016, 0.0
        %2033 = vadd.xlane.f32.xlu0 %v2032
        %v2034 = vpop.xlane.xlu0 %2033
        %v2035 = vsel %vm902, %v2018, 0.0
        %2036 = vadd.xlane.f32.xlu0 %v2035
        %v2037 = vpop.xlane.xlu0 %2036
        %v2038 = vsel %vm902, %v2020, 0.0
        %2039 = vadd.xlane.f32.xlu0 %v2038
        %v2040 = vpop.xlane.xlu0 %2039
        %v2041 = vsel %vm902, %v2022, 0.0
        %2042 = vadd.xlane.f32.xlu0 %v2041
        %v2043 = vpop.xlane.xlu0 %2042
        %v2044 = vsel %vm902, %v2024, 0.0
        %2045 = vadd.xlane.f32.xlu0 %v2044
        %v2046 = vpop.xlane.xlu0 %2045
        %v2047 = vsel %vm902, %v2026, 0.0
        %2048 = vadd.xlane.f32.xlu0 %v2047
        %v2049 = vpop.xlane.xlu0 %2048
        %v2050 = vsel %vm924, %v2028, 0.0
        %2051 = vadd.xlane.f32.xlu0 %v2050
        %v2052 = vpop.xlane.xlu0 %2051
        %v2053 = vrcp.pop %v2031
        %v2054 = vrcp.pop %v2034
        %v2055 = vrcp.pop %v2037
        %v2056 = vrcp.pop %v2040
        %v2057 = vrcp.pop %v2043
        %v2058 = vrcp.pop %v2046
        %v2059 = vrcp.pop %v2049
        %v2060 = vrcp.pop %v2052
        %v2061 = vmul.f32 %v2014, %v2053
        %v2062 = vmul.f32 %v2016, %v2054
        %v2063 = vmul.f32 %v2018, %v2055
        %v2064 = vmul.f32 %v2020, %v2056
        %v2065 = vmul.f32 %v2022, %v2057
        %v2066 = vmul.f32 %v2024, %v2058
        %v2067 = vmul.f32 %v2026, %v2059
        %v2068 = vmul.f32 %v2028, %v2060
        %2069 = vrot.lane.b32.xlu0 %v773, 40
        %v2070 = vpop.permute.xlu0 %2069
        %2071 = vrot.lane.b32.xlu0 %v776, 40
        %v2072 = vpop.permute.xlu0 %2071
        %2073 = vrot.lane.b32.xlu0 %v779, 40
        %v2074 = vpop.permute.xlu0 %2073
        %2075 = vrot.lane.b32.xlu0 %v782, 40
        %v2076 = vpop.permute.xlu0 %2075
        %2077 = vrot.lane.b32.xlu0 %v785, 40
        %v2078 = vpop.permute.xlu0 %2077
        %2079 = vrot.lane.b32.xlu0 %v788, 40
        %v2080 = vpop.permute.xlu0 %2079
        %2081 = vrot.lane.b32.xlu0 %v791, 40
        %v2082 = vpop.permute.xlu0 %2081
        %2083 = vrot.lane.b32.xlu0 %v794, 40
        %v2084 = vpop.permute.xlu0 %2083
        %v2093 = vsel %vm902, %v2061, 0
        %v2096 = vsel %vm902, %v2062, 0
        %v2099 = vsel %vm902, %v2063, 0
        %v2102 = vsel %vm902, %v2064, 0
        %v2105 = vsel %vm902, %v2065, 0
        %v2108 = vsel %vm902, %v2066, 0
        %v2111 = vsel %vm902, %v2067, 0
        %v2114 = vsel %vm902, %v2068, 0
        %v2116 = vsel %vm1039, %v2084, 0
        %2118 = vmatpush.msra.mxu0 0.0
        %2119 = vmatpush.msra.mxu0 0.0
        %2120 = vmatpush.msra.mxu0 0.0
        %2121 = vmatpush.msra.mxu0 0.0
        %2122 = vmatpush.msra.mxu0 0.0
        %2123 = vmatpush.msra.mxu0 0.0
        %2124 = vmatpush.msra.mxu0 0.0
        %2125 = vmatpush.msra.mxu0 0.0
        %2126 = vmatpush.msra.mxu0 %v2116
        %2127 = vmatpush.msra.mxu0 %v2082
        %2128 = vmatpush.msra.mxu0 %v2080
        %2129 = vmatpush.msra.mxu0 %v2078
        %2130 = vmatpush.msra.mxu0 %v2076
        %2131 = vmatpush.msra.mxu0 %v2074
        %2132 = vmatpush.msra.mxu0 %v2072
        %2133 = vmatpush.msra.mxu0 %v2070
        %2134 = vmatmul.f32.gmra.mxu0 %v2093
        %v2135 = vpop.f32.mrf.mxu0
        %v2136 = vadd.f32 0.0, %v2135
        %2137 = vmatmul.f32.gmra.mxu0 %v2096
        %v2138 = vpop.f32.mrf.mxu0
        %v2139 = vadd.f32 0.0, %v2138
        %2140 = vmatmul.f32.gmra.mxu0 %v2099
        %v2141 = vpop.f32.mrf.mxu0
        %v2142 = vadd.f32 0.0, %v2141
        %2143 = vmatmul.f32.gmra.mxu0 %v2102
        %v2144 = vpop.f32.mrf.mxu0
        %v2145 = vadd.f32 0.0, %v2144
        %2146 = vmatmul.f32.gmra.mxu0 %v2105
        %v2147 = vpop.f32.mrf.mxu0
        %v2148 = vadd.f32 0.0, %v2147
        %2149 = vmatmul.f32.gmra.mxu0 %v2108
        %v2150 = vpop.f32.mrf.mxu0
        %v2151 = vadd.f32 0.0, %v2150
        %2152 = vmatmul.f32.gmra.mxu0 %v2111
        %v2153 = vpop.f32.mrf.mxu0
        %v2154 = vadd.f32 0.0, %v2153
        %2155 = vmatmul.f32.gmra.mxu0 %v2114
        %v2156 = vpop.f32.mrf.mxu0
        %v2157 = vadd.f32 0.0, %v2156
        %2158 = vdwg.mxu0
        %v2160 = vsel %vm820, %v2136, 0
        %v2163 = vsel %vm820, %v2139, 0
        %v2166 = vsel %vm820, %v2142, 0
        %v2169 = vsel %vm820, %v2145, 0
        %v2172 = vsel %vm820, %v2148, 0
        %v2175 = vsel %vm820, %v2151, 0
        %v2178 = vsel %vm820, %v2154, 0
        %v2181 = vsel %vm820, %v2157, 0
        %2183 = vmatpush.msra.mxu0 0.0
        %2184 = vmatpush.msra.mxu0 0.0
        %2185 = vmatpush.msra.mxu0 0.0
        %2186 = vmatpush.msra.mxu0 0.0
        %2187 = vmatpush.msra.mxu0 0.0
        %2188 = vmatpush.msra.mxu0 0.0
        %2189 = vmatpush.msra.mxu0 0.0
        %2190 = vmatpush.msra.mxu0 0.0
        %2191 = vmatpush.msra.mxu0 0.0
        %2192 = vmatpush.msra.mxu0 0.0
        %2193 = vmatpush.msra.mxu0 0.0
        %2194 = vmatpush.msra.mxu0 0.0
        %2195 = vmatpush.msra.mxu0 0.0
        %2196 = vmatpush.msra.mxu0 0.0
        %2197 = vmatpush.msra.mxu0 0.0
        %2198 = vmatpush.msra.mxu0 %v699
        %2199 = vmatmul.f32.gmra.mxu0 %v2160
        %v2200 = vpop.f32.mrf.mxu0
        %v2201 = vadd.f32 0.0, %v2200
        %2202 = vmatmul.f32.gmra.mxu0 %v2163
        %v2203 = vpop.f32.mrf.mxu0
        %v2204 = vadd.f32 0.0, %v2203
        %2205 = vmatmul.f32.gmra.mxu0 %v2166
        %v2206 = vpop.f32.mrf.mxu0
        %v2207 = vadd.f32 0.0, %v2206
        %2208 = vmatmul.f32.gmra.mxu0 %v2169
        %v2209 = vpop.f32.mrf.mxu0
        %v2210 = vadd.f32 0.0, %v2209
        %2211 = vmatmul.f32.gmra.mxu0 %v2172
        %v2212 = vpop.f32.mrf.mxu0
        %v2213 = vadd.f32 0.0, %v2212
        %2214 = vmatmul.f32.gmra.mxu0 %v2175
        %v2215 = vpop.f32.mrf.mxu0
        %v2216 = vadd.f32 0.0, %v2215
        %2217 = vmatmul.f32.gmra.mxu0 %v2178
        %v2218 = vpop.f32.mrf.mxu0
        %v2219 = vadd.f32 0.0, %v2218
        %2220 = vmatmul.f32.gmra.mxu0 %v2181
        %v2221 = vpop.f32.mrf.mxu0
        %v2222 = vadd.f32 0.0, %v2221
        %2223 = vdwg.mxu0
        %v2224 = vadd.f32 %v1860, %v2201
        %v2225 = vadd.f32 %v1861, %v2204
        %v2226 = vadd.f32 %v1862, %v2207
        %v2227 = vadd.f32 %v1863, %v2210
        %v2228 = vadd.f32 %v1864, %v2213
        %v2229 = vadd.f32 %v1865, %v2216
        %v2230 = vadd.f32 %v1866, %v2219
        %v2231 = vadd.f32 %v1867, %v2222
        %v2233 = vperm.slane %v700, 0
        %v2235 = vadd.f32 %v2224, %v2233
        %v2236 = vadd.f32 %v2225, %v2233
        %v2237 = vadd.f32 %v2226, %v2233
        %v2238 = vadd.f32 %v2227, %v2233
        %v2239 = vadd.f32 %v2228, %v2233
        %v2240 = vadd.f32 %v2229, %v2233
        %v2241 = vadd.f32 %v2230, %v2233
        %v2242 = vadd.f32 %v2231, %v2233
        %v2243 = vadd.f32 %v719, %v2235
        %v2244 = vadd.f32 %v720, %v2236
        %v2245 = vadd.f32 %v721, %v2237
        %v2246 = vadd.f32 %v722, %v2238
        %v2247 = vadd.f32 %v723, %v2239
        %v2248 = vadd.f32 %v724, %v2240
        %v2249 = vadd.f32 %v725, %v2241
        %v2250 = vadd.f32 %v726, %v2242
        %v2251 = vsel %vm730, %v2243, 0.0
        %2252 = vadd.xlane.f32.xlu0 %v2251
        %v2253 = vpop.xlane.xlu0 %2252
        %v2254 = vsel %vm730, %v2244, 0.0
        %2255 = vadd.xlane.f32.xlu0 %v2254
        %v2256 = vpop.xlane.xlu0 %2255
        %v2257 = vsel %vm730, %v2245, 0.0
        %2258 = vadd.xlane.f32.xlu0 %v2257
        %v2259 = vpop.xlane.xlu0 %2258
        %v2260 = vsel %vm730, %v2246, 0.0
        %2261 = vadd.xlane.f32.xlu0 %v2260
        %v2262 = vpop.xlane.xlu0 %2261
        %v2263 = vsel %vm730, %v2247, 0.0
        %2264 = vadd.xlane.f32.xlu0 %v2263
        %v2265 = vpop.xlane.xlu0 %2264
        %v2266 = vsel %vm730, %v2248, 0.0
        %2267 = vadd.xlane.f32.xlu0 %v2266
        %v2268 = vpop.xlane.xlu0 %2267
        %v2269 = vsel %vm730, %v2249, 0.0
        %2270 = vadd.xlane.f32.xlu0 %v2269
        %v2271 = vpop.xlane.xlu0 %2270
        %vm2272 = vcmask 259072
        %v2273 = vsel %vm2272, %v2250, 0.0
        %2274 = vadd.xlane.f32.xlu0 %v2273
        %v2275 = vpop.xlane.xlu0 %2274
        %v2276 = vrcp.pop 32.0
        %v2277 = vmul.f32 32.0, %v2276
        %v2278 = vsub.f32 1.0, %v2277
        %v2279 = vmul.f32 %v2276, %v2278
        %v2280 = vadd.f32 %v2276, %v2279
        %vm2281 = vweird.f32 %v2276
        %v2282 = vsel %vm2281, %v2276, %v2280
        %v2283 = vmul.f32 %v2253, %v2282
        %v2284 = vmul.f32 %v2256, %v2282
        %v2285 = vmul.f32 %v2259, %v2282
        %v2286 = vmul.f32 %v2262, %v2282
        %v2287 = vmul.f32 %v2265, %v2282
        %v2288 = vmul.f32 %v2268, %v2282
        %v2289 = vmul.f32 %v2271, %v2282
        %v2290 = vmul.f32 %v2275, %v2282
        %v2291 = vsub.f32 %v2243, %v2283
        %v2292 = vsub.f32 %v2244, %v2284
        %v2293 = vsub.f32 %v2245, %v2285
        %v2294 = vsub.f32 %v2246, %v2286
        %v2295 = vsub.f32 %v2247, %v2287
        %v2296 = vsub.f32 %v2248, %v2288
        %v2297 = vsub.f32 %v2249, %v2289
        %v2298 = vsub.f32 %v2250, %v2290
        %v2299 = vmul.f32 %v2291, %v2291
        %v2300 = vmul.f32 %v2292, %v2292
        %v2301 = vmul.f32 %v2293, %v2293
        %v2302 = vmul.f32 %v2294, %v2294
        %v2303 = vmul.f32 %v2295, %v2295
        %v2304 = vmul.f32 %v2296, %v2296
        %v2305 = vmul.f32 %v2297, %v2297
        %v2306 = vmul.f32 %v2298, %v2298
        %v2307 = vsel %vm730, %v2299, 0.0
        %2308 = vadd.xlane.f32.xlu0 %v2307
        %v2309 = vpop.xlane.xlu0 %2308
        %v2310 = vsel %vm730, %v2300, 0.0
        %2311 = vadd.xlane.f32.xlu0 %v2310
        %v2312 = vpop.xlane.xlu0 %2311
        %v2313 = vsel %vm730, %v2301, 0.0
        %2314 = vadd.xlane.f32.xlu0 %v2313
        %v2315 = vpop.xlane.xlu0 %2314
        %v2316 = vsel %vm730, %v2302, 0.0
        %2317 = vadd.xlane.f32.xlu0 %v2316
        %v2318 = vpop.xlane.xlu0 %2317
        %v2319 = vsel %vm730, %v2303, 0.0
        %2320 = vadd.xlane.f32.xlu0 %v2319
        %v2321 = vpop.xlane.xlu0 %2320
        %v2322 = vsel %vm730, %v2304, 0.0
        %2323 = vadd.xlane.f32.xlu0 %v2322
        %v2324 = vpop.xlane.xlu0 %2323
        %v2325 = vsel %vm730, %v2305, 0.0
        %2326 = vadd.xlane.f32.xlu0 %v2325
        %v2327 = vpop.xlane.xlu0 %2326
        %v2328 = vsel %vm2272, %v2306, 0.0
        %2329 = vadd.xlane.f32.xlu0 %v2328
        %v2330 = vpop.xlane.xlu0 %2329
        %v2331 = vmul.f32 %v2309, %v2282
        %v2332 = vmul.f32 %v2312, %v2282
        %v2333 = vmul.f32 %v2315, %v2282
        %v2334 = vmul.f32 %v2318, %v2282
        %v2335 = vmul.f32 %v2321, %v2282
        %v2336 = vmul.f32 %v2324, %v2282
        %v2337 = vmul.f32 %v2327, %v2282
        %v2338 = vmul.f32 %v2330, %v2282
        %v2339 = vadd.f32 %v2331, 1e-05
        %v2340 = vadd.f32 %v2332, 1e-05
        %v2341 = vadd.f32 %v2333, 1e-05
        %v2342 = vadd.f32 %v2334, 1e-05
        %v2343 = vadd.f32 %v2335, 1e-05
        %v2344 = vadd.f32 %v2336, 1e-05
        %v2345 = vadd.f32 %v2337, 1e-05
        %v2346 = vadd.f32 %v2338, 1e-05
        %v2347 = vrsqrt.pop %v2339
        %v2348 = vmul.f32 %v2347, %v2339
        %v2349 = vmul.f32 %v2348, %v2347
        %v2350 = vmul.f32 0.5, %v2349
        %v2351 = vsub.f32 1.5, %v2350
        %v2352 = vmul.f32 %v2347, %v2351
        %vm2353 = vweird.f32 %v2339
        %vm2354 = vweird.f32 %v2347
        %vm2355 = vmor %vm2353, %vm2354
        %v2356 = vsel %vm2355, %v2347, %v2352
        %v2357 = vrsqrt.pop %v2340
        %v2358 = vmul.f32 %v2357, %v2340
        %v2359 = vmul.f32 %v2358, %v2357
        %v2360 = vmul.f32 0.5, %v2359
        %v2361 = vsub.f32 1.5, %v2360
        %v2362 = vmul.f32 %v2357, %v2361
        %vm2363 = vweird.f32 %v2340
        %vm2364 = vweird.f32 %v2357
        %vm2365 = vmor %vm2363, %vm2364
        %v2366 = vsel %vm2365, %v2357, %v2362
        %v2367 = vrsqrt.pop %v2341
        %v2368 = vmul.f32 %v2367, %v2341
        %v2369 = vmul.f32 %v2368, %v2367
        %v2370 = vmul.f32 0.5, %v2369
        %v2371 = vsub.f32 1.5, %v2370
        %v2372 = vmul.f32 %v2367, %v2371
        %vm2373 = vweird.f32 %v2341
        %vm2374 = vweird.f32 %v2367
        %vm2375 = vmor %vm2373, %vm2374
        %v2376 = vsel %vm2375, %v2367, %v2372
        %v2377 = vrsqrt.pop %v2342
        %v2378 = vmul.f32 %v2377, %v2342
        %v2379 = vmul.f32 %v2378, %v2377
        %v2380 = vmul.f32 0.5, %v2379
        %v2381 = vsub.f32 1.5, %v2380
        %v2382 = vmul.f32 %v2377, %v2381
        %vm2383 = vweird.f32 %v2342
        %vm2384 = vweird.f32 %v2377
        %vm2385 = vmor %vm2383, %vm2384
        %v2386 = vsel %vm2385, %v2377, %v2382
        %v2387 = vrsqrt.pop %v2343
        %v2388 = vmul.f32 %v2387, %v2343
        %v2389 = vmul.f32 %v2388, %v2387
        %v2390 = vmul.f32 0.5, %v2389
        %v2391 = vsub.f32 1.5, %v2390
        %v2392 = vmul.f32 %v2387, %v2391
        %vm2393 = vweird.f32 %v2343
        %vm2394 = vweird.f32 %v2387
        %vm2395 = vmor %vm2393, %vm2394
        %v2396 = vsel %vm2395, %v2387, %v2392
        %v2397 = vrsqrt.pop %v2344
        %v2398 = vmul.f32 %v2397, %v2344
        %v2399 = vmul.f32 %v2398, %v2397
        %v2400 = vmul.f32 0.5, %v2399
        %v2401 = vsub.f32 1.5, %v2400
        %v2402 = vmul.f32 %v2397, %v2401
        %vm2403 = vweird.f32 %v2344
        %vm2404 = vweird.f32 %v2397
        %vm2405 = vmor %vm2403, %vm2404
        %v2406 = vsel %vm2405, %v2397, %v2402
        %v2407 = vrsqrt.pop %v2345
        %v2408 = vmul.f32 %v2407, %v2345
        %v2409 = vmul.f32 %v2408, %v2407
        %v2410 = vmul.f32 0.5, %v2409
        %v2411 = vsub.f32 1.5, %v2410
        %v2412 = vmul.f32 %v2407, %v2411
        %vm2413 = vweird.f32 %v2345
        %vm2414 = vweird.f32 %v2407
        %vm2415 = vmor %vm2413, %vm2414
        %v2416 = vsel %vm2415, %v2407, %v2412
        %v2417 = vrsqrt.pop %v2346
        %v2418 = vmul.f32 %v2417, %v2346
        %v2419 = vmul.f32 %v2418, %v2417
        %v2420 = vmul.f32 0.5, %v2419
        %v2421 = vsub.f32 1.5, %v2420
        %v2422 = vmul.f32 %v2417, %v2421
        %vm2423 = vweird.f32 %v2346
        %vm2424 = vweird.f32 %v2417
        %vm2425 = vmor %vm2423, %vm2424
        %v2426 = vsel %vm2425, %v2417, %v2422
        %v2427 = vmul.f32 %v2291, %v2356
        %v2428 = vmul.f32 %v2292, %v2366
        %v2429 = vmul.f32 %v2293, %v2376
        %v2430 = vmul.f32 %v2294, %v2386
        %v2431 = vmul.f32 %v2295, %v2396
        %v2432 = vmul.f32 %v2296, %v2406
        %v2433 = vmul.f32 %v2297, %v2416
        %v2434 = vmul.f32 %v2298, %v2426
        %v2436 = vperm.slane %v701, 0
        %v2438 = vmul.f32 %v2427, %v2436
        %v2439 = vmul.f32 %v2428, %v2436
        %v2440 = vmul.f32 %v2429, %v2436
        %v2441 = vmul.f32 %v2430, %v2436
        %v2442 = vmul.f32 %v2431, %v2436
        %v2443 = vmul.f32 %v2432, %v2436
        %v2444 = vmul.f32 %v2433, %v2436
        %v2445 = vmul.f32 %v2434, %v2436
        %v2447 = vperm.slane %v702, 0
        %v2449 = vadd.f32 %v2438, %v2447
        %v2450 = vadd.f32 %v2439, %v2447
        %v2451 = vadd.f32 %v2440, %v2447
        %v2452 = vadd.f32 %v2441, %v2447
        %v2453 = vadd.f32 %v2442, %v2447
        %v2454 = vadd.f32 %v2443, %v2447
        %v2455 = vadd.f32 %v2444, %v2447
        %v2456 = vadd.f32 %v2445, %v2447
        %v2458 = vperm.slane %v707, 0
        %v2461 = vsel %vm730, %v2449, 0
        %v2464 = vsel %vm730, %v2450, 0
        %v2467 = vsel %vm730, %v2451, 0
        %v2470 = vsel %vm730, %v2452, 0
        %v2473 = vsel %vm730, %v2453, 0
        %v2476 = vsel %vm730, %v2454, 0
        %v2479 = vsel %vm730, %v2455, 0
        %v2482 = vsel %vm730, %v2456, 0
        %2484 = vmatpush.msra.mxu0 0.0
        %2485 = vmatpush.msra.mxu0 0.0
        %2486 = vmatpush.msra.mxu0 0.0
        %2487 = vmatpush.msra.mxu0 0.0
        %2488 = vmatpush.msra.mxu0 0.0
        %2489 = vmatpush.msra.mxu0 0.0
        %2490 = vmatpush.msra.mxu0 0.0
        %2491 = vmatpush.msra.mxu0 0.0
        %2492 = vmatpush.msra.mxu0 0.0
        %2493 = vmatpush.msra.mxu0 0.0
        %2494 = vmatpush.msra.mxu0 0.0
        %2495 = vmatpush.msra.mxu0 0.0
        %2496 = vmatpush.msra.mxu0 %v706
        %2497 = vmatpush.msra.mxu0 %v705
        %2498 = vmatpush.msra.mxu0 %v704
        %2499 = vmatpush.msra.mxu0 %v703
        %2500 = vmatmul.f32.gmra.mxu0 %v2461
        %v2501 = vpop.f32.mrf.mxu0
        %v2502 = vadd.f32 %v2458, %v2501
        %2503 = vmatmul.f32.gmra.mxu0 %v2464
        %v2504 = vpop.f32.mrf.mxu0
        %v2505 = vadd.f32 %v2458, %v2504
        %2506 = vmatmul.f32.gmra.mxu0 %v2467
        %v2507 = vpop.f32.mrf.mxu0
        %v2508 = vadd.f32 %v2458, %v2507
        %2509 = vmatmul.f32.gmra.mxu0 %v2470
        %v2510 = vpop.f32.mrf.mxu0
        %v2511 = vadd.f32 %v2458, %v2510
        %2512 = vmatmul.f32.gmra.mxu0 %v2473
        %v2513 = vpop.f32.mrf.mxu0
        %v2514 = vadd.f32 %v2458, %v2513
        %2515 = vmatmul.f32.gmra.mxu0 %v2476
        %v2516 = vpop.f32.mrf.mxu0
        %v2517 = vadd.f32 %v2458, %v2516
        %2518 = vmatmul.f32.gmra.mxu0 %v2479
        %v2519 = vpop.f32.mrf.mxu0
        %v2520 = vadd.f32 %v2458, %v2519
        %2521 = vmatmul.f32.gmra.mxu0 %v2482
        %v2522 = vpop.f32.mrf.mxu0
        %v2523 = vadd.f32 %v2458, %v2522
        %2524 = vdwg.mxu0
        %v2525 = vmax.f32 %v2502, 0.0
        %v2526 = vmax.f32 %v2505, 0.0
        %v2527 = vmax.f32 %v2508, 0.0
        %v2528 = vmax.f32 %v2511, 0.0
        %v2529 = vmax.f32 %v2514, 0.0
        %v2530 = vmax.f32 %v2517, 0.0
        %v2531 = vmax.f32 %v2520, 0.0
        %v2532 = vmax.f32 %v2523, 0.0
        %v2534 = vperm.slane %v716, 0
        %vm2536 = vcmask 523264
        %v2538 = vsel %vm2536, %v2525, 0
        %v2541 = vsel %vm2536, %v2526, 0
        %v2544 = vsel %vm2536, %v2527, 0
        %v2547 = vsel %vm2536, %v2528, 0
        %v2550 = vsel %vm2536, %v2529, 0
        %v2553 = vsel %vm2536, %v2530, 0
        %v2556 = vsel %vm2536, %v2531, 0
        %v2559 = vsel %vm2536, %v2532, 0
        %2561 = vmatpush.msra.mxu0 0.0
        %2562 = vmatpush.msra.mxu0 0.0
        %2563 = vmatpush.msra.mxu0 0.0
        %2564 = vmatpush.msra.mxu0 0.0
        %2565 = vmatpush.msra.mxu0 0.0
        %2566 = vmatpush.msra.mxu0 0.0
        %2567 = vmatpush.msra.mxu0 0.0
        %2568 = vmatpush.msra.mxu0 0.0
        %2569 = vmatpush.msra.mxu0 %v715
        %2570 = vmatpush.msra.mxu0 %v714
        %2571 = vmatpush.msra.mxu0 %v713
        %2572 = vmatpush.msra.mxu0 %v712
        %2573 = vmatpush.msra.mxu0 %v711
        %2574 = vmatpush.msra.mxu0 %v710
        %2575 = vmatpush.msra.mxu0 %v709
        %2576 = vmatpush.msra.mxu0 %v708
        %2577 = vmatmul.f32.gmra.mxu0 %v2538
        %v2578 = vpop.f32.mrf.mxu0
        %v2579 = vadd.f32 %v2534, %v2578
        %2580 = vmatmul.f32.gmra.mxu0 %v2541
        %v2581 = vpop.f32.mrf.mxu0
        %v2582 = vadd.f32 %v2534, %v2581
        %2583 = vmatmul.f32.gmra.mxu0 %v2544
        %v2584 = vpop.f32.mrf.mxu0
        %v2585 = vadd.f32 %v2534, %v2584
        %2586 = vmatmul.f32.gmra.mxu0 %v2547
        %v2587 = vpop.f32.mrf.mxu0
        %v2588 = vadd.f32 %v2534, %v2587
        %2589 = vmatmul.f32.gmra.mxu0 %v2550
        %v2590 = vpop.f32.mrf.mxu0
        %v2591 = vadd.f32 %v2534, %v2590
        %2592 = vmatmul.f32.gmra.mxu0 %v2553
        %v2593 = vpop.f32.mrf.mxu0
        %v2594 = vadd.f32 %v2534, %v2593
        %2595 = vmatmul.f32.gmra.mxu0 %v2556
        %v2596 = vpop.f32.mrf.mxu0
        %v2597 = vadd.f32 %v2534, %v2596
        %2598 = vmatmul.f32.gmra.mxu0 %v2559
        %v2599 = vpop.f32.mrf.mxu0
        %v2600 = vadd.f32 %v2534, %v2599
        %2601 = vdwg.mxu0
        %v2602 = vadd.f32 %v2449, %v2579
        %v2603 = vadd.f32 %v2450, %v2582
        %v2604 = vadd.f32 %v2451, %v2585
        %v2605 = vadd.f32 %v2452, %v2588
        %v2606 = vadd.f32 %v2453, %v2591
        %v2607 = vadd.f32 %v2454, %v2594
        %v2608 = vadd.f32 %v2455, %v2597
        %v2609 = vadd.f32 %v2456, %v2600
        %v2610 = vsel %vm730, %v2602, 0.0
        %2611 = vadd.xlane.f32.xlu0 %v2610
        %v2612 = vpop.xlane.xlu0 %2611
        %v2613 = vsel %vm730, %v2603, 0.0
        %2614 = vadd.xlane.f32.xlu0 %v2613
        %v2615 = vpop.xlane.xlu0 %2614
        %v2616 = vsel %vm730, %v2604, 0.0
        %2617 = vadd.xlane.f32.xlu0 %v2616
        %v2618 = vpop.xlane.xlu0 %2617
        %v2619 = vsel %vm730, %v2605, 0.0
        %2620 = vadd.xlane.f32.xlu0 %v2619
        %v2621 = vpop.xlane.xlu0 %2620
        %v2622 = vsel %vm730, %v2606, 0.0
        %2623 = vadd.xlane.f32.xlu0 %v2622
        %v2624 = vpop.xlane.xlu0 %2623
        %v2625 = vsel %vm730, %v2607, 0.0
        %2626 = vadd.xlane.f32.xlu0 %v2625
        %v2627 = vpop.xlane.xlu0 %2626
        %v2628 = vsel %vm730, %v2608, 0.0
        %2629 = vadd.xlane.f32.xlu0 %v2628
        %v2630 = vpop.xlane.xlu0 %2629
        %v2631 = vsel %vm2272, %v2609, 0.0
        %2632 = vadd.xlane.f32.xlu0 %v2631
        %v2633 = vpop.xlane.xlu0 %2632
        %v2634 = vmul.f32 %v2612, %v2282
        %v2635 = vmul.f32 %v2615, %v2282
        %v2636 = vmul.f32 %v2618, %v2282
        %v2637 = vmul.f32 %v2621, %v2282
        %v2638 = vmul.f32 %v2624, %v2282
        %v2639 = vmul.f32 %v2627, %v2282
        %v2640 = vmul.f32 %v2630, %v2282
        %v2641 = vmul.f32 %v2633, %v2282
        %v2642 = vsub.f32 %v2602, %v2634
        %v2643 = vsub.f32 %v2603, %v2635
        %v2644 = vsub.f32 %v2604, %v2636
        %v2645 = vsub.f32 %v2605, %v2637
        %v2646 = vsub.f32 %v2606, %v2638
        %v2647 = vsub.f32 %v2607, %v2639
        %v2648 = vsub.f32 %v2608, %v2640
        %v2649 = vsub.f32 %v2609, %v2641
        %v2650 = vmul.f32 %v2642, %v2642
        %v2651 = vmul.f32 %v2643, %v2643
        %v2652 = vmul.f32 %v2644, %v2644
        %v2653 = vmul.f32 %v2645, %v2645
        %v2654 = vmul.f32 %v2646, %v2646
        %v2655 = vmul.f32 %v2647, %v2647
        %v2656 = vmul.f32 %v2648, %v2648
        %v2657 = vmul.f32 %v2649, %v2649
        %v2658 = vsel %vm730, %v2650, 0.0
        %2659 = vadd.xlane.f32.xlu0 %v2658
        %v2660 = vpop.xlane.xlu0 %2659
        %v2661 = vsel %vm730, %v2651, 0.0
        %2662 = vadd.xlane.f32.xlu0 %v2661
        %v2663 = vpop.xlane.xlu0 %2662
        %v2664 = vsel %vm730, %v2652, 0.0
        %2665 = vadd.xlane.f32.xlu0 %v2664
        %v2666 = vpop.xlane.xlu0 %2665
        %v2667 = vsel %vm730, %v2653, 0.0
        %2668 = vadd.xlane.f32.xlu0 %v2667
        %v2669 = vpop.xlane.xlu0 %2668
        %v2670 = vsel %vm730, %v2654, 0.0
        %2671 = vadd.xlane.f32.xlu0 %v2670
        %v2672 = vpop.xlane.xlu0 %2671
        %v2673 = vsel %vm730, %v2655, 0.0
        %2674 = vadd.xlane.f32.xlu0 %v2673
        %v2675 = vpop.xlane.xlu0 %2674
        %v2676 = vsel %vm730, %v2656, 0.0
        %2677 = vadd.xlane.f32.xlu0 %v2676
        %v2678 = vpop.xlane.xlu0 %2677
        %v2679 = vsel %vm2272, %v2657, 0.0
        %2680 = vadd.xlane.f32.xlu0 %v2679
        %v2681 = vpop.xlane.xlu0 %2680
        %v2682 = vmul.f32 %v2660, %v2282
        %v2683 = vmul.f32 %v2663, %v2282
        %v2684 = vmul.f32 %v2666, %v2282
        %v2685 = vmul.f32 %v2669, %v2282
        %v2686 = vmul.f32 %v2672, %v2282
        %v2687 = vmul.f32 %v2675, %v2282
        %v2688 = vmul.f32 %v2678, %v2282
        %v2689 = vmul.f32 %v2681, %v2282
        %v2690 = vadd.f32 %v2682, 1e-05
        %v2691 = vadd.f32 %v2683, 1e-05
        %v2692 = vadd.f32 %v2684, 1e-05
        %v2693 = vadd.f32 %v2685, 1e-05
        %v2694 = vadd.f32 %v2686, 1e-05
        %v2695 = vadd.f32 %v2687, 1e-05
        %v2696 = vadd.f32 %v2688, 1e-05
        %v2697 = vadd.f32 %v2689, 1e-05
        %v2698 = vrsqrt.pop %v2690
        %v2699 = vmul.f32 %v2698, %v2690
        %v2700 = vmul.f32 %v2699, %v2698
        %v2701 = vmul.f32 0.5, %v2700
        %v2702 = vsub.f32 1.5, %v2701
        %v2703 = vmul.f32 %v2698, %v2702
        %vm2704 = vweird.f32 %v2690
        %vm2705 = vweird.f32 %v2698
        %vm2706 = vmor %vm2704, %vm2705
        %v2707 = vsel %vm2706, %v2698, %v2703
        %v2708 = vrsqrt.pop %v2691
        %v2709 = vmul.f32 %v2708, %v2691
        %v2710 = vmul.f32 %v2709, %v2708
        %v2711 = vmul.f32 0.5, %v2710
        %v2712 = vsub.f32 1.5, %v2711
        %v2713 = vmul.f32 %v2708, %v2712
        %vm2714 = vweird.f32 %v2691
        %vm2715 = vweird.f32 %v2708
        %vm2716 = vmor %vm2714, %vm2715
        %v2717 = vsel %vm2716, %v2708, %v2713
        %v2718 = vrsqrt.pop %v2692
        %v2719 = vmul.f32 %v2718, %v2692
        %v2720 = vmul.f32 %v2719, %v2718
        %v2721 = vmul.f32 0.5, %v2720
        %v2722 = vsub.f32 1.5, %v2721
        %v2723 = vmul.f32 %v2718, %v2722
        %vm2724 = vweird.f32 %v2692
        %vm2725 = vweird.f32 %v2718
        %vm2726 = vmor %vm2724, %vm2725
        %v2727 = vsel %vm2726, %v2718, %v2723
        %v2728 = vrsqrt.pop %v2693
        %v2729 = vmul.f32 %v2728, %v2693
        %v2730 = vmul.f32 %v2729, %v2728
        %v2731 = vmul.f32 0.5, %v2730
        %v2732 = vsub.f32 1.5, %v2731
        %v2733 = vmul.f32 %v2728, %v2732
        %vm2734 = vweird.f32 %v2693
        %vm2735 = vweird.f32 %v2728
        %vm2736 = vmor %vm2734, %vm2735
        %v2737 = vsel %vm2736, %v2728, %v2733
        %v2738 = vrsqrt.pop %v2694
        %v2739 = vmul.f32 %v2738, %v2694
        %v2740 = vmul.f32 %v2739, %v2738
        %v2741 = vmul.f32 0.5, %v2740
        %v2742 = vsub.f32 1.5, %v2741
        %v2743 = vmul.f32 %v2738, %v2742
        %vm2744 = vweird.f32 %v2694
        %vm2745 = vweird.f32 %v2738
        %vm2746 = vmor %vm2744, %vm2745
        %v2747 = vsel %vm2746, %v2738, %v2743
        %v2748 = vrsqrt.pop %v2695
        %v2749 = vmul.f32 %v2748, %v2695
        %v2750 = vmul.f32 %v2749, %v2748
        %v2751 = vmul.f32 0.5, %v2750
        %v2752 = vsub.f32 1.5, %v2751
        %v2753 = vmul.f32 %v2748, %v2752
        %vm2754 = vweird.f32 %v2695
        %vm2755 = vweird.f32 %v2748
        %vm2756 = vmor %vm2754, %vm2755
        %v2757 = vsel %vm2756, %v2748, %v2753
        %v2758 = vrsqrt.pop %v2696
        %v2759 = vmul.f32 %v2758, %v2696
        %v2760 = vmul.f32 %v2759, %v2758
        %v2761 = vmul.f32 0.5, %v2760
        %v2762 = vsub.f32 1.5, %v2761
        %v2763 = vmul.f32 %v2758, %v2762
        %vm2764 = vweird.f32 %v2696
        %vm2765 = vweird.f32 %v2758
        %vm2766 = vmor %vm2764, %vm2765
        %v2767 = vsel %vm2766, %v2758, %v2763
        %v2768 = vrsqrt.pop %v2697
        %v2769 = vmul.f32 %v2768, %v2697
        %v2770 = vmul.f32 %v2769, %v2768
        %v2771 = vmul.f32 0.5, %v2770
        %v2772 = vsub.f32 1.5, %v2771
        %v2773 = vmul.f32 %v2768, %v2772
        %vm2774 = vweird.f32 %v2697
        %vm2775 = vweird.f32 %v2768
        %vm2776 = vmor %vm2774, %vm2775
        %v2777 = vsel %vm2776, %v2768, %v2773
        %v2778 = vmul.f32 %v2642, %v2707
        %v2779 = vmul.f32 %v2643, %v2717
        %v2780 = vmul.f32 %v2644, %v2727
        %v2781 = vmul.f32 %v2645, %v2737
        %v2782 = vmul.f32 %v2646, %v2747
        %v2783 = vmul.f32 %v2647, %v2757
        %v2784 = vmul.f32 %v2648, %v2767
        %v2785 = vmul.f32 %v2649, %v2777
        %v2787 = vperm.slane %v717, 0
        %v2789 = vmul.f32 %v2778, %v2787
        %v2790 = vmul.f32 %v2779, %v2787
        %v2791 = vmul.f32 %v2780, %v2787
        %v2792 = vmul.f32 %v2781, %v2787
        %v2793 = vmul.f32 %v2782, %v2787
        %v2794 = vmul.f32 %v2783, %v2787
        %v2795 = vmul.f32 %v2784, %v2787
        %v2796 = vmul.f32 %v2785, %v2787
        %v2798 = vperm.slane %v718, 0
        %v2800 = vadd.f32 %v2789, %v2798
        %v2801 = vadd.f32 %v2790, %v2798
        %v2802 = vadd.f32 %v2791, %v2798
        %v2803 = vadd.f32 %v2792, %v2798
        %v2804 = vadd.f32 %v2793, %v2798
        %v2805 = vadd.f32 %v2794, %v2798
        %v2806 = vadd.f32 %v2795, %v2798
        %v2807 = vadd.f32 %v2796, %v2798
        %2808 = vst.msk [vmem:[#allocation2] sm:$0xff] %vm730, %v2800
        %2809 = vst.msk [vmem:[#allocation2 + $0x8] sm:$0xff] %vm730, %v2801
        %2810 = vst.msk [vmem:[#allocation2 + $0x10] sm:$0xff] %vm730, %v2802
        %2811 = vst.msk [vmem:[#allocation2 + $0x18] sm:$0xff] %vm730, %v2803
        %2812 = vst.msk [vmem:[#allocation2 + $0x20] sm:$0xff] %vm730, %v2804
        %2813 = vst.msk [vmem:[#allocation2 + $0x28] sm:$0xff] %vm730, %v2805
        %2814 = vst.msk [vmem:[#allocation2 + $0x30] sm:$0xff] %vm730, %v2806
        %2815 = vst.msk [vmem:[#allocation2 + $0x38] sm:$0x3f] %vm2272, %v2807
        %s2816 = scalar_lea.vmem [#allocation2], 64
        %v2817 = vld [vmem:[%s2816] sm:$0xff]
        %v2818 = vld [vmem:[%s2816 + $0x8] sm:$0xff]
        %v2819 = vld [vmem:[%s2816 + $0x10] sm:$0xff]
        %v2820 = vld [vmem:[%s2816 + $0x18] sm:$0xff]
        %v2821 = vld [vmem:[%s2816 + $0x20] sm:$0xff]
        %v2822 = vld [vmem:[%s2816 + $0x28] sm:$0xff]
        %v2823 = vld [vmem:[%s2816 + $0x30] sm:$0xff]
        %v2824 = vld [vmem:[%s2816 + $0x38] sm:$0x3f]
        %v2826 = vsel %vm730, %v2817, 0
        %v2829 = vsel %vm730, %v2818, 0
        %v2832 = vsel %vm730, %v2819, 0
        %v2835 = vsel %vm730, %v2820, 0
        %v2838 = vsel %vm730, %v2821, 0
        %v2841 = vsel %vm730, %v2822, 0
        %v2844 = vsel %vm730, %v2823, 0
        %v2847 = vsel %vm730, %v2824, 0
        %2849 = vmatpush.msra.mxu0 0.0
        %2850 = vmatpush.msra.mxu0 0.0
        %2851 = vmatpush.msra.mxu0 0.0
        %2852 = vmatpush.msra.mxu0 0.0
        %2853 = vmatpush.msra.mxu0 0.0
        %2854 = vmatpush.msra.mxu0 0.0
        %2855 = vmatpush.msra.mxu0 0.0
        %2856 = vmatpush.msra.mxu0 0.0
        %2857 = vmatpush.msra.mxu0 0.0
        %2858 = vmatpush.msra.mxu0 0.0
        %2859 = vmatpush.msra.mxu0 0.0
        %2860 = vmatpush.msra.mxu0 0.0
        %2861 = vmatpush.msra.mxu0 %v694
        %2862 = vmatpush.msra.mxu0 %v693
        %2863 = vmatpush.msra.mxu0 %v692
        %2864 = vmatpush.msra.mxu0 %v691
        %2865 = vmatmul.f32.gmra.mxu0 %v2826
        %v2866 = vpop.f32.mrf.mxu0
        %v2867 = vadd.f32 %v728, %v2866
        %2868 = vmatmul.f32.gmra.mxu0 %v2829
        %v2869 = vpop.f32.mrf.mxu0
        %v2870 = vadd.f32 %v728, %v2869
        %2871 = vmatmul.f32.gmra.mxu0 %v2832
        %v2872 = vpop.f32.mrf.mxu0
        %v2873 = vadd.f32 %v728, %v2872
        %2874 = vmatmul.f32.gmra.mxu0 %v2835
        %v2875 = vpop.f32.mrf.mxu0
        %v2876 = vadd.f32 %v728, %v2875
        %2877 = vmatmul.f32.gmra.mxu0 %v2838
        %v2878 = vpop.f32.mrf.mxu0
        %v2879 = vadd.f32 %v728, %v2878
        %2880 = vmatmul.f32.gmra.mxu0 %v2841
        %v2881 = vpop.f32.mrf.mxu0
        %v2882 = vadd.f32 %v728, %v2881
        %2883 = vmatmul.f32.gmra.mxu0 %v2844
        %v2884 = vpop.f32.mrf.mxu0
        %v2885 = vadd.f32 %v728, %v2884
        %2886 = vmatmul.f32.gmra.mxu0 %v2847
        %v2887 = vpop.f32.mrf.mxu0
        %v2888 = vadd.f32 %v728, %v2887
        %2889 = vdwg.mxu0
        %2898 = vrot.lane.b32.xlu0 %v2867, 96
        %v2899 = vpop.permute.xlu0 %2898
        %2900 = vrot.lane.b32.xlu0 %v2870, 96
        %v2901 = vpop.permute.xlu0 %2900
        %2902 = vrot.lane.b32.xlu0 %v2873, 96
        %v2903 = vpop.permute.xlu0 %2902
        %2904 = vrot.lane.b32.xlu0 %v2876, 96
        %v2905 = vpop.permute.xlu0 %2904
        %2906 = vrot.lane.b32.xlu0 %v2879, 96
        %v2907 = vpop.permute.xlu0 %2906
        %2908 = vrot.lane.b32.xlu0 %v2882, 96
        %v2909 = vpop.permute.xlu0 %2908
        %2910 = vrot.lane.b32.xlu0 %v2885, 96
        %v2911 = vpop.permute.xlu0 %2910
        %2912 = vrot.lane.b32.xlu0 %v2888, 96
        %v2913 = vpop.permute.xlu0 %2912
        %v2914 = vsel %vm820, %v2867, 0
        %v2916 = vsel %vm820, %v2870, 0
        %v2918 = vsel %vm820, %v2873, 0
        %v2920 = vsel %vm820, %v2876, 0
        %v2922 = vsel %vm820, %v2879, 0
        %v2924 = vsel %vm820, %v2882, 0
        %v2926 = vsel %vm820, %v2885, 0
        %v2928 = vsel %vm820, %v2888, 0
        %v2930 = vsel %vm820, %v2899, 0
        %v2932 = vsel %vm820, %v2901, 0
        %v2934 = vsel %vm820, %v2903, 0
        %v2936 = vsel %vm820, %v2905, 0
        %v2938 = vsel %vm820, %v2907, 0
        %v2940 = vsel %vm820, %v2909, 0
        %v2942 = vsel %vm820, %v2911, 0
        %v2944 = vsel %vm820, %v2913, 0
        %2946 = vmatpush.xpose.msra.mxu0 0.0
        %2947 = vmatpush.xpose.msra.mxu0 0.0
        %2948 = vmatpush.xpose.msra.mxu0 0.0
        %2949 = vmatpush.xpose.msra.mxu0 0.0
        %2950 = vmatpush.xpose.msra.mxu0 0.0
        %2951 = vmatpush.xpose.msra.mxu0 0.0
        %2952 = vmatpush.xpose.msra.mxu0 0.0
        %2953 = vmatpush.xpose.msra.mxu0 0.0
        %2954 = vmatpush.xpose.msra.mxu0 %v2944
        %2955 = vmatpush.xpose.msra.mxu0 %v2942
        %2956 = vmatpush.xpose.msra.mxu0 %v2940
        %2957 = vmatpush.xpose.msra.mxu0 %v2938
        %2958 = vmatpush.xpose.msra.mxu0 %v2936
        %2959 = vmatpush.xpose.msra.mxu0 %v2934
        %2960 = vmatpush.xpose.msra.mxu0 %v2932
        %2961 = vmatpush.xpose.msra.mxu0 %v2930
        %2962 = vmatmul.f32.gmra.mxu0 %v2914
        %v2963 = vpop.f32.mrf.mxu0
        %v2964 = vadd.f32 0.0, %v2963
        %2965 = vmatmul.f32.gmra.mxu0 %v2916
        %v2966 = vpop.f32.mrf.mxu0
        %v2967 = vadd.f32 0.0, %v2966
        %2968 = vmatmul.f32.gmra.mxu0 %v2918
        %v2969 = vpop.f32.mrf.mxu0
        %v2970 = vadd.f32 0.0, %v2969
        %2971 = vmatmul.f32.gmra.mxu0 %v2920
        %v2972 = vpop.f32.mrf.mxu0
        %v2973 = vadd.f32 0.0, %v2972
        %2974 = vmatmul.f32.gmra.mxu0 %v2922
        %v2975 = vpop.f32.mrf.mxu0
        %v2976 = vadd.f32 0.0, %v2975
        %2977 = vmatmul.f32.gmra.mxu0 %v2924
        %v2978 = vpop.f32.mrf.mxu0
        %v2979 = vadd.f32 0.0, %v2978
        %2980 = vmatmul.f32.gmra.mxu0 %v2926
        %v2981 = vpop.f32.mrf.mxu0
        %v2982 = vadd.f32 0.0, %v2981
        %2983 = vmatmul.f32.gmra.mxu0 %v2928
        %v2984 = vpop.f32.mrf.mxu0
        %v2985 = vadd.f32 0.0, %v2984
        %2986 = vdwg.mxu0
        %v2987 = vmul.f32 %v2964, 0.35355338
        %v2988 = vmul.f32 %v2967, 0.35355338
        %v2989 = vmul.f32 %v2970, 0.35355338
        %v2990 = vmul.f32 %v2973, 0.35355338
        %v2991 = vmul.f32 %v2976, 0.35355338
        %v2992 = vmul.f32 %v2979, 0.35355338
        %v2993 = vmul.f32 %v2982, 0.35355338
        %v2994 = vmul.f32 %v2985, 0.35355338
        %v2995 = vsel %vm902, %v2987, -inf
        %2996 = vmax.xlane.f32.xlu0 %v2995
        %v2997 = vpop.xlane.xlu0 %2996
        %v2998 = vsel %vm902, %v2988, -inf
        %2999 = vmax.xlane.f32.xlu0 %v2998
        %v3000 = vpop.xlane.xlu0 %2999
        %v3001 = vsel %vm902, %v2989, -inf
        %3002 = vmax.xlane.f32.xlu0 %v3001
        %v3003 = vpop.xlane.xlu0 %3002
        %v3004 = vsel %vm902, %v2990, -inf
        %3005 = vmax.xlane.f32.xlu0 %v3004
        %v3006 = vpop.xlane.xlu0 %3005
        %v3007 = vsel %vm902, %v2991, -inf
        %3008 = vmax.xlane.f32.xlu0 %v3007
        %v3009 = vpop.xlane.xlu0 %3008
        %v3010 = vsel %vm902, %v2992, -inf
        %3011 = vmax.xlane.f32.xlu0 %v3010
        %v3012 = vpop.xlane.xlu0 %3011
        %v3013 = vsel %vm902, %v2993, -inf
        %3014 = vmax.xlane.f32.xlu0 %v3013
        %v3015 = vpop.xlane.xlu0 %3014
        %v3016 = vsel %vm924, %v2994, -inf
        %3017 = vmax.xlane.f32.xlu0 %v3016
        %v3018 = vpop.xlane.xlu0 %3017
        %v3019 = vsub.f32 %v2987, %v2997
        %v3020 = vsub.f32 %v2988, %v3000
        %v3021 = vsub.f32 %v2989, %v3003
        %v3022 = vsub.f32 %v2990, %v3006
        %v3023 = vsub.f32 %v2991, %v3009
        %v3024 = vsub.f32 %v2992, %v3012
        %v3025 = vsub.f32 %v2993, %v3015
        %v3026 = vsub.f32 %v2994, %v3018
        %v3027 = vmul.f32 %v3019, 1.442695
        %v3028 = vpow.pop %v3027
        %v3029 = vmul.f32 %v3020, 1.442695
        %v3030 = vpow.pop %v3029
        %v3031 = vmul.f32 %v3021, 1.442695
        %v3032 = vpow.pop %v3031
        %v3033 = vmul.f32 %v3022, 1.442695
        %v3034 = vpow.pop %v3033
        %v3035 = vmul.f32 %v3023, 1.442695
        %v3036 = vpow.pop %v3035
        %v3037 = vmul.f32 %v3024, 1.442695
        %v3038 = vpow.pop %v3037
        %v3039 = vmul.f32 %v3025, 1.442695
        %v3040 = vpow.pop %v3039
        %v3041 = vmul.f32 %v3026, 1.442695
        %v3042 = vpow.pop %v3041
        %v3043 = vsel %vm902, %v3028, 0.0
        %3044 = vadd.xlane.f32.xlu0 %v3043
        %v3045 = vpop.xlane.xlu0 %3044
        %v3046 = vsel %vm902, %v3030, 0.0
        %3047 = vadd.xlane.f32.xlu0 %v3046
        %v3048 = vpop.xlane.xlu0 %3047
        %v3049 = vsel %vm902, %v3032, 0.0
        %3050 = vadd.xlane.f32.xlu0 %v3049
        %v3051 = vpop.xlane.xlu0 %3050
        %v3052 = vsel %vm902, %v3034, 0.0
        %3053 = vadd.xlane.f32.xlu0 %v3052
        %v3054 = vpop.xlane.xlu0 %3053
        %v3055 = vsel %vm902, %v3036, 0.0
        %3056 = vadd.xlane.f32.xlu0 %v3055
        %v3057 = vpop.xlane.xlu0 %3056
        %v3058 = vsel %vm902, %v3038, 0.0
        %3059 = vadd.xlane.f32.xlu0 %v3058
        %v3060 = vpop.xlane.xlu0 %3059
        %v3061 = vsel %vm902, %v3040, 0.0
        %3062 = vadd.xlane.f32.xlu0 %v3061
        %v3063 = vpop.xlane.xlu0 %3062
        %v3064 = vsel %vm924, %v3042, 0.0
        %3065 = vadd.xlane.f32.xlu0 %v3064
        %v3066 = vpop.xlane.xlu0 %3065
        %v3067 = vrcp.pop %v3045
        %v3068 = vrcp.pop %v3048
        %v3069 = vrcp.pop %v3051
        %v3070 = vrcp.pop %v3054
        %v3071 = vrcp.pop %v3057
        %v3072 = vrcp.pop %v3060
        %v3073 = vrcp.pop %v3063
        %v3074 = vrcp.pop %v3066
        %v3075 = vmul.f32 %v3028, %v3067
        %v3076 = vmul.f32 %v3030, %v3068
        %v3077 = vmul.f32 %v3032, %v3069
        %v3078 = vmul.f32 %v3034, %v3070
        %v3079 = vmul.f32 %v3036, %v3071
        %v3080 = vmul.f32 %v3038, %v3072
        %v3081 = vmul.f32 %v3040, %v3073
        %v3082 = vmul.f32 %v3042, %v3074
        %3083 = vrot.lane.b32.xlu0 %v2867, 64
        %v3084 = vpop.permute.xlu0 %3083
        %3085 = vrot.lane.b32.xlu0 %v2870, 64
        %v3086 = vpop.permute.xlu0 %3085
        %3087 = vrot.lane.b32.xlu0 %v2873, 64
        %v3088 = vpop.permute.xlu0 %3087
        %3089 = vrot.lane.b32.xlu0 %v2876, 64
        %v3090 = vpop.permute.xlu0 %3089
        %3091 = vrot.lane.b32.xlu0 %v2879, 64
        %v3092 = vpop.permute.xlu0 %3091
        %3093 = vrot.lane.b32.xlu0 %v2882, 64
        %v3094 = vpop.permute.xlu0 %3093
        %3095 = vrot.lane.b32.xlu0 %v2885, 64
        %v3096 = vpop.permute.xlu0 %3095
        %3097 = vrot.lane.b32.xlu0 %v2888, 64
        %v3098 = vpop.permute.xlu0 %3097
        %v3107 = vsel %vm902, %v3075, 0
        %v3110 = vsel %vm902, %v3076, 0
        %v3113 = vsel %vm902, %v3077, 0
        %v3116 = vsel %vm902, %v3078, 0
        %v3119 = vsel %vm902, %v3079, 0
        %v3122 = vsel %vm902, %v3080, 0
        %v3125 = vsel %vm902, %v3081, 0
        %v3128 = vsel %vm902, %v3082, 0
        %v3130 = vsel %vm1039, %v3098, 0
        %3132 = vmatpush.msra.mxu0 0.0
        %3133 = vmatpush.msra.mxu0 0.0
        %3134 = vmatpush.msra.mxu0 0.0
        %3135 = vmatpush.msra.mxu0 0.0
        %3136 = vmatpush.msra.mxu0 0.0
        %3137 = vmatpush.msra.mxu0 0.0
        %3138 = vmatpush.msra.mxu0 0.0
        %3139 = vmatpush.msra.mxu0 0.0
        %3140 = vmatpush.msra.mxu0 %v3130
        %3141 = vmatpush.msra.mxu0 %v3096
        %3142 = vmatpush.msra.mxu0 %v3094
        %3143 = vmatpush.msra.mxu0 %v3092
        %3144 = vmatpush.msra.mxu0 %v3090
        %3145 = vmatpush.msra.mxu0 %v3088
        %3146 = vmatpush.msra.mxu0 %v3086
        %3147 = vmatpush.msra.mxu0 %v3084
        %3148 = vmatmul.f32.gmra.mxu0 %v3107
        %v3149 = vpop.f32.mrf.mxu0
        %v3150 = vadd.f32 0.0, %v3149
        %3151 = vmatmul.f32.gmra.mxu0 %v3110
        %v3152 = vpop.f32.mrf.mxu0
        %v3153 = vadd.f32 0.0, %v3152
        %3154 = vmatmul.f32.gmra.mxu0 %v3113
        %v3155 = vpop.f32.mrf.mxu0
        %v3156 = vadd.f32 0.0, %v3155
        %3157 = vmatmul.f32.gmra.mxu0 %v3116
        %v3158 = vpop.f32.mrf.mxu0
        %v3159 = vadd.f32 0.0, %v3158
        %3160 = vmatmul.f32.gmra.mxu0 %v3119
        %v3161 = vpop.f32.mrf.mxu0
        %v3162 = vadd.f32 0.0, %v3161
        %3163 = vmatmul.f32.gmra.mxu0 %v3122
        %v3164 = vpop.f32.mrf.mxu0
        %v3165 = vadd.f32 0.0, %v3164
        %3166 = vmatmul.f32.gmra.mxu0 %v3125
        %v3167 = vpop.f32.mrf.mxu0
        %v3168 = vadd.f32 0.0, %v3167
        %3169 = vmatmul.f32.gmra.mxu0 %v3128
        %v3170 = vpop.f32.mrf.mxu0
        %v3171 = vadd.f32 0.0, %v3170
        %3172 = vdwg.mxu0
        %3173 = vrot.lane.b32.xlu0 %v2867, 120
        %v3174 = vpop.permute.xlu0 %3173
        %3175 = vrot.lane.b32.xlu0 %v2870, 120
        %v3176 = vpop.permute.xlu0 %3175
        %3177 = vrot.lane.b32.xlu0 %v2873, 120
        %v3178 = vpop.permute.xlu0 %3177
        %3179 = vrot.lane.b32.xlu0 %v2876, 120
        %v3180 = vpop.permute.xlu0 %3179
        %3181 = vrot.lane.b32.xlu0 %v2879, 120
        %v3182 = vpop.permute.xlu0 %3181
        %3183 = vrot.lane.b32.xlu0 %v2882, 120
        %v3184 = vpop.permute.xlu0 %3183
        %3185 = vrot.lane.b32.xlu0 %v2885, 120
        %v3186 = vpop.permute.xlu0 %3185
        %3187 = vrot.lane.b32.xlu0 %v2888, 120
        %v3188 = vpop.permute.xlu0 %3187
        %3189 = vrot.lane.b32.xlu0 %v2867, 88
        %v3190 = vpop.permute.xlu0 %3189
        %3191 = vrot.lane.b32.xlu0 %v2870, 88
        %v3192 = vpop.permute.xlu0 %3191
        %3193 = vrot.lane.b32.xlu0 %v2873, 88
        %v3194 = vpop.permute.xlu0 %3193
        %3195 = vrot.lane.b32.xlu0 %v2876, 88
        %v3196 = vpop.permute.xlu0 %3195
        %3197 = vrot.lane.b32.xlu0 %v2879, 88
        %v3198 = vpop.permute.xlu0 %3197
        %3199 = vrot.lane.b32.xlu0 %v2882, 88
        %v3200 = vpop.permute.xlu0 %3199
        %3201 = vrot.lane.b32.xlu0 %v2885, 88
        %v3202 = vpop.permute.xlu0 %3201
        %3203 = vrot.lane.b32.xlu0 %v2888, 88
        %v3204 = vpop.permute.xlu0 %3203
        %v3205 = vsel %vm820, %v3174, 0
        %v3207 = vsel %vm820, %v3176, 0
        %v3209 = vsel %vm820, %v3178, 0
        %v3211 = vsel %vm820, %v3180, 0
        %v3213 = vsel %vm820, %v3182, 0
        %v3215 = vsel %vm820, %v3184, 0
        %v3217 = vsel %vm820, %v3186, 0
        %v3219 = vsel %vm820, %v3188, 0
        %v3221 = vsel %vm820, %v3190, 0
        %v3223 = vsel %vm820, %v3192, 0
        %v3225 = vsel %vm820, %v3194, 0
        %v3227 = vsel %vm820, %v3196, 0
        %v3229 = vsel %vm820, %v3198, 0
        %v3231 = vsel %vm820, %v3200, 0
        %v3233 = vsel %vm820, %v3202, 0
        %v3235 = vsel %vm820, %v3204, 0
        %3237 = vmatpush.xpose.msra.mxu0 0.0
        %3238 = vmatpush.xpose.msra.mxu0 0.0
        %3239 = vmatpush.xpose.msra.mxu0 0.0
        %3240 = vmatpush.xpose.msra.mxu0 0.0
        %3241 = vmatpush.xpose.msra.mxu0 0.0
        %3242 = vmatpush.xpose.msra.mxu0 0.0
        %3243 = vmatpush.xpose.msra.mxu0 0.0
        %3244 = vmatpush.xpose.msra.mxu0 0.0
        %3245 = vmatpush.xpose.msra.mxu0 %v3235
        %3246 = vmatpush.xpose.msra.mxu0 %v3233
        %3247 = vmatpush.xpose.msra.mxu0 %v3231
        %3248 = vmatpush.xpose.msra.mxu0 %v3229
        %3249 = vmatpush.xpose.msra.mxu0 %v3227
        %3250 = vmatpush.xpose.msra.mxu0 %v3225
        %3251 = vmatpush.xpose.msra.mxu0 %v3223
        %3252 = vmatpush.xpose.msra.mxu0 %v3221
        %3253 = vmatmul.f32.gmra.mxu0 %v3205
        %v3254 = vpop.f32.mrf.mxu0
        %v3255 = vadd.f32 0.0, %v3254
        %3256 = vmatmul.f32.gmra.mxu0 %v3207
        %v3257 = vpop.f32.mrf.mxu0
        %v3258 = vadd.f32 0.0, %v3257
        %3259 = vmatmul.f32.gmra.mxu0 %v3209
        %v3260 = vpop.f32.mrf.mxu0
        %v3261 = vadd.f32 0.0, %v3260
        %3262 = vmatmul.f32.gmra.mxu0 %v3211
        %v3263 = vpop.f32.mrf.mxu0
        %v3264 = vadd.f32 0.0, %v3263
        %3265 = vmatmul.f32.gmra.mxu0 %v3213
        %v3266 = vpop.f32.mrf.mxu0
        %v3267 = vadd.f32 0.0, %v3266
        %3268 = vmatmul.f32.gmra.mxu0 %v3215
        %v3269 = vpop.f32.mrf.mxu0
        %v3270 = vadd.f32 0.0, %v3269
        %3271 = vmatmul.f32.gmra.mxu0 %v3217
        %v3272 = vpop.f32.mrf.mxu0
        %v3273 = vadd.f32 0.0, %v3272
        %3274 = vmatmul.f32.gmra.mxu0 %v3219
        %v3275 = vpop.f32.mrf.mxu0
        %v3276 = vadd.f32 0.0, %v3275
        %3277 = vdwg.mxu0
        %v3278 = vmul.f32 %v3255, 0.35355338
        %v3279 = vmul.f32 %v3258, 0.35355338
        %v3280 = vmul.f32 %v3261, 0.35355338
        %v3281 = vmul.f32 %v3264, 0.35355338
        %v3282 = vmul.f32 %v3267, 0.35355338
        %v3283 = vmul.f32 %v3270, 0.35355338
        %v3284 = vmul.f32 %v3273, 0.35355338
        %v3285 = vmul.f32 %v3276, 0.35355338
        %v3286 = vsel %vm902, %v3278, -inf
        %3287 = vmax.xlane.f32.xlu0 %v3286
        %v3288 = vpop.xlane.xlu0 %3287
        %v3289 = vsel %vm902, %v3279, -inf
        %3290 = vmax.xlane.f32.xlu0 %v3289
        %v3291 = vpop.xlane.xlu0 %3290
        %v3292 = vsel %vm902, %v3280, -inf
        %3293 = vmax.xlane.f32.xlu0 %v3292
        %v3294 = vpop.xlane.xlu0 %3293
        %v3295 = vsel %vm902, %v3281, -inf
        %3296 = vmax.xlane.f32.xlu0 %v3295
        %v3297 = vpop.xlane.xlu0 %3296
        %v3298 = vsel %vm902, %v3282, -inf
        %3299 = vmax.xlane.f32.xlu0 %v3298
        %v3300 = vpop.xlane.xlu0 %3299
        %v3301 = vsel %vm902, %v3283, -inf
        %3302 = vmax.xlane.f32.xlu0 %v3301
        %v3303 = vpop.xlane.xlu0 %3302
        %v3304 = vsel %vm902, %v3284, -inf
        %3305 = vmax.xlane.f32.xlu0 %v3304
        %v3306 = vpop.xlane.xlu0 %3305
        %v3307 = vsel %vm924, %v3285, -inf
        %3308 = vmax.xlane.f32.xlu0 %v3307
        %v3309 = vpop.xlane.xlu0 %3308
        %v3310 = vsub.f32 %v3278, %v3288
        %v3311 = vsub.f32 %v3279, %v3291
        %v3312 = vsub.f32 %v3280, %v3294
        %v3313 = vsub.f32 %v3281, %v3297
        %v3314 = vsub.f32 %v3282, %v3300
        %v3315 = vsub.f32 %v3283, %v3303
        %v3316 = vsub.f32 %v3284, %v3306
        %v3317 = vsub.f32 %v3285, %v3309
        %v3318 = vmul.f32 %v3310, 1.442695
        %v3319 = vpow.pop %v3318
        %v3320 = vmul.f32 %v3311, 1.442695
        %v3321 = vpow.pop %v3320
        %v3322 = vmul.f32 %v3312, 1.442695
        %v3323 = vpow.pop %v3322
        %v3324 = vmul.f32 %v3313, 1.442695
        %v3325 = vpow.pop %v3324
        %v3326 = vmul.f32 %v3314, 1.442695
        %v3327 = vpow.pop %v3326
        %v3328 = vmul.f32 %v3315, 1.442695
        %v3329 = vpow.pop %v3328
        %v3330 = vmul.f32 %v3316, 1.442695
        %v3331 = vpow.pop %v3330
        %v3332 = vmul.f32 %v3317, 1.442695
        %v3333 = vpow.pop %v3332
        %v3334 = vsel %vm902, %v3319, 0.0
        %3335 = vadd.xlane.f32.xlu0 %v3334
        %v3336 = vpop.xlane.xlu0 %3335
        %v3337 = vsel %vm902, %v3321, 0.0
        %3338 = vadd.xlane.f32.xlu0 %v3337
        %v3339 = vpop.xlane.xlu0 %3338
        %v3340 = vsel %vm902, %v3323, 0.0
        %3341 = vadd.xlane.f32.xlu0 %v3340
        %v3342 = vpop.xlane.xlu0 %3341
        %v3343 = vsel %vm902, %v3325, 0.0
        %3344 = vadd.xlane.f32.xlu0 %v3343
        %v3345 = vpop.xlane.xlu0 %3344
        %v3346 = vsel %vm902, %v3327, 0.0
        %3347 = vadd.xlane.f32.xlu0 %v3346
        %v3348 = vpop.xlane.xlu0 %3347
        %v3349 = vsel %vm902, %v3329, 0.0
        %3350 = vadd.xlane.f32.xlu0 %v3349
        %v3351 = vpop.xlane.xlu0 %3350
        %v3352 = vsel %vm902, %v3331, 0.0
        %3353 = vadd.xlane.f32.xlu0 %v3352
        %v3354 = vpop.xlane.xlu0 %3353
        %v3355 = vsel %vm924, %v3333, 0.0
        %3356 = vadd.xlane.f32.xlu0 %v3355
        %v3357 = vpop.xlane.xlu0 %3356
        %v3358 = vrcp.pop %v3336
        %v3359 = vrcp.pop %v3339
        %v3360 = vrcp.pop %v3342
        %v3361 = vrcp.pop %v3345
        %v3362 = vrcp.pop %v3348
        %v3363 = vrcp.pop %v3351
        %v3364 = vrcp.pop %v3354
        %v3365 = vrcp.pop %v3357
        %v3366 = vmul.f32 %v3319, %v3358
        %v3367 = vmul.f32 %v3321, %v3359
        %v3368 = vmul.f32 %v3323, %v3360
        %v3369 = vmul.f32 %v3325, %v3361
        %v3370 = vmul.f32 %v3327, %v3362
        %v3371 = vmul.f32 %v3329, %v3363
        %v3372 = vmul.f32 %v3331, %v3364
        %v3373 = vmul.f32 %v3333, %v3365
        %3374 = vrot.lane.b32.xlu0 %v2867, 56
        %v3375 = vpop.permute.xlu0 %3374
        %3376 = vrot.lane.b32.xlu0 %v2870, 56
        %v3377 = vpop.permute.xlu0 %3376
        %3378 = vrot.lane.b32.xlu0 %v2873, 56
        %v3379 = vpop.permute.xlu0 %3378
        %3380 = vrot.lane.b32.xlu0 %v2876, 56
        %v3381 = vpop.permute.xlu0 %3380
        %3382 = vrot.lane.b32.xlu0 %v2879, 56
        %v3383 = vpop.permute.xlu0 %3382
        %3384 = vrot.lane.b32.xlu0 %v2882, 56
        %v3385 = vpop.permute.xlu0 %3384
        %3386 = vrot.lane.b32.xlu0 %v2885, 56
        %v3387 = vpop.permute.xlu0 %3386
        %3388 = vrot.lane.b32.xlu0 %v2888, 56
        %v3389 = vpop.permute.xlu0 %3388
        %v3398 = vsel %vm902, %v3366, 0
        %v3401 = vsel %vm902, %v3367, 0
        %v3404 = vsel %vm902, %v3368, 0
        %v3407 = vsel %vm902, %v3369, 0
        %v3410 = vsel %vm902, %v3370, 0
        %v3413 = vsel %vm902, %v3371, 0
        %v3416 = vsel %vm902, %v3372, 0
        %v3419 = vsel %vm902, %v3373, 0
        %v3421 = vsel %vm1039, %v3389, 0
        %3423 = vmatpush.msra.mxu0 0.0
        %3424 = vmatpush.msra.mxu0 0.0
        %3425 = vmatpush.msra.mxu0 0.0
        %3426 = vmatpush.msra.mxu0 0.0
        %3427 = vmatpush.msra.mxu0 0.0
        %3428 = vmatpush.msra.mxu0 0.0
        %3429 = vmatpush.msra.mxu0 0.0
        %3430 = vmatpush.msra.mxu0 0.0
        %3431 = vmatpush.msra.mxu0 %v3421
        %3432 = vmatpush.msra.mxu0 %v3387
        %3433 = vmatpush.msra.mxu0 %v3385
        %3434 = vmatpush.msra.mxu0 %v3383
        %3435 = vmatpush.msra.mxu0 %v3381
        %3436 = vmatpush.msra.mxu0 %v3379
        %3437 = vmatpush.msra.mxu0 %v3377
        %3438 = vmatpush.msra.mxu0 %v3375
        %3439 = vmatmul.f32.gmra.mxu0 %v3398
        %v3440 = vpop.f32.mrf.mxu0
        %v3441 = vadd.f32 0.0, %v3440
        %3442 = vmatmul.f32.gmra.mxu0 %v3401
        %v3443 = vpop.f32.mrf.mxu0
        %v3444 = vadd.f32 0.0, %v3443
        %3445 = vmatmul.f32.gmra.mxu0 %v3404
        %v3446 = vpop.f32.mrf.mxu0
        %v3447 = vadd.f32 0.0, %v3446
        %3448 = vmatmul.f32.gmra.mxu0 %v3407
        %v3449 = vpop.f32.mrf.mxu0
        %v3450 = vadd.f32 0.0, %v3449
        %3451 = vmatmul.f32.gmra.mxu0 %v3410
        %v3452 = vpop.f32.mrf.mxu0
        %v3453 = vadd.f32 0.0, %v3452
        %3454 = vmatmul.f32.gmra.mxu0 %v3413
        %v3455 = vpop.f32.mrf.mxu0
        %v3456 = vadd.f32 0.0, %v3455
        %3457 = vmatmul.f32.gmra.mxu0 %v3416
        %v3458 = vpop.f32.mrf.mxu0
        %v3459 = vadd.f32 0.0, %v3458
        %3460 = vmatmul.f32.gmra.mxu0 %v3419
        %v3461 = vpop.f32.mrf.mxu0
        %v3462 = vadd.f32 0.0, %v3461
        %3463 = vdwg.mxu0
        %v3465 = vsel %vm820, %v3441, 0
        %v3468 = vsel %vm820, %v3444, 0
        %v3471 = vsel %vm820, %v3447, 0
        %v3474 = vsel %vm820, %v3450, 0
        %v3477 = vsel %vm820, %v3453, 0
        %v3480 = vsel %vm820, %v3456, 0
        %v3483 = vsel %vm820, %v3459, 0
        %v3486 = vsel %vm820, %v3462, 0
        %3488 = vmatpush.msra.mxu0 0.0
        %3489 = vmatpush.msra.mxu0 0.0
        %3490 = vmatpush.msra.mxu0 0.0
        %3491 = vmatpush.msra.mxu0 0.0
        %3492 = vmatpush.msra.mxu0 0.0
        %3493 = vmatpush.msra.mxu0 0.0
        %3494 = vmatpush.msra.mxu0 0.0
        %3495 = vmatpush.msra.mxu0 0.0
        %3496 = vmatpush.msra.mxu0 0.0
        %3497 = vmatpush.msra.mxu0 0.0
        %3498 = vmatpush.msra.mxu0 0.0
        %3499 = vmatpush.msra.mxu0 0.0
        %3500 = vmatpush.msra.mxu0 0.0
        %3501 = vmatpush.msra.mxu0 0.0
        %3502 = vmatpush.msra.mxu0 0.0
        %3503 = vmatpush.msra.mxu0 %v697
        %3504 = vmatmul.f32.gmra.mxu0 %v3465
        %v3505 = vpop.f32.mrf.mxu0
        %v3506 = vadd.f32 0.0, %v3505
        %3507 = vmatmul.f32.gmra.mxu0 %v3468
        %v3508 = vpop.f32.mrf.mxu0
        %v3509 = vadd.f32 0.0, %v3508
        %3510 = vmatmul.f32.gmra.mxu0 %v3471
        %v3511 = vpop.f32.mrf.mxu0
        %v3512 = vadd.f32 0.0, %v3511
        %3513 = vmatmul.f32.gmra.mxu0 %v3474
        %v3514 = vpop.f32.mrf.mxu0
        %v3515 = vadd.f32 0.0, %v3514
        %3516 = vmatmul.f32.gmra.mxu0 %v3477
        %v3517 = vpop.f32.mrf.mxu0
        %v3518 = vadd.f32 0.0, %v3517
        %3519 = vmatmul.f32.gmra.mxu0 %v3480
        %v3520 = vpop.f32.mrf.mxu0
        %v3521 = vadd.f32 0.0, %v3520
        %3522 = vmatmul.f32.gmra.mxu0 %v3483
        %v3523 = vpop.f32.mrf.mxu0
        %v3524 = vadd.f32 0.0, %v3523
        %3525 = vmatmul.f32.gmra.mxu0 %v3486
        %v3526 = vpop.f32.mrf.mxu0
        %v3527 = vadd.f32 0.0, %v3526
        %3528 = vdwg.mxu0
        %v3530 = vsel %vm820, %v3150, 0
        %v3533 = vsel %vm820, %v3153, 0
        %v3536 = vsel %vm820, %v3156, 0
        %v3539 = vsel %vm820, %v3159, 0
        %v3542 = vsel %vm820, %v3162, 0
        %v3545 = vsel %vm820, %v3165, 0
        %v3548 = vsel %vm820, %v3168, 0
        %v3551 = vsel %vm820, %v3171, 0
        %3553 = vmatpush.msra.mxu0 0.0
        %3554 = vmatpush.msra.mxu0 0.0
        %3555 = vmatpush.msra.mxu0 0.0
        %3556 = vmatpush.msra.mxu0 0.0
        %3557 = vmatpush.msra.mxu0 0.0
        %3558 = vmatpush.msra.mxu0 0.0
        %3559 = vmatpush.msra.mxu0 0.0
        %3560 = vmatpush.msra.mxu0 0.0
        %3561 = vmatpush.msra.mxu0 0.0
        %3562 = vmatpush.msra.mxu0 0.0
        %3563 = vmatpush.msra.mxu0 0.0
        %3564 = vmatpush.msra.mxu0 0.0
        %3565 = vmatpush.msra.mxu0 0.0
        %3566 = vmatpush.msra.mxu0 0.0
        %3567 = vmatpush.msra.mxu0 0.0
        %3568 = vmatpush.msra.mxu0 %v696
        %3569 = vmatmul.f32.gmra.mxu0 %v3530
        %v3570 = vpop.f32.mrf.mxu0
        %v3571 = vadd.f32 %v3506, %v3570
        %3572 = vmatmul.f32.gmra.mxu0 %v3533
        %v3573 = vpop.f32.mrf.mxu0
        %v3574 = vadd.f32 %v3509, %v3573
        %3575 = vmatmul.f32.gmra.mxu0 %v3536
        %v3576 = vpop.f32.mrf.mxu0
        %v3577 = vadd.f32 %v3512, %v3576
        %3578 = vmatmul.f32.gmra.mxu0 %v3539
        %v3579 = vpop.f32.mrf.mxu0
        %v3580 = vadd.f32 %v3515, %v3579
        %3581 = vmatmul.f32.gmra.mxu0 %v3542
        %v3582 = vpop.f32.mrf.mxu0
        %v3583 = vadd.f32 %v3518, %v3582
        %3584 = vmatmul.f32.gmra.mxu0 %v3545
        %v3585 = vpop.f32.mrf.mxu0
        %v3586 = vadd.f32 %v3521, %v3585
        %3587 = vmatmul.f32.gmra.mxu0 %v3548
        %v3588 = vpop.f32.mrf.mxu0
        %v3589 = vadd.f32 %v3524, %v3588
        %3590 = vmatmul.f32.gmra.mxu0 %v3551
        %v3591 = vpop.f32.mrf.mxu0
        %v3592 = vadd.f32 %v3527, %v3591
        %3593 = vdwg.mxu0
        %3594 = vrot.lane.b32.xlu0 %v2867, 112
        %v3595 = vpop.permute.xlu0 %3594
        %3596 = vrot.lane.b32.xlu0 %v2870, 112
        %v3597 = vpop.permute.xlu0 %3596
        %3598 = vrot.lane.b32.xlu0 %v2873, 112
        %v3599 = vpop.permute.xlu0 %3598
        %3600 = vrot.lane.b32.xlu0 %v2876, 112
        %v3601 = vpop.permute.xlu0 %3600
        %3602 = vrot.lane.b32.xlu0 %v2879, 112
        %v3603 = vpop.permute.xlu0 %3602
        %3604 = vrot.lane.b32.xlu0 %v2882, 112
        %v3605 = vpop.permute.xlu0 %3604
        %3606 = vrot.lane.b32.xlu0 %v2885, 112
        %v3607 = vpop.permute.xlu0 %3606
        %3608 = vrot.lane.b32.xlu0 %v2888, 112
        %v3609 = vpop.permute.xlu0 %3608
        %3610 = vrot.lane.b32.xlu0 %v2867, 80
        %v3611 = vpop.permute.xlu0 %3610
        %3612 = vrot.lane.b32.xlu0 %v2870, 80
        %v3613 = vpop.permute.xlu0 %3612
        %3614 = vrot.lane.b32.xlu0 %v2873, 80
        %v3615 = vpop.permute.xlu0 %3614
        %3616 = vrot.lane.b32.xlu0 %v2876, 80
        %v3617 = vpop.permute.xlu0 %3616
        %3618 = vrot.lane.b32.xlu0 %v2879, 80
        %v3619 = vpop.permute.xlu0 %3618
        %3620 = vrot.lane.b32.xlu0 %v2882, 80
        %v3621 = vpop.permute.xlu0 %3620
        %3622 = vrot.lane.b32.xlu0 %v2885, 80
        %v3623 = vpop.permute.xlu0 %3622
        %3624 = vrot.lane.b32.xlu0 %v2888, 80
        %v3625 = vpop.permute.xlu0 %3624
        %v3626 = vsel %vm820, %v3595, 0
        %v3628 = vsel %vm820, %v3597, 0
        %v3630 = vsel %vm820, %v3599, 0
        %v3632 = vsel %vm820, %v3601, 0
        %v3634 = vsel %vm820, %v3603, 0
        %v3636 = vsel %vm820, %v3605, 0
        %v3638 = vsel %vm820, %v3607, 0
        %v3640 = vsel %vm820, %v3609, 0
        %v3642 = vsel %vm820, %v3611, 0
        %v3644 = vsel %vm820, %v3613, 0
        %v3646 = vsel %vm820, %v3615, 0
        %v3648 = vsel %vm820, %v3617, 0
        %v3650 = vsel %vm820, %v3619, 0
        %v3652 = vsel %vm820, %v3621, 0
        %v3654 = vsel %vm820, %v3623, 0
        %v3656 = vsel %vm820, %v3625, 0
        %3658 = vmatpush.xpose.msra.mxu0 0.0
        %3659 = vmatpush.xpose.msra.mxu0 0.0
        %3660 = vmatpush.xpose.msra.mxu0 0.0
        %3661 = vmatpush.xpose.msra.mxu0 0.0
        %3662 = vmatpush.xpose.msra.mxu0 0.0
        %3663 = vmatpush.xpose.msra.mxu0 0.0
        %3664 = vmatpush.xpose.msra.mxu0 0.0
        %3665 = vmatpush.xpose.msra.mxu0 0.0
        %3666 = vmatpush.xpose.msra.mxu0 %v3656
        %3667 = vmatpush.xpose.msra.mxu0 %v3654
        %3668 = vmatpush.xpose.msra.mxu0 %v3652
        %3669 = vmatpush.xpose.msra.mxu0 %v3650
        %3670 = vmatpush.xpose.msra.mxu0 %v3648
        %3671 = vmatpush.xpose.msra.mxu0 %v3646
        %3672 = vmatpush.xpose.msra.mxu0 %v3644
        %3673 = vmatpush.xpose.msra.mxu0 %v3642
        %3674 = vmatmul.f32.gmra.mxu0 %v3626
        %v3675 = vpop.f32.mrf.mxu0
        %v3676 = vadd.f32 0.0, %v3675
        %3677 = vmatmul.f32.gmra.mxu0 %v3628
        %v3678 = vpop.f32.mrf.mxu0
        %v3679 = vadd.f32 0.0, %v3678
        %3680 = vmatmul.f32.gmra.mxu0 %v3630
        %v3681 = vpop.f32.mrf.mxu0
        %v3682 = vadd.f32 0.0, %v3681
        %3683 = vmatmul.f32.gmra.mxu0 %v3632
        %v3684 = vpop.f32.mrf.mxu0
        %v3685 = vadd.f32 0.0, %v3684
        %3686 = vmatmul.f32.gmra.mxu0 %v3634
        %v3687 = vpop.f32.mrf.mxu0
        %v3688 = vadd.f32 0.0, %v3687
        %3689 = vmatmul.f32.gmra.mxu0 %v3636
        %v3690 = vpop.f32.mrf.mxu0
        %v3691 = vadd.f32 0.0, %v3690
        %3692 = vmatmul.f32.gmra.mxu0 %v3638
        %v3693 = vpop.f32.mrf.mxu0
        %v3694 = vadd.f32 0.0, %v3693
        %3695 = vmatmul.f32.gmra.mxu0 %v3640
        %v3696 = vpop.f32.mrf.mxu0
        %v3697 = vadd.f32 0.0, %v3696
        %3698 = vdwg.mxu0
        %v3699 = vmul.f32 %v3676, 0.35355338
        %v3700 = vmul.f32 %v3679, 0.35355338
        %v3701 = vmul.f32 %v3682, 0.35355338
        %v3702 = vmul.f32 %v3685, 0.35355338
        %v3703 = vmul.f32 %v3688, 0.35355338
        %v3704 = vmul.f32 %v3691, 0.35355338
        %v3705 = vmul.f32 %v3694, 0.35355338
        %v3706 = vmul.f32 %v3697, 0.35355338
        %v3707 = vsel %vm902, %v3699, -inf
        %3708 = vmax.xlane.f32.xlu0 %v3707
        %v3709 = vpop.xlane.xlu0 %3708
        %v3710 = vsel %vm902, %v3700, -inf
        %3711 = vmax.xlane.f32.xlu0 %v3710
        %v3712 = vpop.xlane.xlu0 %3711
        %v3713 = vsel %vm902, %v3701, -inf
        %3714 = vmax.xlane.f32.xlu0 %v3713
        %v3715 = vpop.xlane.xlu0 %3714
        %v3716 = vsel %vm902, %v3702, -inf
        %3717 = vmax.xlane.f32.xlu0 %v3716
        %v3718 = vpop.xlane.xlu0 %3717
        %v3719 = vsel %vm902, %v3703, -inf
        %3720 = vmax.xlane.f32.xlu0 %v3719
        %v3721 = vpop.xlane.xlu0 %3720
        %v3722 = vsel %vm902, %v3704, -inf
        %3723 = vmax.xlane.f32.xlu0 %v3722
        %v3724 = vpop.xlane.xlu0 %3723
        %v3725 = vsel %vm902, %v3705, -inf
        %3726 = vmax.xlane.f32.xlu0 %v3725
        %v3727 = vpop.xlane.xlu0 %3726
        %v3728 = vsel %vm924, %v3706, -inf
        %3729 = vmax.xlane.f32.xlu0 %v3728
        %v3730 = vpop.xlane.xlu0 %3729
        %v3731 = vsub.f32 %v3699, %v3709
        %v3732 = vsub.f32 %v3700, %v3712
        %v3733 = vsub.f32 %v3701, %v3715
        %v3734 = vsub.f32 %v3702, %v3718
        %v3735 = vsub.f32 %v3703, %v3721
        %v3736 = vsub.f32 %v3704, %v3724
        %v3737 = vsub.f32 %v3705, %v3727
        %v3738 = vsub.f32 %v3706, %v3730
        %v3739 = vmul.f32 %v3731, 1.442695
        %v3740 = vpow.pop %v3739
        %v3741 = vmul.f32 %v3732, 1.442695
        %v3742 = vpow.pop %v3741
        %v3743 = vmul.f32 %v3733, 1.442695
        %v3744 = vpow.pop %v3743
        %v3745 = vmul.f32 %v3734, 1.442695
        %v3746 = vpow.pop %v3745
        %v3747 = vmul.f32 %v3735, 1.442695
        %v3748 = vpow.pop %v3747
        %v3749 = vmul.f32 %v3736, 1.442695
        %v3750 = vpow.pop %v3749
        %v3751 = vmul.f32 %v3737, 1.442695
        %v3752 = vpow.pop %v3751
        %v3753 = vmul.f32 %v3738, 1.442695
        %v3754 = vpow.pop %v3753
        %v3755 = vsel %vm902, %v3740, 0.0
        %3756 = vadd.xlane.f32.xlu0 %v3755
        %v3757 = vpop.xlane.xlu0 %3756
        %v3758 = vsel %vm902, %v3742, 0.0
        %3759 = vadd.xlane.f32.xlu0 %v3758
        %v3760 = vpop.xlane.xlu0 %3759
        %v3761 = vsel %vm902, %v3744, 0.0
        %3762 = vadd.xlane.f32.xlu0 %v3761
        %v3763 = vpop.xlane.xlu0 %3762
        %v3764 = vsel %vm902, %v3746, 0.0
        %3765 = vadd.xlane.f32.xlu0 %v3764
        %v3766 = vpop.xlane.xlu0 %3765
        %v3767 = vsel %vm902, %v3748, 0.0
        %3768 = vadd.xlane.f32.xlu0 %v3767
        %v3769 = vpop.xlane.xlu0 %3768
        %v3770 = vsel %vm902, %v3750, 0.0
        %3771 = vadd.xlane.f32.xlu0 %v3770
        %v3772 = vpop.xlane.xlu0 %3771
        %v3773 = vsel %vm902, %v3752, 0.0
        %3774 = vadd.xlane.f32.xlu0 %v3773
        %v3775 = vpop.xlane.xlu0 %3774
        %v3776 = vsel %vm924, %v3754, 0.0
        %3777 = vadd.xlane.f32.xlu0 %v3776
        %v3778 = vpop.xlane.xlu0 %3777
        %v3779 = vrcp.pop %v3757
        %v3780 = vrcp.pop %v3760
        %v3781 = vrcp.pop %v3763
        %v3782 = vrcp.pop %v3766
        %v3783 = vrcp.pop %v3769
        %v3784 = vrcp.pop %v3772
        %v3785 = vrcp.pop %v3775
        %v3786 = vrcp.pop %v3778
        %v3787 = vmul.f32 %v3740, %v3779
        %v3788 = vmul.f32 %v3742, %v3780
        %v3789 = vmul.f32 %v3744, %v3781
        %v3790 = vmul.f32 %v3746, %v3782
        %v3791 = vmul.f32 %v3748, %v3783
        %v3792 = vmul.f32 %v3750, %v3784
        %v3793 = vmul.f32 %v3752, %v3785
        %v3794 = vmul.f32 %v3754, %v3786
        %3795 = vrot.lane.b32.xlu0 %v2867, 48
        %v3796 = vpop.permute.xlu0 %3795
        %3797 = vrot.lane.b32.xlu0 %v2870, 48
        %v3798 = vpop.permute.xlu0 %3797
        %3799 = vrot.lane.b32.xlu0 %v2873, 48
        %v3800 = vpop.permute.xlu0 %3799
        %3801 = vrot.lane.b32.xlu0 %v2876, 48
        %v3802 = vpop.permute.xlu0 %3801
        %3803 = vrot.lane.b32.xlu0 %v2879, 48
        %v3804 = vpop.permute.xlu0 %3803
        %3805 = vrot.lane.b32.xlu0 %v2882, 48
        %v3806 = vpop.permute.xlu0 %3805
        %3807 = vrot.lane.b32.xlu0 %v2885, 48
        %v3808 = vpop.permute.xlu0 %3807
        %3809 = vrot.lane.b32.xlu0 %v2888, 48
        %v3810 = vpop.permute.xlu0 %3809
        %v3819 = vsel %vm902, %v3787, 0
        %v3822 = vsel %vm902, %v3788, 0
        %v3825 = vsel %vm902, %v3789, 0
        %v3828 = vsel %vm902, %v3790, 0
        %v3831 = vsel %vm902, %v3791, 0
        %v3834 = vsel %vm902, %v3792, 0
        %v3837 = vsel %vm902, %v3793, 0
        %v3840 = vsel %vm902, %v3794, 0
        %v3842 = vsel %vm1039, %v3810, 0
        %3844 = vmatpush.msra.mxu0 0.0
        %3845 = vmatpush.msra.mxu0 0.0
        %3846 = vmatpush.msra.mxu0 0.0
        %3847 = vmatpush.msra.mxu0 0.0
        %3848 = vmatpush.msra.mxu0 0.0
        %3849 = vmatpush.msra.mxu0 0.0
        %3850 = vmatpush.msra.mxu0 0.0
        %3851 = vmatpush.msra.mxu0 0.0
        %3852 = vmatpush.msra.mxu0 %v3842
        %3853 = vmatpush.msra.mxu0 %v3808
        %3854 = vmatpush.msra.mxu0 %v3806
        %3855 = vmatpush.msra.mxu0 %v3804
        %3856 = vmatpush.msra.mxu0 %v3802
        %3857 = vmatpush.msra.mxu0 %v3800
        %3858 = vmatpush.msra.mxu0 %v3798
        %3859 = vmatpush.msra.mxu0 %v3796
        %3860 = vmatmul.f32.gmra.mxu0 %v3819
        %v3861 = vpop.f32.mrf.mxu0
        %v3862 = vadd.f32 0.0, %v3861
        %3863 = vmatmul.f32.gmra.mxu0 %v3822
        %v3864 = vpop.f32.mrf.mxu0
        %v3865 = vadd.f32 0.0, %v3864
        %3866 = vmatmul.f32.gmra.mxu0 %v3825
        %v3867 = vpop.f32.mrf.mxu0
        %v3868 = vadd.f32 0.0, %v3867
        %3869 = vmatmul.f32.gmra.mxu0 %v3828
        %v3870 = vpop.f32.mrf.mxu0
        %v3871 = vadd.f32 0.0, %v3870
        %3872 = vmatmul.f32.gmra.mxu0 %v3831
        %v3873 = vpop.f32.mrf.mxu0
        %v3874 = vadd.f32 0.0, %v3873
        %3875 = vmatmul.f32.gmra.mxu0 %v3834
        %v3876 = vpop.f32.mrf.mxu0
        %v3877 = vadd.f32 0.0, %v3876
        %3878 = vmatmul.f32.gmra.mxu0 %v3837
        %v3879 = vpop.f32.mrf.mxu0
        %v3880 = vadd.f32 0.0, %v3879
        %3881 = vmatmul.f32.gmra.mxu0 %v3840
        %v3882 = vpop.f32.mrf.mxu0
        %v3883 = vadd.f32 0.0, %v3882
        %3884 = vdwg.mxu0
        %v3886 = vsel %vm820, %v3862, 0
        %v3889 = vsel %vm820, %v3865, 0
        %v3892 = vsel %vm820, %v3868, 0
        %v3895 = vsel %vm820, %v3871, 0
        %v3898 = vsel %vm820, %v3874, 0
        %v3901 = vsel %vm820, %v3877, 0
        %v3904 = vsel %vm820, %v3880, 0
        %v3907 = vsel %vm820, %v3883, 0
        %3909 = vmatpush.msra.mxu0 0.0
        %3910 = vmatpush.msra.mxu0 0.0
        %3911 = vmatpush.msra.mxu0 0.0
        %3912 = vmatpush.msra.mxu0 0.0
        %3913 = vmatpush.msra.mxu0 0.0
        %3914 = vmatpush.msra.mxu0 0.0
        %3915 = vmatpush.msra.mxu0 0.0
        %3916 = vmatpush.msra.mxu0 0.0
        %3917 = vmatpush.msra.mxu0 0.0
        %3918 = vmatpush.msra.mxu0 0.0
        %3919 = vmatpush.msra.mxu0 0.0
        %3920 = vmatpush.msra.mxu0 0.0
        %3921 = vmatpush.msra.mxu0 0.0
        %3922 = vmatpush.msra.mxu0 0.0
        %3923 = vmatpush.msra.mxu0 0.0
        %3924 = vmatpush.msra.mxu0 %v698
        %3925 = vmatmul.f32.gmra.mxu0 %v3886
        %v3926 = vpop.f32.mrf.mxu0
        %v3927 = vadd.f32 0.0, %v3926
        %3928 = vmatmul.f32.gmra.mxu0 %v3889
        %v3929 = vpop.f32.mrf.mxu0
        %v3930 = vadd.f32 0.0, %v3929
        %3931 = vmatmul.f32.gmra.mxu0 %v3892
        %v3932 = vpop.f32.mrf.mxu0
        %v3933 = vadd.f32 0.0, %v3932
        %3934 = vmatmul.f32.gmra.mxu0 %v3895
        %v3935 = vpop.f32.mrf.mxu0
        %v3936 = vadd.f32 0.0, %v3935
        %3937 = vmatmul.f32.gmra.mxu0 %v3898
        %v3938 = vpop.f32.mrf.mxu0
        %v3939 = vadd.f32 0.0, %v3938
        %3940 = vmatmul.f32.gmra.mxu0 %v3901
        %v3941 = vpop.f32.mrf.mxu0
        %v3942 = vadd.f32 0.0, %v3941
        %3943 = vmatmul.f32.gmra.mxu0 %v3904
        %v3944 = vpop.f32.mrf.mxu0
        %v3945 = vadd.f32 0.0, %v3944
        %3946 = vmatmul.f32.gmra.mxu0 %v3907
        %v3947 = vpop.f32.mrf.mxu0
        %v3948 = vadd.f32 0.0, %v3947
        %3949 = vdwg.mxu0
        %v3950 = vadd.f32 %v3571, %v3927
        %v3951 = vadd.f32 %v3574, %v3930
        %v3952 = vadd.f32 %v3577, %v3933
        %v3953 = vadd.f32 %v3580, %v3936
        %v3954 = vadd.f32 %v3583, %v3939
        %v3955 = vadd.f32 %v3586, %v3942
        %v3956 = vadd.f32 %v3589, %v3945
        %v3957 = vadd.f32 %v3592, %v3948
        %3958 = vrot.lane.b32.xlu0 %v2867, 104
        %v3959 = vpop.permute.xlu0 %3958
        %3960 = vrot.lane.b32.xlu0 %v2870, 104
        %v3961 = vpop.permute.xlu0 %3960
        %3962 = vrot.lane.b32.xlu0 %v2873, 104
        %v3963 = vpop.permute.xlu0 %3962
        %3964 = vrot.lane.b32.xlu0 %v2876, 104
        %v3965 = vpop.permute.xlu0 %3964
        %3966 = vrot.lane.b32.xlu0 %v2879, 104
        %v3967 = vpop.permute.xlu0 %3966
        %3968 = vrot.lane.b32.xlu0 %v2882, 104
        %v3969 = vpop.permute.xlu0 %3968
        %3970 = vrot.lane.b32.xlu0 %v2885, 104
        %v3971 = vpop.permute.xlu0 %3970
        %3972 = vrot.lane.b32.xlu0 %v2888, 104
        %v3973 = vpop.permute.xlu0 %3972
        %3974 = vrot.lane.b32.xlu0 %v2867, 72
        %v3975 = vpop.permute.xlu0 %3974
        %3976 = vrot.lane.b32.xlu0 %v2870, 72
        %v3977 = vpop.permute.xlu0 %3976
        %3978 = vrot.lane.b32.xlu0 %v2873, 72
        %v3979 = vpop.permute.xlu0 %3978
        %3980 = vrot.lane.b32.xlu0 %v2876, 72
        %v3981 = vpop.permute.xlu0 %3980
        %3982 = vrot.lane.b32.xlu0 %v2879, 72
        %v3983 = vpop.permute.xlu0 %3982
        %3984 = vrot.lane.b32.xlu0 %v2882, 72
        %v3985 = vpop.permute.xlu0 %3984
        %3986 = vrot.lane.b32.xlu0 %v2885, 72
        %v3987 = vpop.permute.xlu0 %3986
        %3988 = vrot.lane.b32.xlu0 %v2888, 72
        %v3989 = vpop.permute.xlu0 %3988
        %v3990 = vsel %vm820, %v3959, 0
        %v3992 = vsel %vm820, %v3961, 0
        %v3994 = vsel %vm820, %v3963, 0
        %v3996 = vsel %vm820, %v3965, 0
        %v3998 = vsel %vm820, %v3967, 0
        %v4000 = vsel %vm820, %v3969, 0
        %v4002 = vsel %vm820, %v3971, 0
        %v4004 = vsel %vm820, %v3973, 0
        %v4006 = vsel %vm820, %v3975, 0
        %v4008 = vsel %vm820, %v3977, 0
        %v4010 = vsel %vm820, %v3979, 0
        %v4012 = vsel %vm820, %v3981, 0
        %v4014 = vsel %vm820, %v3983, 0
        %v4016 = vsel %vm820, %v3985, 0
        %v4018 = vsel %vm820, %v3987, 0
        %v4020 = vsel %vm820, %v3989, 0
        %4022 = vmatpush.xpose.msra.mxu0 0.0
        %4023 = vmatpush.xpose.msra.mxu0 0.0
        %4024 = vmatpush.xpose.msra.mxu0 0.0
        %4025 = vmatpush.xpose.msra.mxu0 0.0
        %4026 = vmatpush.xpose.msra.mxu0 0.0
        %4027 = vmatpush.xpose.msra.mxu0 0.0
        %4028 = vmatpush.xpose.msra.mxu0 0.0
        %4029 = vmatpush.xpose.msra.mxu0 0.0
        %4030 = vmatpush.xpose.msra.mxu0 %v4020
        %4031 = vmatpush.xpose.msra.mxu0 %v4018
        %4032 = vmatpush.xpose.msra.mxu0 %v4016
        %4033 = vmatpush.xpose.msra.mxu0 %v4014
        %4034 = vmatpush.xpose.msra.mxu0 %v4012
        %4035 = vmatpush.xpose.msra.mxu0 %v4010
        %4036 = vmatpush.xpose.msra.mxu0 %v4008
        %4037 = vmatpush.xpose.msra.mxu0 %v4006
        %4038 = vmatmul.f32.gmra.mxu0 %v3990
        %v4039 = vpop.f32.mrf.mxu0
        %v4040 = vadd.f32 0.0, %v4039
        %4041 = vmatmul.f32.gmra.mxu0 %v3992
        %v4042 = vpop.f32.mrf.mxu0
        %v4043 = vadd.f32 0.0, %v4042
        %4044 = vmatmul.f32.gmra.mxu0 %v3994
        %v4045 = vpop.f32.mrf.mxu0
        %v4046 = vadd.f32 0.0, %v4045
        %4047 = vmatmul.f32.gmra.mxu0 %v3996
        %v4048 = vpop.f32.mrf.mxu0
        %v4049 = vadd.f32 0.0, %v4048
        %4050 = vmatmul.f32.gmra.mxu0 %v3998
        %v4051 = vpop.f32.mrf.mxu0
        %v4052 = vadd.f32 0.0, %v4051
        %4053 = vmatmul.f32.gmra.mxu0 %v4000
        %v4054 = vpop.f32.mrf.mxu0
        %v4055 = vadd.f32 0.0, %v4054
        %4056 = vmatmul.f32.gmra.mxu0 %v4002
        %v4057 = vpop.f32.mrf.mxu0
        %v4058 = vadd.f32 0.0, %v4057
        %4059 = vmatmul.f32.gmra.mxu0 %v4004
        %v4060 = vpop.f32.mrf.mxu0
        %v4061 = vadd.f32 0.0, %v4060
        %4062 = vdwg.mxu0
        %v4063 = vmul.f32 %v4040, 0.35355338
        %v4064 = vmul.f32 %v4043, 0.35355338
        %v4065 = vmul.f32 %v4046, 0.35355338
        %v4066 = vmul.f32 %v4049, 0.35355338
        %v4067 = vmul.f32 %v4052, 0.35355338
        %v4068 = vmul.f32 %v4055, 0.35355338
        %v4069 = vmul.f32 %v4058, 0.35355338
        %v4070 = vmul.f32 %v4061, 0.35355338
        %v4071 = vsel %vm902, %v4063, -inf
        %4072 = vmax.xlane.f32.xlu0 %v4071
        %v4073 = vpop.xlane.xlu0 %4072
        %v4074 = vsel %vm902, %v4064, -inf
        %4075 = vmax.xlane.f32.xlu0 %v4074
        %v4076 = vpop.xlane.xlu0 %4075
        %v4077 = vsel %vm902, %v4065, -inf
        %4078 = vmax.xlane.f32.xlu0 %v4077
        %v4079 = vpop.xlane.xlu0 %4078
        %v4080 = vsel %vm902, %v4066, -inf
        %4081 = vmax.xlane.f32.xlu0 %v4080
        %v4082 = vpop.xlane.xlu0 %4081
        %v4083 = vsel %vm902, %v4067, -inf
        %4084 = vmax.xlane.f32.xlu0 %v4083
        %v4085 = vpop.xlane.xlu0 %4084
        %v4086 = vsel %vm902, %v4068, -inf
        %4087 = vmax.xlane.f32.xlu0 %v4086
        %v4088 = vpop.xlane.xlu0 %4087
        %v4089 = vsel %vm902, %v4069, -inf
        %4090 = vmax.xlane.f32.xlu0 %v4089
        %v4091 = vpop.xlane.xlu0 %4090
        %v4092 = vsel %vm924, %v4070, -inf
        %4093 = vmax.xlane.f32.xlu0 %v4092
        %v4094 = vpop.xlane.xlu0 %4093
        %v4095 = vsub.f32 %v4063, %v4073
        %v4096 = vsub.f32 %v4064, %v4076
        %v4097 = vsub.f32 %v4065, %v4079
        %v4098 = vsub.f32 %v4066, %v4082
        %v4099 = vsub.f32 %v4067, %v4085
        %v4100 = vsub.f32 %v4068, %v4088
        %v4101 = vsub.f32 %v4069, %v4091
        %v4102 = vsub.f32 %v4070, %v4094
        %v4103 = vmul.f32 %v4095, 1.442695
        %v4104 = vpow.pop %v4103
        %v4105 = vmul.f32 %v4096, 1.442695
        %v4106 = vpow.pop %v4105
        %v4107 = vmul.f32 %v4097, 1.442695
        %v4108 = vpow.pop %v4107
        %v4109 = vmul.f32 %v4098, 1.442695
        %v4110 = vpow.pop %v4109
        %v4111 = vmul.f32 %v4099, 1.442695
        %v4112 = vpow.pop %v4111
        %v4113 = vmul.f32 %v4100, 1.442695
        %v4114 = vpow.pop %v4113
        %v4115 = vmul.f32 %v4101, 1.442695
        %v4116 = vpow.pop %v4115
        %v4117 = vmul.f32 %v4102, 1.442695
        %v4118 = vpow.pop %v4117
        %v4119 = vsel %vm902, %v4104, 0.0
        %4120 = vadd.xlane.f32.xlu0 %v4119
        %v4121 = vpop.xlane.xlu0 %4120
        %v4122 = vsel %vm902, %v4106, 0.0
        %4123 = vadd.xlane.f32.xlu0 %v4122
        %v4124 = vpop.xlane.xlu0 %4123
        %v4125 = vsel %vm902, %v4108, 0.0
        %4126 = vadd.xlane.f32.xlu0 %v4125
        %v4127 = vpop.xlane.xlu0 %4126
        %v4128 = vsel %vm902, %v4110, 0.0
        %4129 = vadd.xlane.f32.xlu0 %v4128
        %v4130 = vpop.xlane.xlu0 %4129
        %v4131 = vsel %vm902, %v4112, 0.0
        %4132 = vadd.xlane.f32.xlu0 %v4131
        %v4133 = vpop.xlane.xlu0 %4132
        %v4134 = vsel %vm902, %v4114, 0.0
        %4135 = vadd.xlane.f32.xlu0 %v4134
        %v4136 = vpop.xlane.xlu0 %4135
        %v4137 = vsel %vm902, %v4116, 0.0
        %4138 = vadd.xlane.f32.xlu0 %v4137
        %v4139 = vpop.xlane.xlu0 %4138
        %v4140 = vsel %vm924, %v4118, 0.0
        %4141 = vadd.xlane.f32.xlu0 %v4140
        %v4142 = vpop.xlane.xlu0 %4141
        %v4143 = vrcp.pop %v4121
        %v4144 = vrcp.pop %v4124
        %v4145 = vrcp.pop %v4127
        %v4146 = vrcp.pop %v4130
        %v4147 = vrcp.pop %v4133
        %v4148 = vrcp.pop %v4136
        %v4149 = vrcp.pop %v4139
        %v4150 = vrcp.pop %v4142
        %v4151 = vmul.f32 %v4104, %v4143
        %v4152 = vmul.f32 %v4106, %v4144
        %v4153 = vmul.f32 %v4108, %v4145
        %v4154 = vmul.f32 %v4110, %v4146
        %v4155 = vmul.f32 %v4112, %v4147
        %v4156 = vmul.f32 %v4114, %v4148
        %v4157 = vmul.f32 %v4116, %v4149
        %v4158 = vmul.f32 %v4118, %v4150
        %4159 = vrot.lane.b32.xlu0 %v2867, 40
        %v4160 = vpop.permute.xlu0 %4159
        %4161 = vrot.lane.b32.xlu0 %v2870, 40
        %v4162 = vpop.permute.xlu0 %4161
        %4163 = vrot.lane.b32.xlu0 %v2873, 40
        %v4164 = vpop.permute.xlu0 %4163
        %4165 = vrot.lane.b32.xlu0 %v2876, 40
        %v4166 = vpop.permute.xlu0 %4165
        %4167 = vrot.lane.b32.xlu0 %v2879, 40
        %v4168 = vpop.permute.xlu0 %4167
        %4169 = vrot.lane.b32.xlu0 %v2882, 40
        %v4170 = vpop.permute.xlu0 %4169
        %4171 = vrot.lane.b32.xlu0 %v2885, 40
        %v4172 = vpop.permute.xlu0 %4171
        %4173 = vrot.lane.b32.xlu0 %v2888, 40
        %v4174 = vpop.permute.xlu0 %4173
        %v4183 = vsel %vm902, %v4151, 0
        %v4186 = vsel %vm902, %v4152, 0
        %v4189 = vsel %vm902, %v4153, 0
        %v4192 = vsel %vm902, %v4154, 0
        %v4195 = vsel %vm902, %v4155, 0
        %v4198 = vsel %vm902, %v4156, 0
        %v4201 = vsel %vm902, %v4157, 0
        %v4204 = vsel %vm902, %v4158, 0
        %v4206 = vsel %vm1039, %v4174, 0
        %4208 = vmatpush.msra.mxu0 0.0
        %4209 = vmatpush.msra.mxu0 0.0
        %4210 = vmatpush.msra.mxu0 0.0
        %4211 = vmatpush.msra.mxu0 0.0
        %4212 = vmatpush.msra.mxu0 0.0
        %4213 = vmatpush.msra.mxu0 0.0
        %4214 = vmatpush.msra.mxu0 0.0
        %4215 = vmatpush.msra.mxu0 0.0
        %4216 = vmatpush.msra.mxu0 %v4206
        %4217 = vmatpush.msra.mxu0 %v4172
        %4218 = vmatpush.msra.mxu0 %v4170
        %4219 = vmatpush.msra.mxu0 %v4168
        %4220 = vmatpush.msra.mxu0 %v4166
        %4221 = vmatpush.msra.mxu0 %v4164
        %4222 = vmatpush.msra.mxu0 %v4162
        %4223 = vmatpush.msra.mxu0 %v4160
        %4224 = vmatmul.f32.gmra.mxu0 %v4183
        %v4225 = vpop.f32.mrf.mxu0
        %v4226 = vadd.f32 0.0, %v4225
        %4227 = vmatmul.f32.gmra.mxu0 %v4186
        %v4228 = vpop.f32.mrf.mxu0
        %v4229 = vadd.f32 0.0, %v4228
        %4230 = vmatmul.f32.gmra.mxu0 %v4189
        %v4231 = vpop.f32.mrf.mxu0
        %v4232 = vadd.f32 0.0, %v4231
        %4233 = vmatmul.f32.gmra.mxu0 %v4192
        %v4234 = vpop.f32.mrf.mxu0
        %v4235 = vadd.f32 0.0, %v4234
        %4236 = vmatmul.f32.gmra.mxu0 %v4195
        %v4237 = vpop.f32.mrf.mxu0
        %v4238 = vadd.f32 0.0, %v4237
        %4239 = vmatmul.f32.gmra.mxu0 %v4198
        %v4240 = vpop.f32.mrf.mxu0
        %v4241 = vadd.f32 0.0, %v4240
        %4242 = vmatmul.f32.gmra.mxu0 %v4201
        %v4243 = vpop.f32.mrf.mxu0
        %v4244 = vadd.f32 0.0, %v4243
        %4245 = vmatmul.f32.gmra.mxu0 %v4204
        %v4246 = vpop.f32.mrf.mxu0
        %v4247 = vadd.f32 0.0, %v4246
        %4248 = vdwg.mxu0
        %v4250 = vsel %vm820, %v4226, 0
        %v4253 = vsel %vm820, %v4229, 0
        %v4256 = vsel %vm820, %v4232, 0
        %v4259 = vsel %vm820, %v4235, 0
        %v4262 = vsel %vm820, %v4238, 0
        %v4265 = vsel %vm820, %v4241, 0
        %v4268 = vsel %vm820, %v4244, 0
        %v4271 = vsel %vm820, %v4247, 0
        %4273 = vmatpush.msra.mxu0 0.0
        %4274 = vmatpush.msra.mxu0 0.0
        %4275 = vmatpush.msra.mxu0 0.0
        %4276 = vmatpush.msra.mxu0 0.0
        %4277 = vmatpush.msra.mxu0 0.0
        %4278 = vmatpush.msra.mxu0 0.0
        %4279 = vmatpush.msra.mxu0 0.0
        %4280 = vmatpush.msra.mxu0 0.0
        %4281 = vmatpush.msra.mxu0 0.0
        %4282 = vmatpush.msra.mxu0 0.0
        %4283 = vmatpush.msra.mxu0 0.0
        %4284 = vmatpush.msra.mxu0 0.0
        %4285 = vmatpush.msra.mxu0 0.0
        %4286 = vmatpush.msra.mxu0 0.0
        %4287 = vmatpush.msra.mxu0 0.0
        %4288 = vmatpush.msra.mxu0 %v699
        %4289 = vmatmul.f32.gmra.mxu0 %v4250
        %v4290 = vpop.f32.mrf.mxu0
        %v4291 = vadd.f32 0.0, %v4290
        %4292 = vmatmul.f32.gmra.mxu0 %v4253
        %v4293 = vpop.f32.mrf.mxu0
        %v4294 = vadd.f32 0.0, %v4293
        %4295 = vmatmul.f32.gmra.mxu0 %v4256
        %v4296 = vpop.f32.mrf.mxu0
        %v4297 = vadd.f32 0.0, %v4296
        %4298 = vmatmul.f32.gmra.mxu0 %v4259
        %v4299 = vpop.f32.mrf.mxu0
        %v4300 = vadd.f32 0.0, %v4299
        %4301 = vmatmul.f32.gmra.mxu0 %v4262
        %v4302 = vpop.f32.mrf.mxu0
        %v4303 = vadd.f32 0.0, %v4302
        %4304 = vmatmul.f32.gmra.mxu0 %v4265
        %v4305 = vpop.f32.mrf.mxu0
        %v4306 = vadd.f32 0.0, %v4305
        %4307 = vmatmul.f32.gmra.mxu0 %v4268
        %v4308 = vpop.f32.mrf.mxu0
        %v4309 = vadd.f32 0.0, %v4308
        %4310 = vmatmul.f32.gmra.mxu0 %v4271
        %v4311 = vpop.f32.mrf.mxu0
        %v4312 = vadd.f32 0.0, %v4311
        %4313 = vdwg.mxu0
        %v4314 = vadd.f32 %v3950, %v4291
        %v4315 = vadd.f32 %v3951, %v4294
        %v4316 = vadd.f32 %v3952, %v4297
        %v4317 = vadd.f32 %v3953, %v4300
        %v4318 = vadd.f32 %v3954, %v4303
        %v4319 = vadd.f32 %v3955, %v4306
        %v4320 = vadd.f32 %v3956, %v4309
        %v4321 = vadd.f32 %v3957, %v4312
        %v4322 = vadd.f32 %v4314, %v2233
        %v4323 = vadd.f32 %v4315, %v2233
        %v4324 = vadd.f32 %v4316, %v2233
        %v4325 = vadd.f32 %v4317, %v2233
        %v4326 = vadd.f32 %v4318, %v2233
        %v4327 = vadd.f32 %v4319, %v2233
        %v4328 = vadd.f32 %v4320, %v2233
        %v4329 = vadd.f32 %v4321, %v2233
        %v4330 = vadd.f32 %v2817, %v4322
        %v4331 = vadd.f32 %v2818, %v4323
        %v4332 = vadd.f32 %v2819, %v4324
        %v4333 = vadd.f32 %v2820, %v4325
        %v4334 = vadd.f32 %v2821, %v4326
        %v4335 = vadd.f32 %v2822, %v4327
        %v4336 = vadd.f32 %v2823, %v4328
        %v4337 = vadd.f32 %v2824, %v4329
        %v4338 = vsel %vm730, %v4330, 0.0
        %4339 = vadd.xlane.f32.xlu0 %v4338
        %v4340 = vpop.xlane.xlu0 %4339
        %v4341 = vsel %vm730, %v4331, 0.0
        %4342 = vadd.xlane.f32.xlu0 %v4341
        %v4343 = vpop.xlane.xlu0 %4342
        %v4344 = vsel %vm730, %v4332, 0.0
        %4345 = vadd.xlane.f32.xlu0 %v4344
        %v4346 = vpop.xlane.xlu0 %4345
        %v4347 = vsel %vm730, %v4333, 0.0
        %4348 = vadd.xlane.f32.xlu0 %v4347
        %v4349 = vpop.xlane.xlu0 %4348
        %v4350 = vsel %vm730, %v4334, 0.0
        %4351 = vadd.xlane.f32.xlu0 %v4350
        %v4352 = vpop.xlane.xlu0 %4351
        %v4353 = vsel %vm730, %v4335, 0.0
        %4354 = vadd.xlane.f32.xlu0 %v4353
        %v4355 = vpop.xlane.xlu0 %4354
        %v4356 = vsel %vm730, %v4336, 0.0
        %4357 = vadd.xlane.f32.xlu0 %v4356
        %v4358 = vpop.xlane.xlu0 %4357
        %v4359 = vsel %vm2272, %v4337, 0.0
        %4360 = vadd.xlane.f32.xlu0 %v4359
        %v4361 = vpop.xlane.xlu0 %4360
        %v4362 = vmul.f32 %v4340, %v2282
        %v4363 = vmul.f32 %v4343, %v2282
        %v4364 = vmul.f32 %v4346, %v2282
        %v4365 = vmul.f32 %v4349, %v2282
        %v4366 = vmul.f32 %v4352, %v2282
        %v4367 = vmul.f32 %v4355, %v2282
        %v4368 = vmul.f32 %v4358, %v2282
        %v4369 = vmul.f32 %v4361, %v2282
        %v4370 = vsub.f32 %v4330, %v4362
        %v4371 = vsub.f32 %v4331, %v4363
        %v4372 = vsub.f32 %v4332, %v4364
        %v4373 = vsub.f32 %v4333, %v4365
        %v4374 = vsub.f32 %v4334, %v4366
        %v4375 = vsub.f32 %v4335, %v4367
        %v4376 = vsub.f32 %v4336, %v4368
        %v4377 = vsub.f32 %v4337, %v4369
        %v4378 = vmul.f32 %v4370, %v4370
        %v4379 = vmul.f32 %v4371, %v4371
        %v4380 = vmul.f32 %v4372, %v4372
        %v4381 = vmul.f32 %v4373, %v4373
        %v4382 = vmul.f32 %v4374, %v4374
        %v4383 = vmul.f32 %v4375, %v4375
        %v4384 = vmul.f32 %v4376, %v4376
        %v4385 = vmul.f32 %v4377, %v4377
        %v4386 = vsel %vm730, %v4378, 0.0
        %4387 = vadd.xlane.f32.xlu0 %v4386
        %v4388 = vpop.xlane.xlu0 %4387
        %v4389 = vsel %vm730, %v4379, 0.0
        %4390 = vadd.xlane.f32.xlu0 %v4389
        %v4391 = vpop.xlane.xlu0 %4390
        %v4392 = vsel %vm730, %v4380, 0.0
        %4393 = vadd.xlane.f32.xlu0 %v4392
        %v4394 = vpop.xlane.xlu0 %4393
        %v4395 = vsel %vm730, %v4381, 0.0
        %4396 = vadd.xlane.f32.xlu0 %v4395
        %v4397 = vpop.xlane.xlu0 %4396
        %v4398 = vsel %vm730, %v4382, 0.0
        %4399 = vadd.xlane.f32.xlu0 %v4398
        %v4400 = vpop.xlane.xlu0 %4399
        %v4401 = vsel %vm730, %v4383, 0.0
        %4402 = vadd.xlane.f32.xlu0 %v4401
        %v4403 = vpop.xlane.xlu0 %4402
        %v4404 = vsel %vm730, %v4384, 0.0
        %4405 = vadd.xlane.f32.xlu0 %v4404
        %v4406 = vpop.xlane.xlu0 %4405
        %v4407 = vsel %vm2272, %v4385, 0.0
        %4408 = vadd.xlane.f32.xlu0 %v4407
        %v4409 = vpop.xlane.xlu0 %4408
        %v4410 = vmul.f32 %v4388, %v2282
        %v4411 = vmul.f32 %v4391, %v2282
        %v4412 = vmul.f32 %v4394, %v2282
        %v4413 = vmul.f32 %v4397, %v2282
        %v4414 = vmul.f32 %v4400, %v2282
        %v4415 = vmul.f32 %v4403, %v2282
        %v4416 = vmul.f32 %v4406, %v2282
        %v4417 = vmul.f32 %v4409, %v2282
        %v4418 = vadd.f32 %v4410, 1e-05
        %v4419 = vadd.f32 %v4411, 1e-05
        %v4420 = vadd.f32 %v4412, 1e-05
        %v4421 = vadd.f32 %v4413, 1e-05
        %v4422 = vadd.f32 %v4414, 1e-05
        %v4423 = vadd.f32 %v4415, 1e-05
        %v4424 = vadd.f32 %v4416, 1e-05
        %v4425 = vadd.f32 %v4417, 1e-05
        %v4426 = vrsqrt.pop %v4418
        %v4427 = vmul.f32 %v4426, %v4418
        %v4428 = vmul.f32 %v4427, %v4426
        %v4429 = vmul.f32 0.5, %v4428
        %v4430 = vsub.f32 1.5, %v4429
        %v4431 = vmul.f32 %v4426, %v4430
        %vm4432 = vweird.f32 %v4418
        %vm4433 = vweird.f32 %v4426
        %vm4434 = vmor %vm4432, %vm4433
        %v4435 = vsel %vm4434, %v4426, %v4431
        %v4436 = vrsqrt.pop %v4419
        %v4437 = vmul.f32 %v4436, %v4419
        %v4438 = vmul.f32 %v4437, %v4436
        %v4439 = vmul.f32 0.5, %v4438
        %v4440 = vsub.f32 1.5, %v4439
        %v4441 = vmul.f32 %v4436, %v4440
        %vm4442 = vweird.f32 %v4419
        %vm4443 = vweird.f32 %v4436
        %vm4444 = vmor %vm4442, %vm4443
        %v4445 = vsel %vm4444, %v4436, %v4441
        %v4446 = vrsqrt.pop %v4420
        %v4447 = vmul.f32 %v4446, %v4420
        %v4448 = vmul.f32 %v4447, %v4446
        %v4449 = vmul.f32 0.5, %v4448
        %v4450 = vsub.f32 1.5, %v4449
        %v4451 = vmul.f32 %v4446, %v4450
        %vm4452 = vweird.f32 %v4420
        %vm4453 = vweird.f32 %v4446
        %vm4454 = vmor %vm4452, %vm4453
        %v4455 = vsel %vm4454, %v4446, %v4451
        %v4456 = vrsqrt.pop %v4421
        %v4457 = vmul.f32 %v4456, %v4421
        %v4458 = vmul.f32 %v4457, %v4456
        %v4459 = vmul.f32 0.5, %v4458
        %v4460 = vsub.f32 1.5, %v4459
        %v4461 = vmul.f32 %v4456, %v4460
        %vm4462 = vweird.f32 %v4421
        %vm4463 = vweird.f32 %v4456
        %vm4464 = vmor %vm4462, %vm4463
        %v4465 = vsel %vm4464, %v4456, %v4461
        %v4466 = vrsqrt.pop %v4422
        %v4467 = vmul.f32 %v4466, %v4422
        %v4468 = vmul.f32 %v4467, %v4466
        %v4469 = vmul.f32 0.5, %v4468
        %v4470 = vsub.f32 1.5, %v4469
        %v4471 = vmul.f32 %v4466, %v4470
        %vm4472 = vweird.f32 %v4422
        %vm4473 = vweird.f32 %v4466
        %vm4474 = vmor %vm4472, %vm4473
        %v4475 = vsel %vm4474, %v4466, %v4471
        %v4476 = vrsqrt.pop %v4423
        %v4477 = vmul.f32 %v4476, %v4423
        %v4478 = vmul.f32 %v4477, %v4476
        %v4479 = vmul.f32 0.5, %v4478
        %v4480 = vsub.f32 1.5, %v4479
        %v4481 = vmul.f32 %v4476, %v4480
        %vm4482 = vweird.f32 %v4423
        %vm4483 = vweird.f32 %v4476
        %vm4484 = vmor %vm4482, %vm4483
        %v4485 = vsel %vm4484, %v4476, %v4481
        %v4486 = vrsqrt.pop %v4424
        %v4487 = vmul.f32 %v4486, %v4424
        %v4488 = vmul.f32 %v4487, %v4486
        %v4489 = vmul.f32 0.5, %v4488
        %v4490 = vsub.f32 1.5, %v4489
        %v4491 = vmul.f32 %v4486, %v4490
        %vm4492 = vweird.f32 %v4424
        %vm4493 = vweird.f32 %v4486
        %vm4494 = vmor %vm4492, %vm4493
        %v4495 = vsel %vm4494, %v4486, %v4491
        %v4496 = vrsqrt.pop %v4425
        %v4497 = vmul.f32 %v4496, %v4425
        %v4498 = vmul.f32 %v4497, %v4496
        %v4499 = vmul.f32 0.5, %v4498
        %v4500 = vsub.f32 1.5, %v4499
        %v4501 = vmul.f32 %v4496, %v4500
        %vm4502 = vweird.f32 %v4425
        %vm4503 = vweird.f32 %v4496
        %vm4504 = vmor %vm4502, %vm4503
        %v4505 = vsel %vm4504, %v4496, %v4501
        %v4506 = vmul.f32 %v4370, %v4435
        %v4507 = vmul.f32 %v4371, %v4445
        %v4508 = vmul.f32 %v4372, %v4455
        %v4509 = vmul.f32 %v4373, %v4465
        %v4510 = vmul.f32 %v4374, %v4475
        %v4511 = vmul.f32 %v4375, %v4485
        %v4512 = vmul.f32 %v4376, %v4495
        %v4513 = vmul.f32 %v4377, %v4505
        %v4514 = vmul.f32 %v4506, %v2436
        %v4515 = vmul.f32 %v4507, %v2436
        %v4516 = vmul.f32 %v4508, %v2436
        %v4517 = vmul.f32 %v4509, %v2436
        %v4518 = vmul.f32 %v4510, %v2436
        %v4519 = vmul.f32 %v4511, %v2436
        %v4520 = vmul.f32 %v4512, %v2436
        %v4521 = vmul.f32 %v4513, %v2436
        %v4522 = vadd.f32 %v4514, %v2447
        %v4523 = vadd.f32 %v4515, %v2447
        %v4524 = vadd.f32 %v4516, %v2447
        %v4525 = vadd.f32 %v4517, %v2447
        %v4526 = vadd.f32 %v4518, %v2447
        %v4527 = vadd.f32 %v4519, %v2447
        %v4528 = vadd.f32 %v4520, %v2447
        %v4529 = vadd.f32 %v4521, %v2447
        %v4531 = vsel %vm730, %v4522, 0
        %v4534 = vsel %vm730, %v4523, 0
        %v4537 = vsel %vm730, %v4524, 0
        %v4540 = vsel %vm730, %v4525, 0
        %v4543 = vsel %vm730, %v4526, 0
        %v4546 = vsel %vm730, %v4527, 0
        %v4549 = vsel %vm730, %v4528, 0
        %v4552 = vsel %vm730, %v4529, 0
        %4554 = vmatpush.msra.mxu0 0.0
        %4555 = vmatpush.msra.mxu0 0.0
        %4556 = vmatpush.msra.mxu0 0.0
        %4557 = vmatpush.msra.mxu0 0.0
        %4558 = vmatpush.msra.mxu0 0.0
        %4559 = vmatpush.msra.mxu0 0.0
        %4560 = vmatpush.msra.mxu0 0.0
        %4561 = vmatpush.msra.mxu0 0.0
        %4562 = vmatpush.msra.mxu0 0.0
        %4563 = vmatpush.msra.mxu0 0.0
        %4564 = vmatpush.msra.mxu0 0.0
        %4565 = vmatpush.msra.mxu0 0.0
        %4566 = vmatpush.msra.mxu0 %v706
        %4567 = vmatpush.msra.mxu0 %v705
        %4568 = vmatpush.msra.mxu0 %v704
        %4569 = vmatpush.msra.mxu0 %v703
        %4570 = vmatmul.f32.gmra.mxu0 %v4531
        %v4571 = vpop.f32.mrf.mxu0
        %v4572 = vadd.f32 %v2458, %v4571
        %4573 = vmatmul.f32.gmra.mxu0 %v4534
        %v4574 = vpop.f32.mrf.mxu0
        %v4575 = vadd.f32 %v2458, %v4574
        %4576 = vmatmul.f32.gmra.mxu0 %v4537
        %v4577 = vpop.f32.mrf.mxu0
        %v4578 = vadd.f32 %v2458, %v4577
        %4579 = vmatmul.f32.gmra.mxu0 %v4540
        %v4580 = vpop.f32.mrf.mxu0
        %v4581 = vadd.f32 %v2458, %v4580
        %4582 = vmatmul.f32.gmra.mxu0 %v4543
        %v4583 = vpop.f32.mrf.mxu0
        %v4584 = vadd.f32 %v2458, %v4583
        %4585 = vmatmul.f32.gmra.mxu0 %v4546
        %v4586 = vpop.f32.mrf.mxu0
        %v4587 = vadd.f32 %v2458, %v4586
        %4588 = vmatmul.f32.gmra.mxu0 %v4549
        %v4589 = vpop.f32.mrf.mxu0
        %v4590 = vadd.f32 %v2458, %v4589
        %4591 = vmatmul.f32.gmra.mxu0 %v4552
        %v4592 = vpop.f32.mrf.mxu0
        %v4593 = vadd.f32 %v2458, %v4592
        %4594 = vdwg.mxu0
        %v4595 = vmax.f32 %v4572, 0.0
        %v4596 = vmax.f32 %v4575, 0.0
        %v4597 = vmax.f32 %v4578, 0.0
        %v4598 = vmax.f32 %v4581, 0.0
        %v4599 = vmax.f32 %v4584, 0.0
        %v4600 = vmax.f32 %v4587, 0.0
        %v4601 = vmax.f32 %v4590, 0.0
        %v4602 = vmax.f32 %v4593, 0.0
        %v4604 = vsel %vm2536, %v4595, 0
        %v4607 = vsel %vm2536, %v4596, 0
        %v4610 = vsel %vm2536, %v4597, 0
        %v4613 = vsel %vm2536, %v4598, 0
        %v4616 = vsel %vm2536, %v4599, 0
        %v4619 = vsel %vm2536, %v4600, 0
        %v4622 = vsel %vm2536, %v4601, 0
        %v4625 = vsel %vm2536, %v4602, 0
        %4627 = vmatpush.msra.mxu0 0.0
        %4628 = vmatpush.msra.mxu0 0.0
        %4629 = vmatpush.msra.mxu0 0.0
        %4630 = vmatpush.msra.mxu0 0.0
        %4631 = vmatpush.msra.mxu0 0.0
        %4632 = vmatpush.msra.mxu0 0.0
        %4633 = vmatpush.msra.mxu0 0.0
        %4634 = vmatpush.msra.mxu0 0.0
        %4635 = vmatpush.msra.mxu0 %v715
        %4636 = vmatpush.msra.mxu0 %v714
        %4637 = vmatpush.msra.mxu0 %v713
        %4638 = vmatpush.msra.mxu0 %v712
        %4639 = vmatpush.msra.mxu0 %v711
        %4640 = vmatpush.msra.mxu0 %v710
        %4641 = vmatpush.msra.mxu0 %v709
        %4642 = vmatpush.msra.mxu0 %v708
        %4643 = vmatmul.f32.gmra.mxu0 %v4604
        %v4644 = vpop.f32.mrf.mxu0
        %v4645 = vadd.f32 %v2534, %v4644
        %4646 = vmatmul.f32.gmra.mxu0 %v4607
        %v4647 = vpop.f32.mrf.mxu0
        %v4648 = vadd.f32 %v2534, %v4647
        %4649 = vmatmul.f32.gmra.mxu0 %v4610
        %v4650 = vpop.f32.mrf.mxu0
        %v4651 = vadd.f32 %v2534, %v4650
        %4652 = vmatmul.f32.gmra.mxu0 %v4613
        %v4653 = vpop.f32.mrf.mxu0
        %v4654 = vadd.f32 %v2534, %v4653
        %4655 = vmatmul.f32.gmra.mxu0 %v4616
        %v4656 = vpop.f32.mrf.mxu0
        %v4657 = vadd.f32 %v2534, %v4656
        %4658 = vmatmul.f32.gmra.mxu0 %v4619
        %v4659 = vpop.f32.mrf.mxu0
        %v4660 = vadd.f32 %v2534, %v4659
        %4661 = vmatmul.f32.gmra.mxu0 %v4622
        %v4662 = vpop.f32.mrf.mxu0
        %v4663 = vadd.f32 %v2534, %v4662
        %4664 = vmatmul.f32.gmra.mxu0 %v4625
        %v4665 = vpop.f32.mrf.mxu0
        %v4666 = vadd.f32 %v2534, %v4665
        %4667 = vdwg.mxu0
        %v4668 = vadd.f32 %v4522, %v4645
        %v4669 = vadd.f32 %v4523, %v4648
        %v4670 = vadd.f32 %v4524, %v4651
        %v4671 = vadd.f32 %v4525, %v4654
        %v4672 = vadd.f32 %v4526, %v4657
        %v4673 = vadd.f32 %v4527, %v4660
        %v4674 = vadd.f32 %v4528, %v4663
        %v4675 = vadd.f32 %v4529, %v4666
        %v4676 = vsel %vm730, %v4668, 0.0
        %4677 = vadd.xlane.f32.xlu0 %v4676
        %v4678 = vpop.xlane.xlu0 %4677
        %v4679 = vsel %vm730, %v4669, 0.0
        %4680 = vadd.xlane.f32.xlu0 %v4679
        %v4681 = vpop.xlane.xlu0 %4680
        %v4682 = vsel %vm730, %v4670, 0.0
        %4683 = vadd.xlane.f32.xlu0 %v4682
        %v4684 = vpop.xlane.xlu0 %4683
        %v4685 = vsel %vm730, %v4671, 0.0
        %4686 = vadd.xlane.f32.xlu0 %v4685
        %v4687 = vpop.xlane.xlu0 %4686
        %v4688 = vsel %vm730, %v4672, 0.0
        %4689 = vadd.xlane.f32.xlu0 %v4688
        %v4690 = vpop.xlane.xlu0 %4689
        %v4691 = vsel %vm730, %v4673, 0.0
        %4692 = vadd.xlane.f32.xlu0 %v4691
        %v4693 = vpop.xlane.xlu0 %4692
        %v4694 = vsel %vm730, %v4674, 0.0
        %4695 = vadd.xlane.f32.xlu0 %v4694
        %v4696 = vpop.xlane.xlu0 %4695
        %v4697 = vsel %vm2272, %v4675, 0.0
        %4698 = vadd.xlane.f32.xlu0 %v4697
        %v4699 = vpop.xlane.xlu0 %4698
        %v4700 = vmul.f32 %v4678, %v2282
        %v4701 = vmul.f32 %v4681, %v2282
        %v4702 = vmul.f32 %v4684, %v2282
        %v4703 = vmul.f32 %v4687, %v2282
        %v4704 = vmul.f32 %v4690, %v2282
        %v4705 = vmul.f32 %v4693, %v2282
        %v4706 = vmul.f32 %v4696, %v2282
        %v4707 = vmul.f32 %v4699, %v2282
        %v4708 = vsub.f32 %v4668, %v4700
        %v4709 = vsub.f32 %v4669, %v4701
        %v4710 = vsub.f32 %v4670, %v4702
        %v4711 = vsub.f32 %v4671, %v4703
        %v4712 = vsub.f32 %v4672, %v4704
        %v4713 = vsub.f32 %v4673, %v4705
        %v4714 = vsub.f32 %v4674, %v4706
        %v4715 = vsub.f32 %v4675, %v4707
        %v4716 = vmul.f32 %v4708, %v4708
        %v4717 = vmul.f32 %v4709, %v4709
        %v4718 = vmul.f32 %v4710, %v4710
        %v4719 = vmul.f32 %v4711, %v4711
        %v4720 = vmul.f32 %v4712, %v4712
        %v4721 = vmul.f32 %v4713, %v4713
        %v4722 = vmul.f32 %v4714, %v4714
        %v4723 = vmul.f32 %v4715, %v4715
        %v4724 = vsel %vm730, %v4716, 0.0
        %4725 = vadd.xlane.f32.xlu0 %v4724
        %v4726 = vpop.xlane.xlu0 %4725
        %v4727 = vsel %vm730, %v4717, 0.0
        %4728 = vadd.xlane.f32.xlu0 %v4727
        %v4729 = vpop.xlane.xlu0 %4728
        %v4730 = vsel %vm730, %v4718, 0.0
        %4731 = vadd.xlane.f32.xlu0 %v4730
        %v4732 = vpop.xlane.xlu0 %4731
        %v4733 = vsel %vm730, %v4719, 0.0
        %4734 = vadd.xlane.f32.xlu0 %v4733
        %v4735 = vpop.xlane.xlu0 %4734
        %v4736 = vsel %vm730, %v4720, 0.0
        %4737 = vadd.xlane.f32.xlu0 %v4736
        %v4738 = vpop.xlane.xlu0 %4737
        %v4739 = vsel %vm730, %v4721, 0.0
        %4740 = vadd.xlane.f32.xlu0 %v4739
        %v4741 = vpop.xlane.xlu0 %4740
        %v4742 = vsel %vm730, %v4722, 0.0
        %4743 = vadd.xlane.f32.xlu0 %v4742
        %v4744 = vpop.xlane.xlu0 %4743
        %v4745 = vsel %vm2272, %v4723, 0.0
        %4746 = vadd.xlane.f32.xlu0 %v4745
        %v4747 = vpop.xlane.xlu0 %4746
        %v4748 = vmul.f32 %v4726, %v2282
        %v4749 = vmul.f32 %v4729, %v2282
        %v4750 = vmul.f32 %v4732, %v2282
        %v4751 = vmul.f32 %v4735, %v2282
        %v4752 = vmul.f32 %v4738, %v2282
        %v4753 = vmul.f32 %v4741, %v2282
        %v4754 = vmul.f32 %v4744, %v2282
        %v4755 = vmul.f32 %v4747, %v2282
        %v4756 = vadd.f32 %v4748, 1e-05
        %v4757 = vadd.f32 %v4749, 1e-05
        %v4758 = vadd.f32 %v4750, 1e-05
        %v4759 = vadd.f32 %v4751, 1e-05
        %v4760 = vadd.f32 %v4752, 1e-05
        %v4761 = vadd.f32 %v4753, 1e-05
        %v4762 = vadd.f32 %v4754, 1e-05
        %v4763 = vadd.f32 %v4755, 1e-05
        %v4764 = vrsqrt.pop %v4756
        %v4765 = vmul.f32 %v4764, %v4756
        %v4766 = vmul.f32 %v4765, %v4764
        %v4767 = vmul.f32 0.5, %v4766
        %v4768 = vsub.f32 1.5, %v4767
        %v4769 = vmul.f32 %v4764, %v4768
        %vm4770 = vweird.f32 %v4756
        %vm4771 = vweird.f32 %v4764
        %vm4772 = vmor %vm4770, %vm4771
        %v4773 = vsel %vm4772, %v4764, %v4769
        %v4774 = vrsqrt.pop %v4757
        %v4775 = vmul.f32 %v4774, %v4757
        %v4776 = vmul.f32 %v4775, %v4774
        %v4777 = vmul.f32 0.5, %v4776
        %v4778 = vsub.f32 1.5, %v4777
        %v4779 = vmul.f32 %v4774, %v4778
        %vm4780 = vweird.f32 %v4757
        %vm4781 = vweird.f32 %v4774
        %vm4782 = vmor %vm4780, %vm4781
        %v4783 = vsel %vm4782, %v4774, %v4779
        %v4784 = vrsqrt.pop %v4758
        %v4785 = vmul.f32 %v4784, %v4758
        %v4786 = vmul.f32 %v4785, %v4784
        %v4787 = vmul.f32 0.5, %v4786
        %v4788 = vsub.f32 1.5, %v4787
        %v4789 = vmul.f32 %v4784, %v4788
        %vm4790 = vweird.f32 %v4758
        %vm4791 = vweird.f32 %v4784
        %vm4792 = vmor %vm4790, %vm4791
        %v4793 = vsel %vm4792, %v4784, %v4789
        %v4794 = vrsqrt.pop %v4759
        %v4795 = vmul.f32 %v4794, %v4759
        %v4796 = vmul.f32 %v4795, %v4794
        %v4797 = vmul.f32 0.5, %v4796
        %v4798 = vsub.f32 1.5, %v4797
        %v4799 = vmul.f32 %v4794, %v4798
        %vm4800 = vweird.f32 %v4759
        %vm4801 = vweird.f32 %v4794
        %vm4802 = vmor %vm4800, %vm4801
        %v4803 = vsel %vm4802, %v4794, %v4799
        %v4804 = vrsqrt.pop %v4760
        %v4805 = vmul.f32 %v4804, %v4760
        %v4806 = vmul.f32 %v4805, %v4804
        %v4807 = vmul.f32 0.5, %v4806
        %v4808 = vsub.f32 1.5, %v4807
        %v4809 = vmul.f32 %v4804, %v4808
        %vm4810 = vweird.f32 %v4760
        %vm4811 = vweird.f32 %v4804
        %vm4812 = vmor %vm4810, %vm4811
        %v4813 = vsel %vm4812, %v4804, %v4809
        %v4814 = vrsqrt.pop %v4761
        %v4815 = vmul.f32 %v4814, %v4761
        %v4816 = vmul.f32 %v4815, %v4814
        %v4817 = vmul.f32 0.5, %v4816
        %v4818 = vsub.f32 1.5, %v4817
        %v4819 = vmul.f32 %v4814, %v4818
        %vm4820 = vweird.f32 %v4761
        %vm4821 = vweird.f32 %v4814
        %vm4822 = vmor %vm4820, %vm4821
        %v4823 = vsel %vm4822, %v4814, %v4819
        %v4824 = vrsqrt.pop %v4762
        %v4825 = vmul.f32 %v4824, %v4762
        %v4826 = vmul.f32 %v4825, %v4824
        %v4827 = vmul.f32 0.5, %v4826
        %v4828 = vsub.f32 1.5, %v4827
        %v4829 = vmul.f32 %v4824, %v4828
        %vm4830 = vweird.f32 %v4762
        %vm4831 = vweird.f32 %v4824
        %vm4832 = vmor %vm4830, %vm4831
        %v4833 = vsel %vm4832, %v4824, %v4829
        %v4834 = vrsqrt.pop %v4763
        %v4835 = vmul.f32 %v4834, %v4763
        %v4836 = vmul.f32 %v4835, %v4834
        %v4837 = vmul.f32 0.5, %v4836
        %v4838 = vsub.f32 1.5, %v4837
        %v4839 = vmul.f32 %v4834, %v4838
        %vm4840 = vweird.f32 %v4763
        %vm4841 = vweird.f32 %v4834
        %vm4842 = vmor %vm4840, %vm4841
        %v4843 = vsel %vm4842, %v4834, %v4839
        %v4844 = vmul.f32 %v4708, %v4773
        %v4845 = vmul.f32 %v4709, %v4783
        %v4846 = vmul.f32 %v4710, %v4793
        %v4847 = vmul.f32 %v4711, %v4803
        %v4848 = vmul.f32 %v4712, %v4813
        %v4849 = vmul.f32 %v4713, %v4823
        %v4850 = vmul.f32 %v4714, %v4833
        %v4851 = vmul.f32 %v4715, %v4843
        %v4852 = vmul.f32 %v4844, %v2787
        %v4853 = vmul.f32 %v4845, %v2787
        %v4854 = vmul.f32 %v4846, %v2787
        %v4855 = vmul.f32 %v4847, %v2787
        %v4856 = vmul.f32 %v4848, %v2787
        %v4857 = vmul.f32 %v4849, %v2787
        %v4858 = vmul.f32 %v4850, %v2787
        %v4859 = vmul.f32 %v4851, %v2787
        %v4860 = vadd.f32 %v4852, %v2798
        %v4861 = vadd.f32 %v4853, %v2798
        %v4862 = vadd.f32 %v4854, %v2798
        %v4863 = vadd.f32 %v4855, %v2798
        %v4864 = vadd.f32 %v4856, %v2798
        %v4865 = vadd.f32 %v4857, %v2798
        %v4866 = vadd.f32 %v4858, %v2798
        %v4867 = vadd.f32 %v4859, %v2798
        %4868 = vst.msk [vmem:[%s2816] sm:$0xff] %vm730, %v4860
        %4869 = vst.msk [vmem:[%s2816 + $0x8] sm:$0xff] %vm730, %v4861
        %4870 = vst.msk [vmem:[%s2816 + $0x10] sm:$0xff] %vm730, %v4862
        %4871 = vst.msk [vmem:[%s2816 + $0x18] sm:$0xff] %vm730, %v4863
        %4872 = vst.msk [vmem:[%s2816 + $0x20] sm:$0xff] %vm730, %v4864
        %4873 = vst.msk [vmem:[%s2816 + $0x28] sm:$0xff] %vm730, %v4865
        %4874 = vst.msk [vmem:[%s2816 + $0x30] sm:$0xff] %vm730, %v4866
        %4875 = vst.msk [vmem:[%s2816 + $0x38] sm:$0x3f] %vm2272, %v4867
        %p4876 = scmp.eq.s32.totalorder %s27, 1
        // Predicated region
        $region85: #{network_forward.3} parent=79 // pred_check
          %p4877 = pneg %p4876
        $region86: #{network_forward.3} parent=79 // pred_check_branch
          %4879 = sbr.rel (%p4877) target = $region88
        $region87: #{network_forward.3} parent=79 // pred_region
          %v4880 = vld [vmem:[#allocation2] sm:$0xff]
          %v4881 = vld [vmem:[#allocation2 + $0x8] sm:$0xff]
          %v4882 = vld [vmem:[#allocation2 + $0x10] sm:$0xff]
          %v4883 = vld [vmem:[#allocation2 + $0x18] sm:$0xff]
          %v4884 = vld [vmem:[#allocation2 + $0x20] sm:$0xff]
          %v4885 = vld [vmem:[#allocation2 + $0x28] sm:$0xff]
          %v4886 = vld [vmem:[#allocation2 + $0x30] sm:$0xff]
          %v4887 = vld [vmem:[#allocation2 + $0x38] sm:$0x3f]
          %v4888 = vsel %vm730, %v4880, 0.0
          %v4889 = vsel %vm730, %v4881, 0.0
          %v4890 = vadd.f32 %v4888, %v4889
          %v4891 = vsel %vm730, %v4882, 0.0
          %v4892 = vadd.f32 %v4890, %v4891
          %v4893 = vsel %vm730, %v4883, 0.0
          %v4894 = vadd.f32 %v4892, %v4893
          %v4895 = vsel %vm730, %v4884, 0.0
          %v4896 = vadd.f32 %v4894, %v4895
          %v4897 = vsel %vm730, %v4885, 0.0
          %v4898 = vadd.f32 %v4896, %v4897
          %v4899 = vsel %vm730, %v4886, 0.0
          %v4900 = vadd.f32 %v4898, %v4899
          %v4901 = vsel %vm2272, %v4887, 0.0
          %v4902 = vadd.f32 %v4900, %v4901
          %v4903 = vrot.slane %v4902, 4
          %v4904 = vadd.f32 %v4902, %v4903
          %v4905 = vrot.slane %v4904, 2
          %v4906 = vadd.f32 %v4904, %v4905
          %v4907 = vrot.slane %v4906, 1
          %v4908 = vadd.f32 %v4906, %v4907
          %v4909 = vrcp.pop 62.0
          %v4910 = vmul.f32 62.0, %v4909
          %v4911 = vsub.f32 1.0, %v4910
          %v4912 = vmul.f32 %v4909, %v4911
          %v4913 = vadd.f32 %v4909, %v4912
          %vm4914 = vweird.f32 %v4909
          %v4915 = vsel %vm4914, %v4909, %v4913
          %v4916 = vmul.f32 %v4908, %v4915
          %v4917 = vld [vmem:[%s13] sm:$0xff]
          %v4918 = vld [vmem:[%s13 + $0x8] sm:$0xff]
          %v4919 = vld [vmem:[%s13 + $0x10] sm:$0xff]
          %v4920 = vld [vmem:[%s13 + $0x18] sm:$0xff]
          %v4921 = vld [vmem:[%s14] sm:$0x1]
          %v4923 = vsel %vm730, %v4916, 0
          %4925 = vmatpush.msra.mxu0 0.0
          %4926 = vmatpush.msra.mxu0 0.0
          %4927 = vmatpush.msra.mxu0 0.0
          %4928 = vmatpush.msra.mxu0 0.0
          %4929 = vmatpush.msra.mxu0 0.0
          %4930 = vmatpush.msra.mxu0 0.0
          %4931 = vmatpush.msra.mxu0 0.0
          %4932 = vmatpush.msra.mxu0 0.0
          %4933 = vmatpush.msra.mxu0 0.0
          %4934 = vmatpush.msra.mxu0 0.0
          %4935 = vmatpush.msra.mxu0 0.0
          %4936 = vmatpush.msra.mxu0 0.0
          %4937 = vmatpush.msra.mxu0 %v4920
          %4938 = vmatpush.msra.mxu0 %v4919
          %4939 = vmatpush.msra.mxu0 %v4918
          %4940 = vmatpush.msra.mxu0 %v4917
          %4941 = vmatmul.f32.gmra.mxu0 %v4923
          %v4942 = vpop.f32.mrf.mxu0
          %v4943 = vadd.f32 %v4921, %v4942
          %4944 = vdwg.mxu0
          %vm4945 = vcmask 57344
          %4946 = vst.msk [vmem:[#allocation3] sm:$0x1] %vm4945, %v4943
          %v4947 = vld [vmem:[%s2816] sm:$0xff]
          %v4948 = vld [vmem:[%s2816 + $0x8] sm:$0xff]
          %v4949 = vld [vmem:[%s2816 + $0x10] sm:$0xff]
          %v4950 = vld [vmem:[%s2816 + $0x18] sm:$0xff]
          %v4951 = vld [vmem:[%s2816 + $0x20] sm:$0xff]
          %v4952 = vld [vmem:[%s2816 + $0x28] sm:$0xff]
          %v4953 = vld [vmem:[%s2816 + $0x30] sm:$0xff]
          %v4954 = vld [vmem:[%s2816 + $0x38] sm:$0x3f]
          %v4955 = vsel %vm730, %v4947, 0.0
          %v4956 = vsel %vm730, %v4948, 0.0
          %v4957 = vadd.f32 %v4955, %v4956
          %v4958 = vsel %vm730, %v4949, 0.0
          %v4959 = vadd.f32 %v4957, %v4958
          %v4960 = vsel %vm730, %v4950, 0.0
          %v4961 = vadd.f32 %v4959, %v4960
          %v4962 = vsel %vm730, %v4951, 0.0
          %v4963 = vadd.f32 %v4961, %v4962
          %v4964 = vsel %vm730, %v4952, 0.0
          %v4965 = vadd.f32 %v4963, %v4964
          %v4966 = vsel %vm730, %v4953, 0.0
          %v4967 = vadd.f32 %v4965, %v4966
          %v4968 = vsel %vm2272, %v4954, 0.0
          %v4969 = vadd.f32 %v4967, %v4968
          %v4970 = vrot.slane %v4969, 4
          %v4971 = vadd.f32 %v4969, %v4970
          %v4972 = vrot.slane %v4971, 2
          %v4973 = vadd.f32 %v4971, %v4972
          %v4974 = vrot.slane %v4973, 1
          %v4975 = vadd.f32 %v4973, %v4974
          %v4976 = vmul.f32 %v4975, %v4915
          %v4977 = vld [vmem:[%s13] sm:$0xff]
          %v4978 = vld [vmem:[%s13 + $0x8] sm:$0xff]
          %v4979 = vld [vmem:[%s13 + $0x10] sm:$0xff]
          %v4980 = vld [vmem:[%s13 + $0x18] sm:$0xff]
          %v4981 = vld [vmem:[%s14] sm:$0x1]
          %v4983 = vsel %vm730, %v4976, 0
          %4985 = vmatpush.msra.mxu0 0.0
          %4986 = vmatpush.msra.mxu0 0.0
          %4987 = vmatpush.msra.mxu0 0.0
          %4988 = vmatpush.msra.mxu0 0.0
          %4989 = vmatpush.msra.mxu0 0.0
          %4990 = vmatpush.msra.mxu0 0.0
          %4991 = vmatpush.msra.mxu0 0.0
          %4992 = vmatpush.msra.mxu0 0.0
          %4993 = vmatpush.msra.mxu0 0.0
          %4994 = vmatpush.msra.mxu0 0.0
          %4995 = vmatpush.msra.mxu0 0.0
          %4996 = vmatpush.msra.mxu0 0.0
          %4997 = vmatpush.msra.mxu0 %v4980
          %4998 = vmatpush.msra.mxu0 %v4979
          %4999 = vmatpush.msra.mxu0 %v4978
          %5000 = vmatpush.msra.mxu0 %v4977
          %5001 = vmatmul.f32.gmra.mxu0 %v4983
          %v5002 = vpop.f32.mrf.mxu0
          %v5003 = vadd.f32 %v4981, %v5002
          %5004 = vdwg.mxu0
          %5005 = vst.msk [vmem:[#allocation3 + $0x1] sm:$0x1] %vm4945, %v5003
        $region88: #{network_forward.3} parent=79 // pred_fallthru
          _
        // Predicated region
        $region89: #{network_forward.3} parent=79 // pred_check
          %p5006 = pneg %p415
        $region90: #{network_forward.3} parent=79 // pred_check_branch
          %5008 = sbr.rel (%p5006) target = $region92
        $region91: #{network_forward.3} parent=79 // pred_region
          %5010 = vsyncadd [#allocation4], 0
          %s5012 = sshll.u32 [#allocation3], 4
          %s5013 = int_to_ptr.vmem [resolvable:$true] %s5012
          %s5014 = sshll.u32 %s15, 4
          %s5015 = int_to_ptr.hbm [resolvable:$true] %s5014
          %5017 = dma.vmem_to_hbm [thread:$0]  %s5013, 32, %s5015, [#allocation4]
        $region92: #{network_forward.3} parent=79 // pred_fallthru
          _
        // Predicated region
        $region93: #{network_forward.3} parent=79 // pred_check
          %p5018 = pneg %p415
        $region94: #{network_forward.3} parent=79 // pred_check_branch
          %5020 = sbr.rel (%p5018) target = $region96
        $region95: #{network_forward.3} parent=79 // pred_region
          %5022 = dma.done [#allocation4], 32
        $region96: #{network_forward.3} parent=79 // pred_fallthru
          _
      $region80: #{network_forward.3} parent=5 // pred_fallthru
        _
      %p5023 = scmp.le.s32.totalorder 2, %s22
      // Predicated region
      $region97: #{network_forward.3} parent=5 // pred_check
        %p5024 = pneg %p5023
      $region98: #{network_forward.3} parent=5 // pred_check_branch
        %5026 = sbr.rel (%p5024) target = $region100
      $region99: #{network_forward.3} parent=5 // pred_region
        %s5027 = ssub.s32 %s22, 2
      $region100: #{network_forward.3} parent=5 // pred_fallthru
        _
    $region6: #{network_forward.3} parent=1 // loop_footer
      %s26 = sadd.s32 1, %s22
    $region7: #{network_forward.3} parent=1 // loop_footer_branch
      %21 = sbr.rel target = $region3
    $region8: #{network_forward.3} parent=1 // loop_exit
      _
    %5028 = vsyncpa [#allocation4], 1
    %s5029 = scalar_lea.sflag [#allocation4], 1
    %5030 = vsyncpa %s5029, 1

</llo_original>
